<compile_context>
chip_gen: v7x
topology: tpu7x:2x2x1
jax: 0.10.0
libtpu: 0.0.40
codegen_flags: <defaults>
</compile_context>

<pallas_src>
import functools

import jax
import jax.numpy as jnp
from jax import lax
from jax.experimental import pallas as pl
from jax.experimental.pallas import tpu as pltpu

EPS = 1e-5          # BatchNorm2d default eps
SLOPE = 0.2         # LeakyReLU negative slope
LANE = 128          # channel padding target (lane width)
MXU_DTYPE = jnp.bfloat16


def _round_up(x, m):
    return ((x + m - 1) // m) * m


# ------------------------- XLA glue (cheap layout prep) -------------------------

def _conv_input_flat(x_nhwc, dtype):
    """Spatially pad for a 3x3 / stride-1 / pad-1 conv and row-flatten.

    Output rows are indexed q = i*(W+2) + j; the conv kernel reads tap (kh, kw) as the
    contiguous slice starting at kh*(W+2)+kw, so no im2col matrix is ever materialized.
    """
    n, h, w, c = x_nhwc.shape
    xp = jnp.pad(x_nhwc, ((0, 0), (1, 2), (1, 1), (0, 0)))   # (N, H+3, W+2, C)
    return xp.reshape(n, (h + 3) * (w + 2), c).astype(dtype)


def _pack_params(p, cpad, dtype):
    """Weights -> (9*Cin, Cpad) tap-major matrices; per-channel vectors -> (1, Cpad)."""
    def w2d(w, cin_pad):
        co, ci = w.shape[:2]
        wt = jnp.transpose(w, (2, 3, 1, 0))                  # (KH, KW, Cin, Cout)
        wt = jnp.pad(wt, ((0, 0), (0, 0), (0, cin_pad - ci), (0, cpad - co)))
        return wt.reshape(9 * cin_pad, cpad).astype(dtype)

    def vec(v):
        return jnp.pad(v, (0, cpad - v.shape[0])).reshape(1, cpad).astype(jnp.float32)

    in_nc = p["w0"].shape[1]
    return {
        "w0": w2d(p["w0"], in_nc),     # conv0 keeps the true Cin as the per-tap K dim
        "b0": vec(p["b0"]),
        "w1": w2d(p["w1"], cpad),      # conv1 input channels already padded to 128
        "b1": vec(p["b1"]),
        "gamma": vec(p["gamma"]),      # padded gamma = 0 -> padded channels stay 0
        "beta": vec(p["beta"]),
    }


# --------------------------------- Pallas kernels ---------------------------------

def _conv_taps(x_ref, w_ref, b_ref, offsets, lout):
    """3x3 conv as 9 statically-unrolled shifted matmuls; f32 accumulator + fused bias."""
    cpad = w_ref.shape[1]
    cin = w_ref.shape[0] // 9
    xa = x_ref[0]                      # (Lin, Cin)   bf16
    wa = w_ref[...]                    # (9*Cin, Cpad) bf16
    acc = jnp.zeros((lout, cpad), jnp.float32)
    for t, off in enumerate(offsets):  # offsets are python ints -> static slices
        acc += jnp.dot(xa[off:off + lout, :], wa[t * cin:(t + 1) * cin, :],
                       preferred_element_type=jnp.float32)
    return acc + b_ref[...]


def _conv0_kernel(x_ref, w_ref, b_ref, mask_ref, y_ref, s_ref, sq_ref, *, offsets, lout):
    acc = _conv_taps(x_ref, w_ref, b_ref, offsets, lout)
    y_ref[0] = acc.astype(y_ref.dtype)
    # Fused BN batch statistics; mask (in {0,1}) removes the garbage columns j in [W, W+2).
    m = mask_ref[...]                                        # (Lout, 1)
    ym = acc * m
    s_ref[0] = jnp.sum(ym, axis=0, keepdims=True)            # per-channel sum
    sq_ref[0] = jnp.sum(ym * acc, axis=0, keepdims=True)     # per-channel sum of squares


def _conv1_kernel(x_ref, w_ref, b_ref, y_ref, *, offsets, lout, slope):
    acc = _conv_taps(x_ref, w_ref, b_ref, offsets, lout)
    acc = jnp.where(acc >= 0, acc, slope * acc)              # fused LeakyReLU
    y_ref[0] = acc.astype(y_ref.dtype)


def _bn_act_kernel(y_ref, scale_ref, shift_ref, o_ref, *, slope):
    z = y_ref[0] * scale_ref[...] + shift_ref[...]           # single FMA per element
    o_ref[0] = jnp.where(z >= 0, z, slope * z).astype(o_ref.dtype)


# --------------------------------- pallas_call wrappers ---------------------------------

def _conv0_call(xf, w2d, bias, mask, *, wq, lout):
    n, lin, cin = xf.shape
    cpad = w2d.shape[1]
    offsets = tuple(kh * wq + kw for kh in range(3) for kw in range(3))
    return pl.pallas_call(
        functools.partial(_conv0_kernel, offsets=offsets, lout=lout),
        out_shape=(jax.ShapeDtypeStruct((n, lout, cpad), jnp.float32),
                   jax.ShapeDtypeStruct((n, 1, cpad), jnp.float32),
                   jax.ShapeDtypeStruct((n, 1, cpad), jnp.float32)),
        grid=(n,),
        in_specs=[pl.BlockSpec((1, lin, cin), lambda i: (i, 0, 0)),
                  pl.BlockSpec((9 * cin, cpad), lambda i: (0, 0)),
                  pl.BlockSpec((1, cpad), lambda i: (0, 0)),
                  pl.BlockSpec((lout, 1), lambda i: (0, 0))],
        out_specs=(pl.BlockSpec((1, lout, cpad), lambda i: (i, 0, 0)),
                   pl.BlockSpec((1, 1, cpad), lambda i: (i, 0, 0)),
                   pl.BlockSpec((1, 1, cpad), lambda i: (i, 0, 0))),
        compiler_params=pltpu.CompilerParams(dimension_semantics=("parallel",)),
    )(xf, w2d, bias, mask)


def _conv1_call(xf, w2d, bias, *, wq, lout):
    n, lin, cin = xf.shape
    cpad = w2d.shape[1]
    offsets = tuple(kh * wq + kw for kh in range(3) for kw in range(3))
    return pl.pallas_call(
        functools.partial(_conv1_kernel, offsets=offsets, lout=lout, slope=SLOPE),
        out_shape=jax.ShapeDtypeStruct((n, lout, cpad), jnp.float32),
        grid=(n,),
        in_specs=[pl.BlockSpec((1, lin, cin), lambda i: (i, 0, 0)),
                  pl.BlockSpec((9 * cin, cpad), lambda i: (0, 0)),
                  pl.BlockSpec((1, cpad), lambda i: (0, 0))],
        out_specs=pl.BlockSpec((1, lout, cpad), lambda i: (i, 0, 0)),
        compiler_params=pltpu.CompilerParams(dimension_semantics=("parallel",)),
    )(xf, w2d, bias)


def _bn_act_call(y, scale, shift):
    n, lout, cpad = y.shape
    return pl.pallas_call(
        functools.partial(_bn_act_kernel, slope=SLOPE),
        out_shape=jax.ShapeDtypeStruct((n, lout, cpad), jnp.float32),
        grid=(n,),
        in_specs=[pl.BlockSpec((1, lout, cpad), lambda i: (i, 0, 0)),
                  pl.BlockSpec((1, cpad), lambda i: (0, 0)),
                  pl.BlockSpec((1, cpad), lambda i: (0, 0))],
        out_specs=pl.BlockSpec((1, lout, cpad), lambda i: (i, 0, 0)),
        compiler_params=pltpu.CompilerParams(dimension_semantics=("parallel",)),
    )(y, scale, shift)


# --------------------------------- ConcatBlock forward ---------------------------------

def concat_block_forward(x_nchw, params):
    n, in_nc, h, w = x_nchw.shape
    out_nc = params["w0"].shape[0]
    cpad = _round_up(out_nc, LANE)
    wq = w + 2                       # flattened row stride (width incl. left/right pad)
    lout = h * wq                    # rows per image in the padded flattened layout

    pk = _pack_params(params, cpad, MXU_DTYPE)

    x_nhwc = jnp.transpose(x_nchw, (0, 2, 3, 1))
    x0f = _conv_input_flat(x_nhwc, MXU_DTYPE)                 # (N, (H+3)*(W+2), Cin)

    # valid-column mask (1 for j < W, 0 for the 2 garbage columns) used only for BN stats
    col = jnp.arange(lout, dtype=jnp.int32) % wq
    mask = (col < w).astype(jnp.float32).reshape(lout, 1)

    # conv0 (+bias) with fused per-image BN sum / sumsq accumulation
    y0, s, sq = _conv0_call(x0f, pk["w0"], pk["b0"], mask, wq=wq, lout=lout)

    # tiny per-channel reduction + parameter folding (outside the hot loop)
    cnt = jnp.float32(n * h * w)
    mean = jnp.sum(s, axis=0) / cnt                           # (1, Cpad)
    var = jnp.sum(sq, axis=0) / cnt - mean * mean             # biased (training-mode) var
    scale = pk["gamma"] * lax.rsqrt(var + EPS)
    shift = pk["beta"] - mean * scale

    # fused BN apply + LeakyReLU (y0 stays in its padded layout; garbage cols are harmless)
    x1 = _bn_act_call(y0, scale, shift)                       # (N, Lout, Cpad) f32

    # cheap spatial re-pad for conv1 (valid slice + zero border), then conv1 (+bias+LReLU)
    x1 = x1.reshape(n, h, wq, cpad)[:, :, :w, :]
    x1f = _conv_input_flat(x1, MXU_DTYPE)                     # (N, (H+3)*(W+2), Cpad)
    y1 = _conv1_call(x1f, pk["w1"], pk["b1"], wq=wq, lout=lout)

    # strip garbage columns + padded channels once, back to NCHW, then the ConcatBlock cat
    sub = y1.reshape(n, h, wq, cpad)[:, :, :w, :out_nc]
    sub = jnp.transpose(sub, (0, 3, 1, 2))                    # (N, out_nc, H, W)
    return jnp.concatenate([x_nchw, sub], axis=1)             # (N, in_nc+out_nc, H, W)


# --------------------------------- params / reference ---------------------------------

def init_params(key, in_nc, out_nc, ksize=3):
    k0, k1, k2, k3 = jax.random.split(key, 4)
    lim0 = 1.0 / (in_nc * ksize * ksize) ** 0.5
    lim1 = 1.0 / (out_nc * ksize * ksize) ** 0.5
    return {
        "w0": jax.random.uniform(k0, (out_nc, in_nc, ksize, ksize),
                                 jnp.float32, -lim0, lim0),
        "b0": jax.random.uniform(k1, (out_nc,), jnp.float32, -lim0, lim0),
        "w1": jax.random.uniform(k2, (out_nc, out_nc, ksize, ksize),
                                 jnp.float32, -lim1, lim1),
        "b1": jax.random.uniform(k3, (out_nc,), jnp.float32, -lim1, lim1),
        "gamma": jnp.ones((out_nc,), jnp.float32),
        "beta": jnp.zeros((out_nc,), jnp.float32),
    }


def reference_forward(x, p):
    """Pure-XLA reference with the same bf16 rounding of the MXU operands."""
    dn = ("NCHW", "OIHW", "NCHW")

    def conv(a, w):
        return lax.conv_general_dilated(
            a.astype(MXU_DTYPE), w.astype(MXU_DTYPE), (1, 1), ((1, 1), (1, 1)),
            dimension_numbers=dn, preferred_element_type=jnp.float32)

    y0 = conv(x, p["w0"]) + p["b0"][None, :, None, None]
    mean = jnp.mean(y0, axis=(0, 2, 3), keepdims=True)
    var = jnp.var(y0, axis=(0, 2, 3), keepdims=True)
    x1 = (y0 - mean) / jnp.sqrt(var + EPS)
    x1 = x1 * p["gamma"][None, :, None, None] + p["beta"][None, :, None, None]
    x1 = jnp.where(x1 >= 0, x1, SLOPE * x1)
    y1 = conv(x1, p["w1"]) + p["b1"][None, :, None, None]
    y1 = jnp.where(y1 >= 0, y1, SLOPE * y1)
    return jnp.concatenate([x, y1], axis=1)


if __name__ == "__main__":
    in_nc, out_nc = 4, 8
    key = jax.random.PRNGKey(0)
    kx, kp = jax.random.split(key)
    x = jax.random.normal(kx, (2, in_nc, 16, 16), jnp.float32)    # NCHW
    params = init_params(kp, in_nc, out_nc)

    fwd = jax.jit(concat_block_forward)
    out = jax.block_until_ready(fwd(x, params))
    ref = jax.block_until_ready(reference_forward(x, params))

    assert out.shape == (2, in_nc + out_nc, 16, 16), out.shape
    err = float(jnp.max(jnp.abs(out - ref)))
    assert err < 1e-2, err     # bf16 MXU operands, f32 accumulation (reference matched)
    print("KERNEL_OK")
</pallas_src>

<mosaic_0001>
module attributes {stable_mosaic.version = 11 : i64} {
  func.func @_conv0_kernel(%arg0: i32, %arg1: memref<1x342x4xbf16, #tpu.memory_space<vmem>>, %arg2: memref<36x128xbf16, #tpu.memory_space<vmem>>, %arg3: memref<1x128xf32, #tpu.memory_space<vmem>>, %arg4: memref<288x1xf32, #tpu.memory_space<vmem>>, %arg5: memref<1x288x128xf32, #tpu.memory_space<vmem>>, %arg6: memref<1x1x128xf32, #tpu.memory_space<vmem>>, %arg7: memref<1x1x128xf32, #tpu.memory_space<vmem>>) attributes {dimension_semantics = [#tpu.dimension_semantics<parallel>], iteration_bounds = array<i64: 2>, scalar_prefetch = 0 : i64, scratch_operands = 0 : i64, tpu.core_type = #tpu.core_type<tc>, window_params = [{transform_indices = @transform_0, window_bounds = array<i64: 1, 342, 4>}, {pipeline_mode = #tpu.pipeline_mode<synchronous>, transform_indices = @transform_1, window_bounds = array<i64: 36, 128>}, {pipeline_mode = #tpu.pipeline_mode<synchronous>, transform_indices = @transform_2, window_bounds = array<i64: 1, 128>}, {pipeline_mode = #tpu.pipeline_mode<synchronous>, transform_indices = @transform_3, window_bounds = array<i64: 288, 1>}, {transform_indices = @transform_4, window_bounds = array<i64: 1, 288, 128>}, {transform_indices = @transform_5, window_bounds = array<i64: 1, 1, 128>}, {transform_indices = @transform_6, window_bounds = array<i64: 1, 1, 128>}]} {
    %c0 = arith.constant 0 : index
    %c0_0 = arith.constant 0 : index
    %c0_1 = arith.constant 0 : index
    %0 = vector.load %arg1[%c0, %c0_0, %c0_1] : memref<1x342x4xbf16, #tpu.memory_space<vmem>>, vector<1x342x4xbf16>
    %1 = vector.shape_cast %0 : vector<1x342x4xbf16> to vector<342x4xbf16>
    %c0_2 = arith.constant 0 : index
    %c0_3 = arith.constant 0 : index
    %2 = vector.load %arg2[%c0_2, %c0_3] : memref<36x128xbf16, #tpu.memory_space<vmem>>, vector<36x128xbf16>
    %cst = arith.constant 0.000000e+00 : f32
    %3 = vector.broadcast %cst : f32 to vector<288x128xf32>
    %4 = vector.extract_strided_slice %1 {offsets = [0, 0], sizes = [288, 4], strides = [1, 1]} : vector<342x4xbf16> to vector<288x4xbf16>
    %5 = vector.extract_strided_slice %2 {offsets = [0, 0], sizes = [4, 128], strides = [1, 1]} : vector<36x128xbf16> to vector<4x128xbf16>
    %cst_4 = arith.constant dense<0.000000e+00> : vector<288x128xf32>
    %6 = tpu.matmul %4, %5, %cst_4 {dimension_numbers = #tpu.dot_dimension_numbers<[1], [0], [0], [1], [0, 0, 1, 1], [], []>} : vector<288x4xbf16>, vector<4x128xbf16>, vector<288x128xf32> -> vector<288x128xf32>
    %7 = arith.addf %3, %6 : vector<288x128xf32>
    %8 = vector.extract_strided_slice %1 {offsets = [1, 0], sizes = [288, 4], strides = [1, 1]} : vector<342x4xbf16> to vector<288x4xbf16>
    %9 = vector.extract_strided_slice %2 {offsets = [4, 0], sizes = [4, 128], strides = [1, 1]} : vector<36x128xbf16> to vector<4x128xbf16>
    %cst_5 = arith.constant dense<0.000000e+00> : vector<288x128xf32>
    %10 = tpu.matmul %8, %9, %cst_5 {dimension_numbers = #tpu.dot_dimension_numbers<[1], [0], [0], [1], [0, 0, 1, 1], [], []>} : vector<288x4xbf16>, vector<4x128xbf16>, vector<288x128xf32> -> vector<288x128xf32>
    %11 = arith.addf %7, %10 : vector<288x128xf32>
    %12 = vector.extract_strided_slice %1 {offsets = [2, 0], sizes = [288, 4], strides = [1, 1]} : vector<342x4xbf16> to vector<288x4xbf16>
    %13 = vector.extract_strided_slice %2 {offsets = [8, 0], sizes = [4, 128], strides = [1, 1]} : vector<36x128xbf16> to vector<4x128xbf16>
    %cst_6 = arith.constant dense<0.000000e+00> : vector<288x128xf32>
    %14 = tpu.matmul %12, %13, %cst_6 {dimension_numbers = #tpu.dot_dimension_numbers<[1], [0], [0], [1], [0, 0, 1, 1], [], []>} : vector<288x4xbf16>, vector<4x128xbf16>, vector<288x128xf32> -> vector<288x128xf32>
    %15 = arith.addf %11, %14 : vector<288x128xf32>
    %16 = vector.extract_strided_slice %1 {offsets = [18, 0], sizes = [288, 4], strides = [1, 1]} : vector<342x4xbf16> to vector<288x4xbf16>
    %17 = vector.extract_strided_slice %2 {offsets = [12, 0], sizes = [4, 128], strides = [1, 1]} : vector<36x128xbf16> to vector<4x128xbf16>
    %cst_7 = arith.constant dense<0.000000e+00> : vector<288x128xf32>
    %18 = tpu.matmul %16, %17, %cst_7 {dimension_numbers = #tpu.dot_dimension_numbers<[1], [0], [0], [1], [0, 0, 1, 1], [], []>} : vector<288x4xbf16>, vector<4x128xbf16>, vector<288x128xf32> -> vector<288x128xf32>
    %19 = arith.addf %15, %18 : vector<288x128xf32>
    %20 = vector.extract_strided_slice %1 {offsets = [19, 0], sizes = [288, 4], strides = [1, 1]} : vector<342x4xbf16> to vector<288x4xbf16>
    %21 = vector.extract_strided_slice %2 {offsets = [16, 0], sizes = [4, 128], strides = [1, 1]} : vector<36x128xbf16> to vector<4x128xbf16>
    %cst_8 = arith.constant dense<0.000000e+00> : vector<288x128xf32>
    %22 = tpu.matmul %20, %21, %cst_8 {dimension_numbers = #tpu.dot_dimension_numbers<[1], [0], [0], [1], [0, 0, 1, 1], [], []>} : vector<288x4xbf16>, vector<4x128xbf16>, vector<288x128xf32> -> vector<288x128xf32>
    %23 = arith.addf %19, %22 : vector<288x128xf32>
    %24 = vector.extract_strided_slice %1 {offsets = [20, 0], sizes = [288, 4], strides = [1, 1]} : vector<342x4xbf16> to vector<288x4xbf16>
    %25 = vector.extract_strided_slice %2 {offsets = [20, 0], sizes = [4, 128], strides = [1, 1]} : vector<36x128xbf16> to vector<4x128xbf16>
    %cst_9 = arith.constant dense<0.000000e+00> : vector<288x128xf32>
    %26 = tpu.matmul %24, %25, %cst_9 {dimension_numbers = #tpu.dot_dimension_numbers<[1], [0], [0], [1], [0, 0, 1, 1], [], []>} : vector<288x4xbf16>, vector<4x128xbf16>, vector<288x128xf32> -> vector<288x128xf32>
    %27 = arith.addf %23, %26 : vector<288x128xf32>
    %28 = vector.extract_strided_slice %1 {offsets = [36, 0], sizes = [288, 4], strides = [1, 1]} : vector<342x4xbf16> to vector<288x4xbf16>
    %29 = vector.extract_strided_slice %2 {offsets = [24, 0], sizes = [4, 128], strides = [1, 1]} : vector<36x128xbf16> to vector<4x128xbf16>
    %cst_10 = arith.constant dense<0.000000e+00> : vector<288x128xf32>
    %30 = tpu.matmul %28, %29, %cst_10 {dimension_numbers = #tpu.dot_dimension_numbers<[1], [0], [0], [1], [0, 0, 1, 1], [], []>} : vector<288x4xbf16>, vector<4x128xbf16>, vector<288x128xf32> -> vector<288x128xf32>
    %31 = arith.addf %27, %30 : vector<288x128xf32>
    %32 = vector.extract_strided_slice %1 {offsets = [37, 0], sizes = [288, 4], strides = [1, 1]} : vector<342x4xbf16> to vector<288x4xbf16>
    %33 = vector.extract_strided_slice %2 {offsets = [28, 0], sizes = [4, 128], strides = [1, 1]} : vector<36x128xbf16> to vector<4x128xbf16>
    %cst_11 = arith.constant dense<0.000000e+00> : vector<288x128xf32>
    %34 = tpu.matmul %32, %33, %cst_11 {dimension_numbers = #tpu.dot_dimension_numbers<[1], [0], [0], [1], [0, 0, 1, 1], [], []>} : vector<288x4xbf16>, vector<4x128xbf16>, vector<288x128xf32> -> vector<288x128xf32>
    %35 = arith.addf %31, %34 : vector<288x128xf32>
    %36 = vector.extract_strided_slice %1 {offsets = [38, 0], sizes = [288, 4], strides = [1, 1]} : vector<342x4xbf16> to vector<288x4xbf16>
    %37 = vector.extract_strided_slice %2 {offsets = [32, 0], sizes = [4, 128], strides = [1, 1]} : vector<36x128xbf16> to vector<4x128xbf16>
    %cst_12 = arith.constant dense<0.000000e+00> : vector<288x128xf32>
    %38 = tpu.matmul %36, %37, %cst_12 {dimension_numbers = #tpu.dot_dimension_numbers<[1], [0], [0], [1], [0, 0, 1, 1], [], []>} : vector<288x4xbf16>, vector<4x128xbf16>, vector<288x128xf32> -> vector<288x128xf32>
    %39 = arith.addf %35, %38 : vector<288x128xf32>
    %c0_13 = arith.constant 0 : index
    %c0_14 = arith.constant 0 : index
    %40 = vector.load %arg3[%c0_13, %c0_14] : memref<1x128xf32, #tpu.memory_space<vmem>>, vector<1x128xf32>
    %41 = vector.broadcast %40 : vector<1x128xf32> to vector<288x128xf32>
    %42 = arith.addf %39, %41 : vector<288x128xf32>
    %c0_15 = arith.constant 0 : index
    %c0_16 = arith.constant 0 : index
    %c0_17 = arith.constant 0 : index
    %43 = vector.load %arg5[%c0_15, %c0_16, %c0_17] : memref<1x288x128xf32, #tpu.memory_space<vmem>>, vector<1x288x128xf32>
    %44 = vector.shape_cast %43 : vector<1x288x128xf32> to vector<288x128xf32>
    %45 = vector.shape_cast %42 : vector<288x128xf32> to vector<1x288x128xf32>
    tpu.vector_store %arg5[%c0_15, %c0_16, %c0_17], %45 {strides = array<i32>} : memref<1x288x128xf32, #tpu.memory_space<vmem>>, vector<1x288x128xf32>,
    %c0_18 = arith.constant 0 : index
    %c0_19 = arith.constant 0 : index
    %46 = vector.load %arg4[%c0_18, %c0_19] : memref<288x1xf32, #tpu.memory_space<vmem>>, vector<288x1xf32>
    %47 = vector.broadcast %46 : vector<288x1xf32> to vector<288x128xf32>
    %48 = arith.mulf %42, %47 : vector<288x128xf32>
    %cst_20 = arith.constant dense<0.000000e+00> : vector<128xf32>
    %49 = vector.multi_reduction <add>, %48, %cst_20 [0] : vector<288x128xf32> to vector<128xf32>
    %50 = vector.shape_cast %49 : vector<128xf32> to vector<1x128xf32>
    %c0_21 = arith.constant 0 : index
    %c0_22 = arith.constant 0 : index
    %c0_23 = arith.constant 0 : index
    %51 = vector.load %arg6[%c0_21, %c0_22, %c0_23] : memref<1x1x128xf32, #tpu.memory_space<vmem>>, vector<1x1x128xf32>
    %52 = vector.shape_cast %51 : vector<1x1x128xf32> to vector<1x128xf32>
    %53 = vector.shape_cast %50 : vector<1x128xf32> to vector<1x1x128xf32>
    tpu.vector_store %arg6[%c0_21, %c0_22, %c0_23], %53 {strides = array<i32>} : memref<1x1x128xf32, #tpu.memory_space<vmem>>, vector<1x1x128xf32>,
    %54 = arith.mulf %48, %42 : vector<288x128xf32>
    %cst_24 = arith.constant dense<0.000000e+00> : vector<128xf32>
    %55 = vector.multi_reduction <add>, %54, %cst_24 [0] : vector<288x128xf32> to vector<128xf32>
    %56 = vector.shape_cast %55 : vector<128xf32> to vector<1x128xf32>
    %c0_25 = arith.constant 0 : index
    %c0_26 = arith.constant 0 : index
    %c0_27 = arith.constant 0 : index
    %57 = vector.load %arg7[%c0_25, %c0_26, %c0_27] : memref<1x1x128xf32, #tpu.memory_space<vmem>>, vector<1x1x128xf32>
    %58 = vector.shape_cast %57 : vector<1x1x128xf32> to vector<1x128xf32>
    %59 = vector.shape_cast %56 : vector<1x128xf32> to vector<1x1x128xf32>
    tpu.vector_store %arg7[%c0_25, %c0_26, %c0_27], %59 {strides = array<i32>} : memref<1x1x128xf32, #tpu.memory_space<vmem>>, vector<1x1x128xf32>,
    return
  }
  func.func @transform_0(%arg0: i32) -> (i32, i32, i32) {
    %c0_i32 = arith.constant 0 : i32
    %c0_i32_0 = arith.constant 0 : i32
    %c0_i32_1 = arith.constant 0 : i32
    return %arg0, %c0_i32, %c0_i32_0 : i32, i32, i32
  }
  func.func @transform_1(%arg0: i32) -> (i32, i32) {
    %c0_i32 = arith.constant 0 : i32
    %c0_i32_0 = arith.constant 0 : i32
    %c0_i32_1 = arith.constant 0 : i32
    return %c0_i32, %c0_i32_0 : i32, i32
  }
  func.func @transform_2(%arg0: i32) -> (i32, i32) {
    %c0_i32 = arith.constant 0 : i32
    %c0_i32_0 = arith.constant 0 : i32
    %c0_i32_1 = arith.constant 0 : i32
    return %c0_i32, %c0_i32_0 : i32, i32
  }
  func.func @transform_3(%arg0: i32) -> (i32, i32) {
    %c0_i32 = arith.constant 0 : i32
    %c0_i32_0 = arith.constant 0 : i32
    %c0_i32_1 = arith.constant 0 : i32
    return %c0_i32, %c0_i32_0 : i32, i32
  }
  func.func @transform_4(%arg0: i32) -> (i32, i32, i32) {
    %c0_i32 = arith.constant 0 : i32
    %c0_i32_0 = arith.constant 0 : i32
    %c0_i32_1 = arith.constant 0 : i32
    return %arg0, %c0_i32, %c0_i32_0 : i32, i32, i32
  }
  func.func @transform_5(%arg0: i32) -> (i32, i32, i32) {
    %c0_i32 = arith.constant 0 : i32
    %c0_i32_0 = arith.constant 0 : i32
    %c0_i32_1 = arith.constant 0 : i32
    return %arg0, %c0_i32, %c0_i32_0 : i32, i32, i32
  }
  func.func @transform_6(%arg0: i32) -> (i32, i32, i32) {
    %c0_i32 = arith.constant 0 : i32
    %c0_i32_0 = arith.constant 0 : i32
    %c0_i32_1 = arith.constant 0 : i32
    return %arg0, %c0_i32, %c0_i32_0 : i32, i32, i32
  }
}

module attributes {stable_mosaic.version = 11 : i64} {
  func.func @_bn_act_kernel(%arg0: i32, %arg1: memref<1x288x128xf32, #tpu.memory_space<vmem>>, %arg2: memref<1x128xf32, #tpu.memory_space<vmem>>, %arg3: memref<1x128xf32, #tpu.memory_space<vmem>>, %arg4: memref<1x288x128xf32, #tpu.memory_space<vmem>>) attributes {dimension_semantics = [#tpu.dimension_semantics<parallel>], iteration_bounds = array<i64: 2>, scalar_prefetch = 0 : i64, scratch_operands = 0 : i64, tpu.core_type = #tpu.core_type<tc>, window_params = [{transform_indices = @transform_0, window_bounds = array<i64: 1, 288, 128>}, {pipeline_mode = #tpu.pipeline_mode<synchronous>, transform_indices = @transform_1, window_bounds = array<i64: 1, 128>}, {pipeline_mode = #tpu.pipeline_mode<synchronous>, transform_indices = @transform_2, window_bounds = array<i64: 1, 128>}, {transform_indices = @transform_3, window_bounds = array<i64: 1, 288, 128>}]} {
    %c0 = arith.constant 0 : index
    %c0_0 = arith.constant 0 : index
    %c0_1 = arith.constant 0 : index
    %0 = vector.load %arg1[%c0, %c0_0, %c0_1] : memref<1x288x128xf32, #tpu.memory_space<vmem>>, vector<1x288x128xf32>
    %1 = vector.shape_cast %0 : vector<1x288x128xf32> to vector<288x128xf32>
    %c0_2 = arith.constant 0 : index
    %c0_3 = arith.constant 0 : index
    %2 = vector.load %arg2[%c0_2, %c0_3] : memref<1x128xf32, #tpu.memory_space<vmem>>, vector<1x128xf32>
    %3 = vector.broadcast %2 : vector<1x128xf32> to vector<288x128xf32>
    %4 = arith.mulf %1, %3 : vector<288x128xf32>
    %c0_4 = arith.constant 0 : index
    %c0_5 = arith.constant 0 : index
    %5 = vector.load %arg3[%c0_4, %c0_5] : memref<1x128xf32, #tpu.memory_space<vmem>>, vector<1x128xf32>
    %6 = vector.broadcast %5 : vector<1x128xf32> to vector<288x128xf32>
    %7 = arith.addf %4, %6 : vector<288x128xf32>
    %cst = arith.constant 0.000000e+00 : f32
    %8 = vector.broadcast %cst : f32 to vector<288x128xf32>
    %9 = arith.cmpf oge, %7, %8 : vector<288x128xf32>
    %cst_6 = arith.constant 2.000000e-01 : f32
    %10 = vector.broadcast %cst_6 : f32 to vector<288x128xf32>
    %11 = arith.mulf %10, %7 : vector<288x128xf32>
    %12 = arith.select %9, %7, %11 : vector<288x128xi1>, vector<288x128xf32>
    %c0_7 = arith.constant 0 : index
    %c0_8 = arith.constant 0 : index
    %c0_9 = arith.constant 0 : index
    %13 = vector.load %arg4[%c0_7, %c0_8, %c0_9] : memref<1x288x128xf32, #tpu.memory_space<vmem>>, vector<1x288x128xf32>
    %14 = vector.shape_cast %13 : vector<1x288x128xf32> to vector<288x128xf32>
    %15 = vector.shape_cast %12 : vector<288x128xf32> to vector<1x288x128xf32>
    tpu.vector_store %arg4[%c0_7, %c0_8, %c0_9], %15 {strides = array<i32>} : memref<1x288x128xf32, #tpu.memory_space<vmem>>, vector<1x288x128xf32>,
    return
  }
  func.func @transform_0(%arg0: i32) -> (i32, i32, i32) {
    %c0_i32 = arith.constant 0 : i32
    %c0_i32_0 = arith.constant 0 : i32
    %c0_i32_1 = arith.constant 0 : i32
    return %arg0, %c0_i32, %c0_i32_0 : i32, i32, i32
  }
  func.func @transform_1(%arg0: i32) -> (i32, i32) {
    %c0_i32 = arith.constant 0 : i32
    %c0_i32_0 = arith.constant 0 : i32
    %c0_i32_1 = arith.constant 0 : i32
    return %c0_i32, %c0_i32_0 : i32, i32
  }
  func.func @transform_2(%arg0: i32) -> (i32, i32) {
    %c0_i32 = arith.constant 0 : i32
    %c0_i32_0 = arith.constant 0 : i32
    %c0_i32_1 = arith.constant 0 : i32
    return %c0_i32, %c0_i32_0 : i32, i32
  }
  func.func @transform_3(%arg0: i32) -> (i32, i32, i32) {
    %c0_i32 = arith.constant 0 : i32
    %c0_i32_0 = arith.constant 0 : i32
    %c0_i32_1 = arith.constant 0 : i32
    return %arg0, %c0_i32, %c0_i32_0 : i32, i32, i32
  }
}

module attributes {stable_mosaic.version = 11 : i64} {
  func.func @_conv1_kernel(%arg0: i32, %arg1: memref<1x342x128xbf16, #tpu.memory_space<vmem>>, %arg2: memref<1152x128xbf16, #tpu.memory_space<vmem>>, %arg3: memref<1x128xf32, #tpu.memory_space<vmem>>, %arg4: memref<1x288x128xf32, #tpu.memory_space<vmem>>) attributes {dimension_semantics = [#tpu.dimension_semantics<parallel>], iteration_bounds = array<i64: 2>, scalar_prefetch = 0 : i64, scratch_operands = 0 : i64, tpu.core_type = #tpu.core_type<tc>, window_params = [{transform_indices = @transform_0, window_bounds = array<i64: 1, 342, 128>}, {pipeline_mode = #tpu.pipeline_mode<synchronous>, transform_indices = @transform_1, window_bounds = array<i64: 1152, 128>}, {pipeline_mode = #tpu.pipeline_mode<synchronous>, transform_indices = @transform_2, window_bounds = array<i64: 1, 128>}, {transform_indices = @transform_3, window_bounds = array<i64: 1, 288, 128>}]} {
    %c0 = arith.constant 0 : index
    %c0_0 = arith.constant 0 : index
    %c0_1 = arith.constant 0 : index
    %0 = vector.load %arg1[%c0, %c0_0, %c0_1] : memref<1x342x128xbf16, #tpu.memory_space<vmem>>, vector<1x342x128xbf16>
    %1 = vector.shape_cast %0 : vector<1x342x128xbf16> to vector<342x128xbf16>
    %c0_2 = arith.constant 0 : index
    %c0_3 = arith.constant 0 : index
    %2 = vector.load %arg2[%c0_2, %c0_3] : memref<1152x128xbf16, #tpu.memory_space<vmem>>, vector<1152x128xbf16>
    %cst = arith.constant 0.000000e+00 : f32
    %3 = vector.broadcast %cst : f32 to vector<288x128xf32>
    %4 = vector.extract_strided_slice %1 {offsets = [0, 0], sizes = [288, 128], strides = [1, 1]} : vector<342x128xbf16> to vector<288x128xbf16>
    %5 = vector.extract_strided_slice %2 {offsets = [0, 0], sizes = [128, 128], strides = [1, 1]} : vector<1152x128xbf16> to vector<128x128xbf16>
    %cst_4 = arith.constant dense<0.000000e+00> : vector<288x128xf32>
    %6 = tpu.matmul %4, %5, %cst_4 {dimension_numbers = #tpu.dot_dimension_numbers<[1], [0], [0], [1], [0, 0, 1, 1], [], []>} : vector<288x128xbf16>, vector<128x128xbf16>, vector<288x128xf32> -> vector<288x128xf32>
    %7 = arith.addf %3, %6 : vector<288x128xf32>
    %8 = vector.extract_strided_slice %1 {offsets = [1, 0], sizes = [288, 128], strides = [1, 1]} : vector<342x128xbf16> to vector<288x128xbf16>
    %9 = vector.extract_strided_slice %2 {offsets = [128, 0], sizes = [128, 128], strides = [1, 1]} : vector<1152x128xbf16> to vector<128x128xbf16>
    %cst_5 = arith.constant dense<0.000000e+00> : vector<288x128xf32>
    %10 = tpu.matmul %8, %9, %cst_5 {dimension_numbers = #tpu.dot_dimension_numbers<[1], [0], [0], [1], [0, 0, 1, 1], [], []>} : vector<288x128xbf16>, vector<128x128xbf16>, vector<288x128xf32> -> vector<288x128xf32>
    %11 = arith.addf %7, %10 : vector<288x128xf32>
    %12 = vector.extract_strided_slice %1 {offsets = [2, 0], sizes = [288, 128], strides = [1, 1]} : vector<342x128xbf16> to vector<288x128xbf16>
    %13 = vector.extract_strided_slice %2 {offsets = [256, 0], sizes = [128, 128], strides = [1, 1]} : vector<1152x128xbf16> to vector<128x128xbf16>
    %cst_6 = arith.constant dense<0.000000e+00> : vector<288x128xf32>
    %14 = tpu.matmul %12, %13, %cst_6 {dimension_numbers = #tpu.dot_dimension_numbers<[1], [0], [0], [1], [0, 0, 1, 1], [], []>} : vector<288x128xbf16>, vector<128x128xbf16>, vector<288x128xf32> -> vector<288x128xf32>
    %15 = arith.addf %11, %14 : vector<288x128xf32>
    %16 = vector.extract_strided_slice %1 {offsets = [18, 0], sizes = [288, 128], strides = [1, 1]} : vector<342x128xbf16> to vector<288x128xbf16>
    %17 = vector.extract_strided_slice %2 {offsets = [384, 0], sizes = [128, 128], strides = [1, 1]} : vector<1152x128xbf16> to vector<128x128xbf16>
    %cst_7 = arith.constant dense<0.000000e+00> : vector<288x128xf32>
    %18 = tpu.matmul %16, %17, %cst_7 {dimension_numbers = #tpu.dot_dimension_numbers<[1], [0], [0], [1], [0, 0, 1, 1], [], []>} : vector<288x128xbf16>, vector<128x128xbf16>, vector<288x128xf32> -> vector<288x128xf32>
    %19 = arith.addf %15, %18 : vector<288x128xf32>
    %20 = vector.extract_strided_slice %1 {offsets = [19, 0], sizes = [288, 128], strides = [1, 1]} : vector<342x128xbf16> to vector<288x128xbf16>
    %21 = vector.extract_strided_slice %2 {offsets = [512, 0], sizes = [128, 128], strides = [1, 1]} : vector<1152x128xbf16> to vector<128x128xbf16>
    %cst_8 = arith.constant dense<0.000000e+00> : vector<288x128xf32>
    %22 = tpu.matmul %20, %21, %cst_8 {dimension_numbers = #tpu.dot_dimension_numbers<[1], [0], [0], [1], [0, 0, 1, 1], [], []>} : vector<288x128xbf16>, vector<128x128xbf16>, vector<288x128xf32> -> vector<288x128xf32>
    %23 = arith.addf %19, %22 : vector<288x128xf32>
    %24 = vector.extract_strided_slice %1 {offsets = [20, 0], sizes = [288, 128], strides = [1, 1]} : vector<342x128xbf16> to vector<288x128xbf16>
    %25 = vector.extract_strided_slice %2 {offsets = [640, 0], sizes = [128, 128], strides = [1, 1]} : vector<1152x128xbf16> to vector<128x128xbf16>
    %cst_9 = arith.constant dense<0.000000e+00> : vector<288x128xf32>
    %26 = tpu.matmul %24, %25, %cst_9 {dimension_numbers = #tpu.dot_dimension_numbers<[1], [0], [0], [1], [0, 0, 1, 1], [], []>} : vector<288x128xbf16>, vector<128x128xbf16>, vector<288x128xf32> -> vector<288x128xf32>
    %27 = arith.addf %23, %26 : vector<288x128xf32>
    %28 = vector.extract_strided_slice %1 {offsets = [36, 0], sizes = [288, 128], strides = [1, 1]} : vector<342x128xbf16> to vector<288x128xbf16>
    %29 = vector.extract_strided_slice %2 {offsets = [768, 0], sizes = [128, 128], strides = [1, 1]} : vector<1152x128xbf16> to vector<128x128xbf16>
    %cst_10 = arith.constant dense<0.000000e+00> : vector<288x128xf32>
    %30 = tpu.matmul %28, %29, %cst_10 {dimension_numbers = #tpu.dot_dimension_numbers<[1], [0], [0], [1], [0, 0, 1, 1], [], []>} : vector<288x128xbf16>, vector<128x128xbf16>, vector<288x128xf32> -> vector<288x128xf32>
    %31 = arith.addf %27, %30 : vector<288x128xf32>
    %32 = vector.extract_strided_slice %1 {offsets = [37, 0], sizes = [288, 128], strides = [1, 1]} : vector<342x128xbf16> to vector<288x128xbf16>
    %33 = vector.extract_strided_slice %2 {offsets = [896, 0], sizes = [128, 128], strides = [1, 1]} : vector<1152x128xbf16> to vector<128x128xbf16>
    %cst_11 = arith.constant dense<0.000000e+00> : vector<288x128xf32>
    %34 = tpu.matmul %32, %33, %cst_11 {dimension_numbers = #tpu.dot_dimension_numbers<[1], [0], [0], [1], [0, 0, 1, 1], [], []>} : vector<288x128xbf16>, vector<128x128xbf16>, vector<288x128xf32> -> vector<288x128xf32>
    %35 = arith.addf %31, %34 : vector<288x128xf32>
    %36 = vector.extract_strided_slice %1 {offsets = [38, 0], sizes = [288, 128], strides = [1, 1]} : vector<342x128xbf16> to vector<288x128xbf16>
    %37 = vector.extract_strided_slice %2 {offsets = [1024, 0], sizes = [128, 128], strides = [1, 1]} : vector<1152x128xbf16> to vector<128x128xbf16>
    %cst_12 = arith.constant dense<0.000000e+00> : vector<288x128xf32>
    %38 = tpu.matmul %36, %37, %cst_12 {dimension_numbers = #tpu.dot_dimension_numbers<[1], [0], [0], [1], [0, 0, 1, 1], [], []>} : vector<288x128xbf16>, vector<128x128xbf16>, vector<288x128xf32> -> vector<288x128xf32>
    %39 = arith.addf %35, %38 : vector<288x128xf32>
    %c0_13 = arith.constant 0 : index
    %c0_14 = arith.constant 0 : index
    %40 = vector.load %arg3[%c0_13, %c0_14] : memref<1x128xf32, #tpu.memory_space<vmem>>, vector<1x128xf32>
    %41 = vector.broadcast %40 : vector<1x128xf32> to vector<288x128xf32>
    %42 = arith.addf %39, %41 : vector<288x128xf32>
    %cst_15 = arith.constant 0.000000e+00 : f32
    %43 = vector.broadcast %cst_15 : f32 to vector<288x128xf32>
    %44 = arith.cmpf oge, %42, %43 : vector<288x128xf32>
    %cst_16 = arith.constant 2.000000e-01 : f32
    %45 = vector.broadcast %cst_16 : f32 to vector<288x128xf32>
    %46 = arith.mulf %45, %42 : vector<288x128xf32>
    %47 = arith.select %44, %42, %46 : vector<288x128xi1>, vector<288x128xf32>
    %c0_17 = arith.constant 0 : index
    %c0_18 = arith.constant 0 : index
    %c0_19 = arith.constant 0 : index
    %48 = vector.load %arg4[%c0_17, %c0_18, %c0_19] : memref<1x288x128xf32, #tpu.memory_space<vmem>>, vector<1x288x128xf32>
    %49 = vector.shape_cast %48 : vector<1x288x128xf32> to vector<288x128xf32>
    %50 = vector.shape_cast %47 : vector<288x128xf32> to vector<1x288x128xf32>
    tpu.vector_store %arg4[%c0_17, %c0_18, %c0_19], %50 {strides = array<i32>} : memref<1x288x128xf32, #tpu.memory_space<vmem>>, vector<1x288x128xf32>,
    return
  }
  func.func @transform_0(%arg0: i32) -> (i32, i32, i32) {
    %c0_i32 = arith.constant 0 : i32
    %c0_i32_0 = arith.constant 0 : i32
    %c0_i32_1 = arith.constant 0 : i32
    return %arg0, %c0_i32, %c0_i32_0 : i32, i32, i32
  }
  func.func @transform_1(%arg0: i32) -> (i32, i32) {
    %c0_i32 = arith.constant 0 : i32
    %c0_i32_0 = arith.constant 0 : i32
    %c0_i32_1 = arith.constant 0 : i32
    return %c0_i32, %c0_i32_0 : i32, i32
  }
  func.func @transform_2(%arg0: i32) -> (i32, i32) {
    %c0_i32 = arith.constant 0 : i32
    %c0_i32_0 = arith.constant 0 : i32
    %c0_i32_1 = arith.constant 0 : i32
    return %c0_i32, %c0_i32_0 : i32, i32
  }
  func.func @transform_3(%arg0: i32) -> (i32, i32, i32) {
    %c0_i32 = arith.constant 0 : i32
    %c0_i32_0 = arith.constant 0 : i32
    %c0_i32_1 = arith.constant 0 : i32
    return %arg0, %c0_i32, %c0_i32_0 : i32, i32, i32
  }
}

</mosaic_0001>

<llo_original>
// kernel: concat_block_forward.4
$region0: #{concat_block_forward.4}
  #allocation0 [shape = 'u32[]', space=smem, size = 0x4, offset = 0x4, fixed_abs, tag = 'smem constant byte address 0x4 - core index']
  #allocation1 [shape = 'u32[144,128]{1,0:T(1,128)}', space=vmem, size = 0x12000, scoped, tag = 'internal scratch']
  %s0 = inlined_call_operand.vmem [shape: f32[2,288,128], index: 0, kind: input, shape index: {}]
  %s1 = inlined_call_operand.vmem [shape: f32[1,128], index: 1, kind: input, shape index: {}]
  %s2 = inlined_call_operand.vmem [shape: f32[1,128], index: 2, kind: input, shape index: {}]
  %s3 = inlined_call_operand.vmem [shape: f32[2,288,128], index: 3, kind: output, shape index: {}]
  %s4 = sld [smem:[#allocation0]]
  $region45: #{concat_block_forward.4} parent=0
    _
  %s6 = ssub.s32 1, %s4
  %s7 = scalar_select 0, %s6, %s4
  loop: start=0, step=1, limit=4
  $region2: #{concat_block_forward.4} parent=0 // loop_pre_header
    _
  $region3: #{concat_block_forward.4} parent=0 // loop_header
    %s9 = sphi 0, %s13
    %p10 = scmp.ge.s32.totalorder %s9, 4
    %s19 = sphi 0, %s21
    %s22 = sphi 0, %s19
    %s23 = sphi 0, %s22
    %s39 = sphi 0, %s23
    %s43 = sphi 0, %s43
    %s45 = sphi 0, %s43
    %s46 = sphi 0, %s45
    %s60 = sphi 0, %s46
    %s64 = sphi 0, %s64
    %s66 = sphi 0, %s64
    %s67 = sphi 0, %s66
    %s81 = sphi 0, %s67
    %s87 = sphi 0, %s89
    %s90 = sphi 0, %s87
    %s91 = sphi 0, %s90
    %s107 = sphi 0, %s91
  $region4: #{concat_block_forward.4} parent=0 // loop_header_branch
    %12 = sbr.rel (%p10) target = $region8
  $region5: #{concat_block_forward.4} parent=0 // loop_body
    %s14 = ssub.s32 %s9, 1
    %s15 = ssub.s32 %s9, 2
    %s16 = sadd.s32 %s9, 1
    %s17 = ssub.s32 %s9, %s16
    %p18 = scmp.eq.s32.totalorder %s17, 0
    %s20 = sadd.s32 %s19, 1
    %s21 = scalar_select %p18, %s19, %s20
    %p24 = pneg %p18
    %p25 = scmp.eq.s32.totalorder %s9, 1
    %p26 = por %p24, %p25
    %p27 = scmp.ne.s32.totalorder %s19, %s22
    %p28 = scmp.eq.s32.totalorder %s9, 0
    %p29 = por %p27, %p28
    %p30 = scmp.ne.s32.totalorder %s19, %s22
    %p31 = scmp.eq.s32.totalorder %s14, 1
    %p32 = por %p30, %p31
    %p33 = scmp.ne.s32.totalorder %s22, %s23
    %p34 = scmp.eq.s32.totalorder %s14, 0
    %p35 = por %p33, %p34
    %p36 = scmp.ne.s32.totalorder %s22, %s23
    %p37 = scmp.eq.s32.totalorder %s15, 1
    %p38 = por %p36, %p37
    %p40 = scmp.ne.s32.totalorder %s23, %s39
    %p41 = scmp.eq.s32.totalorder %s15, 0
    %p42 = por %p40, %p41
    %s44 = sadd.s32 %s43, 1
    %p47 = scmp.eq.s32.totalorder %s9, 1
    %p48 = scmp.ne.s32.totalorder %s43, %s45
    %p49 = scmp.eq.s32.totalorder %s9, 0
    %p50 = por %p48, %p49
    %p51 = scmp.ne.s32.totalorder %s43, %s45
    %p52 = scmp.eq.s32.totalorder %s14, 1
    %p53 = por %p51, %p52
    %p54 = scmp.ne.s32.totalorder %s45, %s46
    %p55 = scmp.eq.s32.totalorder %s14, 0
    %p56 = por %p54, %p55
    %p57 = scmp.ne.s32.totalorder %s45, %s46
    %p58 = scmp.eq.s32.totalorder %s15, 1
    %p59 = por %p57, %p58
    %p61 = scmp.ne.s32.totalorder %s46, %s60
    %p62 = scmp.eq.s32.totalorder %s15, 0
    %p63 = por %p61, %p62
    %s65 = sadd.s32 %s64, 1
    %p68 = scmp.eq.s32.totalorder %s9, 1
    %p69 = scmp.ne.s32.totalorder %s64, %s66
    %p70 = scmp.eq.s32.totalorder %s9, 0
    %p71 = por %p69, %p70
    %p72 = scmp.ne.s32.totalorder %s64, %s66
    %p73 = scmp.eq.s32.totalorder %s14, 1
    %p74 = por %p72, %p73
    %p75 = scmp.ne.s32.totalorder %s66, %s67
    %p76 = scmp.eq.s32.totalorder %s14, 0
    %p77 = por %p75, %p76
    %p78 = scmp.ne.s32.totalorder %s66, %s67
    %p79 = scmp.eq.s32.totalorder %s15, 1
    %p80 = por %p78, %p79
    %p82 = scmp.ne.s32.totalorder %s67, %s81
    %p83 = scmp.eq.s32.totalorder %s15, 0
    %p84 = por %p82, %p83
    %s85 = ssub.s32 %s9, %s16
    %p86 = scmp.eq.s32.totalorder %s85, 0
    %s88 = sadd.s32 %s87, 1
    %s89 = scalar_select %p86, %s87, %s88
    %p92 = pneg %p86
    %p93 = scmp.eq.s32.totalorder %s9, 1
    %p94 = por %p92, %p93
    %p95 = scmp.ne.s32.totalorder %s87, %s90
    %p96 = scmp.eq.s32.totalorder %s9, 0
    %p97 = por %p95, %p96
    %p98 = scmp.ne.s32.totalorder %s87, %s90
    %p99 = scmp.eq.s32.totalorder %s14, 1
    %p100 = por %p98, %p99
    %p101 = scmp.ne.s32.totalorder %s90, %s91
    %p102 = scmp.eq.s32.totalorder %s14, 0
    %p103 = por %p101, %p102
    %p104 = scmp.ne.s32.totalorder %s90, %s91
    %p105 = scmp.eq.s32.totalorder %s15, 1
    %p106 = por %p104, %p105
    %p108 = scmp.ne.s32.totalorder %s91, %s107
    %p109 = scmp.eq.s32.totalorder %s15, 0
    %p110 = por %p108, %p109
    %p111 = scmp.le.s32.totalorder 1, %s9
    %p112 = scmp.lt.s32.totalorder %s9, 3
    %p113 = pnand %p111, %p112
    %p114 = pneg %p113
    // Predicated region
    $region9: #{concat_block_forward.4} parent=5 // pred_check
      _
    $region10: #{concat_block_forward.4} parent=5 // pred_check_branch
      %116 = sbr.rel (%p113) target = $region12
    $region11: #{concat_block_forward.4} parent=5 // pred_region
      %s117 = ssub.s32 %s9, 1
      // Predicated region
      $region13: #{concat_block_forward.4} parent=11 // pred_check
        %p118 = pneg %p56
      $region14: #{concat_block_forward.4} parent=11 // pred_check_branch
        %120 = sbr.rel (%p118) target = $region16
      $region15: #{concat_block_forward.4} parent=11 // pred_region
        _
      $region16: #{concat_block_forward.4} parent=11 // pred_fallthru
        _
      // Predicated region
      $region17: #{concat_block_forward.4} parent=11 // pred_check
        %p121 = pneg %p77
      $region18: #{concat_block_forward.4} parent=11 // pred_check_branch
        %123 = sbr.rel (%p121) target = $region20
      $region19: #{concat_block_forward.4} parent=11 // pred_region
        _
      $region20: #{concat_block_forward.4} parent=11 // pred_fallthru
        _
    $region12: #{concat_block_forward.4} parent=5 // pred_fallthru
      _
    %p124 = scmp.lt.s32.totalorder %s9, 2
    // Predicated region
    $region21: #{concat_block_forward.4} parent=5 // pred_check
      %p125 = pneg %p124
    $region22: #{concat_block_forward.4} parent=5 // pred_check_branch
      %127 = sbr.rel (%p125) target = $region24
    $region23: #{concat_block_forward.4} parent=5 // pred_region
      // Predicated region
      $region25: #{concat_block_forward.4} parent=23 // pred_check
        %p128 = pneg %p29
      $region26: #{concat_block_forward.4} parent=23 // pred_check_branch
        %130 = sbr.rel (%p128) target = $region28
      $region27: #{concat_block_forward.4} parent=23 // pred_region
        %p131 = scmp.lt.s32.totalorder %s9, 1
        %s132 = scalar_select %p131, %s9, 1
        %s133 = smul.addr %s132, 36
        %s134 = smul.addr %s133, 8
        %s135 = scalar_lea.vmem %s0, %s134
      $region28: #{concat_block_forward.4} parent=23 // pred_fallthru
        _
    $region24: #{concat_block_forward.4} parent=5 // pred_fallthru
      _
    %p136 = scmp.le.s32.totalorder 1, %s9
    %p137 = scmp.lt.s32.totalorder %s9, 3
    %p138 = pnand %p136, %p137
    %p139 = pneg %p138
    // Predicated region
    $region29: #{concat_block_forward.4} parent=5 // pred_check
      _
    $region30: #{concat_block_forward.4} parent=5 // pred_check_branch
      %141 = sbr.rel (%p138) target = $region32
    $region31: #{concat_block_forward.4} parent=5 // pred_region
      %s142 = ssub.s32 %s9, 1
      %p143 = scmp.lt.s32.totalorder %s14, 1
      %s144 = scalar_select %p143, %s14, 1
      %s145 = smul.addr %s144, 36
      %s146 = smul.addr %s145, 8
      %s147 = scalar_lea.vmem %s0, %s146
      %p148 = pneg %p35
      %p149 = pneg %p32
      %p150 = pneg %p56
      %p151 = pneg %p53
      %p152 = pneg %p77
      %p153 = pneg %p74
      %p154 = pneg %p103
      %p155 = pneg %p100
      %p156 = scmp.lt.s32.totalorder %s14, 1
      %s157 = scalar_select %p156, %s14, 1
      %s158 = smul.addr %s157, 36
      %s159 = smul.addr %s158, 8
      %s160 = scalar_lea.vmem %s3, %s159
      %p161 = scmp.lt.s32.totalorder %s14, 1
      %s162 = scalar_select %p161, %s14, 1
      %s163 = smul.addr %s162, 36
      %s164 = smul.addr %s163, 8
      %s165 = scalar_lea.vmem %s0, %s164
      %p166 = scmp.lt.s32.totalorder %s14, 1
      %s167 = scalar_select %p166, %s14, 1
      %s168 = smul.addr %s167, 36
      %s169 = smul.addr %s168, 8
      %s170 = scalar_lea.vmem %s3, %s169
      %v171 = vld [vmem:[%s165] sm:$0xff]
      %v172 = vld [vmem:[%s165 + $0x8] sm:$0xff]
      %v173 = vld [vmem:[%s165 + $0x10] sm:$0xff]
      %v174 = vld [vmem:[%s165 + $0x18] sm:$0xff]
      %v175 = vld [vmem:[%s165 + $0x20] sm:$0xff]
      %v176 = vld [vmem:[%s165 + $0x28] sm:$0xff]
      %v177 = vld [vmem:[%s165 + $0x30] sm:$0xff]
      %v178 = vld [vmem:[%s165 + $0x38] sm:$0xff]
      %v179 = vld [vmem:[%s165 + $0x40] sm:$0xff]
      %v180 = vld [vmem:[%s165 + $0x48] sm:$0xff]
      %v181 = vld [vmem:[%s165 + $0x50] sm:$0xff]
      %v182 = vld [vmem:[%s165 + $0x58] sm:$0xff]
      %v183 = vld [vmem:[%s165 + $0x60] sm:$0xff]
      %v184 = vld [vmem:[%s165 + $0x68] sm:$0xff]
      %v185 = vld [vmem:[%s165 + $0x70] sm:$0xff]
      %v186 = vld [vmem:[%s165 + $0x78] sm:$0xff]
      %v187 = vld [vmem:[%s165 + $0x80] sm:$0xff]
      %v188 = vld [vmem:[%s165 + $0x88] sm:$0xff]
      %v189 = vld [vmem:[%s165 + $0x90] sm:$0xff]
      %v190 = vld [vmem:[%s165 + $0x98] sm:$0xff]
      %v191 = vld [vmem:[%s165 + $0xa0] sm:$0xff]
      %v192 = vld [vmem:[%s165 + $0xa8] sm:$0xff]
      %v193 = vld [vmem:[%s165 + $0xb0] sm:$0xff]
      %v194 = vld [vmem:[%s165 + $0xb8] sm:$0xff]
      %v195 = vld [vmem:[%s165 + $0xc0] sm:$0xff]
      %v196 = vld [vmem:[%s165 + $0xc8] sm:$0xff]
      %v197 = vld [vmem:[%s165 + $0xd0] sm:$0xff]
      %v198 = vld [vmem:[%s165 + $0xd8] sm:$0xff]
      %v199 = vld [vmem:[%s165 + $0xe0] sm:$0xff]
      %v200 = vld [vmem:[%s165 + $0xe8] sm:$0xff]
      %v201 = vld [vmem:[%s165 + $0xf0] sm:$0xff]
      %v202 = vld [vmem:[%s165 + $0xf8] sm:$0xff]
      %v203 = vld [vmem:[%s165 + $0x100] sm:$0xff]
      %v204 = vld [vmem:[%s165 + $0x108] sm:$0xff]
      %v205 = vld [vmem:[%s165 + $0x110] sm:$0xff]
      %v206 = vld [vmem:[%s165 + $0x118] sm:$0xff]
      %v207 = vld [vmem:[%s1] sm:$0x1]
      %v209 = vlaneseq
      %v210 = vshrl.u32 %v209, 7
      %v211 = vsub.s32 0, %v210
      %v212 = vrot.slane %v207, %v211
      %v214 = vmul.f32 %v171, %v212
      %v215 = vmul.f32 %v172, %v212
      %v216 = vmul.f32 %v173, %v212
      %v217 = vmul.f32 %v174, %v212
      %v218 = vmul.f32 %v175, %v212
      %v219 = vmul.f32 %v176, %v212
      %v220 = vmul.f32 %v177, %v212
      %v221 = vmul.f32 %v178, %v212
      %v222 = vmul.f32 %v179, %v212
      %v223 = vmul.f32 %v180, %v212
      %v224 = vmul.f32 %v181, %v212
      %v225 = vmul.f32 %v182, %v212
      %v226 = vmul.f32 %v183, %v212
      %v227 = vmul.f32 %v184, %v212
      %v228 = vmul.f32 %v185, %v212
      %v229 = vmul.f32 %v186, %v212
      %v230 = vmul.f32 %v187, %v212
      %v231 = vmul.f32 %v188, %v212
      %v232 = vmul.f32 %v189, %v212
      %v233 = vmul.f32 %v190, %v212
      %v234 = vmul.f32 %v191, %v212
      %v235 = vmul.f32 %v192, %v212
      %v236 = vmul.f32 %v193, %v212
      %v237 = vmul.f32 %v194, %v212
      %v238 = vmul.f32 %v195, %v212
      %v239 = vmul.f32 %v196, %v212
      %v240 = vmul.f32 %v197, %v212
      %v241 = vmul.f32 %v198, %v212
      %v242 = vmul.f32 %v199, %v212
      %v243 = vmul.f32 %v200, %v212
      %v244 = vmul.f32 %v201, %v212
      %v245 = vmul.f32 %v202, %v212
      %v246 = vmul.f32 %v203, %v212
      %v247 = vmul.f32 %v204, %v212
      %v248 = vmul.f32 %v205, %v212
      %v249 = vmul.f32 %v206, %v212
      %v250 = vld [vmem:[%s2] sm:$0x1]
      %v252 = vlaneseq
      %v253 = vshrl.u32 %v252, 7
      %v254 = vsub.s32 0, %v253
      %v255 = vrot.slane %v250, %v254
      %v257 = vadd.f32 %v214, %v255
      %v258 = vadd.f32 %v215, %v255
      %v259 = vadd.f32 %v216, %v255
      %v260 = vadd.f32 %v217, %v255
      %v261 = vadd.f32 %v218, %v255
      %v262 = vadd.f32 %v219, %v255
      %v263 = vadd.f32 %v220, %v255
      %v264 = vadd.f32 %v221, %v255
      %v265 = vadd.f32 %v222, %v255
      %v266 = vadd.f32 %v223, %v255
      %v267 = vadd.f32 %v224, %v255
      %v268 = vadd.f32 %v225, %v255
      %v269 = vadd.f32 %v226, %v255
      %v270 = vadd.f32 %v227, %v255
      %v271 = vadd.f32 %v228, %v255
      %v272 = vadd.f32 %v229, %v255
      %v273 = vadd.f32 %v230, %v255
      %v274 = vadd.f32 %v231, %v255
      %v275 = vadd.f32 %v232, %v255
      %v276 = vadd.f32 %v233, %v255
      %v277 = vadd.f32 %v234, %v255
      %v278 = vadd.f32 %v235, %v255
      %v279 = vadd.f32 %v236, %v255
      %v280 = vadd.f32 %v237, %v255
      %v281 = vadd.f32 %v238, %v255
      %v282 = vadd.f32 %v239, %v255
      %v283 = vadd.f32 %v240, %v255
      %v284 = vadd.f32 %v241, %v255
      %v285 = vadd.f32 %v242, %v255
      %v286 = vadd.f32 %v243, %v255
      %v287 = vadd.f32 %v244, %v255
      %v288 = vadd.f32 %v245, %v255
      %v289 = vadd.f32 %v246, %v255
      %v290 = vadd.f32 %v247, %v255
      %v291 = vadd.f32 %v248, %v255
      %v292 = vadd.f32 %v249, %v255
      %vm293 = vcmp.ge.f32.partialorder %v257, 0.0
      %vm294 = vcmp.ge.f32.partialorder %v258, 0.0
      %vm295 = vcmp.ge.f32.partialorder %v259, 0.0
      %vm296 = vcmp.ge.f32.partialorder %v260, 0.0
      %vm297 = vcmp.ge.f32.partialorder %v261, 0.0
      %vm298 = vcmp.ge.f32.partialorder %v262, 0.0
      %vm299 = vcmp.ge.f32.partialorder %v263, 0.0
      %vm300 = vcmp.ge.f32.partialorder %v264, 0.0
      %vm301 = vcmp.ge.f32.partialorder %v265, 0.0
      %vm302 = vcmp.ge.f32.partialorder %v266, 0.0
      %vm303 = vcmp.ge.f32.partialorder %v267, 0.0
      %vm304 = vcmp.ge.f32.partialorder %v268, 0.0
      %vm305 = vcmp.ge.f32.partialorder %v269, 0.0
      %vm306 = vcmp.ge.f32.partialorder %v270, 0.0
      %vm307 = vcmp.ge.f32.partialorder %v271, 0.0
      %vm308 = vcmp.ge.f32.partialorder %v272, 0.0
      %vm309 = vcmp.ge.f32.partialorder %v273, 0.0
      %vm310 = vcmp.ge.f32.partialorder %v274, 0.0
      %vm311 = vcmp.ge.f32.partialorder %v275, 0.0
      %vm312 = vcmp.ge.f32.partialorder %v276, 0.0
      %vm313 = vcmp.ge.f32.partialorder %v277, 0.0
      %vm314 = vcmp.ge.f32.partialorder %v278, 0.0
      %vm315 = vcmp.ge.f32.partialorder %v279, 0.0
      %vm316 = vcmp.ge.f32.partialorder %v280, 0.0
      %vm317 = vcmp.ge.f32.partialorder %v281, 0.0
      %vm318 = vcmp.ge.f32.partialorder %v282, 0.0
      %vm319 = vcmp.ge.f32.partialorder %v283, 0.0
      %vm320 = vcmp.ge.f32.partialorder %v284, 0.0
      %vm321 = vcmp.ge.f32.partialorder %v285, 0.0
      %vm322 = vcmp.ge.f32.partialorder %v286, 0.0
      %vm323 = vcmp.ge.f32.partialorder %v287, 0.0
      %vm324 = vcmp.ge.f32.partialorder %v288, 0.0
      %vm325 = vcmp.ge.f32.partialorder %v289, 0.0
      %vm326 = vcmp.ge.f32.partialorder %v290, 0.0
      %vm327 = vcmp.ge.f32.partialorder %v291, 0.0
      %vm328 = vcmp.ge.f32.partialorder %v292, 0.0
      %v329 = vmul.f32 %v257, 0.2
      %v330 = vmul.f32 %v258, 0.2
      %v331 = vmul.f32 %v259, 0.2
      %v332 = vmul.f32 %v260, 0.2
      %v333 = vmul.f32 %v261, 0.2
      %v334 = vmul.f32 %v262, 0.2
      %v335 = vmul.f32 %v263, 0.2
      %v336 = vmul.f32 %v264, 0.2
      %v337 = vmul.f32 %v265, 0.2
      %v338 = vmul.f32 %v266, 0.2
      %v339 = vmul.f32 %v267, 0.2
      %v340 = vmul.f32 %v268, 0.2
      %v341 = vmul.f32 %v269, 0.2
      %v342 = vmul.f32 %v270, 0.2
      %v343 = vmul.f32 %v271, 0.2
      %v344 = vmul.f32 %v272, 0.2
      %v345 = vmul.f32 %v273, 0.2
      %v346 = vmul.f32 %v274, 0.2
      %v347 = vmul.f32 %v275, 0.2
      %v348 = vmul.f32 %v276, 0.2
      %v349 = vmul.f32 %v277, 0.2
      %v350 = vmul.f32 %v278, 0.2
      %v351 = vmul.f32 %v279, 0.2
      %v352 = vmul.f32 %v280, 0.2
      %v353 = vmul.f32 %v281, 0.2
      %v354 = vmul.f32 %v282, 0.2
      %v355 = vmul.f32 %v283, 0.2
      %v356 = vmul.f32 %v284, 0.2
      %v357 = vmul.f32 %v285, 0.2
      %v358 = vmul.f32 %v286, 0.2
      %v359 = vmul.f32 %v287, 0.2
      %v360 = vmul.f32 %v288, 0.2
      %v361 = vmul.f32 %v289, 0.2
      %v362 = vmul.f32 %v290, 0.2
      %v363 = vmul.f32 %v291, 0.2
      %v364 = vmul.f32 %v292, 0.2
      %v365 = vsel %vm293, %v257, %v329
      %v366 = vsel %vm294, %v258, %v330
      %v367 = vsel %vm295, %v259, %v331
      %v368 = vsel %vm296, %v260, %v332
      %v369 = vsel %vm297, %v261, %v333
      %v370 = vsel %vm298, %v262, %v334
      %v371 = vsel %vm299, %v263, %v335
      %v372 = vsel %vm300, %v264, %v336
      %v373 = vsel %vm301, %v265, %v337
      %v374 = vsel %vm302, %v266, %v338
      %v375 = vsel %vm303, %v267, %v339
      %v376 = vsel %vm304, %v268, %v340
      %v377 = vsel %vm305, %v269, %v341
      %v378 = vsel %vm306, %v270, %v342
      %v379 = vsel %vm307, %v271, %v343
      %v380 = vsel %vm308, %v272, %v344
      %v381 = vsel %vm309, %v273, %v345
      %v382 = vsel %vm310, %v274, %v346
      %v383 = vsel %vm311, %v275, %v347
      %v384 = vsel %vm312, %v276, %v348
      %v385 = vsel %vm313, %v277, %v349
      %v386 = vsel %vm314, %v278, %v350
      %v387 = vsel %vm315, %v279, %v351
      %v388 = vsel %vm316, %v280, %v352
      %v389 = vsel %vm317, %v281, %v353
      %v390 = vsel %vm318, %v282, %v354
      %v391 = vsel %vm319, %v283, %v355
      %v392 = vsel %vm320, %v284, %v356
      %v393 = vsel %vm321, %v285, %v357
      %v394 = vsel %vm322, %v286, %v358
      %v395 = vsel %vm323, %v287, %v359
      %v396 = vsel %vm324, %v288, %v360
      %v397 = vsel %vm325, %v289, %v361
      %v398 = vsel %vm326, %v290, %v362
      %v399 = vsel %vm327, %v291, %v363
      %v400 = vsel %vm328, %v292, %v364
      %401 = vst [vmem:[%s170] sm:$0xff] %v365
      %402 = vst [vmem:[%s170 + $0x8] sm:$0xff] %v366
      %403 = vst [vmem:[%s170 + $0x10] sm:$0xff] %v367
      %404 = vst [vmem:[%s170 + $0x18] sm:$0xff] %v368
      %405 = vst [vmem:[%s170 + $0x20] sm:$0xff] %v369
      %406 = vst [vmem:[%s170 + $0x28] sm:$0xff] %v370
      %407 = vst [vmem:[%s170 + $0x30] sm:$0xff] %v371
      %408 = vst [vmem:[%s170 + $0x38] sm:$0xff] %v372
      %409 = vst [vmem:[%s170 + $0x40] sm:$0xff] %v373
      %410 = vst [vmem:[%s170 + $0x48] sm:$0xff] %v374
      %411 = vst [vmem:[%s170 + $0x50] sm:$0xff] %v375
      %412 = vst [vmem:[%s170 + $0x58] sm:$0xff] %v376
      %413 = vst [vmem:[%s170 + $0x60] sm:$0xff] %v377
      %414 = vst [vmem:[%s170 + $0x68] sm:$0xff] %v378
      %415 = vst [vmem:[%s170 + $0x70] sm:$0xff] %v379
      %416 = vst [vmem:[%s170 + $0x78] sm:$0xff] %v380
      %417 = vst [vmem:[%s170 + $0x80] sm:$0xff] %v381
      %418 = vst [vmem:[%s170 + $0x88] sm:$0xff] %v382
      %419 = vst [vmem:[%s170 + $0x90] sm:$0xff] %v383
      %420 = vst [vmem:[%s170 + $0x98] sm:$0xff] %v384
      %421 = vst [vmem:[%s170 + $0xa0] sm:$0xff] %v385
      %422 = vst [vmem:[%s170 + $0xa8] sm:$0xff] %v386
      %423 = vst [vmem:[%s170 + $0xb0] sm:$0xff] %v387
      %424 = vst [vmem:[%s170 + $0xb8] sm:$0xff] %v388
      %425 = vst [vmem:[%s170 + $0xc0] sm:$0xff] %v389
      %426 = vst [vmem:[%s170 + $0xc8] sm:$0xff] %v390
      %427 = vst [vmem:[%s170 + $0xd0] sm:$0xff] %v391
      %428 = vst [vmem:[%s170 + $0xd8] sm:$0xff] %v392
      %429 = vst [vmem:[%s170 + $0xe0] sm:$0xff] %v393
      %430 = vst [vmem:[%s170 + $0xe8] sm:$0xff] %v394
      %431 = vst [vmem:[%s170 + $0xf0] sm:$0xff] %v395
      %432 = vst [vmem:[%s170 + $0xf8] sm:$0xff] %v396
      %433 = vst [vmem:[%s170 + $0x100] sm:$0xff] %v397
      %434 = vst [vmem:[%s170 + $0x108] sm:$0xff] %v398
      %435 = vst [vmem:[%s170 + $0x110] sm:$0xff] %v399
      %436 = vst [vmem:[%s170 + $0x118] sm:$0xff] %v400
      %p437 = scmp.lt.s32.totalorder %s14, 1
      %s438 = scalar_select %p437, %s14, 1
      %s439 = smul.addr %s438, 36
      %s440 = smul.addr %s439, 8
      %s441 = scalar_lea.vmem %s3, %s440
      // Predicated region
      $region33: #{concat_block_forward.4} parent=31 // pred_check
        %p442 = pneg %p100
      $region34: #{concat_block_forward.4} parent=31 // pred_check_branch
        %444 = sbr.rel (%p442) target = $region36
      $region35: #{concat_block_forward.4} parent=31 // pred_region
        _
      $region36: #{concat_block_forward.4} parent=31 // pred_fallthru
        _
    $region32: #{concat_block_forward.4} parent=5 // pred_fallthru
      _
    %p445 = scmp.le.s32.totalorder 2, %s9
    // Predicated region
    $region37: #{concat_block_forward.4} parent=5 // pred_check
      %p446 = pneg %p445
    $region38: #{concat_block_forward.4} parent=5 // pred_check_branch
      %448 = sbr.rel (%p446) target = $region40
    $region39: #{concat_block_forward.4} parent=5 // pred_region
      %s449 = ssub.s32 %s9, 2
      // Predicated region
      $region41: #{concat_block_forward.4} parent=39 // pred_check
        %p450 = pneg %p106
      $region42: #{concat_block_forward.4} parent=39 // pred_check_branch
        %452 = sbr.rel (%p450) target = $region44
      $region43: #{concat_block_forward.4} parent=39 // pred_region
        %p453 = scmp.lt.s32.totalorder %s15, 1
        %s454 = scalar_select %p453, %s15, 1
        %s455 = smul.addr %s454, 36
        %s456 = smul.addr %s455, 8
        %s457 = scalar_lea.vmem %s3, %s456
      $region44: #{concat_block_forward.4} parent=39 // pred_fallthru
        _
    $region40: #{concat_block_forward.4} parent=5 // pred_fallthru
      _
  $region6: #{concat_block_forward.4} parent=0 // loop_footer
    %s13 = sadd.s32 1, %s9
  $region7: #{concat_block_forward.4} parent=0 // loop_footer_branch
    %8 = sbr.rel target = $region3
  $region8: #{concat_block_forward.4} parent=0 // loop_exit
    _

// kernel: concat_block_forward.3
$region0: #{concat_block_forward.3}
  #allocation0 [shape = 'u32[]', space=smem, size = 0x4, offset = 0x4, fixed_abs, tag = 'smem constant byte address 0x4 - core index']
  #allocation1 [shape = 'u32[144,128]{1,0:T(1,128)}', space=vmem, size = 0x12000, scoped, tag = 'internal scratch']
  %s0 = inlined_call_operand.vmem [shape: bf16[2,342,4], index: 0, kind: input, shape index: {}]
  %s1 = inlined_call_operand.vmem [shape: bf16[36,128], index: 1, kind: input, shape index: {}]
  %s2 = inlined_call_operand.vmem [shape: f32[1,128], index: 2, kind: input, shape index: {}]
  %s3 = inlined_call_operand.vmem [shape: f32[288,1], index: 3, kind: input, shape index: {}]
  %s4 = inlined_call_operand.vmem [shape: f32[2,288,128], index: 4, kind: output, shape index: {0}]
  %s5 = inlined_call_operand.vmem [shape: f32[2,1,128], index: 5, kind: output, shape index: {1}]
  %s6 = inlined_call_operand.vmem [shape: f32[2,1,128], index: 6, kind: output, shape index: {2}]
  %7 = xla_tuple %s4, %s5, %s6
  %s8 = sld [smem:[#allocation0]]
  $region65: #{concat_block_forward.3} parent=0
    _
  %s10 = ssub.s32 1, %s8
  %s11 = scalar_select 0, %s10, %s8
  loop: start=0, step=1, limit=4
  $region2: #{concat_block_forward.3} parent=0 // loop_pre_header
    _
  $region3: #{concat_block_forward.3} parent=0 // loop_header
    %s13 = sphi 0, %s17
    %p14 = scmp.ge.s32.totalorder %s13, 4
    %s23 = sphi 0, %s25
    %s26 = sphi 0, %s23
    %s27 = sphi 0, %s26
    %s43 = sphi 0, %s27
    %s47 = sphi 0, %s47
    %s49 = sphi 0, %s47
    %s50 = sphi 0, %s49
    %s64 = sphi 0, %s50
    %s68 = sphi 0, %s68
    %s70 = sphi 0, %s68
    %s71 = sphi 0, %s70
    %s85 = sphi 0, %s71
    %s89 = sphi 0, %s89
    %s91 = sphi 0, %s89
    %s92 = sphi 0, %s91
    %s106 = sphi 0, %s92
    %s112 = sphi 0, %s114
    %s115 = sphi 0, %s112
    %s116 = sphi 0, %s115
    %s132 = sphi 0, %s116
    %s138 = sphi 0, %s140
    %s141 = sphi 0, %s138
    %s142 = sphi 0, %s141
    %s158 = sphi 0, %s142
    %s164 = sphi 0, %s166
    %s167 = sphi 0, %s164
    %s168 = sphi 0, %s167
    %s184 = sphi 0, %s168
  $region4: #{concat_block_forward.3} parent=0 // loop_header_branch
    %16 = sbr.rel (%p14) target = $region8
  $region5: #{concat_block_forward.3} parent=0 // loop_body
    %s18 = ssub.s32 %s13, 1
    %s19 = ssub.s32 %s13, 2
    %s20 = sadd.s32 %s13, 1
    %s21 = ssub.s32 %s13, %s20
    %p22 = scmp.eq.s32.totalorder %s21, 0
    %s24 = sadd.s32 %s23, 1
    %s25 = scalar_select %p22, %s23, %s24
    %p28 = pneg %p22
    %p29 = scmp.eq.s32.totalorder %s13, 1
    %p30 = por %p28, %p29
    %p31 = scmp.ne.s32.totalorder %s23, %s26
    %p32 = scmp.eq.s32.totalorder %s13, 0
    %p33 = por %p31, %p32
    %p34 = scmp.ne.s32.totalorder %s23, %s26
    %p35 = scmp.eq.s32.totalorder %s18, 1
    %p36 = por %p34, %p35
    %p37 = scmp.ne.s32.totalorder %s26, %s27
    %p38 = scmp.eq.s32.totalorder %s18, 0
    %p39 = por %p37, %p38
    %p40 = scmp.ne.s32.totalorder %s26, %s27
    %p41 = scmp.eq.s32.totalorder %s19, 1
    %p42 = por %p40, %p41
    %p44 = scmp.ne.s32.totalorder %s27, %s43
    %p45 = scmp.eq.s32.totalorder %s19, 0
    %p46 = por %p44, %p45
    %s48 = sadd.s32 %s47, 1
    %p51 = scmp.eq.s32.totalorder %s13, 1
    %p52 = scmp.ne.s32.totalorder %s47, %s49
    %p53 = scmp.eq.s32.totalorder %s13, 0
    %p54 = por %p52, %p53
    %p55 = scmp.ne.s32.totalorder %s47, %s49
    %p56 = scmp.eq.s32.totalorder %s18, 1
    %p57 = por %p55, %p56
    %p58 = scmp.ne.s32.totalorder %s49, %s50
    %p59 = scmp.eq.s32.totalorder %s18, 0
    %p60 = por %p58, %p59
    %p61 = scmp.ne.s32.totalorder %s49, %s50
    %p62 = scmp.eq.s32.totalorder %s19, 1
    %p63 = por %p61, %p62
    %p65 = scmp.ne.s32.totalorder %s50, %s64
    %p66 = scmp.eq.s32.totalorder %s19, 0
    %p67 = por %p65, %p66
    %s69 = sadd.s32 %s68, 1
    %p72 = scmp.eq.s32.totalorder %s13, 1
    %p73 = scmp.ne.s32.totalorder %s68, %s70
    %p74 = scmp.eq.s32.totalorder %s13, 0
    %p75 = por %p73, %p74
    %p76 = scmp.ne.s32.totalorder %s68, %s70
    %p77 = scmp.eq.s32.totalorder %s18, 1
    %p78 = por %p76, %p77
    %p79 = scmp.ne.s32.totalorder %s70, %s71
    %p80 = scmp.eq.s32.totalorder %s18, 0
    %p81 = por %p79, %p80
    %p82 = scmp.ne.s32.totalorder %s70, %s71
    %p83 = scmp.eq.s32.totalorder %s19, 1
    %p84 = por %p82, %p83
    %p86 = scmp.ne.s32.totalorder %s71, %s85
    %p87 = scmp.eq.s32.totalorder %s19, 0
    %p88 = por %p86, %p87
    %s90 = sadd.s32 %s89, 1
    %p93 = scmp.eq.s32.totalorder %s13, 1
    %p94 = scmp.ne.s32.totalorder %s89, %s91
    %p95 = scmp.eq.s32.totalorder %s13, 0
    %p96 = por %p94, %p95
    %p97 = scmp.ne.s32.totalorder %s89, %s91
    %p98 = scmp.eq.s32.totalorder %s18, 1
    %p99 = por %p97, %p98
    %p100 = scmp.ne.s32.totalorder %s91, %s92
    %p101 = scmp.eq.s32.totalorder %s18, 0
    %p102 = por %p100, %p101
    %p103 = scmp.ne.s32.totalorder %s91, %s92
    %p104 = scmp.eq.s32.totalorder %s19, 1
    %p105 = por %p103, %p104
    %p107 = scmp.ne.s32.totalorder %s92, %s106
    %p108 = scmp.eq.s32.totalorder %s19, 0
    %p109 = por %p107, %p108
    %s110 = ssub.s32 %s13, %s20
    %p111 = scmp.eq.s32.totalorder %s110, 0
    %s113 = sadd.s32 %s112, 1
    %s114 = scalar_select %p111, %s112, %s113
    %p117 = pneg %p111
    %p118 = scmp.eq.s32.totalorder %s13, 1
    %p119 = por %p117, %p118
    %p120 = scmp.ne.s32.totalorder %s112, %s115
    %p121 = scmp.eq.s32.totalorder %s13, 0
    %p122 = por %p120, %p121
    %p123 = scmp.ne.s32.totalorder %s112, %s115
    %p124 = scmp.eq.s32.totalorder %s18, 1
    %p125 = por %p123, %p124
    %p126 = scmp.ne.s32.totalorder %s115, %s116
    %p127 = scmp.eq.s32.totalorder %s18, 0
    %p128 = por %p126, %p127
    %p129 = scmp.ne.s32.totalorder %s115, %s116
    %p130 = scmp.eq.s32.totalorder %s19, 1
    %p131 = por %p129, %p130
    %p133 = scmp.ne.s32.totalorder %s116, %s132
    %p134 = scmp.eq.s32.totalorder %s19, 0
    %p135 = por %p133, %p134
    %s136 = ssub.s32 %s13, %s20
    %p137 = scmp.eq.s32.totalorder %s136, 0
    %s139 = sadd.s32 %s138, 1
    %s140 = scalar_select %p137, %s138, %s139
    %p143 = pneg %p137
    %p144 = scmp.eq.s32.totalorder %s13, 1
    %p145 = por %p143, %p144
    %p146 = scmp.ne.s32.totalorder %s138, %s141
    %p147 = scmp.eq.s32.totalorder %s13, 0
    %p148 = por %p146, %p147
    %p149 = scmp.ne.s32.totalorder %s138, %s141
    %p150 = scmp.eq.s32.totalorder %s18, 1
    %p151 = por %p149, %p150
    %p152 = scmp.ne.s32.totalorder %s141, %s142
    %p153 = scmp.eq.s32.totalorder %s18, 0
    %p154 = por %p152, %p153
    %p155 = scmp.ne.s32.totalorder %s141, %s142
    %p156 = scmp.eq.s32.totalorder %s19, 1
    %p157 = por %p155, %p156
    %p159 = scmp.ne.s32.totalorder %s142, %s158
    %p160 = scmp.eq.s32.totalorder %s19, 0
    %p161 = por %p159, %p160
    %s162 = ssub.s32 %s13, %s20
    %p163 = scmp.eq.s32.totalorder %s162, 0
    %s165 = sadd.s32 %s164, 1
    %s166 = scalar_select %p163, %s164, %s165
    %p169 = pneg %p163
    %p170 = scmp.eq.s32.totalorder %s13, 1
    %p171 = por %p169, %p170
    %p172 = scmp.ne.s32.totalorder %s164, %s167
    %p173 = scmp.eq.s32.totalorder %s13, 0
    %p174 = por %p172, %p173
    %p175 = scmp.ne.s32.totalorder %s164, %s167
    %p176 = scmp.eq.s32.totalorder %s18, 1
    %p177 = por %p175, %p176
    %p178 = scmp.ne.s32.totalorder %s167, %s168
    %p179 = scmp.eq.s32.totalorder %s18, 0
    %p180 = por %p178, %p179
    %p181 = scmp.ne.s32.totalorder %s167, %s168
    %p182 = scmp.eq.s32.totalorder %s19, 1
    %p183 = por %p181, %p182
    %p185 = scmp.ne.s32.totalorder %s168, %s184
    %p186 = scmp.eq.s32.totalorder %s19, 0
    %p187 = por %p185, %p186
    %p188 = scmp.le.s32.totalorder 1, %s13
    %p189 = scmp.lt.s32.totalorder %s13, 3
    %p190 = pnand %p188, %p189
    %p191 = pneg %p190
    // Predicated region
    $region9: #{concat_block_forward.3} parent=5 // pred_check
      _
    $region10: #{concat_block_forward.3} parent=5 // pred_check_branch
      %193 = sbr.rel (%p190) target = $region12
    $region11: #{concat_block_forward.3} parent=5 // pred_region
      %s194 = ssub.s32 %s13, 1
      // Predicated region
      $region13: #{concat_block_forward.3} parent=11 // pred_check
        %p195 = pneg %p60
      $region14: #{concat_block_forward.3} parent=11 // pred_check_branch
        %197 = sbr.rel (%p195) target = $region16
      $region15: #{concat_block_forward.3} parent=11 // pred_region
        _
      $region16: #{concat_block_forward.3} parent=11 // pred_fallthru
        _
      // Predicated region
      $region17: #{concat_block_forward.3} parent=11 // pred_check
        %p198 = pneg %p81
      $region18: #{concat_block_forward.3} parent=11 // pred_check_branch
        %200 = sbr.rel (%p198) target = $region20
      $region19: #{concat_block_forward.3} parent=11 // pred_region
        _
      $region20: #{concat_block_forward.3} parent=11 // pred_fallthru
        _
      // Predicated region
      $region21: #{concat_block_forward.3} parent=11 // pred_check
        %p201 = pneg %p102
      $region22: #{concat_block_forward.3} parent=11 // pred_check_branch
        %203 = sbr.rel (%p201) target = $region24
      $region23: #{concat_block_forward.3} parent=11 // pred_region
        _
      $region24: #{concat_block_forward.3} parent=11 // pred_fallthru
        _
    $region12: #{concat_block_forward.3} parent=5 // pred_fallthru
      _
    %p204 = scmp.lt.s32.totalorder %s13, 2
    // Predicated region
    $region25: #{concat_block_forward.3} parent=5 // pred_check
      %p205 = pneg %p204
    $region26: #{concat_block_forward.3} parent=5 // pred_check_branch
      %207 = sbr.rel (%p205) target = $region28
    $region27: #{concat_block_forward.3} parent=5 // pred_region
      // Predicated region
      $region29: #{concat_block_forward.3} parent=27 // pred_check
        %p208 = pneg %p33
      $region30: #{concat_block_forward.3} parent=27 // pred_check_branch
        %210 = sbr.rel (%p208) target = $region32
      $region31: #{concat_block_forward.3} parent=27 // pred_region
        %p211 = scmp.lt.s32.totalorder %s13, 1
        %s212 = scalar_select %p211, %s13, 1
        %s213 = smul.addr %s212, 43
        %s214 = smul.addr %s213, 4
        %s215 = scalar_lea.vmem %s0, %s214
      $region32: #{concat_block_forward.3} parent=27 // pred_fallthru
        _
    $region28: #{concat_block_forward.3} parent=5 // pred_fallthru
      _
    %p216 = scmp.le.s32.totalorder 1, %s13
    %p217 = scmp.lt.s32.totalorder %s13, 3
    %p218 = pnand %p216, %p217
    %p219 = pneg %p218
    // Predicated region
    $region33: #{concat_block_forward.3} parent=5 // pred_check
      _
    $region34: #{concat_block_forward.3} parent=5 // pred_check_branch
      %221 = sbr.rel (%p218) target = $region36
    $region35: #{concat_block_forward.3} parent=5 // pred_region
      %s222 = ssub.s32 %s13, 1
      %p223 = scmp.lt.s32.totalorder %s18, 1
      %s224 = scalar_select %p223, %s18, 1
      %s225 = smul.addr %s224, 43
      %s226 = smul.addr %s225, 4
      %s227 = scalar_lea.vmem %s0, %s226
      %p228 = pneg %p39
      %p229 = pneg %p36
      %p230 = pneg %p60
      %p231 = pneg %p57
      %p232 = pneg %p81
      %p233 = pneg %p78
      %p234 = pneg %p102
      %p235 = pneg %p99
      %p236 = pneg %p128
      %p237 = pneg %p125
      %p238 = scmp.lt.s32.totalorder %s18, 1
      %s239 = scalar_select %p238, %s18, 1
      %s240 = smul.addr %s239, 36
      %s241 = smul.addr %s240, 8
      %s242 = scalar_lea.vmem %s4, %s241
      %p243 = pneg %p154
      %p244 = pneg %p151
      %p245 = scmp.lt.s32.totalorder %s18, 1
      %s246 = scalar_select %p245, %s18, 1
      %s247 = scalar_lea.vmem %s5, %s246
      %p248 = pneg %p180
      %p249 = pneg %p177
      %p250 = scmp.lt.s32.totalorder %s18, 1
      %s251 = scalar_select %p250, %s18, 1
      %s252 = scalar_lea.vmem %s6, %s251
      %p253 = scmp.lt.s32.totalorder %s18, 1
      %s254 = scalar_select %p253, %s18, 1
      %s255 = smul.addr %s254, 43
      %s256 = smul.addr %s255, 4
      %s257 = scalar_lea.vmem %s0, %s256
      %p258 = scmp.lt.s32.totalorder %s18, 1
      %s259 = scalar_select %p258, %s18, 1
      %s260 = smul.addr %s259, 36
      %s261 = smul.addr %s260, 8
      %s262 = scalar_lea.vmem %s4, %s261
      %p263 = scmp.lt.s32.totalorder %s18, 1
      %s264 = scalar_select %p263, %s18, 1
      %s265 = scalar_lea.vmem %s5, %s264
      %p266 = scmp.lt.s32.totalorder %s18, 1
      %s267 = scalar_select %p266, %s18, 1
      %s268 = scalar_lea.vmem %s6, %s267
      %v270 = vld [vmem:[%s257] sm:$0xf]
      %v271 = vld [vmem:[%s257 + $0x4] sm:$0xf]
      %v272 = vld [vmem:[%s257 + $0x8] sm:$0xf]
      %v273 = vld [vmem:[%s257 + $0xc] sm:$0xf]
      %v274 = vld [vmem:[%s257 + $0x10] sm:$0xf]
      %v275 = vld [vmem:[%s257 + $0x14] sm:$0xf]
      %v276 = vld [vmem:[%s257 + $0x18] sm:$0xf]
      %v277 = vld [vmem:[%s257 + $0x1c] sm:$0xf]
      %v278 = vld [vmem:[%s257 + $0x20] sm:$0xf]
      %v279 = vld [vmem:[%s257 + $0x24] sm:$0xf]
      %v280 = vld [vmem:[%s257 + $0x28] sm:$0xf]
      %v281 = vld [vmem:[%s257 + $0x2c] sm:$0xf]
      %v282 = vld [vmem:[%s257 + $0x30] sm:$0xf]
      %v283 = vld [vmem:[%s257 + $0x34] sm:$0xf]
      %v284 = vld [vmem:[%s257 + $0x38] sm:$0xf]
      %v285 = vld [vmem:[%s257 + $0x3c] sm:$0xf]
      %v286 = vld [vmem:[%s257 + $0x40] sm:$0xf]
      %v287 = vld [vmem:[%s257 + $0x44] sm:$0xf]
      %v288 = vld [vmem:[%s257 + $0x48] sm:$0xf]
      %v289 = vld [vmem:[%s257 + $0x4c] sm:$0xf]
      %v290 = vld [vmem:[%s257 + $0x50] sm:$0xf]
      %v291 = vld [vmem:[%s257 + $0x54] sm:$0xf]
      %v292 = vld [vmem:[%s257 + $0x58] sm:$0xf]
      %v293 = vld [vmem:[%s257 + $0x5c] sm:$0xf]
      %v294 = vld [vmem:[%s257 + $0x60] sm:$0xf]
      %v295 = vld [vmem:[%s257 + $0x64] sm:$0xf]
      %v296 = vld [vmem:[%s257 + $0x68] sm:$0xf]
      %v297 = vld [vmem:[%s257 + $0x6c] sm:$0xf]
      %v298 = vld [vmem:[%s257 + $0x70] sm:$0xf]
      %v299 = vld [vmem:[%s257 + $0x74] sm:$0xf]
      %v300 = vld [vmem:[%s257 + $0x78] sm:$0xf]
      %v301 = vld [vmem:[%s257 + $0x7c] sm:$0xf]
      %v302 = vld [vmem:[%s257 + $0x80] sm:$0xf]
      %v303 = vld [vmem:[%s257 + $0x84] sm:$0xf]
      %v304 = vld [vmem:[%s257 + $0x88] sm:$0xf]
      %v305 = vld [vmem:[%s257 + $0x8c] sm:$0xf]
      %v306 = vld [vmem:[%s257 + $0x90] sm:$0xf]
      %v307 = vld [vmem:[%s257 + $0x94] sm:$0xf]
      %v308 = vld [vmem:[%s257 + $0x98] sm:$0xf]
      %v309 = vld [vmem:[%s257 + $0x9c] sm:$0xf]
      %v310 = vld [vmem:[%s257 + $0xa0] sm:$0xf]
      %v311 = vld [vmem:[%s1] sm:$0xf]
      %v312 = vld [vmem:[%s1 + $0x4] sm:$0xf]
      %v313 = vld [vmem:[%s1 + $0x8] sm:$0xf]
      %v314 = vld [vmem:[%s1 + $0xc] sm:$0xf]
      %v315 = vld [vmem:[%s1 + $0x10] sm:$0x3]
      %v353 = vunpack.c.l.b16 %v270
      %v354 = vunpack.c.l.b16 %v271
      %v355 = vunpack.c.l.b16 %v272
      %v356 = vunpack.c.l.b16 %v273
      %v357 = vunpack.c.l.b16 %v274
      %v358 = vunpack.c.l.b16 %v275
      %v359 = vunpack.c.l.b16 %v276
      %v360 = vunpack.c.l.b16 %v277
      %v361 = vunpack.c.l.b16 %v278
      %v362 = vunpack.c.l.b16 %v279
      %v363 = vunpack.c.l.b16 %v280
      %v364 = vunpack.c.l.b16 %v281
      %v365 = vunpack.c.l.b16 %v282
      %v366 = vunpack.c.l.b16 %v283
      %v367 = vunpack.c.l.b16 %v284
      %v368 = vunpack.c.l.b16 %v285
      %v369 = vunpack.c.l.b16 %v286
      %v370 = vunpack.c.l.b16 %v287
      %v371 = vunpack.c.l.b16 %v288
      %v372 = vunpack.c.l.b16 %v289
      %v373 = vunpack.c.l.b16 %v290
      %v374 = vunpack.c.l.b16 %v291
      %v375 = vunpack.c.l.b16 %v292
      %v376 = vunpack.c.l.b16 %v293
      %v377 = vunpack.c.l.b16 %v294
      %v378 = vunpack.c.l.b16 %v295
      %v379 = vunpack.c.l.b16 %v296
      %v380 = vunpack.c.l.b16 %v297
      %v381 = vunpack.c.l.b16 %v298
      %v382 = vunpack.c.l.b16 %v299
      %v383 = vunpack.c.l.b16 %v300
      %v384 = vunpack.c.l.b16 %v301
      %v385 = vunpack.c.l.b16 %v302
      %v386 = vunpack.c.l.b16 %v303
      %v387 = vunpack.c.l.b16 %v304
      %v388 = vunpack.c.l.b16 %v305
      %v389 = vunpack.c.l.b16 %v306
      %v390 = vpack.c.b16 %v354, %v353
      %v391 = vpack.c.b16 %v356, %v355
      %v392 = vpack.c.b16 %v358, %v357
      %v393 = vpack.c.b16 %v360, %v359
      %v394 = vpack.c.b16 %v362, %v361
      %v395 = vpack.c.b16 %v364, %v363
      %v396 = vpack.c.b16 %v366, %v365
      %v397 = vpack.c.b16 %v368, %v367
      %v398 = vpack.c.b16 %v370, %v369
      %v399 = vpack.c.b16 %v372, %v371
      %v400 = vpack.c.b16 %v374, %v373
      %v401 = vpack.c.b16 %v376, %v375
      %v402 = vpack.c.b16 %v378, %v377
      %v403 = vpack.c.b16 %v380, %v379
      %v404 = vpack.c.b16 %v382, %v381
      %v405 = vpack.c.b16 %v384, %v383
      %v406 = vpack.c.b16 %v386, %v385
      %v407 = vpack.c.b16 %v388, %v387
      %v408 = vpack.c.b16 %v389, %v389
      %vm409 = vsmask.f32 7424
      %v411 = vshrl.u32 %v390, 16
      %v413 = vshll.u32 %v390, 16
      %v415 = vrot.slane %v413, 1
      %v416 = vor.u32 %v411, %v415
      %v418 = vshll.u32 %v391, 16
      %v420 = vrot.slane %v418, 1
      %v421 = vsel %vm409, %v416, %v420
      %v422 = vshrl.u32 %v391, 16
      %v424 = vor.u32 %v422, %v420
      %v426 = vshll.u32 %v392, 16
      %v428 = vrot.slane %v426, 1
      %v429 = vsel %vm409, %v424, %v428
      %v430 = vshrl.u32 %v392, 16
      %v432 = vor.u32 %v430, %v428
      %v434 = vshll.u32 %v393, 16
      %v436 = vrot.slane %v434, 1
      %v437 = vsel %vm409, %v432, %v436
      %v438 = vshrl.u32 %v393, 16
      %v440 = vor.u32 %v438, %v436
      %v442 = vshll.u32 %v394, 16
      %v444 = vrot.slane %v442, 1
      %v445 = vsel %vm409, %v440, %v444
      %v446 = vshrl.u32 %v394, 16
      %v448 = vor.u32 %v446, %v444
      %v450 = vshll.u32 %v395, 16
      %v452 = vrot.slane %v450, 1
      %v453 = vsel %vm409, %v448, %v452
      %v454 = vshrl.u32 %v395, 16
      %v456 = vor.u32 %v454, %v452
      %v458 = vshll.u32 %v396, 16
      %v460 = vrot.slane %v458, 1
      %v461 = vsel %vm409, %v456, %v460
      %v462 = vshrl.u32 %v396, 16
      %v464 = vor.u32 %v462, %v460
      %v466 = vshll.u32 %v397, 16
      %v468 = vrot.slane %v466, 1
      %v469 = vsel %vm409, %v464, %v468
      %v470 = vshrl.u32 %v397, 16
      %v472 = vor.u32 %v470, %v468
      %v474 = vshll.u32 %v398, 16
      %v476 = vrot.slane %v474, 1
      %v477 = vsel %vm409, %v472, %v476
      %v478 = vshrl.u32 %v398, 16
      %v480 = vor.u32 %v478, %v476
      %v482 = vshll.u32 %v399, 16
      %v484 = vrot.slane %v482, 1
      %v485 = vsel %vm409, %v480, %v484
      %v486 = vshrl.u32 %v399, 16
      %v488 = vor.u32 %v486, %v484
      %v490 = vshll.u32 %v400, 16
      %v492 = vrot.slane %v490, 1
      %v493 = vsel %vm409, %v488, %v492
      %v494 = vshrl.u32 %v400, 16
      %v496 = vor.u32 %v494, %v492
      %v498 = vshll.u32 %v401, 16
      %v500 = vrot.slane %v498, 1
      %v501 = vsel %vm409, %v496, %v500
      %v502 = vshrl.u32 %v401, 16
      %v504 = vor.u32 %v502, %v500
      %v506 = vshll.u32 %v402, 16
      %v508 = vrot.slane %v506, 1
      %v509 = vsel %vm409, %v504, %v508
      %v510 = vshrl.u32 %v402, 16
      %v512 = vor.u32 %v510, %v508
      %v514 = vshll.u32 %v403, 16
      %v516 = vrot.slane %v514, 1
      %v517 = vsel %vm409, %v512, %v516
      %v518 = vshrl.u32 %v403, 16
      %v520 = vor.u32 %v518, %v516
      %v522 = vshll.u32 %v404, 16
      %v524 = vrot.slane %v522, 1
      %v525 = vsel %vm409, %v520, %v524
      %v526 = vshrl.u32 %v404, 16
      %v528 = vor.u32 %v526, %v524
      %v530 = vshll.u32 %v405, 16
      %v532 = vrot.slane %v530, 1
      %v533 = vsel %vm409, %v528, %v532
      %v534 = vshrl.u32 %v405, 16
      %v536 = vor.u32 %v534, %v532
      %v538 = vshll.u32 %v406, 16
      %v540 = vrot.slane %v538, 1
      %v541 = vsel %vm409, %v536, %v540
      %v542 = vshrl.u32 %v406, 16
      %v544 = vor.u32 %v542, %v540
      %v546 = vshll.u32 %v407, 16
      %v548 = vrot.slane %v546, 1
      %v549 = vsel %vm409, %v544, %v548
      %v550 = vshrl.u32 %v407, 16
      %v552 = vor.u32 %v550, %v548
      %v554 = vshll.u32 %v408, 16
      %v556 = vrot.slane %v554, 1
      %v557 = vsel %vm409, %v552, %v556
      %v559 = vunpack.c.l.b16 %v311
      %v560 = vpack.c.b16 %v559, %v559
      %v561 = vrot.slane %v560, 2
      %vm562 = vcmask 31744
      %v564 = vsel %vm562, %v421, 0
      %v567 = vsel %vm562, %v429, 0
      %v570 = vsel %vm562, %v437, 0
      %v573 = vsel %vm562, %v445, 0
      %v576 = vsel %vm562, %v453, 0
      %v579 = vsel %vm562, %v461, 0
      %v582 = vsel %vm562, %v469, 0
      %v585 = vsel %vm562, %v477, 0
      %v588 = vsel %vm562, %v485, 0
      %v591 = vsel %vm562, %v493, 0
      %v594 = vsel %vm562, %v501, 0
      %v597 = vsel %vm562, %v509, 0
      %v600 = vsel %vm562, %v517, 0
      %v603 = vsel %vm562, %v525, 0
      %v606 = vsel %vm562, %v533, 0
      %v609 = vsel %vm562, %v541, 0
      %v612 = vsel %vm562, %v549, 0
      %v615 = vsel %vm562, %v557, 0
      %vm617 = vcmask 1041408
      %v619 = vsel %vm617, %v561, 0
      %621 = vmatprep.subr.bf16.mxu0 0
      %622 = vmatpush1.bf16.msra.mxu0 %v619
      %623 = vmatprep.subr.bf16.mxu0 0
      %624 = vmatpush1.bf16.msra.mxu0 0
      %625 = vmatprep.subr.bf16.mxu0 0
      %626 = vmatpush1.bf16.msra.mxu0 0
      %627 = vmatprep.subr.bf16.mxu0 0
      %628 = vmatpush1.bf16.msra.mxu0 0
      %629 = vmatprep.subr.bf16.mxu0 0
      %630 = vmatpush1.bf16.msra.mxu0 0
      %631 = vmatprep.subr.bf16.mxu0 0
      %632 = vmatpush1.bf16.msra.mxu0 0
      %633 = vmatprep.subr.bf16.mxu0 0
      %634 = vmatpush1.bf16.msra.mxu0 0
      %635 = vmatprep.subr.bf16.mxu0 0
      %636 = vmatpush1.bf16.msra.mxu0 0
      %637 = vmatprep.subr.bf16.mxu0 0
      %638 = vmatpush1.bf16.msra.mxu0 0
      %639 = vmatprep.subr.bf16.mxu0 0
      %640 = vmatpush1.bf16.msra.mxu0 0
      %641 = vmatprep.subr.bf16.mxu0 0
      %642 = vmatpush1.bf16.msra.mxu0 0
      %643 = vmatprep.subr.bf16.mxu0 0
      %644 = vmatpush1.bf16.msra.mxu0 0
      %645 = vmatprep.subr.bf16.mxu0 0
      %646 = vmatpush1.bf16.msra.mxu0 0
      %647 = vmatprep.subr.bf16.mxu0 0
      %648 = vmatpush1.bf16.msra.mxu0 0
      %649 = vmatprep.subr.bf16.mxu0 0
      %650 = vmatpush1.bf16.msra.mxu0 0
      %651 = vmatprep.subr.bf16.mxu0 0
      %652 = vmatpush1.bf16.msra.mxu0 0
      %653 = vmatprep.mubr.bf16.mxu0 0
      %654 = vmatmul.mubr.bf16.gmra.mrb[0].mxu0 %v564
      %v655 = vpop.f32.mrb[0].mxu0
      %v656 = vadd.f32 0.0, %v655
      %v657 = vpop.f32.mrb[0].mxu0
      %v658 = vpop.f32.mrb[0].mxu0
      %v659 = vadd.f32 0.0, %v658
      %v660 = vpop.f32.mrb[0].mxu0
      %661 = vmatprep.mubr.bf16.mxu0 0
      %662 = vmatmul.mubr.bf16.gmra.mrb[0].mxu0 %v567
      %v663 = vpop.f32.mrb[0].mxu0
      %v664 = vadd.f32 0.0, %v663
      %v665 = vpop.f32.mrb[0].mxu0
      %v666 = vpop.f32.mrb[0].mxu0
      %v667 = vadd.f32 0.0, %v666
      %v668 = vpop.f32.mrb[0].mxu0
      %669 = vmatprep.mubr.bf16.mxu0 0
      %670 = vmatmul.mubr.bf16.gmra.mrb[0].mxu0 %v570
      %v671 = vpop.f32.mrb[0].mxu0
      %v672 = vadd.f32 0.0, %v671
      %v673 = vpop.f32.mrb[0].mxu0
      %v674 = vpop.f32.mrb[0].mxu0
      %v675 = vadd.f32 0.0, %v674
      %v676 = vpop.f32.mrb[0].mxu0
      %677 = vmatprep.mubr.bf16.mxu0 0
      %678 = vmatmul.mubr.bf16.gmra.mrb[0].mxu0 %v573
      %v679 = vpop.f32.mrb[0].mxu0
      %v680 = vadd.f32 0.0, %v679
      %v681 = vpop.f32.mrb[0].mxu0
      %v682 = vpop.f32.mrb[0].mxu0
      %v683 = vadd.f32 0.0, %v682
      %v684 = vpop.f32.mrb[0].mxu0
      %685 = vmatprep.mubr.bf16.mxu0 0
      %686 = vmatmul.mubr.bf16.gmra.mrb[0].mxu0 %v576
      %v687 = vpop.f32.mrb[0].mxu0
      %v688 = vadd.f32 0.0, %v687
      %v689 = vpop.f32.mrb[0].mxu0
      %v690 = vpop.f32.mrb[0].mxu0
      %v691 = vadd.f32 0.0, %v690
      %v692 = vpop.f32.mrb[0].mxu0
      %693 = vmatprep.mubr.bf16.mxu0 0
      %694 = vmatmul.mubr.bf16.gmra.mrb[0].mxu0 %v579
      %v695 = vpop.f32.mrb[0].mxu0
      %v696 = vadd.f32 0.0, %v695
      %v697 = vpop.f32.mrb[0].mxu0
      %v698 = vpop.f32.mrb[0].mxu0
      %v699 = vadd.f32 0.0, %v698
      %v700 = vpop.f32.mrb[0].mxu0
      %701 = vmatprep.mubr.bf16.mxu0 0
      %702 = vmatmul.mubr.bf16.gmra.mrb[0].mxu0 %v582
      %v703 = vpop.f32.mrb[0].mxu0
      %v704 = vadd.f32 0.0, %v703
      %v705 = vpop.f32.mrb[0].mxu0
      %v706 = vpop.f32.mrb[0].mxu0
      %v707 = vadd.f32 0.0, %v706
      %v708 = vpop.f32.mrb[0].mxu0
      %709 = vmatprep.mubr.bf16.mxu0 0
      %710 = vmatmul.mubr.bf16.gmra.mrb[0].mxu0 %v585
      %v711 = vpop.f32.mrb[0].mxu0
      %v712 = vadd.f32 0.0, %v711
      %v713 = vpop.f32.mrb[0].mxu0
      %v714 = vpop.f32.mrb[0].mxu0
      %v715 = vadd.f32 0.0, %v714
      %v716 = vpop.f32.mrb[0].mxu0
      %717 = vmatprep.mubr.bf16.mxu0 0
      %718 = vmatmul.mubr.bf16.gmra.mrb[0].mxu0 %v588
      %v719 = vpop.f32.mrb[0].mxu0
      %v720 = vadd.f32 0.0, %v719
      %v721 = vpop.f32.mrb[0].mxu0
      %v722 = vpop.f32.mrb[0].mxu0
      %v723 = vadd.f32 0.0, %v722
      %v724 = vpop.f32.mrb[0].mxu0
      %725 = vmatprep.mubr.bf16.mxu0 0
      %726 = vmatmul.mubr.bf16.gmra.mrb[0].mxu0 %v591
      %v727 = vpop.f32.mrb[0].mxu0
      %v728 = vadd.f32 0.0, %v727
      %v729 = vpop.f32.mrb[0].mxu0
      %v730 = vpop.f32.mrb[0].mxu0
      %v731 = vadd.f32 0.0, %v730
      %v732 = vpop.f32.mrb[0].mxu0
      %733 = vmatprep.mubr.bf16.mxu0 0
      %734 = vmatmul.mubr.bf16.gmra.mrb[0].mxu0 %v594
      %v735 = vpop.f32.mrb[0].mxu0
      %v736 = vadd.f32 0.0, %v735
      %v737 = vpop.f32.mrb[0].mxu0
      %v738 = vpop.f32.mrb[0].mxu0
      %v739 = vadd.f32 0.0, %v738
      %v740 = vpop.f32.mrb[0].mxu0
      %741 = vmatprep.mubr.bf16.mxu0 0
      %742 = vmatmul.mubr.bf16.gmra.mrb[0].mxu0 %v597
      %v743 = vpop.f32.mrb[0].mxu0
      %v744 = vadd.f32 0.0, %v743
      %v745 = vpop.f32.mrb[0].mxu0
      %v746 = vpop.f32.mrb[0].mxu0
      %v747 = vadd.f32 0.0, %v746
      %v748 = vpop.f32.mrb[0].mxu0
      %749 = vmatprep.mubr.bf16.mxu0 0
      %750 = vmatmul.mubr.bf16.gmra.mrb[0].mxu0 %v600
      %v751 = vpop.f32.mrb[0].mxu0
      %v752 = vadd.f32 0.0, %v751
      %v753 = vpop.f32.mrb[0].mxu0
      %v754 = vpop.f32.mrb[0].mxu0
      %v755 = vadd.f32 0.0, %v754
      %v756 = vpop.f32.mrb[0].mxu0
      %757 = vmatprep.mubr.bf16.mxu0 0
      %758 = vmatmul.mubr.bf16.gmra.mrb[0].mxu0 %v603
      %v759 = vpop.f32.mrb[0].mxu0
      %v760 = vadd.f32 0.0, %v759
      %v761 = vpop.f32.mrb[0].mxu0
      %v762 = vpop.f32.mrb[0].mxu0
      %v763 = vadd.f32 0.0, %v762
      %v764 = vpop.f32.mrb[0].mxu0
      %765 = vmatprep.mubr.bf16.mxu0 0
      %766 = vmatmul.mubr.bf16.gmra.mrb[0].mxu0 %v606
      %v767 = vpop.f32.mrb[0].mxu0
      %v768 = vadd.f32 0.0, %v767
      %v769 = vpop.f32.mrb[0].mxu0
      %v770 = vpop.f32.mrb[0].mxu0
      %v771 = vadd.f32 0.0, %v770
      %v772 = vpop.f32.mrb[0].mxu0
      %773 = vmatprep.mubr.bf16.mxu0 0
      %774 = vmatmul.mubr.bf16.gmra.mrb[0].mxu0 %v609
      %v775 = vpop.f32.mrb[0].mxu0
      %v776 = vadd.f32 0.0, %v775
      %v777 = vpop.f32.mrb[0].mxu0
      %v778 = vpop.f32.mrb[0].mxu0
      %v779 = vadd.f32 0.0, %v778
      %v780 = vpop.f32.mrb[0].mxu0
      %781 = vmatprep.mubr.bf16.mxu0 0
      %782 = vmatmul.mubr.bf16.gmra.mrb[0].mxu0 %v612
      %v783 = vpop.f32.mrb[0].mxu0
      %v784 = vadd.f32 0.0, %v783
      %v785 = vpop.f32.mrb[0].mxu0
      %v786 = vpop.f32.mrb[0].mxu0
      %v787 = vadd.f32 0.0, %v786
      %v788 = vpop.f32.mrb[0].mxu0
      %789 = vmatprep.mubr.bf16.mxu0 0
      %790 = vmatmul.mubr.bf16.gmra.mrb[0].mxu0 %v615
      %v791 = vpop.f32.mrb[0].mxu0
      %v792 = vadd.f32 0.0, %v791
      %v793 = vpop.f32.mrb[0].mxu0
      %v794 = vpop.f32.mrb[0].mxu0
      %v795 = vadd.f32 0.0, %v794
      %v796 = vpop.f32.mrb[0].mxu0
      %797 = vdwg.mxu0
      %v798 = vsel %vm562, %v390, 0
      %v800 = vsel %vm562, %v391, 0
      %v802 = vsel %vm562, %v392, 0
      %v804 = vsel %vm562, %v393, 0
      %v806 = vsel %vm562, %v394, 0
      %v808 = vsel %vm562, %v395, 0
      %v810 = vsel %vm562, %v396, 0
      %v812 = vsel %vm562, %v397, 0
      %v814 = vsel %vm562, %v398, 0
      %v816 = vsel %vm562, %v399, 0
      %v818 = vsel %vm562, %v400, 0
      %v820 = vsel %vm562, %v401, 0
      %v822 = vsel %vm562, %v402, 0
      %v824 = vsel %vm562, %v403, 0
      %v826 = vsel %vm562, %v404, 0
      %v828 = vsel %vm562, %v405, 0
      %v830 = vsel %vm562, %v406, 0
      %v832 = vsel %vm562, %v407, 0
      %v835 = vsel %vm617, %v311, 0
      %837 = vmatprep.subr.bf16.mxu0 0
      %838 = vmatpush1.bf16.msra.mxu0 %v835
      %839 = vmatprep.subr.bf16.mxu0 0
      %840 = vmatpush1.bf16.msra.mxu0 0
      %841 = vmatprep.subr.bf16.mxu0 0
      %842 = vmatpush1.bf16.msra.mxu0 0
      %843 = vmatprep.subr.bf16.mxu0 0
      %844 = vmatpush1.bf16.msra.mxu0 0
      %845 = vmatprep.subr.bf16.mxu0 0
      %846 = vmatpush1.bf16.msra.mxu0 0
      %847 = vmatprep.subr.bf16.mxu0 0
      %848 = vmatpush1.bf16.msra.mxu0 0
      %849 = vmatprep.subr.bf16.mxu0 0
      %850 = vmatpush1.bf16.msra.mxu0 0
      %851 = vmatprep.subr.bf16.mxu0 0
      %852 = vmatpush1.bf16.msra.mxu0 0
      %853 = vmatprep.subr.bf16.mxu0 0
      %854 = vmatpush1.bf16.msra.mxu0 0
      %855 = vmatprep.subr.bf16.mxu0 0
      %856 = vmatpush1.bf16.msra.mxu0 0
      %857 = vmatprep.subr.bf16.mxu0 0
      %858 = vmatpush1.bf16.msra.mxu0 0
      %859 = vmatprep.subr.bf16.mxu0 0
      %860 = vmatpush1.bf16.msra.mxu0 0
      %861 = vmatprep.subr.bf16.mxu0 0
      %862 = vmatpush1.bf16.msra.mxu0 0
      %863 = vmatprep.subr.bf16.mxu0 0
      %864 = vmatpush1.bf16.msra.mxu0 0
      %865 = vmatprep.subr.bf16.mxu0 0
      %866 = vmatpush1.bf16.msra.mxu0 0
      %867 = vmatprep.subr.bf16.mxu0 0
      %868 = vmatpush1.bf16.msra.mxu0 0
      %869 = vmatprep.mubr.bf16.mxu0 0
      %870 = vmatmul.mubr.bf16.gmra.mrb[0].mxu0 %v798
      %v871 = vpop.f32.mrb[0].mxu0
      %v872 = vadd.f32 %v656, %v871
      %v873 = vpop.f32.mrb[0].mxu0
      %v874 = vpop.f32.mrb[0].mxu0
      %v875 = vadd.f32 %v659, %v874
      %v876 = vpop.f32.mrb[0].mxu0
      %877 = vmatprep.mubr.bf16.mxu0 0
      %878 = vmatmul.mubr.bf16.gmra.mrb[0].mxu0 %v800
      %v879 = vpop.f32.mrb[0].mxu0
      %v880 = vadd.f32 %v664, %v879
      %v881 = vpop.f32.mrb[0].mxu0
      %v882 = vpop.f32.mrb[0].mxu0
      %v883 = vadd.f32 %v667, %v882
      %v884 = vpop.f32.mrb[0].mxu0
      %885 = vmatprep.mubr.bf16.mxu0 0
      %886 = vmatmul.mubr.bf16.gmra.mrb[0].mxu0 %v802
      %v887 = vpop.f32.mrb[0].mxu0
      %v888 = vadd.f32 %v672, %v887
      %v889 = vpop.f32.mrb[0].mxu0
      %v890 = vpop.f32.mrb[0].mxu0
      %v891 = vadd.f32 %v675, %v890
      %v892 = vpop.f32.mrb[0].mxu0
      %893 = vmatprep.mubr.bf16.mxu0 0
      %894 = vmatmul.mubr.bf16.gmra.mrb[0].mxu0 %v804
      %v895 = vpop.f32.mrb[0].mxu0
      %v896 = vadd.f32 %v680, %v895
      %v897 = vpop.f32.mrb[0].mxu0
      %v898 = vpop.f32.mrb[0].mxu0
      %v899 = vadd.f32 %v683, %v898
      %v900 = vpop.f32.mrb[0].mxu0
      %901 = vmatprep.mubr.bf16.mxu0 0
      %902 = vmatmul.mubr.bf16.gmra.mrb[0].mxu0 %v806
      %v903 = vpop.f32.mrb[0].mxu0
      %v904 = vadd.f32 %v688, %v903
      %v905 = vpop.f32.mrb[0].mxu0
      %v906 = vpop.f32.mrb[0].mxu0
      %v907 = vadd.f32 %v691, %v906
      %v908 = vpop.f32.mrb[0].mxu0
      %909 = vmatprep.mubr.bf16.mxu0 0
      %910 = vmatmul.mubr.bf16.gmra.mrb[0].mxu0 %v808
      %v911 = vpop.f32.mrb[0].mxu0
      %v912 = vadd.f32 %v696, %v911
      %v913 = vpop.f32.mrb[0].mxu0
      %v914 = vpop.f32.mrb[0].mxu0
      %v915 = vadd.f32 %v699, %v914
      %v916 = vpop.f32.mrb[0].mxu0
      %917 = vmatprep.mubr.bf16.mxu0 0
      %918 = vmatmul.mubr.bf16.gmra.mrb[0].mxu0 %v810
      %v919 = vpop.f32.mrb[0].mxu0
      %v920 = vadd.f32 %v704, %v919
      %v921 = vpop.f32.mrb[0].mxu0
      %v922 = vpop.f32.mrb[0].mxu0
      %v923 = vadd.f32 %v707, %v922
      %v924 = vpop.f32.mrb[0].mxu0
      %925 = vmatprep.mubr.bf16.mxu0 0
      %926 = vmatmul.mubr.bf16.gmra.mrb[0].mxu0 %v812
      %v927 = vpop.f32.mrb[0].mxu0
      %v928 = vadd.f32 %v712, %v927
      %v929 = vpop.f32.mrb[0].mxu0
      %v930 = vpop.f32.mrb[0].mxu0
      %v931 = vadd.f32 %v715, %v930
      %v932 = vpop.f32.mrb[0].mxu0
      %933 = vmatprep.mubr.bf16.mxu0 0
      %934 = vmatmul.mubr.bf16.gmra.mrb[0].mxu0 %v814
      %v935 = vpop.f32.mrb[0].mxu0
      %v936 = vadd.f32 %v720, %v935
      %v937 = vpop.f32.mrb[0].mxu0
      %v938 = vpop.f32.mrb[0].mxu0
      %v939 = vadd.f32 %v723, %v938
      %v940 = vpop.f32.mrb[0].mxu0
      %941 = vmatprep.mubr.bf16.mxu0 0
      %942 = vmatmul.mubr.bf16.gmra.mrb[0].mxu0 %v816
      %v943 = vpop.f32.mrb[0].mxu0
      %v944 = vadd.f32 %v728, %v943
      %v945 = vpop.f32.mrb[0].mxu0
      %v946 = vpop.f32.mrb[0].mxu0
      %v947 = vadd.f32 %v731, %v946
      %v948 = vpop.f32.mrb[0].mxu0
      %949 = vmatprep.mubr.bf16.mxu0 0
      %950 = vmatmul.mubr.bf16.gmra.mrb[0].mxu0 %v818
      %v951 = vpop.f32.mrb[0].mxu0
      %v952 = vadd.f32 %v736, %v951
      %v953 = vpop.f32.mrb[0].mxu0
      %v954 = vpop.f32.mrb[0].mxu0
      %v955 = vadd.f32 %v739, %v954
      %v956 = vpop.f32.mrb[0].mxu0
      %957 = vmatprep.mubr.bf16.mxu0 0
      %958 = vmatmul.mubr.bf16.gmra.mrb[0].mxu0 %v820
      %v959 = vpop.f32.mrb[0].mxu0
      %v960 = vadd.f32 %v744, %v959
      %v961 = vpop.f32.mrb[0].mxu0
      %v962 = vpop.f32.mrb[0].mxu0
      %v963 = vadd.f32 %v747, %v962
      %v964 = vpop.f32.mrb[0].mxu0
      %965 = vmatprep.mubr.bf16.mxu0 0
      %966 = vmatmul.mubr.bf16.gmra.mrb[0].mxu0 %v822
      %v967 = vpop.f32.mrb[0].mxu0
      %v968 = vadd.f32 %v752, %v967
      %v969 = vpop.f32.mrb[0].mxu0
      %v970 = vpop.f32.mrb[0].mxu0
      %v971 = vadd.f32 %v755, %v970
      %v972 = vpop.f32.mrb[0].mxu0
      %973 = vmatprep.mubr.bf16.mxu0 0
      %974 = vmatmul.mubr.bf16.gmra.mrb[0].mxu0 %v824
      %v975 = vpop.f32.mrb[0].mxu0
      %v976 = vadd.f32 %v760, %v975
      %v977 = vpop.f32.mrb[0].mxu0
      %v978 = vpop.f32.mrb[0].mxu0
      %v979 = vadd.f32 %v763, %v978
      %v980 = vpop.f32.mrb[0].mxu0
      %981 = vmatprep.mubr.bf16.mxu0 0
      %982 = vmatmul.mubr.bf16.gmra.mrb[0].mxu0 %v826
      %v983 = vpop.f32.mrb[0].mxu0
      %v984 = vadd.f32 %v768, %v983
      %v985 = vpop.f32.mrb[0].mxu0
      %v986 = vpop.f32.mrb[0].mxu0
      %v987 = vadd.f32 %v771, %v986
      %v988 = vpop.f32.mrb[0].mxu0
      %989 = vmatprep.mubr.bf16.mxu0 0
      %990 = vmatmul.mubr.bf16.gmra.mrb[0].mxu0 %v828
      %v991 = vpop.f32.mrb[0].mxu0
      %v992 = vadd.f32 %v776, %v991
      %v993 = vpop.f32.mrb[0].mxu0
      %v994 = vpop.f32.mrb[0].mxu0
      %v995 = vadd.f32 %v779, %v994
      %v996 = vpop.f32.mrb[0].mxu0
      %997 = vmatprep.mubr.bf16.mxu0 0
      %998 = vmatmul.mubr.bf16.gmra.mrb[0].mxu0 %v830
      %v999 = vpop.f32.mrb[0].mxu0
      %v1000 = vadd.f32 %v784, %v999
      %v1001 = vpop.f32.mrb[0].mxu0
      %v1002 = vpop.f32.mrb[0].mxu0
      %v1003 = vadd.f32 %v787, %v1002
      %v1004 = vpop.f32.mrb[0].mxu0
      %1005 = vmatprep.mubr.bf16.mxu0 0
      %1006 = vmatmul.mubr.bf16.gmra.mrb[0].mxu0 %v832
      %v1007 = vpop.f32.mrb[0].mxu0
      %v1008 = vadd.f32 %v792, %v1007
      %v1009 = vpop.f32.mrb[0].mxu0
      %v1010 = vpop.f32.mrb[0].mxu0
      %v1011 = vadd.f32 %v795, %v1010
      %v1012 = vpop.f32.mrb[0].mxu0
      %1013 = vdwg.mxu0
      %vm1014 = vcmask 1046528
      %v1015 = vrot.slane %v390, 1
      %v1016 = vrot.slane %v391, 1
      %v1017 = vsel %vm1014, %v1015, %v1016
      %v1018 = vrot.slane %v392, 1
      %v1019 = vsel %vm1014, %v1016, %v1018
      %v1020 = vrot.slane %v393, 1
      %v1021 = vsel %vm1014, %v1018, %v1020
      %v1022 = vrot.slane %v394, 1
      %v1023 = vsel %vm1014, %v1020, %v1022
      %v1024 = vrot.slane %v395, 1
      %v1025 = vsel %vm1014, %v1022, %v1024
      %v1026 = vrot.slane %v396, 1
      %v1027 = vsel %vm1014, %v1024, %v1026
      %v1028 = vrot.slane %v397, 1
      %v1029 = vsel %vm1014, %v1026, %v1028
      %v1030 = vrot.slane %v398, 1
      %v1031 = vsel %vm1014, %v1028, %v1030
      %v1032 = vrot.slane %v399, 1
      %v1033 = vsel %vm1014, %v1030, %v1032
      %v1034 = vrot.slane %v400, 1
      %v1035 = vsel %vm1014, %v1032, %v1034
      %v1036 = vrot.slane %v401, 1
      %v1037 = vsel %vm1014, %v1034, %v1036
      %v1038 = vrot.slane %v402, 1
      %v1039 = vsel %vm1014, %v1036, %v1038
      %v1040 = vrot.slane %v403, 1
      %v1041 = vsel %vm1014, %v1038, %v1040
      %v1042 = vrot.slane %v404, 1
      %v1043 = vsel %vm1014, %v1040, %v1042
      %v1044 = vrot.slane %v405, 1
      %v1045 = vsel %vm1014, %v1042, %v1044
      %v1046 = vrot.slane %v406, 1
      %v1047 = vsel %vm1014, %v1044, %v1046
      %v1048 = vrot.slane %v407, 1
      %v1049 = vsel %vm1014, %v1046, %v1048
      %v1050 = vrot.slane %v408, 1
      %v1051 = vsel %vm1014, %v1048, %v1050
      %v1053 = vsel %vm562, %v1017, 0
      %v1056 = vsel %vm562, %v1019, 0
      %v1059 = vsel %vm562, %v1021, 0
      %v1062 = vsel %vm562, %v1023, 0
      %v1065 = vsel %vm562, %v1025, 0
      %v1068 = vsel %vm562, %v1027, 0
      %v1071 = vsel %vm562, %v1029, 0
      %v1074 = vsel %vm562, %v1031, 0
      %v1077 = vsel %vm562, %v1033, 0
      %v1080 = vsel %vm562, %v1035, 0
      %v1083 = vsel %vm562, %v1037, 0
      %v1086 = vsel %vm562, %v1039, 0
      %v1089 = vsel %vm562, %v1041, 0
      %v1092 = vsel %vm562, %v1043, 0
      %v1095 = vsel %vm562, %v1045, 0
      %v1098 = vsel %vm562, %v1047, 0
      %v1101 = vsel %vm562, %v1049, 0
      %v1104 = vsel %vm562, %v1051, 0
      %v1107 = vsel %vm617, %v312, 0
      %1109 = vmatprep.subr.bf16.mxu0 0
      %1110 = vmatpush1.bf16.msra.mxu0 %v1107
      %1111 = vmatprep.subr.bf16.mxu0 0
      %1112 = vmatpush1.bf16.msra.mxu0 0
      %1113 = vmatprep.subr.bf16.mxu0 0
      %1114 = vmatpush1.bf16.msra.mxu0 0
      %1115 = vmatprep.subr.bf16.mxu0 0
      %1116 = vmatpush1.bf16.msra.mxu0 0
      %1117 = vmatprep.subr.bf16.mxu0 0
      %1118 = vmatpush1.bf16.msra.mxu0 0
      %1119 = vmatprep.subr.bf16.mxu0 0
      %1120 = vmatpush1.bf16.msra.mxu0 0
      %1121 = vmatprep.subr.bf16.mxu0 0
      %1122 = vmatpush1.bf16.msra.mxu0 0
      %1123 = vmatprep.subr.bf16.mxu0 0
      %1124 = vmatpush1.bf16.msra.mxu0 0
      %1125 = vmatprep.subr.bf16.mxu0 0
      %1126 = vmatpush1.bf16.msra.mxu0 0
      %1127 = vmatprep.subr.bf16.mxu0 0
      %1128 = vmatpush1.bf16.msra.mxu0 0
      %1129 = vmatprep.subr.bf16.mxu0 0
      %1130 = vmatpush1.bf16.msra.mxu0 0
      %1131 = vmatprep.subr.bf16.mxu0 0
      %1132 = vmatpush1.bf16.msra.mxu0 0
      %1133 = vmatprep.subr.bf16.mxu0 0
      %1134 = vmatpush1.bf16.msra.mxu0 0
      %1135 = vmatprep.subr.bf16.mxu0 0
      %1136 = vmatpush1.bf16.msra.mxu0 0
      %1137 = vmatprep.subr.bf16.mxu0 0
      %1138 = vmatpush1.bf16.msra.mxu0 0
      %1139 = vmatprep.subr.bf16.mxu0 0
      %1140 = vmatpush1.bf16.msra.mxu0 0
      %1141 = vmatprep.mubr.bf16.mxu0 0
      %1142 = vmatmul.mubr.bf16.gmra.mrb[0].mxu0 %v1053
      %v1143 = vpop.f32.mrb[0].mxu0
      %v1144 = vadd.f32 0.0, %v1143
      %v1145 = vpop.f32.mrb[0].mxu0
      %v1146 = vpop.f32.mrb[0].mxu0
      %v1147 = vadd.f32 0.0, %v1146
      %v1148 = vpop.f32.mrb[0].mxu0
      %1149 = vmatprep.mubr.bf16.mxu0 0
      %1150 = vmatmul.mubr.bf16.gmra.mrb[0].mxu0 %v1056
      %v1151 = vpop.f32.mrb[0].mxu0
      %v1152 = vadd.f32 0.0, %v1151
      %v1153 = vpop.f32.mrb[0].mxu0
      %v1154 = vpop.f32.mrb[0].mxu0
      %v1155 = vadd.f32 0.0, %v1154
      %v1156 = vpop.f32.mrb[0].mxu0
      %1157 = vmatprep.mubr.bf16.mxu0 0
      %1158 = vmatmul.mubr.bf16.gmra.mrb[0].mxu0 %v1059
      %v1159 = vpop.f32.mrb[0].mxu0
      %v1160 = vadd.f32 0.0, %v1159
      %v1161 = vpop.f32.mrb[0].mxu0
      %v1162 = vpop.f32.mrb[0].mxu0
      %v1163 = vadd.f32 0.0, %v1162
      %v1164 = vpop.f32.mrb[0].mxu0
      %1165 = vmatprep.mubr.bf16.mxu0 0
      %1166 = vmatmul.mubr.bf16.gmra.mrb[0].mxu0 %v1062
      %v1167 = vpop.f32.mrb[0].mxu0
      %v1168 = vadd.f32 0.0, %v1167
      %v1169 = vpop.f32.mrb[0].mxu0
      %v1170 = vpop.f32.mrb[0].mxu0
      %v1171 = vadd.f32 0.0, %v1170
      %v1172 = vpop.f32.mrb[0].mxu0
      %1173 = vmatprep.mubr.bf16.mxu0 0
      %1174 = vmatmul.mubr.bf16.gmra.mrb[0].mxu0 %v1065
      %v1175 = vpop.f32.mrb[0].mxu0
      %v1176 = vadd.f32 0.0, %v1175
      %v1177 = vpop.f32.mrb[0].mxu0
      %v1178 = vpop.f32.mrb[0].mxu0
      %v1179 = vadd.f32 0.0, %v1178
      %v1180 = vpop.f32.mrb[0].mxu0
      %1181 = vmatprep.mubr.bf16.mxu0 0
      %1182 = vmatmul.mubr.bf16.gmra.mrb[0].mxu0 %v1068
      %v1183 = vpop.f32.mrb[0].mxu0
      %v1184 = vadd.f32 0.0, %v1183
      %v1185 = vpop.f32.mrb[0].mxu0
      %v1186 = vpop.f32.mrb[0].mxu0
      %v1187 = vadd.f32 0.0, %v1186
      %v1188 = vpop.f32.mrb[0].mxu0
      %1189 = vmatprep.mubr.bf16.mxu0 0
      %1190 = vmatmul.mubr.bf16.gmra.mrb[0].mxu0 %v1071
      %v1191 = vpop.f32.mrb[0].mxu0
      %v1192 = vadd.f32 0.0, %v1191
      %v1193 = vpop.f32.mrb[0].mxu0
      %v1194 = vpop.f32.mrb[0].mxu0
      %v1195 = vadd.f32 0.0, %v1194
      %v1196 = vpop.f32.mrb[0].mxu0
      %1197 = vmatprep.mubr.bf16.mxu0 0
      %1198 = vmatmul.mubr.bf16.gmra.mrb[0].mxu0 %v1074
      %v1199 = vpop.f32.mrb[0].mxu0
      %v1200 = vadd.f32 0.0, %v1199
      %v1201 = vpop.f32.mrb[0].mxu0
      %v1202 = vpop.f32.mrb[0].mxu0
      %v1203 = vadd.f32 0.0, %v1202
      %v1204 = vpop.f32.mrb[0].mxu0
      %1205 = vmatprep.mubr.bf16.mxu0 0
      %1206 = vmatmul.mubr.bf16.gmra.mrb[0].mxu0 %v1077
      %v1207 = vpop.f32.mrb[0].mxu0
      %v1208 = vadd.f32 0.0, %v1207
      %v1209 = vpop.f32.mrb[0].mxu0
      %v1210 = vpop.f32.mrb[0].mxu0
      %v1211 = vadd.f32 0.0, %v1210
      %v1212 = vpop.f32.mrb[0].mxu0
      %1213 = vmatprep.mubr.bf16.mxu0 0
      %1214 = vmatmul.mubr.bf16.gmra.mrb[0].mxu0 %v1080
      %v1215 = vpop.f32.mrb[0].mxu0
      %v1216 = vadd.f32 0.0, %v1215
      %v1217 = vpop.f32.mrb[0].mxu0
      %v1218 = vpop.f32.mrb[0].mxu0
      %v1219 = vadd.f32 0.0, %v1218
      %v1220 = vpop.f32.mrb[0].mxu0
      %1221 = vmatprep.mubr.bf16.mxu0 0
      %1222 = vmatmul.mubr.bf16.gmra.mrb[0].mxu0 %v1083
      %v1223 = vpop.f32.mrb[0].mxu0
      %v1224 = vadd.f32 0.0, %v1223
      %v1225 = vpop.f32.mrb[0].mxu0
      %v1226 = vpop.f32.mrb[0].mxu0
      %v1227 = vadd.f32 0.0, %v1226
      %v1228 = vpop.f32.mrb[0].mxu0
      %1229 = vmatprep.mubr.bf16.mxu0 0
      %1230 = vmatmul.mubr.bf16.gmra.mrb[0].mxu0 %v1086
      %v1231 = vpop.f32.mrb[0].mxu0
      %v1232 = vadd.f32 0.0, %v1231
      %v1233 = vpop.f32.mrb[0].mxu0
      %v1234 = vpop.f32.mrb[0].mxu0
      %v1235 = vadd.f32 0.0, %v1234
      %v1236 = vpop.f32.mrb[0].mxu0
      %1237 = vmatprep.mubr.bf16.mxu0 0
      %1238 = vmatmul.mubr.bf16.gmra.mrb[0].mxu0 %v1089
      %v1239 = vpop.f32.mrb[0].mxu0
      %v1240 = vadd.f32 0.0, %v1239
      %v1241 = vpop.f32.mrb[0].mxu0
      %v1242 = vpop.f32.mrb[0].mxu0
      %v1243 = vadd.f32 0.0, %v1242
      %v1244 = vpop.f32.mrb[0].mxu0
      %1245 = vmatprep.mubr.bf16.mxu0 0
      %1246 = vmatmul.mubr.bf16.gmra.mrb[0].mxu0 %v1092
      %v1247 = vpop.f32.mrb[0].mxu0
      %v1248 = vadd.f32 0.0, %v1247
      %v1249 = vpop.f32.mrb[0].mxu0
      %v1250 = vpop.f32.mrb[0].mxu0
      %v1251 = vadd.f32 0.0, %v1250
      %v1252 = vpop.f32.mrb[0].mxu0
      %1253 = vmatprep.mubr.bf16.mxu0 0
      %1254 = vmatmul.mubr.bf16.gmra.mrb[0].mxu0 %v1095
      %v1255 = vpop.f32.mrb[0].mxu0
      %v1256 = vadd.f32 0.0, %v1255
      %v1257 = vpop.f32.mrb[0].mxu0
      %v1258 = vpop.f32.mrb[0].mxu0
      %v1259 = vadd.f32 0.0, %v1258
      %v1260 = vpop.f32.mrb[0].mxu0
      %1261 = vmatprep.mubr.bf16.mxu0 0
      %1262 = vmatmul.mubr.bf16.gmra.mrb[0].mxu0 %v1098
      %v1263 = vpop.f32.mrb[0].mxu0
      %v1264 = vadd.f32 0.0, %v1263
      %v1265 = vpop.f32.mrb[0].mxu0
      %v1266 = vpop.f32.mrb[0].mxu0
      %v1267 = vadd.f32 0.0, %v1266
      %v1268 = vpop.f32.mrb[0].mxu0
      %1269 = vmatprep.mubr.bf16.mxu0 0
      %1270 = vmatmul.mubr.bf16.gmra.mrb[0].mxu0 %v1101
      %v1271 = vpop.f32.mrb[0].mxu0
      %v1272 = vadd.f32 0.0, %v1271
      %v1273 = vpop.f32.mrb[0].mxu0
      %v1274 = vpop.f32.mrb[0].mxu0
      %v1275 = vadd.f32 0.0, %v1274
      %v1276 = vpop.f32.mrb[0].mxu0
      %1277 = vmatprep.mubr.bf16.mxu0 0
      %1278 = vmatmul.mubr.bf16.gmra.mrb[0].mxu0 %v1104
      %v1279 = vpop.f32.mrb[0].mxu0
      %v1280 = vadd.f32 0.0, %v1279
      %v1281 = vpop.f32.mrb[0].mxu0
      %v1282 = vpop.f32.mrb[0].mxu0
      %v1283 = vadd.f32 0.0, %v1282
      %v1284 = vpop.f32.mrb[0].mxu0
      %1285 = vdwg.mxu0
      %v1286 = vadd.f32 %v872, %v1144
      %v1287 = vadd.f32 %v875, %v1147
      %v1288 = vadd.f32 %v880, %v1152
      %v1289 = vadd.f32 %v883, %v1155
      %v1290 = vadd.f32 %v888, %v1160
      %v1291 = vadd.f32 %v891, %v1163
      %v1292 = vadd.f32 %v896, %v1168
      %v1293 = vadd.f32 %v899, %v1171
      %v1294 = vadd.f32 %v904, %v1176
      %v1295 = vadd.f32 %v907, %v1179
      %v1296 = vadd.f32 %v912, %v1184
      %v1297 = vadd.f32 %v915, %v1187
      %v1298 = vadd.f32 %v920, %v1192
      %v1299 = vadd.f32 %v923, %v1195
      %v1300 = vadd.f32 %v928, %v1200
      %v1301 = vadd.f32 %v931, %v1203
      %v1302 = vadd.f32 %v936, %v1208
      %v1303 = vadd.f32 %v939, %v1211
      %v1304 = vadd.f32 %v944, %v1216
      %v1305 = vadd.f32 %v947, %v1219
      %v1306 = vadd.f32 %v952, %v1224
      %v1307 = vadd.f32 %v955, %v1227
      %v1308 = vadd.f32 %v960, %v1232
      %v1309 = vadd.f32 %v963, %v1235
      %v1310 = vadd.f32 %v968, %v1240
      %v1311 = vadd.f32 %v971, %v1243
      %v1312 = vadd.f32 %v976, %v1248
      %v1313 = vadd.f32 %v979, %v1251
      %v1314 = vadd.f32 %v984, %v1256
      %v1315 = vadd.f32 %v987, %v1259
      %v1316 = vadd.f32 %v992, %v1264
      %v1317 = vadd.f32 %v995, %v1267
      %v1318 = vadd.f32 %v1000, %v1272
      %v1319 = vadd.f32 %v1003, %v1275
      %v1320 = vadd.f32 %v1008, %v1280
      %v1321 = vadd.f32 %v1011, %v1283
      %v1324 = vunpack.c.l.b16 %v307
      %v1325 = vunpack.c.l.b16 %v308
      %v1326 = vpack.c.b16 %v1324, %v389
      %v1327 = vpack.c.b16 %v1325, %v1325
      %v1328 = vrot.slane %v1326, 1
      %v1329 = vsel %vm1014, %v1048, %v1328
      %v1330 = vrot.slane %v1327, 1
      %v1331 = vsel %vm1014, %v1328, %v1330
      %v1333 = vunpack.c.l.b16 %v312
      %v1334 = vpack.c.b16 %v1333, %v1333
      %v1335 = vrot.slane %v1334, 2
      %v1337 = vsel %vm562, %v1329, 0
      %v1340 = vsel %vm562, %v1331, 0
      %v1343 = vsel %vm617, %v1335, 0
      %1345 = vmatprep.subr.bf16.mxu0 0
      %1346 = vmatpush1.bf16.msra.mxu0 %v1343
      %1347 = vmatprep.subr.bf16.mxu0 0
      %1348 = vmatpush1.bf16.msra.mxu0 0
      %1349 = vmatprep.subr.bf16.mxu0 0
      %1350 = vmatpush1.bf16.msra.mxu0 0
      %1351 = vmatprep.subr.bf16.mxu0 0
      %1352 = vmatpush1.bf16.msra.mxu0 0
      %1353 = vmatprep.subr.bf16.mxu0 0
      %1354 = vmatpush1.bf16.msra.mxu0 0
      %1355 = vmatprep.subr.bf16.mxu0 0
      %1356 = vmatpush1.bf16.msra.mxu0 0
      %1357 = vmatprep.subr.bf16.mxu0 0
      %1358 = vmatpush1.bf16.msra.mxu0 0
      %1359 = vmatprep.subr.bf16.mxu0 0
      %1360 = vmatpush1.bf16.msra.mxu0 0
      %1361 = vmatprep.subr.bf16.mxu0 0
      %1362 = vmatpush1.bf16.msra.mxu0 0
      %1363 = vmatprep.subr.bf16.mxu0 0
      %1364 = vmatpush1.bf16.msra.mxu0 0
      %1365 = vmatprep.subr.bf16.mxu0 0
      %1366 = vmatpush1.bf16.msra.mxu0 0
      %1367 = vmatprep.subr.bf16.mxu0 0
      %1368 = vmatpush1.bf16.msra.mxu0 0
      %1369 = vmatprep.subr.bf16.mxu0 0
      %1370 = vmatpush1.bf16.msra.mxu0 0
      %1371 = vmatprep.subr.bf16.mxu0 0
      %1372 = vmatpush1.bf16.msra.mxu0 0
      %1373 = vmatprep.subr.bf16.mxu0 0
      %1374 = vmatpush1.bf16.msra.mxu0 0
      %1375 = vmatprep.subr.bf16.mxu0 0
      %1376 = vmatpush1.bf16.msra.mxu0 0
      %1377 = vmatprep.mubr.bf16.mxu0 0
      %1378 = vmatmul.mubr.bf16.gmra.mrb[0].mxu0 %v1056
      %v1379 = vpop.f32.mrb[0].mxu0
      %v1380 = vadd.f32 0.0, %v1379
      %v1381 = vpop.f32.mrb[0].mxu0
      %v1382 = vpop.f32.mrb[0].mxu0
      %v1383 = vadd.f32 0.0, %v1382
      %v1384 = vpop.f32.mrb[0].mxu0
      %1385 = vmatprep.mubr.bf16.mxu0 0
      %1386 = vmatmul.mubr.bf16.gmra.mrb[0].mxu0 %v1059
      %v1387 = vpop.f32.mrb[0].mxu0
      %v1388 = vadd.f32 0.0, %v1387
      %v1389 = vpop.f32.mrb[0].mxu0
      %v1390 = vpop.f32.mrb[0].mxu0
      %v1391 = vadd.f32 0.0, %v1390
      %v1392 = vpop.f32.mrb[0].mxu0
      %1393 = vmatprep.mubr.bf16.mxu0 0
      %1394 = vmatmul.mubr.bf16.gmra.mrb[0].mxu0 %v1062
      %v1395 = vpop.f32.mrb[0].mxu0
      %v1396 = vadd.f32 0.0, %v1395
      %v1397 = vpop.f32.mrb[0].mxu0
      %v1398 = vpop.f32.mrb[0].mxu0
      %v1399 = vadd.f32 0.0, %v1398
      %v1400 = vpop.f32.mrb[0].mxu0
      %1401 = vmatprep.mubr.bf16.mxu0 0
      %1402 = vmatmul.mubr.bf16.gmra.mrb[0].mxu0 %v1065
      %v1403 = vpop.f32.mrb[0].mxu0
      %v1404 = vadd.f32 0.0, %v1403
      %v1405 = vpop.f32.mrb[0].mxu0
      %v1406 = vpop.f32.mrb[0].mxu0
      %v1407 = vadd.f32 0.0, %v1406
      %v1408 = vpop.f32.mrb[0].mxu0
      %1409 = vmatprep.mubr.bf16.mxu0 0
      %1410 = vmatmul.mubr.bf16.gmra.mrb[0].mxu0 %v1068
      %v1411 = vpop.f32.mrb[0].mxu0
      %v1412 = vadd.f32 0.0, %v1411
      %v1413 = vpop.f32.mrb[0].mxu0
      %v1414 = vpop.f32.mrb[0].mxu0
      %v1415 = vadd.f32 0.0, %v1414
      %v1416 = vpop.f32.mrb[0].mxu0
      %1417 = vmatprep.mubr.bf16.mxu0 0
      %1418 = vmatmul.mubr.bf16.gmra.mrb[0].mxu0 %v1071
      %v1419 = vpop.f32.mrb[0].mxu0
      %v1420 = vadd.f32 0.0, %v1419
      %v1421 = vpop.f32.mrb[0].mxu0
      %v1422 = vpop.f32.mrb[0].mxu0
      %v1423 = vadd.f32 0.0, %v1422
      %v1424 = vpop.f32.mrb[0].mxu0
      %1425 = vmatprep.mubr.bf16.mxu0 0
      %1426 = vmatmul.mubr.bf16.gmra.mrb[0].mxu0 %v1074
      %v1427 = vpop.f32.mrb[0].mxu0
      %v1428 = vadd.f32 0.0, %v1427
      %v1429 = vpop.f32.mrb[0].mxu0
      %v1430 = vpop.f32.mrb[0].mxu0
      %v1431 = vadd.f32 0.0, %v1430
      %v1432 = vpop.f32.mrb[0].mxu0
      %1433 = vmatprep.mubr.bf16.mxu0 0
      %1434 = vmatmul.mubr.bf16.gmra.mrb[0].mxu0 %v1077
      %v1435 = vpop.f32.mrb[0].mxu0
      %v1436 = vadd.f32 0.0, %v1435
      %v1437 = vpop.f32.mrb[0].mxu0
      %v1438 = vpop.f32.mrb[0].mxu0
      %v1439 = vadd.f32 0.0, %v1438
      %v1440 = vpop.f32.mrb[0].mxu0
      %1441 = vmatprep.mubr.bf16.mxu0 0
      %1442 = vmatmul.mubr.bf16.gmra.mrb[0].mxu0 %v1080
      %v1443 = vpop.f32.mrb[0].mxu0
      %v1444 = vadd.f32 0.0, %v1443
      %v1445 = vpop.f32.mrb[0].mxu0
      %v1446 = vpop.f32.mrb[0].mxu0
      %v1447 = vadd.f32 0.0, %v1446
      %v1448 = vpop.f32.mrb[0].mxu0
      %1449 = vmatprep.mubr.bf16.mxu0 0
      %1450 = vmatmul.mubr.bf16.gmra.mrb[0].mxu0 %v1083
      %v1451 = vpop.f32.mrb[0].mxu0
      %v1452 = vadd.f32 0.0, %v1451
      %v1453 = vpop.f32.mrb[0].mxu0
      %v1454 = vpop.f32.mrb[0].mxu0
      %v1455 = vadd.f32 0.0, %v1454
      %v1456 = vpop.f32.mrb[0].mxu0
      %1457 = vmatprep.mubr.bf16.mxu0 0
      %1458 = vmatmul.mubr.bf16.gmra.mrb[0].mxu0 %v1086
      %v1459 = vpop.f32.mrb[0].mxu0
      %v1460 = vadd.f32 0.0, %v1459
      %v1461 = vpop.f32.mrb[0].mxu0
      %v1462 = vpop.f32.mrb[0].mxu0
      %v1463 = vadd.f32 0.0, %v1462
      %v1464 = vpop.f32.mrb[0].mxu0
      %1465 = vmatprep.mubr.bf16.mxu0 0
      %1466 = vmatmul.mubr.bf16.gmra.mrb[0].mxu0 %v1089
      %v1467 = vpop.f32.mrb[0].mxu0
      %v1468 = vadd.f32 0.0, %v1467
      %v1469 = vpop.f32.mrb[0].mxu0
      %v1470 = vpop.f32.mrb[0].mxu0
      %v1471 = vadd.f32 0.0, %v1470
      %v1472 = vpop.f32.mrb[0].mxu0
      %1473 = vmatprep.mubr.bf16.mxu0 0
      %1474 = vmatmul.mubr.bf16.gmra.mrb[0].mxu0 %v1092
      %v1475 = vpop.f32.mrb[0].mxu0
      %v1476 = vadd.f32 0.0, %v1475
      %v1477 = vpop.f32.mrb[0].mxu0
      %v1478 = vpop.f32.mrb[0].mxu0
      %v1479 = vadd.f32 0.0, %v1478
      %v1480 = vpop.f32.mrb[0].mxu0
      %1481 = vmatprep.mubr.bf16.mxu0 0
      %1482 = vmatmul.mubr.bf16.gmra.mrb[0].mxu0 %v1095
      %v1483 = vpop.f32.mrb[0].mxu0
      %v1484 = vadd.f32 0.0, %v1483
      %v1485 = vpop.f32.mrb[0].mxu0
      %v1486 = vpop.f32.mrb[0].mxu0
      %v1487 = vadd.f32 0.0, %v1486
      %v1488 = vpop.f32.mrb[0].mxu0
      %1489 = vmatprep.mubr.bf16.mxu0 0
      %1490 = vmatmul.mubr.bf16.gmra.mrb[0].mxu0 %v1098
      %v1491 = vpop.f32.mrb[0].mxu0
      %v1492 = vadd.f32 0.0, %v1491
      %v1493 = vpop.f32.mrb[0].mxu0
      %v1494 = vpop.f32.mrb[0].mxu0
      %v1495 = vadd.f32 0.0, %v1494
      %v1496 = vpop.f32.mrb[0].mxu0
      %1497 = vmatprep.mubr.bf16.mxu0 0
      %1498 = vmatmul.mubr.bf16.gmra.mrb[0].mxu0 %v1101
      %v1499 = vpop.f32.mrb[0].mxu0
      %v1500 = vadd.f32 0.0, %v1499
      %v1501 = vpop.f32.mrb[0].mxu0
      %v1502 = vpop.f32.mrb[0].mxu0
      %v1503 = vadd.f32 0.0, %v1502
      %v1504 = vpop.f32.mrb[0].mxu0
      %1505 = vmatprep.mubr.bf16.mxu0 0
      %1506 = vmatmul.mubr.bf16.gmra.mrb[0].mxu0 %v1337
      %v1507 = vpop.f32.mrb[0].mxu0
      %v1508 = vadd.f32 0.0, %v1507
      %v1509 = vpop.f32.mrb[0].mxu0
      %v1510 = vpop.f32.mrb[0].mxu0
      %v1511 = vadd.f32 0.0, %v1510
      %v1512 = vpop.f32.mrb[0].mxu0
      %1513 = vmatprep.mubr.bf16.mxu0 0
      %1514 = vmatmul.mubr.bf16.gmra.mrb[0].mxu0 %v1340
      %v1515 = vpop.f32.mrb[0].mxu0
      %v1516 = vadd.f32 0.0, %v1515
      %v1517 = vpop.f32.mrb[0].mxu0
      %v1518 = vpop.f32.mrb[0].mxu0
      %v1519 = vadd.f32 0.0, %v1518
      %v1520 = vpop.f32.mrb[0].mxu0
      %1521 = vdwg.mxu0
      %v1522 = vadd.f32 %v1286, %v1380
      %v1523 = vadd.f32 %v1287, %v1383
      %v1524 = vadd.f32 %v1288, %v1388
      %v1525 = vadd.f32 %v1289, %v1391
      %v1526 = vadd.f32 %v1290, %v1396
      %v1527 = vadd.f32 %v1291, %v1399
      %v1528 = vadd.f32 %v1292, %v1404
      %v1529 = vadd.f32 %v1293, %v1407
      %v1530 = vadd.f32 %v1294, %v1412
      %v1531 = vadd.f32 %v1295, %v1415
      %v1532 = vadd.f32 %v1296, %v1420
      %v1533 = vadd.f32 %v1297, %v1423
      %v1534 = vadd.f32 %v1298, %v1428
      %v1535 = vadd.f32 %v1299, %v1431
      %v1536 = vadd.f32 %v1300, %v1436
      %v1537 = vadd.f32 %v1301, %v1439
      %v1538 = vadd.f32 %v1302, %v1444
      %v1539 = vadd.f32 %v1303, %v1447
      %v1540 = vadd.f32 %v1304, %v1452
      %v1541 = vadd.f32 %v1305, %v1455
      %v1542 = vadd.f32 %v1306, %v1460
      %v1543 = vadd.f32 %v1307, %v1463
      %v1544 = vadd.f32 %v1308, %v1468
      %v1545 = vadd.f32 %v1309, %v1471
      %v1546 = vadd.f32 %v1310, %v1476
      %v1547 = vadd.f32 %v1311, %v1479
      %v1548 = vadd.f32 %v1312, %v1484
      %v1549 = vadd.f32 %v1313, %v1487
      %v1550 = vadd.f32 %v1314, %v1492
      %v1551 = vadd.f32 %v1315, %v1495
      %v1552 = vadd.f32 %v1316, %v1500
      %v1553 = vadd.f32 %v1317, %v1503
      %v1554 = vadd.f32 %v1318, %v1508
      %v1555 = vadd.f32 %v1319, %v1511
      %v1556 = vadd.f32 %v1320, %v1516
      %v1557 = vadd.f32 %v1321, %v1519
      %vm1558 = vsmask.f32 6400
      %v1559 = vrot.slane %v422, 1
      %v1560 = vrot.slane %v418, 2
      %v1561 = vor.u32 %v1559, %v1560
      %v1562 = vrot.slane %v430, 1
      %v1563 = vrot.slane %v426, 2
      %v1564 = vor.u32 %v1562, %v1563
      %v1565 = vsel %vm1558, %v1561, %v1564
      %v1566 = vrot.slane %v438, 1
      %v1567 = vrot.slane %v434, 2
      %v1568 = vor.u32 %v1566, %v1567
      %v1569 = vsel %vm1558, %v1564, %v1568
      %v1570 = vrot.slane %v446, 1
      %v1571 = vrot.slane %v442, 2
      %v1572 = vor.u32 %v1570, %v1571
      %v1573 = vsel %vm1558, %v1568, %v1572
      %v1574 = vrot.slane %v454, 1
      %v1575 = vrot.slane %v450, 2
      %v1576 = vor.u32 %v1574, %v1575
      %v1577 = vsel %vm1558, %v1572, %v1576
      %v1578 = vrot.slane %v462, 1
      %v1579 = vrot.slane %v458, 2
      %v1580 = vor.u32 %v1578, %v1579
      %v1581 = vsel %vm1558, %v1576, %v1580
      %v1582 = vrot.slane %v470, 1
      %v1583 = vrot.slane %v466, 2
      %v1584 = vor.u32 %v1582, %v1583
      %v1585 = vsel %vm1558, %v1580, %v1584
      %v1586 = vrot.slane %v478, 1
      %v1587 = vrot.slane %v474, 2
      %v1588 = vor.u32 %v1586, %v1587
      %v1589 = vsel %vm1558, %v1584, %v1588
      %v1590 = vrot.slane %v486, 1
      %v1591 = vrot.slane %v482, 2
      %v1592 = vor.u32 %v1590, %v1591
      %v1593 = vsel %vm1558, %v1588, %v1592
      %v1594 = vrot.slane %v494, 1
      %v1595 = vrot.slane %v490, 2
      %v1596 = vor.u32 %v1594, %v1595
      %v1597 = vsel %vm1558, %v1592, %v1596
      %v1598 = vrot.slane %v502, 1
      %v1599 = vrot.slane %v498, 2
      %v1600 = vor.u32 %v1598, %v1599
      %v1601 = vsel %vm1558, %v1596, %v1600
      %v1602 = vrot.slane %v510, 1
      %v1603 = vrot.slane %v506, 2
      %v1604 = vor.u32 %v1602, %v1603
      %v1605 = vsel %vm1558, %v1600, %v1604
      %v1606 = vrot.slane %v518, 1
      %v1607 = vrot.slane %v514, 2
      %v1608 = vor.u32 %v1606, %v1607
      %v1609 = vsel %vm1558, %v1604, %v1608
      %v1610 = vrot.slane %v526, 1
      %v1611 = vrot.slane %v522, 2
      %v1612 = vor.u32 %v1610, %v1611
      %v1613 = vsel %vm1558, %v1608, %v1612
      %v1614 = vrot.slane %v534, 1
      %v1615 = vrot.slane %v530, 2
      %v1616 = vor.u32 %v1614, %v1615
      %v1617 = vsel %vm1558, %v1612, %v1616
      %v1618 = vrot.slane %v542, 1
      %v1619 = vrot.slane %v538, 2
      %v1620 = vor.u32 %v1618, %v1619
      %v1621 = vsel %vm1558, %v1616, %v1620
      %v1622 = vrot.slane %v550, 1
      %v1623 = vrot.slane %v546, 2
      %v1624 = vor.u32 %v1622, %v1623
      %v1625 = vsel %vm1558, %v1620, %v1624
      %v1627 = vshrl.u32 %v1326, 16
      %v1629 = vrot.slane %v1627, 1
      %v1630 = vshll.u32 %v1326, 16
      %v1632 = vrot.slane %v1630, 2
      %v1633 = vor.u32 %v1629, %v1632
      %v1634 = vsel %vm1558, %v1624, %v1633
      %v1636 = vshrl.u32 %v1327, 16
      %v1638 = vrot.slane %v1636, 1
      %v1639 = vshll.u32 %v1327, 16
      %v1641 = vrot.slane %v1639, 2
      %v1642 = vor.u32 %v1638, %v1641
      %v1643 = vsel %vm1558, %v1633, %v1642
      %v1645 = vsel %vm562, %v1565, 0
      %v1648 = vsel %vm562, %v1569, 0
      %v1651 = vsel %vm562, %v1573, 0
      %v1654 = vsel %vm562, %v1577, 0
      %v1657 = vsel %vm562, %v1581, 0
      %v1660 = vsel %vm562, %v1585, 0
      %v1663 = vsel %vm562, %v1589, 0
      %v1666 = vsel %vm562, %v1593, 0
      %v1669 = vsel %vm562, %v1597, 0
      %v1672 = vsel %vm562, %v1601, 0
      %v1675 = vsel %vm562, %v1605, 0
      %v1678 = vsel %vm562, %v1609, 0
      %v1681 = vsel %vm562, %v1613, 0
      %v1684 = vsel %vm562, %v1617, 0
      %v1687 = vsel %vm562, %v1621, 0
      %v1690 = vsel %vm562, %v1625, 0
      %v1693 = vsel %vm562, %v1634, 0
      %v1696 = vsel %vm562, %v1643, 0
      %v1699 = vsel %vm617, %v313, 0
      %1701 = vmatprep.subr.bf16.mxu0 0
      %1702 = vmatpush1.bf16.msra.mxu0 %v1699
      %1703 = vmatprep.subr.bf16.mxu0 0
      %1704 = vmatpush1.bf16.msra.mxu0 0
      %1705 = vmatprep.subr.bf16.mxu0 0
      %1706 = vmatpush1.bf16.msra.mxu0 0
      %1707 = vmatprep.subr.bf16.mxu0 0
      %1708 = vmatpush1.bf16.msra.mxu0 0
      %1709 = vmatprep.subr.bf16.mxu0 0
      %1710 = vmatpush1.bf16.msra.mxu0 0
      %1711 = vmatprep.subr.bf16.mxu0 0
      %1712 = vmatpush1.bf16.msra.mxu0 0
      %1713 = vmatprep.subr.bf16.mxu0 0
      %1714 = vmatpush1.bf16.msra.mxu0 0
      %1715 = vmatprep.subr.bf16.mxu0 0
      %1716 = vmatpush1.bf16.msra.mxu0 0
      %1717 = vmatprep.subr.bf16.mxu0 0
      %1718 = vmatpush1.bf16.msra.mxu0 0
      %1719 = vmatprep.subr.bf16.mxu0 0
      %1720 = vmatpush1.bf16.msra.mxu0 0
      %1721 = vmatprep.subr.bf16.mxu0 0
      %1722 = vmatpush1.bf16.msra.mxu0 0
      %1723 = vmatprep.subr.bf16.mxu0 0
      %1724 = vmatpush1.bf16.msra.mxu0 0
      %1725 = vmatprep.subr.bf16.mxu0 0
      %1726 = vmatpush1.bf16.msra.mxu0 0
      %1727 = vmatprep.subr.bf16.mxu0 0
      %1728 = vmatpush1.bf16.msra.mxu0 0
      %1729 = vmatprep.subr.bf16.mxu0 0
      %1730 = vmatpush1.bf16.msra.mxu0 0
      %1731 = vmatprep.subr.bf16.mxu0 0
      %1732 = vmatpush1.bf16.msra.mxu0 0
      %1733 = vmatprep.mubr.bf16.mxu0 0
      %1734 = vmatmul.mubr.bf16.gmra.mrb[0].mxu0 %v1645
      %v1735 = vpop.f32.mrb[0].mxu0
      %v1736 = vadd.f32 0.0, %v1735
      %v1737 = vpop.f32.mrb[0].mxu0
      %v1738 = vpop.f32.mrb[0].mxu0
      %v1739 = vadd.f32 0.0, %v1738
      %v1740 = vpop.f32.mrb[0].mxu0
      %1741 = vmatprep.mubr.bf16.mxu0 0
      %1742 = vmatmul.mubr.bf16.gmra.mrb[0].mxu0 %v1648
      %v1743 = vpop.f32.mrb[0].mxu0
      %v1744 = vadd.f32 0.0, %v1743
      %v1745 = vpop.f32.mrb[0].mxu0
      %v1746 = vpop.f32.mrb[0].mxu0
      %v1747 = vadd.f32 0.0, %v1746
      %v1748 = vpop.f32.mrb[0].mxu0
      %1749 = vmatprep.mubr.bf16.mxu0 0
      %1750 = vmatmul.mubr.bf16.gmra.mrb[0].mxu0 %v1651
      %v1751 = vpop.f32.mrb[0].mxu0
      %v1752 = vadd.f32 0.0, %v1751
      %v1753 = vpop.f32.mrb[0].mxu0
      %v1754 = vpop.f32.mrb[0].mxu0
      %v1755 = vadd.f32 0.0, %v1754
      %v1756 = vpop.f32.mrb[0].mxu0
      %1757 = vmatprep.mubr.bf16.mxu0 0
      %1758 = vmatmul.mubr.bf16.gmra.mrb[0].mxu0 %v1654
      %v1759 = vpop.f32.mrb[0].mxu0
      %v1760 = vadd.f32 0.0, %v1759
      %v1761 = vpop.f32.mrb[0].mxu0
      %v1762 = vpop.f32.mrb[0].mxu0
      %v1763 = vadd.f32 0.0, %v1762
      %v1764 = vpop.f32.mrb[0].mxu0
      %1765 = vmatprep.mubr.bf16.mxu0 0
      %1766 = vmatmul.mubr.bf16.gmra.mrb[0].mxu0 %v1657
      %v1767 = vpop.f32.mrb[0].mxu0
      %v1768 = vadd.f32 0.0, %v1767
      %v1769 = vpop.f32.mrb[0].mxu0
      %v1770 = vpop.f32.mrb[0].mxu0
      %v1771 = vadd.f32 0.0, %v1770
      %v1772 = vpop.f32.mrb[0].mxu0
      %1773 = vmatprep.mubr.bf16.mxu0 0
      %1774 = vmatmul.mubr.bf16.gmra.mrb[0].mxu0 %v1660
      %v1775 = vpop.f32.mrb[0].mxu0
      %v1776 = vadd.f32 0.0, %v1775
      %v1777 = vpop.f32.mrb[0].mxu0
      %v1778 = vpop.f32.mrb[0].mxu0
      %v1779 = vadd.f32 0.0, %v1778
      %v1780 = vpop.f32.mrb[0].mxu0
      %1781 = vmatprep.mubr.bf16.mxu0 0
      %1782 = vmatmul.mubr.bf16.gmra.mrb[0].mxu0 %v1663
      %v1783 = vpop.f32.mrb[0].mxu0
      %v1784 = vadd.f32 0.0, %v1783
      %v1785 = vpop.f32.mrb[0].mxu0
      %v1786 = vpop.f32.mrb[0].mxu0
      %v1787 = vadd.f32 0.0, %v1786
      %v1788 = vpop.f32.mrb[0].mxu0
      %1789 = vmatprep.mubr.bf16.mxu0 0
      %1790 = vmatmul.mubr.bf16.gmra.mrb[0].mxu0 %v1666
      %v1791 = vpop.f32.mrb[0].mxu0
      %v1792 = vadd.f32 0.0, %v1791
      %v1793 = vpop.f32.mrb[0].mxu0
      %v1794 = vpop.f32.mrb[0].mxu0
      %v1795 = vadd.f32 0.0, %v1794
      %v1796 = vpop.f32.mrb[0].mxu0
      %1797 = vmatprep.mubr.bf16.mxu0 0
      %1798 = vmatmul.mubr.bf16.gmra.mrb[0].mxu0 %v1669
      %v1799 = vpop.f32.mrb[0].mxu0
      %v1800 = vadd.f32 0.0, %v1799
      %v1801 = vpop.f32.mrb[0].mxu0
      %v1802 = vpop.f32.mrb[0].mxu0
      %v1803 = vadd.f32 0.0, %v1802
      %v1804 = vpop.f32.mrb[0].mxu0
      %1805 = vmatprep.mubr.bf16.mxu0 0
      %1806 = vmatmul.mubr.bf16.gmra.mrb[0].mxu0 %v1672
      %v1807 = vpop.f32.mrb[0].mxu0
      %v1808 = vadd.f32 0.0, %v1807
      %v1809 = vpop.f32.mrb[0].mxu0
      %v1810 = vpop.f32.mrb[0].mxu0
      %v1811 = vadd.f32 0.0, %v1810
      %v1812 = vpop.f32.mrb[0].mxu0
      %1813 = vmatprep.mubr.bf16.mxu0 0
      %1814 = vmatmul.mubr.bf16.gmra.mrb[0].mxu0 %v1675
      %v1815 = vpop.f32.mrb[0].mxu0
      %v1816 = vadd.f32 0.0, %v1815
      %v1817 = vpop.f32.mrb[0].mxu0
      %v1818 = vpop.f32.mrb[0].mxu0
      %v1819 = vadd.f32 0.0, %v1818
      %v1820 = vpop.f32.mrb[0].mxu0
      %1821 = vmatprep.mubr.bf16.mxu0 0
      %1822 = vmatmul.mubr.bf16.gmra.mrb[0].mxu0 %v1678
      %v1823 = vpop.f32.mrb[0].mxu0
      %v1824 = vadd.f32 0.0, %v1823
      %v1825 = vpop.f32.mrb[0].mxu0
      %v1826 = vpop.f32.mrb[0].mxu0
      %v1827 = vadd.f32 0.0, %v1826
      %v1828 = vpop.f32.mrb[0].mxu0
      %1829 = vmatprep.mubr.bf16.mxu0 0
      %1830 = vmatmul.mubr.bf16.gmra.mrb[0].mxu0 %v1681
      %v1831 = vpop.f32.mrb[0].mxu0
      %v1832 = vadd.f32 0.0, %v1831
      %v1833 = vpop.f32.mrb[0].mxu0
      %v1834 = vpop.f32.mrb[0].mxu0
      %v1835 = vadd.f32 0.0, %v1834
      %v1836 = vpop.f32.mrb[0].mxu0
      %1837 = vmatprep.mubr.bf16.mxu0 0
      %1838 = vmatmul.mubr.bf16.gmra.mrb[0].mxu0 %v1684
      %v1839 = vpop.f32.mrb[0].mxu0
      %v1840 = vadd.f32 0.0, %v1839
      %v1841 = vpop.f32.mrb[0].mxu0
      %v1842 = vpop.f32.mrb[0].mxu0
      %v1843 = vadd.f32 0.0, %v1842
      %v1844 = vpop.f32.mrb[0].mxu0
      %1845 = vmatprep.mubr.bf16.mxu0 0
      %1846 = vmatmul.mubr.bf16.gmra.mrb[0].mxu0 %v1687
      %v1847 = vpop.f32.mrb[0].mxu0
      %v1848 = vadd.f32 0.0, %v1847
      %v1849 = vpop.f32.mrb[0].mxu0
      %v1850 = vpop.f32.mrb[0].mxu0
      %v1851 = vadd.f32 0.0, %v1850
      %v1852 = vpop.f32.mrb[0].mxu0
      %1853 = vmatprep.mubr.bf16.mxu0 0
      %1854 = vmatmul.mubr.bf16.gmra.mrb[0].mxu0 %v1690
      %v1855 = vpop.f32.mrb[0].mxu0
      %v1856 = vadd.f32 0.0, %v1855
      %v1857 = vpop.f32.mrb[0].mxu0
      %v1858 = vpop.f32.mrb[0].mxu0
      %v1859 = vadd.f32 0.0, %v1858
      %v1860 = vpop.f32.mrb[0].mxu0
      %1861 = vmatprep.mubr.bf16.mxu0 0
      %1862 = vmatmul.mubr.bf16.gmra.mrb[0].mxu0 %v1693
      %v1863 = vpop.f32.mrb[0].mxu0
      %v1864 = vadd.f32 0.0, %v1863
      %v1865 = vpop.f32.mrb[0].mxu0
      %v1866 = vpop.f32.mrb[0].mxu0
      %v1867 = vadd.f32 0.0, %v1866
      %v1868 = vpop.f32.mrb[0].mxu0
      %1869 = vmatprep.mubr.bf16.mxu0 0
      %1870 = vmatmul.mubr.bf16.gmra.mrb[0].mxu0 %v1696
      %v1871 = vpop.f32.mrb[0].mxu0
      %v1872 = vadd.f32 0.0, %v1871
      %v1873 = vpop.f32.mrb[0].mxu0
      %v1874 = vpop.f32.mrb[0].mxu0
      %v1875 = vadd.f32 0.0, %v1874
      %v1876 = vpop.f32.mrb[0].mxu0
      %1877 = vdwg.mxu0
      %v1878 = vadd.f32 %v1522, %v1736
      %v1879 = vadd.f32 %v1523, %v1739
      %v1880 = vadd.f32 %v1524, %v1744
      %v1881 = vadd.f32 %v1525, %v1747
      %v1882 = vadd.f32 %v1526, %v1752
      %v1883 = vadd.f32 %v1527, %v1755
      %v1884 = vadd.f32 %v1528, %v1760
      %v1885 = vadd.f32 %v1529, %v1763
      %v1886 = vadd.f32 %v1530, %v1768
      %v1887 = vadd.f32 %v1531, %v1771
      %v1888 = vadd.f32 %v1532, %v1776
      %v1889 = vadd.f32 %v1533, %v1779
      %v1890 = vadd.f32 %v1534, %v1784
      %v1891 = vadd.f32 %v1535, %v1787
      %v1892 = vadd.f32 %v1536, %v1792
      %v1893 = vadd.f32 %v1537, %v1795
      %v1894 = vadd.f32 %v1538, %v1800
      %v1895 = vadd.f32 %v1539, %v1803
      %v1896 = vadd.f32 %v1540, %v1808
      %v1897 = vadd.f32 %v1541, %v1811
      %v1898 = vadd.f32 %v1542, %v1816
      %v1899 = vadd.f32 %v1543, %v1819
      %v1900 = vadd.f32 %v1544, %v1824
      %v1901 = vadd.f32 %v1545, %v1827
      %v1902 = vadd.f32 %v1546, %v1832
      %v1903 = vadd.f32 %v1547, %v1835
      %v1904 = vadd.f32 %v1548, %v1840
      %v1905 = vadd.f32 %v1549, %v1843
      %v1906 = vadd.f32 %v1550, %v1848
      %v1907 = vadd.f32 %v1551, %v1851
      %v1908 = vadd.f32 %v1552, %v1856
      %v1909 = vadd.f32 %v1553, %v1859
      %v1910 = vadd.f32 %v1554, %v1864
      %v1911 = vadd.f32 %v1555, %v1867
      %v1912 = vadd.f32 %v1556, %v1872
      %v1913 = vadd.f32 %v1557, %v1875
      %vm1914 = vcmask 1045504
      %v1915 = vrot.slane %v391, 2
      %v1916 = vrot.slane %v392, 2
      %v1917 = vsel %vm1914, %v1915, %v1916
      %v1918 = vrot.slane %v393, 2
      %v1919 = vsel %vm1914, %v1916, %v1918
      %v1920 = vrot.slane %v394, 2
      %v1921 = vsel %vm1914, %v1918, %v1920
      %v1922 = vrot.slane %v395, 2
      %v1923 = vsel %vm1914, %v1920, %v1922
      %v1924 = vrot.slane %v396, 2
      %v1925 = vsel %vm1914, %v1922, %v1924
      %v1926 = vrot.slane %v397, 2
      %v1927 = vsel %vm1914, %v1924, %v1926
      %v1928 = vrot.slane %v398, 2
      %v1929 = vsel %vm1914, %v1926, %v1928
      %v1930 = vrot.slane %v399, 2
      %v1931 = vsel %vm1914, %v1928, %v1930
      %v1932 = vrot.slane %v400, 2
      %v1933 = vsel %vm1914, %v1930, %v1932
      %v1934 = vrot.slane %v401, 2
      %v1935 = vsel %vm1914, %v1932, %v1934
      %v1936 = vrot.slane %v402, 2
      %v1937 = vsel %vm1914, %v1934, %v1936
      %v1938 = vrot.slane %v403, 2
      %v1939 = vsel %vm1914, %v1936, %v1938
      %v1940 = vrot.slane %v404, 2
      %v1941 = vsel %vm1914, %v1938, %v1940
      %v1942 = vrot.slane %v405, 2
      %v1943 = vsel %vm1914, %v1940, %v1942
      %v1944 = vrot.slane %v406, 2
      %v1945 = vsel %vm1914, %v1942, %v1944
      %v1946 = vrot.slane %v407, 2
      %v1947 = vsel %vm1914, %v1944, %v1946
      %v1948 = vrot.slane %v1326, 2
      %v1949 = vsel %vm1914, %v1946, %v1948
      %v1950 = vrot.slane %v1327, 2
      %v1951 = vsel %vm1914, %v1948, %v1950
      %v1953 = vunpack.c.l.b16 %v313
      %v1954 = vpack.c.b16 %v1953, %v1953
      %v1955 = vrot.slane %v1954, 2
      %v1957 = vsel %vm562, %v1917, 0
      %v1960 = vsel %vm562, %v1919, 0
      %v1963 = vsel %vm562, %v1921, 0
      %v1966 = vsel %vm562, %v1923, 0
      %v1969 = vsel %vm562, %v1925, 0
      %v1972 = vsel %vm562, %v1927, 0
      %v1975 = vsel %vm562, %v1929, 0
      %v1978 = vsel %vm562, %v1931, 0
      %v1981 = vsel %vm562, %v1933, 0
      %v1984 = vsel %vm562, %v1935, 0
      %v1987 = vsel %vm562, %v1937, 0
      %v1990 = vsel %vm562, %v1939, 0
      %v1993 = vsel %vm562, %v1941, 0
      %v1996 = vsel %vm562, %v1943, 0
      %v1999 = vsel %vm562, %v1945, 0
      %v2002 = vsel %vm562, %v1947, 0
      %v2005 = vsel %vm562, %v1949, 0
      %v2008 = vsel %vm562, %v1951, 0
      %v2011 = vsel %vm617, %v1955, 0
      %2013 = vmatprep.subr.bf16.mxu0 0
      %2014 = vmatpush1.bf16.msra.mxu0 %v2011
      %2015 = vmatprep.subr.bf16.mxu0 0
      %2016 = vmatpush1.bf16.msra.mxu0 0
      %2017 = vmatprep.subr.bf16.mxu0 0
      %2018 = vmatpush1.bf16.msra.mxu0 0
      %2019 = vmatprep.subr.bf16.mxu0 0
      %2020 = vmatpush1.bf16.msra.mxu0 0
      %2021 = vmatprep.subr.bf16.mxu0 0
      %2022 = vmatpush1.bf16.msra.mxu0 0
      %2023 = vmatprep.subr.bf16.mxu0 0
      %2024 = vmatpush1.bf16.msra.mxu0 0
      %2025 = vmatprep.subr.bf16.mxu0 0
      %2026 = vmatpush1.bf16.msra.mxu0 0
      %2027 = vmatprep.subr.bf16.mxu0 0
      %2028 = vmatpush1.bf16.msra.mxu0 0
      %2029 = vmatprep.subr.bf16.mxu0 0
      %2030 = vmatpush1.bf16.msra.mxu0 0
      %2031 = vmatprep.subr.bf16.mxu0 0
      %2032 = vmatpush1.bf16.msra.mxu0 0
      %2033 = vmatprep.subr.bf16.mxu0 0
      %2034 = vmatpush1.bf16.msra.mxu0 0
      %2035 = vmatprep.subr.bf16.mxu0 0
      %2036 = vmatpush1.bf16.msra.mxu0 0
      %2037 = vmatprep.subr.bf16.mxu0 0
      %2038 = vmatpush1.bf16.msra.mxu0 0
      %2039 = vmatprep.subr.bf16.mxu0 0
      %2040 = vmatpush1.bf16.msra.mxu0 0
      %2041 = vmatprep.subr.bf16.mxu0 0
      %2042 = vmatpush1.bf16.msra.mxu0 0
      %2043 = vmatprep.subr.bf16.mxu0 0
      %2044 = vmatpush1.bf16.msra.mxu0 0
      %2045 = vmatprep.mubr.bf16.mxu0 0
      %2046 = vmatmul.mubr.bf16.gmra.mrb[0].mxu0 %v1957
      %v2047 = vpop.f32.mrb[0].mxu0
      %v2048 = vadd.f32 0.0, %v2047
      %v2049 = vpop.f32.mrb[0].mxu0
      %v2050 = vpop.f32.mrb[0].mxu0
      %v2051 = vadd.f32 0.0, %v2050
      %v2052 = vpop.f32.mrb[0].mxu0
      %2053 = vmatprep.mubr.bf16.mxu0 0
      %2054 = vmatmul.mubr.bf16.gmra.mrb[0].mxu0 %v1960
      %v2055 = vpop.f32.mrb[0].mxu0
      %v2056 = vadd.f32 0.0, %v2055
      %v2057 = vpop.f32.mrb[0].mxu0
      %v2058 = vpop.f32.mrb[0].mxu0
      %v2059 = vadd.f32 0.0, %v2058
      %v2060 = vpop.f32.mrb[0].mxu0
      %2061 = vmatprep.mubr.bf16.mxu0 0
      %2062 = vmatmul.mubr.bf16.gmra.mrb[0].mxu0 %v1963
      %v2063 = vpop.f32.mrb[0].mxu0
      %v2064 = vadd.f32 0.0, %v2063
      %v2065 = vpop.f32.mrb[0].mxu0
      %v2066 = vpop.f32.mrb[0].mxu0
      %v2067 = vadd.f32 0.0, %v2066
      %v2068 = vpop.f32.mrb[0].mxu0
      %2069 = vmatprep.mubr.bf16.mxu0 0
      %2070 = vmatmul.mubr.bf16.gmra.mrb[0].mxu0 %v1966
      %v2071 = vpop.f32.mrb[0].mxu0
      %v2072 = vadd.f32 0.0, %v2071
      %v2073 = vpop.f32.mrb[0].mxu0
      %v2074 = vpop.f32.mrb[0].mxu0
      %v2075 = vadd.f32 0.0, %v2074
      %v2076 = vpop.f32.mrb[0].mxu0
      %2077 = vmatprep.mubr.bf16.mxu0 0
      %2078 = vmatmul.mubr.bf16.gmra.mrb[0].mxu0 %v1969
      %v2079 = vpop.f32.mrb[0].mxu0
      %v2080 = vadd.f32 0.0, %v2079
      %v2081 = vpop.f32.mrb[0].mxu0
      %v2082 = vpop.f32.mrb[0].mxu0
      %v2083 = vadd.f32 0.0, %v2082
      %v2084 = vpop.f32.mrb[0].mxu0
      %2085 = vmatprep.mubr.bf16.mxu0 0
      %2086 = vmatmul.mubr.bf16.gmra.mrb[0].mxu0 %v1972
      %v2087 = vpop.f32.mrb[0].mxu0
      %v2088 = vadd.f32 0.0, %v2087
      %v2089 = vpop.f32.mrb[0].mxu0
      %v2090 = vpop.f32.mrb[0].mxu0
      %v2091 = vadd.f32 0.0, %v2090
      %v2092 = vpop.f32.mrb[0].mxu0
      %2093 = vmatprep.mubr.bf16.mxu0 0
      %2094 = vmatmul.mubr.bf16.gmra.mrb[0].mxu0 %v1975
      %v2095 = vpop.f32.mrb[0].mxu0
      %v2096 = vadd.f32 0.0, %v2095
      %v2097 = vpop.f32.mrb[0].mxu0
      %v2098 = vpop.f32.mrb[0].mxu0
      %v2099 = vadd.f32 0.0, %v2098
      %v2100 = vpop.f32.mrb[0].mxu0
      %2101 = vmatprep.mubr.bf16.mxu0 0
      %2102 = vmatmul.mubr.bf16.gmra.mrb[0].mxu0 %v1978
      %v2103 = vpop.f32.mrb[0].mxu0
      %v2104 = vadd.f32 0.0, %v2103
      %v2105 = vpop.f32.mrb[0].mxu0
      %v2106 = vpop.f32.mrb[0].mxu0
      %v2107 = vadd.f32 0.0, %v2106
      %v2108 = vpop.f32.mrb[0].mxu0
      %2109 = vmatprep.mubr.bf16.mxu0 0
      %2110 = vmatmul.mubr.bf16.gmra.mrb[0].mxu0 %v1981
      %v2111 = vpop.f32.mrb[0].mxu0
      %v2112 = vadd.f32 0.0, %v2111
      %v2113 = vpop.f32.mrb[0].mxu0
      %v2114 = vpop.f32.mrb[0].mxu0
      %v2115 = vadd.f32 0.0, %v2114
      %v2116 = vpop.f32.mrb[0].mxu0
      %2117 = vmatprep.mubr.bf16.mxu0 0
      %2118 = vmatmul.mubr.bf16.gmra.mrb[0].mxu0 %v1984
      %v2119 = vpop.f32.mrb[0].mxu0
      %v2120 = vadd.f32 0.0, %v2119
      %v2121 = vpop.f32.mrb[0].mxu0
      %v2122 = vpop.f32.mrb[0].mxu0
      %v2123 = vadd.f32 0.0, %v2122
      %v2124 = vpop.f32.mrb[0].mxu0
      %2125 = vmatprep.mubr.bf16.mxu0 0
      %2126 = vmatmul.mubr.bf16.gmra.mrb[0].mxu0 %v1987
      %v2127 = vpop.f32.mrb[0].mxu0
      %v2128 = vadd.f32 0.0, %v2127
      %v2129 = vpop.f32.mrb[0].mxu0
      %v2130 = vpop.f32.mrb[0].mxu0
      %v2131 = vadd.f32 0.0, %v2130
      %v2132 = vpop.f32.mrb[0].mxu0
      %2133 = vmatprep.mubr.bf16.mxu0 0
      %2134 = vmatmul.mubr.bf16.gmra.mrb[0].mxu0 %v1990
      %v2135 = vpop.f32.mrb[0].mxu0
      %v2136 = vadd.f32 0.0, %v2135
      %v2137 = vpop.f32.mrb[0].mxu0
      %v2138 = vpop.f32.mrb[0].mxu0
      %v2139 = vadd.f32 0.0, %v2138
      %v2140 = vpop.f32.mrb[0].mxu0
      %2141 = vmatprep.mubr.bf16.mxu0 0
      %2142 = vmatmul.mubr.bf16.gmra.mrb[0].mxu0 %v1993
      %v2143 = vpop.f32.mrb[0].mxu0
      %v2144 = vadd.f32 0.0, %v2143
      %v2145 = vpop.f32.mrb[0].mxu0
      %v2146 = vpop.f32.mrb[0].mxu0
      %v2147 = vadd.f32 0.0, %v2146
      %v2148 = vpop.f32.mrb[0].mxu0
      %2149 = vmatprep.mubr.bf16.mxu0 0
      %2150 = vmatmul.mubr.bf16.gmra.mrb[0].mxu0 %v1996
      %v2151 = vpop.f32.mrb[0].mxu0
      %v2152 = vadd.f32 0.0, %v2151
      %v2153 = vpop.f32.mrb[0].mxu0
      %v2154 = vpop.f32.mrb[0].mxu0
      %v2155 = vadd.f32 0.0, %v2154
      %v2156 = vpop.f32.mrb[0].mxu0
      %2157 = vmatprep.mubr.bf16.mxu0 0
      %2158 = vmatmul.mubr.bf16.gmra.mrb[0].mxu0 %v1999
      %v2159 = vpop.f32.mrb[0].mxu0
      %v2160 = vadd.f32 0.0, %v2159
      %v2161 = vpop.f32.mrb[0].mxu0
      %v2162 = vpop.f32.mrb[0].mxu0
      %v2163 = vadd.f32 0.0, %v2162
      %v2164 = vpop.f32.mrb[0].mxu0
      %2165 = vmatprep.mubr.bf16.mxu0 0
      %2166 = vmatmul.mubr.bf16.gmra.mrb[0].mxu0 %v2002
      %v2167 = vpop.f32.mrb[0].mxu0
      %v2168 = vadd.f32 0.0, %v2167
      %v2169 = vpop.f32.mrb[0].mxu0
      %v2170 = vpop.f32.mrb[0].mxu0
      %v2171 = vadd.f32 0.0, %v2170
      %v2172 = vpop.f32.mrb[0].mxu0
      %2173 = vmatprep.mubr.bf16.mxu0 0
      %2174 = vmatmul.mubr.bf16.gmra.mrb[0].mxu0 %v2005
      %v2175 = vpop.f32.mrb[0].mxu0
      %v2176 = vadd.f32 0.0, %v2175
      %v2177 = vpop.f32.mrb[0].mxu0
      %v2178 = vpop.f32.mrb[0].mxu0
      %v2179 = vadd.f32 0.0, %v2178
      %v2180 = vpop.f32.mrb[0].mxu0
      %2181 = vmatprep.mubr.bf16.mxu0 0
      %2182 = vmatmul.mubr.bf16.gmra.mrb[0].mxu0 %v2008
      %v2183 = vpop.f32.mrb[0].mxu0
      %v2184 = vadd.f32 0.0, %v2183
      %v2185 = vpop.f32.mrb[0].mxu0
      %v2186 = vpop.f32.mrb[0].mxu0
      %v2187 = vadd.f32 0.0, %v2186
      %v2188 = vpop.f32.mrb[0].mxu0
      %2189 = vdwg.mxu0
      %v2190 = vadd.f32 %v1878, %v2048
      %v2191 = vadd.f32 %v1879, %v2051
      %v2192 = vadd.f32 %v1880, %v2056
      %v2193 = vadd.f32 %v1881, %v2059
      %v2194 = vadd.f32 %v1882, %v2064
      %v2195 = vadd.f32 %v1883, %v2067
      %v2196 = vadd.f32 %v1884, %v2072
      %v2197 = vadd.f32 %v1885, %v2075
      %v2198 = vadd.f32 %v1886, %v2080
      %v2199 = vadd.f32 %v1887, %v2083
      %v2200 = vadd.f32 %v1888, %v2088
      %v2201 = vadd.f32 %v1889, %v2091
      %v2202 = vadd.f32 %v1890, %v2096
      %v2203 = vadd.f32 %v1891, %v2099
      %v2204 = vadd.f32 %v1892, %v2104
      %v2205 = vadd.f32 %v1893, %v2107
      %v2206 = vadd.f32 %v1894, %v2112
      %v2207 = vadd.f32 %v1895, %v2115
      %v2208 = vadd.f32 %v1896, %v2120
      %v2209 = vadd.f32 %v1897, %v2123
      %v2210 = vadd.f32 %v1898, %v2128
      %v2211 = vadd.f32 %v1899, %v2131
      %v2212 = vadd.f32 %v1900, %v2136
      %v2213 = vadd.f32 %v1901, %v2139
      %v2214 = vadd.f32 %v1902, %v2144
      %v2215 = vadd.f32 %v1903, %v2147
      %v2216 = vadd.f32 %v1904, %v2152
      %v2217 = vadd.f32 %v1905, %v2155
      %v2218 = vadd.f32 %v1906, %v2160
      %v2219 = vadd.f32 %v1907, %v2163
      %v2220 = vadd.f32 %v1908, %v2168
      %v2221 = vadd.f32 %v1909, %v2171
      %v2222 = vadd.f32 %v1910, %v2176
      %v2223 = vadd.f32 %v1911, %v2179
      %v2224 = vadd.f32 %v1912, %v2184
      %v2225 = vadd.f32 %v1913, %v2187
      %v2228 = vunpack.c.l.b16 %v309
      %v2229 = vunpack.c.l.b16 %v310
      %v2230 = vpack.c.b16 %v2228, %v1325
      %v2231 = vpack.c.b16 %v2229, %v2229
      %v2232 = vrot.slane %v2230, 2
      %v2233 = vsel %vm1914, %v1948, %v2232
      %v2234 = vrot.slane %v2231, 2
      %v2235 = vsel %vm1914, %v2232, %v2234
      %v2237 = vsel %vm562, %v2233, 0
      %v2240 = vsel %vm562, %v2235, 0
      %v2243 = vsel %vm617, %v314, 0
      %2245 = vmatprep.subr.bf16.mxu0 0
      %2246 = vmatpush1.bf16.msra.mxu0 %v2243
      %2247 = vmatprep.subr.bf16.mxu0 0
      %2248 = vmatpush1.bf16.msra.mxu0 0
      %2249 = vmatprep.subr.bf16.mxu0 0
      %2250 = vmatpush1.bf16.msra.mxu0 0
      %2251 = vmatprep.subr.bf16.mxu0 0
      %2252 = vmatpush1.bf16.msra.mxu0 0
      %2253 = vmatprep.subr.bf16.mxu0 0
      %2254 = vmatpush1.bf16.msra.mxu0 0
      %2255 = vmatprep.subr.bf16.mxu0 0
      %2256 = vmatpush1.bf16.msra.mxu0 0
      %2257 = vmatprep.subr.bf16.mxu0 0
      %2258 = vmatpush1.bf16.msra.mxu0 0
      %2259 = vmatprep.subr.bf16.mxu0 0
      %2260 = vmatpush1.bf16.msra.mxu0 0
      %2261 = vmatprep.subr.bf16.mxu0 0
      %2262 = vmatpush1.bf16.msra.mxu0 0
      %2263 = vmatprep.subr.bf16.mxu0 0
      %2264 = vmatpush1.bf16.msra.mxu0 0
      %2265 = vmatprep.subr.bf16.mxu0 0
      %2266 = vmatpush1.bf16.msra.mxu0 0
      %2267 = vmatprep.subr.bf16.mxu0 0
      %2268 = vmatpush1.bf16.msra.mxu0 0
      %2269 = vmatprep.subr.bf16.mxu0 0
      %2270 = vmatpush1.bf16.msra.mxu0 0
      %2271 = vmatprep.subr.bf16.mxu0 0
      %2272 = vmatpush1.bf16.msra.mxu0 0
      %2273 = vmatprep.subr.bf16.mxu0 0
      %2274 = vmatpush1.bf16.msra.mxu0 0
      %2275 = vmatprep.subr.bf16.mxu0 0
      %2276 = vmatpush1.bf16.msra.mxu0 0
      %2277 = vmatprep.mubr.bf16.mxu0 0
      %2278 = vmatmul.mubr.bf16.gmra.mrb[0].mxu0 %v1960
      %v2279 = vpop.f32.mrb[0].mxu0
      %v2280 = vadd.f32 0.0, %v2279
      %v2281 = vpop.f32.mrb[0].mxu0
      %v2282 = vpop.f32.mrb[0].mxu0
      %v2283 = vadd.f32 0.0, %v2282
      %v2284 = vpop.f32.mrb[0].mxu0
      %2285 = vmatprep.mubr.bf16.mxu0 0
      %2286 = vmatmul.mubr.bf16.gmra.mrb[0].mxu0 %v1963
      %v2287 = vpop.f32.mrb[0].mxu0
      %v2288 = vadd.f32 0.0, %v2287
      %v2289 = vpop.f32.mrb[0].mxu0
      %v2290 = vpop.f32.mrb[0].mxu0
      %v2291 = vadd.f32 0.0, %v2290
      %v2292 = vpop.f32.mrb[0].mxu0
      %2293 = vmatprep.mubr.bf16.mxu0 0
      %2294 = vmatmul.mubr.bf16.gmra.mrb[0].mxu0 %v1966
      %v2295 = vpop.f32.mrb[0].mxu0
      %v2296 = vadd.f32 0.0, %v2295
      %v2297 = vpop.f32.mrb[0].mxu0
      %v2298 = vpop.f32.mrb[0].mxu0
      %v2299 = vadd.f32 0.0, %v2298
      %v2300 = vpop.f32.mrb[0].mxu0
      %2301 = vmatprep.mubr.bf16.mxu0 0
      %2302 = vmatmul.mubr.bf16.gmra.mrb[0].mxu0 %v1969
      %v2303 = vpop.f32.mrb[0].mxu0
      %v2304 = vadd.f32 0.0, %v2303
      %v2305 = vpop.f32.mrb[0].mxu0
      %v2306 = vpop.f32.mrb[0].mxu0
      %v2307 = vadd.f32 0.0, %v2306
      %v2308 = vpop.f32.mrb[0].mxu0
      %2309 = vmatprep.mubr.bf16.mxu0 0
      %2310 = vmatmul.mubr.bf16.gmra.mrb[0].mxu0 %v1972
      %v2311 = vpop.f32.mrb[0].mxu0
      %v2312 = vadd.f32 0.0, %v2311
      %v2313 = vpop.f32.mrb[0].mxu0
      %v2314 = vpop.f32.mrb[0].mxu0
      %v2315 = vadd.f32 0.0, %v2314
      %v2316 = vpop.f32.mrb[0].mxu0
      %2317 = vmatprep.mubr.bf16.mxu0 0
      %2318 = vmatmul.mubr.bf16.gmra.mrb[0].mxu0 %v1975
      %v2319 = vpop.f32.mrb[0].mxu0
      %v2320 = vadd.f32 0.0, %v2319
      %v2321 = vpop.f32.mrb[0].mxu0
      %v2322 = vpop.f32.mrb[0].mxu0
      %v2323 = vadd.f32 0.0, %v2322
      %v2324 = vpop.f32.mrb[0].mxu0
      %2325 = vmatprep.mubr.bf16.mxu0 0
      %2326 = vmatmul.mubr.bf16.gmra.mrb[0].mxu0 %v1978
      %v2327 = vpop.f32.mrb[0].mxu0
      %v2328 = vadd.f32 0.0, %v2327
      %v2329 = vpop.f32.mrb[0].mxu0
      %v2330 = vpop.f32.mrb[0].mxu0
      %v2331 = vadd.f32 0.0, %v2330
      %v2332 = vpop.f32.mrb[0].mxu0
      %2333 = vmatprep.mubr.bf16.mxu0 0
      %2334 = vmatmul.mubr.bf16.gmra.mrb[0].mxu0 %v1981
      %v2335 = vpop.f32.mrb[0].mxu0
      %v2336 = vadd.f32 0.0, %v2335
      %v2337 = vpop.f32.mrb[0].mxu0
      %v2338 = vpop.f32.mrb[0].mxu0
      %v2339 = vadd.f32 0.0, %v2338
      %v2340 = vpop.f32.mrb[0].mxu0
      %2341 = vmatprep.mubr.bf16.mxu0 0
      %2342 = vmatmul.mubr.bf16.gmra.mrb[0].mxu0 %v1984
      %v2343 = vpop.f32.mrb[0].mxu0
      %v2344 = vadd.f32 0.0, %v2343
      %v2345 = vpop.f32.mrb[0].mxu0
      %v2346 = vpop.f32.mrb[0].mxu0
      %v2347 = vadd.f32 0.0, %v2346
      %v2348 = vpop.f32.mrb[0].mxu0
      %2349 = vmatprep.mubr.bf16.mxu0 0
      %2350 = vmatmul.mubr.bf16.gmra.mrb[0].mxu0 %v1987
      %v2351 = vpop.f32.mrb[0].mxu0
      %v2352 = vadd.f32 0.0, %v2351
      %v2353 = vpop.f32.mrb[0].mxu0
      %v2354 = vpop.f32.mrb[0].mxu0
      %v2355 = vadd.f32 0.0, %v2354
      %v2356 = vpop.f32.mrb[0].mxu0
      %2357 = vmatprep.mubr.bf16.mxu0 0
      %2358 = vmatmul.mubr.bf16.gmra.mrb[0].mxu0 %v1990
      %v2359 = vpop.f32.mrb[0].mxu0
      %v2360 = vadd.f32 0.0, %v2359
      %v2361 = vpop.f32.mrb[0].mxu0
      %v2362 = vpop.f32.mrb[0].mxu0
      %v2363 = vadd.f32 0.0, %v2362
      %v2364 = vpop.f32.mrb[0].mxu0
      %2365 = vmatprep.mubr.bf16.mxu0 0
      %2366 = vmatmul.mubr.bf16.gmra.mrb[0].mxu0 %v1993
      %v2367 = vpop.f32.mrb[0].mxu0
      %v2368 = vadd.f32 0.0, %v2367
      %v2369 = vpop.f32.mrb[0].mxu0
      %v2370 = vpop.f32.mrb[0].mxu0
      %v2371 = vadd.f32 0.0, %v2370
      %v2372 = vpop.f32.mrb[0].mxu0
      %2373 = vmatprep.mubr.bf16.mxu0 0
      %2374 = vmatmul.mubr.bf16.gmra.mrb[0].mxu0 %v1996
      %v2375 = vpop.f32.mrb[0].mxu0
      %v2376 = vadd.f32 0.0, %v2375
      %v2377 = vpop.f32.mrb[0].mxu0
      %v2378 = vpop.f32.mrb[0].mxu0
      %v2379 = vadd.f32 0.0, %v2378
      %v2380 = vpop.f32.mrb[0].mxu0
      %2381 = vmatprep.mubr.bf16.mxu0 0
      %2382 = vmatmul.mubr.bf16.gmra.mrb[0].mxu0 %v1999
      %v2383 = vpop.f32.mrb[0].mxu0
      %v2384 = vadd.f32 0.0, %v2383
      %v2385 = vpop.f32.mrb[0].mxu0
      %v2386 = vpop.f32.mrb[0].mxu0
      %v2387 = vadd.f32 0.0, %v2386
      %v2388 = vpop.f32.mrb[0].mxu0
      %2389 = vmatprep.mubr.bf16.mxu0 0
      %2390 = vmatmul.mubr.bf16.gmra.mrb[0].mxu0 %v2002
      %v2391 = vpop.f32.mrb[0].mxu0
      %v2392 = vadd.f32 0.0, %v2391
      %v2393 = vpop.f32.mrb[0].mxu0
      %v2394 = vpop.f32.mrb[0].mxu0
      %v2395 = vadd.f32 0.0, %v2394
      %v2396 = vpop.f32.mrb[0].mxu0
      %2397 = vmatprep.mubr.bf16.mxu0 0
      %2398 = vmatmul.mubr.bf16.gmra.mrb[0].mxu0 %v2005
      %v2399 = vpop.f32.mrb[0].mxu0
      %v2400 = vadd.f32 0.0, %v2399
      %v2401 = vpop.f32.mrb[0].mxu0
      %v2402 = vpop.f32.mrb[0].mxu0
      %v2403 = vadd.f32 0.0, %v2402
      %v2404 = vpop.f32.mrb[0].mxu0
      %2405 = vmatprep.mubr.bf16.mxu0 0
      %2406 = vmatmul.mubr.bf16.gmra.mrb[0].mxu0 %v2237
      %v2407 = vpop.f32.mrb[0].mxu0
      %v2408 = vadd.f32 0.0, %v2407
      %v2409 = vpop.f32.mrb[0].mxu0
      %v2410 = vpop.f32.mrb[0].mxu0
      %v2411 = vadd.f32 0.0, %v2410
      %v2412 = vpop.f32.mrb[0].mxu0
      %2413 = vmatprep.mubr.bf16.mxu0 0
      %2414 = vmatmul.mubr.bf16.gmra.mrb[0].mxu0 %v2240
      %v2415 = vpop.f32.mrb[0].mxu0
      %v2416 = vadd.f32 0.0, %v2415
      %v2417 = vpop.f32.mrb[0].mxu0
      %v2418 = vpop.f32.mrb[0].mxu0
      %v2419 = vadd.f32 0.0, %v2418
      %v2420 = vpop.f32.mrb[0].mxu0
      %2421 = vdwg.mxu0
      %v2422 = vadd.f32 %v2190, %v2280
      %v2423 = vadd.f32 %v2191, %v2283
      %v2424 = vadd.f32 %v2192, %v2288
      %v2425 = vadd.f32 %v2193, %v2291
      %v2426 = vadd.f32 %v2194, %v2296
      %v2427 = vadd.f32 %v2195, %v2299
      %v2428 = vadd.f32 %v2196, %v2304
      %v2429 = vadd.f32 %v2197, %v2307
      %v2430 = vadd.f32 %v2198, %v2312
      %v2431 = vadd.f32 %v2199, %v2315
      %v2432 = vadd.f32 %v2200, %v2320
      %v2433 = vadd.f32 %v2201, %v2323
      %v2434 = vadd.f32 %v2202, %v2328
      %v2435 = vadd.f32 %v2203, %v2331
      %v2436 = vadd.f32 %v2204, %v2336
      %v2437 = vadd.f32 %v2205, %v2339
      %v2438 = vadd.f32 %v2206, %v2344
      %v2439 = vadd.f32 %v2207, %v2347
      %v2440 = vadd.f32 %v2208, %v2352
      %v2441 = vadd.f32 %v2209, %v2355
      %v2442 = vadd.f32 %v2210, %v2360
      %v2443 = vadd.f32 %v2211, %v2363
      %v2444 = vadd.f32 %v2212, %v2368
      %v2445 = vadd.f32 %v2213, %v2371
      %v2446 = vadd.f32 %v2214, %v2376
      %v2447 = vadd.f32 %v2215, %v2379
      %v2448 = vadd.f32 %v2216, %v2384
      %v2449 = vadd.f32 %v2217, %v2387
      %v2450 = vadd.f32 %v2218, %v2392
      %v2451 = vadd.f32 %v2219, %v2395
      %v2452 = vadd.f32 %v2220, %v2400
      %v2453 = vadd.f32 %v2221, %v2403
      %v2454 = vadd.f32 %v2222, %v2408
      %v2455 = vadd.f32 %v2223, %v2411
      %v2456 = vadd.f32 %v2224, %v2416
      %v2457 = vadd.f32 %v2225, %v2419
      %vm2458 = vsmask.f32 5376
      %v2459 = vrot.slane %v430, 2
      %v2460 = vrot.slane %v426, 3
      %v2461 = vor.u32 %v2459, %v2460
      %v2462 = vrot.slane %v438, 2
      %v2463 = vrot.slane %v434, 3
      %v2464 = vor.u32 %v2462, %v2463
      %v2465 = vsel %vm2458, %v2461, %v2464
      %v2466 = vrot.slane %v446, 2
      %v2467 = vrot.slane %v442, 3
      %v2468 = vor.u32 %v2466, %v2467
      %v2469 = vsel %vm2458, %v2464, %v2468
      %v2470 = vrot.slane %v454, 2
      %v2471 = vrot.slane %v450, 3
      %v2472 = vor.u32 %v2470, %v2471
      %v2473 = vsel %vm2458, %v2468, %v2472
      %v2474 = vrot.slane %v462, 2
      %v2475 = vrot.slane %v458, 3
      %v2476 = vor.u32 %v2474, %v2475
      %v2477 = vsel %vm2458, %v2472, %v2476
      %v2478 = vrot.slane %v470, 2
      %v2479 = vrot.slane %v466, 3
      %v2480 = vor.u32 %v2478, %v2479
      %v2481 = vsel %vm2458, %v2476, %v2480
      %v2482 = vrot.slane %v478, 2
      %v2483 = vrot.slane %v474, 3
      %v2484 = vor.u32 %v2482, %v2483
      %v2485 = vsel %vm2458, %v2480, %v2484
      %v2486 = vrot.slane %v486, 2
      %v2487 = vrot.slane %v482, 3
      %v2488 = vor.u32 %v2486, %v2487
      %v2489 = vsel %vm2458, %v2484, %v2488
      %v2490 = vrot.slane %v494, 2
      %v2491 = vrot.slane %v490, 3
      %v2492 = vor.u32 %v2490, %v2491
      %v2493 = vsel %vm2458, %v2488, %v2492
      %v2494 = vrot.slane %v502, 2
      %v2495 = vrot.slane %v498, 3
      %v2496 = vor.u32 %v2494, %v2495
      %v2497 = vsel %vm2458, %v2492, %v2496
      %v2498 = vrot.slane %v510, 2
      %v2499 = vrot.slane %v506, 3
      %v2500 = vor.u32 %v2498, %v2499
      %v2501 = vsel %vm2458, %v2496, %v2500
      %v2502 = vrot.slane %v518, 2
      %v2503 = vrot.slane %v514, 3
      %v2504 = vor.u32 %v2502, %v2503
      %v2505 = vsel %vm2458, %v2500, %v2504
      %v2506 = vrot.slane %v526, 2
      %v2507 = vrot.slane %v522, 3
      %v2508 = vor.u32 %v2506, %v2507
      %v2509 = vsel %vm2458, %v2504, %v2508
      %v2510 = vrot.slane %v534, 2
      %v2511 = vrot.slane %v530, 3
      %v2512 = vor.u32 %v2510, %v2511
      %v2513 = vsel %vm2458, %v2508, %v2512
      %v2514 = vrot.slane %v542, 2
      %v2515 = vrot.slane %v538, 3
      %v2516 = vor.u32 %v2514, %v2515
      %v2517 = vsel %vm2458, %v2512, %v2516
      %v2518 = vrot.slane %v550, 2
      %v2519 = vrot.slane %v546, 3
      %v2520 = vor.u32 %v2518, %v2519
      %v2521 = vsel %vm2458, %v2516, %v2520
      %v2522 = vrot.slane %v1627, 2
      %v2523 = vrot.slane %v1630, 3
      %v2524 = vor.u32 %v2522, %v2523
      %v2525 = vsel %vm2458, %v2520, %v2524
      %v2527 = vshrl.u32 %v2230, 16
      %v2529 = vrot.slane %v2527, 2
      %v2530 = vshll.u32 %v2230, 16
      %v2532 = vrot.slane %v2530, 3
      %v2533 = vor.u32 %v2529, %v2532
      %v2534 = vsel %vm2458, %v2524, %v2533
      %v2536 = vshrl.u32 %v2231, 16
      %v2538 = vrot.slane %v2536, 2
      %v2539 = vshll.u32 %v2231, 16
      %v2541 = vrot.slane %v2539, 3
      %v2542 = vor.u32 %v2538, %v2541
      %v2543 = vsel %vm2458, %v2533, %v2542
      %v2545 = vunpack.c.l.b16 %v314
      %v2546 = vpack.c.b16 %v2545, %v2545
      %v2547 = vrot.slane %v2546, 2
      %v2549 = vsel %vm562, %v2465, 0
      %v2552 = vsel %vm562, %v2469, 0
      %v2555 = vsel %vm562, %v2473, 0
      %v2558 = vsel %vm562, %v2477, 0
      %v2561 = vsel %vm562, %v2481, 0
      %v2564 = vsel %vm562, %v2485, 0
      %v2567 = vsel %vm562, %v2489, 0
      %v2570 = vsel %vm562, %v2493, 0
      %v2573 = vsel %vm562, %v2497, 0
      %v2576 = vsel %vm562, %v2501, 0
      %v2579 = vsel %vm562, %v2505, 0
      %v2582 = vsel %vm562, %v2509, 0
      %v2585 = vsel %vm562, %v2513, 0
      %v2588 = vsel %vm562, %v2517, 0
      %v2591 = vsel %vm562, %v2521, 0
      %v2594 = vsel %vm562, %v2525, 0
      %v2597 = vsel %vm562, %v2534, 0
      %v2600 = vsel %vm562, %v2543, 0
      %v2603 = vsel %vm617, %v2547, 0
      %2605 = vmatprep.subr.bf16.mxu0 0
      %2606 = vmatpush1.bf16.msra.mxu0 %v2603
      %2607 = vmatprep.subr.bf16.mxu0 0
      %2608 = vmatpush1.bf16.msra.mxu0 0
      %2609 = vmatprep.subr.bf16.mxu0 0
      %2610 = vmatpush1.bf16.msra.mxu0 0
      %2611 = vmatprep.subr.bf16.mxu0 0
      %2612 = vmatpush1.bf16.msra.mxu0 0
      %2613 = vmatprep.subr.bf16.mxu0 0
      %2614 = vmatpush1.bf16.msra.mxu0 0
      %2615 = vmatprep.subr.bf16.mxu0 0
      %2616 = vmatpush1.bf16.msra.mxu0 0
      %2617 = vmatprep.subr.bf16.mxu0 0
      %2618 = vmatpush1.bf16.msra.mxu0 0
      %2619 = vmatprep.subr.bf16.mxu0 0
      %2620 = vmatpush1.bf16.msra.mxu0 0
      %2621 = vmatprep.subr.bf16.mxu0 0
      %2622 = vmatpush1.bf16.msra.mxu0 0
      %2623 = vmatprep.subr.bf16.mxu0 0
      %2624 = vmatpush1.bf16.msra.mxu0 0
      %2625 = vmatprep.subr.bf16.mxu0 0
      %2626 = vmatpush1.bf16.msra.mxu0 0
      %2627 = vmatprep.subr.bf16.mxu0 0
      %2628 = vmatpush1.bf16.msra.mxu0 0
      %2629 = vmatprep.subr.bf16.mxu0 0
      %2630 = vmatpush1.bf16.msra.mxu0 0
      %2631 = vmatprep.subr.bf16.mxu0 0
      %2632 = vmatpush1.bf16.msra.mxu0 0
      %2633 = vmatprep.subr.bf16.mxu0 0
      %2634 = vmatpush1.bf16.msra.mxu0 0
      %2635 = vmatprep.subr.bf16.mxu0 0
      %2636 = vmatpush1.bf16.msra.mxu0 0
      %2637 = vmatprep.mubr.bf16.mxu0 0
      %2638 = vmatmul.mubr.bf16.gmra.mrb[0].mxu0 %v2549
      %v2639 = vpop.f32.mrb[0].mxu0
      %v2640 = vadd.f32 0.0, %v2639
      %v2641 = vpop.f32.mrb[0].mxu0
      %v2642 = vpop.f32.mrb[0].mxu0
      %v2643 = vadd.f32 0.0, %v2642
      %v2644 = vpop.f32.mrb[0].mxu0
      %2645 = vmatprep.mubr.bf16.mxu0 0
      %2646 = vmatmul.mubr.bf16.gmra.mrb[0].mxu0 %v2552
      %v2647 = vpop.f32.mrb[0].mxu0
      %v2648 = vadd.f32 0.0, %v2647
      %v2649 = vpop.f32.mrb[0].mxu0
      %v2650 = vpop.f32.mrb[0].mxu0
      %v2651 = vadd.f32 0.0, %v2650
      %v2652 = vpop.f32.mrb[0].mxu0
      %2653 = vmatprep.mubr.bf16.mxu0 0
      %2654 = vmatmul.mubr.bf16.gmra.mrb[0].mxu0 %v2555
      %v2655 = vpop.f32.mrb[0].mxu0
      %v2656 = vadd.f32 0.0, %v2655
      %v2657 = vpop.f32.mrb[0].mxu0
      %v2658 = vpop.f32.mrb[0].mxu0
      %v2659 = vadd.f32 0.0, %v2658
      %v2660 = vpop.f32.mrb[0].mxu0
      %2661 = vmatprep.mubr.bf16.mxu0 0
      %2662 = vmatmul.mubr.bf16.gmra.mrb[0].mxu0 %v2558
      %v2663 = vpop.f32.mrb[0].mxu0
      %v2664 = vadd.f32 0.0, %v2663
      %v2665 = vpop.f32.mrb[0].mxu0
      %v2666 = vpop.f32.mrb[0].mxu0
      %v2667 = vadd.f32 0.0, %v2666
      %v2668 = vpop.f32.mrb[0].mxu0
      %2669 = vmatprep.mubr.bf16.mxu0 0
      %2670 = vmatmul.mubr.bf16.gmra.mrb[0].mxu0 %v2561
      %v2671 = vpop.f32.mrb[0].mxu0
      %v2672 = vadd.f32 0.0, %v2671
      %v2673 = vpop.f32.mrb[0].mxu0
      %v2674 = vpop.f32.mrb[0].mxu0
      %v2675 = vadd.f32 0.0, %v2674
      %v2676 = vpop.f32.mrb[0].mxu0
      %2677 = vmatprep.mubr.bf16.mxu0 0
      %2678 = vmatmul.mubr.bf16.gmra.mrb[0].mxu0 %v2564
      %v2679 = vpop.f32.mrb[0].mxu0
      %v2680 = vadd.f32 0.0, %v2679
      %v2681 = vpop.f32.mrb[0].mxu0
      %v2682 = vpop.f32.mrb[0].mxu0
      %v2683 = vadd.f32 0.0, %v2682
      %v2684 = vpop.f32.mrb[0].mxu0
      %2685 = vmatprep.mubr.bf16.mxu0 0
      %2686 = vmatmul.mubr.bf16.gmra.mrb[0].mxu0 %v2567
      %v2687 = vpop.f32.mrb[0].mxu0
      %v2688 = vadd.f32 0.0, %v2687
      %v2689 = vpop.f32.mrb[0].mxu0
      %v2690 = vpop.f32.mrb[0].mxu0
      %v2691 = vadd.f32 0.0, %v2690
      %v2692 = vpop.f32.mrb[0].mxu0
      %2693 = vmatprep.mubr.bf16.mxu0 0
      %2694 = vmatmul.mubr.bf16.gmra.mrb[0].mxu0 %v2570
      %v2695 = vpop.f32.mrb[0].mxu0
      %v2696 = vadd.f32 0.0, %v2695
      %v2697 = vpop.f32.mrb[0].mxu0
      %v2698 = vpop.f32.mrb[0].mxu0
      %v2699 = vadd.f32 0.0, %v2698
      %v2700 = vpop.f32.mrb[0].mxu0
      %2701 = vmatprep.mubr.bf16.mxu0 0
      %2702 = vmatmul.mubr.bf16.gmra.mrb[0].mxu0 %v2573
      %v2703 = vpop.f32.mrb[0].mxu0
      %v2704 = vadd.f32 0.0, %v2703
      %v2705 = vpop.f32.mrb[0].mxu0
      %v2706 = vpop.f32.mrb[0].mxu0
      %v2707 = vadd.f32 0.0, %v2706
      %v2708 = vpop.f32.mrb[0].mxu0
      %2709 = vmatprep.mubr.bf16.mxu0 0
      %2710 = vmatmul.mubr.bf16.gmra.mrb[0].mxu0 %v2576
      %v2711 = vpop.f32.mrb[0].mxu0
      %v2712 = vadd.f32 0.0, %v2711
      %v2713 = vpop.f32.mrb[0].mxu0
      %v2714 = vpop.f32.mrb[0].mxu0
      %v2715 = vadd.f32 0.0, %v2714
      %v2716 = vpop.f32.mrb[0].mxu0
      %2717 = vmatprep.mubr.bf16.mxu0 0
      %2718 = vmatmul.mubr.bf16.gmra.mrb[0].mxu0 %v2579
      %v2719 = vpop.f32.mrb[0].mxu0
      %v2720 = vadd.f32 0.0, %v2719
      %v2721 = vpop.f32.mrb[0].mxu0
      %v2722 = vpop.f32.mrb[0].mxu0
      %v2723 = vadd.f32 0.0, %v2722
      %v2724 = vpop.f32.mrb[0].mxu0
      %2725 = vmatprep.mubr.bf16.mxu0 0
      %2726 = vmatmul.mubr.bf16.gmra.mrb[0].mxu0 %v2582
      %v2727 = vpop.f32.mrb[0].mxu0
      %v2728 = vadd.f32 0.0, %v2727
      %v2729 = vpop.f32.mrb[0].mxu0
      %v2730 = vpop.f32.mrb[0].mxu0
      %v2731 = vadd.f32 0.0, %v2730
      %v2732 = vpop.f32.mrb[0].mxu0
      %2733 = vmatprep.mubr.bf16.mxu0 0
      %2734 = vmatmul.mubr.bf16.gmra.mrb[0].mxu0 %v2585
      %v2735 = vpop.f32.mrb[0].mxu0
      %v2736 = vadd.f32 0.0, %v2735
      %v2737 = vpop.f32.mrb[0].mxu0
      %v2738 = vpop.f32.mrb[0].mxu0
      %v2739 = vadd.f32 0.0, %v2738
      %v2740 = vpop.f32.mrb[0].mxu0
      %2741 = vmatprep.mubr.bf16.mxu0 0
      %2742 = vmatmul.mubr.bf16.gmra.mrb[0].mxu0 %v2588
      %v2743 = vpop.f32.mrb[0].mxu0
      %v2744 = vadd.f32 0.0, %v2743
      %v2745 = vpop.f32.mrb[0].mxu0
      %v2746 = vpop.f32.mrb[0].mxu0
      %v2747 = vadd.f32 0.0, %v2746
      %v2748 = vpop.f32.mrb[0].mxu0
      %2749 = vmatprep.mubr.bf16.mxu0 0
      %2750 = vmatmul.mubr.bf16.gmra.mrb[0].mxu0 %v2591
      %v2751 = vpop.f32.mrb[0].mxu0
      %v2752 = vadd.f32 0.0, %v2751
      %v2753 = vpop.f32.mrb[0].mxu0
      %v2754 = vpop.f32.mrb[0].mxu0
      %v2755 = vadd.f32 0.0, %v2754
      %v2756 = vpop.f32.mrb[0].mxu0
      %2757 = vmatprep.mubr.bf16.mxu0 0
      %2758 = vmatmul.mubr.bf16.gmra.mrb[0].mxu0 %v2594
      %v2759 = vpop.f32.mrb[0].mxu0
      %v2760 = vadd.f32 0.0, %v2759
      %v2761 = vpop.f32.mrb[0].mxu0
      %v2762 = vpop.f32.mrb[0].mxu0
      %v2763 = vadd.f32 0.0, %v2762
      %v2764 = vpop.f32.mrb[0].mxu0
      %2765 = vmatprep.mubr.bf16.mxu0 0
      %2766 = vmatmul.mubr.bf16.gmra.mrb[0].mxu0 %v2597
      %v2767 = vpop.f32.mrb[0].mxu0
      %v2768 = vadd.f32 0.0, %v2767
      %v2769 = vpop.f32.mrb[0].mxu0
      %v2770 = vpop.f32.mrb[0].mxu0
      %v2771 = vadd.f32 0.0, %v2770
      %v2772 = vpop.f32.mrb[0].mxu0
      %2773 = vmatprep.mubr.bf16.mxu0 0
      %2774 = vmatmul.mubr.bf16.gmra.mrb[0].mxu0 %v2600
      %v2775 = vpop.f32.mrb[0].mxu0
      %v2776 = vadd.f32 0.0, %v2775
      %v2777 = vpop.f32.mrb[0].mxu0
      %v2778 = vpop.f32.mrb[0].mxu0
      %v2779 = vadd.f32 0.0, %v2778
      %v2780 = vpop.f32.mrb[0].mxu0
      %2781 = vdwg.mxu0
      %v2782 = vadd.f32 %v2422, %v2640
      %v2783 = vadd.f32 %v2423, %v2643
      %v2784 = vadd.f32 %v2424, %v2648
      %v2785 = vadd.f32 %v2425, %v2651
      %v2786 = vadd.f32 %v2426, %v2656
      %v2787 = vadd.f32 %v2427, %v2659
      %v2788 = vadd.f32 %v2428, %v2664
      %v2789 = vadd.f32 %v2429, %v2667
      %v2790 = vadd.f32 %v2430, %v2672
      %v2791 = vadd.f32 %v2431, %v2675
      %v2792 = vadd.f32 %v2432, %v2680
      %v2793 = vadd.f32 %v2433, %v2683
      %v2794 = vadd.f32 %v2434, %v2688
      %v2795 = vadd.f32 %v2435, %v2691
      %v2796 = vadd.f32 %v2436, %v2696
      %v2797 = vadd.f32 %v2437, %v2699
      %v2798 = vadd.f32 %v2438, %v2704
      %v2799 = vadd.f32 %v2439, %v2707
      %v2800 = vadd.f32 %v2440, %v2712
      %v2801 = vadd.f32 %v2441, %v2715
      %v2802 = vadd.f32 %v2442, %v2720
      %v2803 = vadd.f32 %v2443, %v2723
      %v2804 = vadd.f32 %v2444, %v2728
      %v2805 = vadd.f32 %v2445, %v2731
      %v2806 = vadd.f32 %v2446, %v2736
      %v2807 = vadd.f32 %v2447, %v2739
      %v2808 = vadd.f32 %v2448, %v2744
      %v2809 = vadd.f32 %v2449, %v2747
      %v2810 = vadd.f32 %v2450, %v2752
      %v2811 = vadd.f32 %v2451, %v2755
      %v2812 = vadd.f32 %v2452, %v2760
      %v2813 = vadd.f32 %v2453, %v2763
      %v2814 = vadd.f32 %v2454, %v2768
      %v2815 = vadd.f32 %v2455, %v2771
      %v2816 = vadd.f32 %v2456, %v2776
      %v2817 = vadd.f32 %v2457, %v2779
      %vm2818 = vcmask 1044480
      %v2819 = vrot.slane %v392, 3
      %v2820 = vrot.slane %v393, 3
      %v2821 = vsel %vm2818, %v2819, %v2820
      %v2822 = vrot.slane %v394, 3
      %v2823 = vsel %vm2818, %v2820, %v2822
      %v2824 = vrot.slane %v395, 3
      %v2825 = vsel %vm2818, %v2822, %v2824
      %v2826 = vrot.slane %v396, 3
      %v2827 = vsel %vm2818, %v2824, %v2826
      %v2828 = vrot.slane %v397, 3
      %v2829 = vsel %vm2818, %v2826, %v2828
      %v2830 = vrot.slane %v398, 3
      %v2831 = vsel %vm2818, %v2828, %v2830
      %v2832 = vrot.slane %v399, 3
      %v2833 = vsel %vm2818, %v2830, %v2832
      %v2834 = vrot.slane %v400, 3
      %v2835 = vsel %vm2818, %v2832, %v2834
      %v2836 = vrot.slane %v401, 3
      %v2837 = vsel %vm2818, %v2834, %v2836
      %v2838 = vrot.slane %v402, 3
      %v2839 = vsel %vm2818, %v2836, %v2838
      %v2840 = vrot.slane %v403, 3
      %v2841 = vsel %vm2818, %v2838, %v2840
      %v2842 = vrot.slane %v404, 3
      %v2843 = vsel %vm2818, %v2840, %v2842
      %v2844 = vrot.slane %v405, 3
      %v2845 = vsel %vm2818, %v2842, %v2844
      %v2846 = vrot.slane %v406, 3
      %v2847 = vsel %vm2818, %v2844, %v2846
      %v2848 = vrot.slane %v407, 3
      %v2849 = vsel %vm2818, %v2846, %v2848
      %v2850 = vrot.slane %v1326, 3
      %v2851 = vsel %vm2818, %v2848, %v2850
      %v2852 = vrot.slane %v2230, 3
      %v2853 = vsel %vm2818, %v2850, %v2852
      %v2854 = vrot.slane %v2231, 3
      %v2855 = vsel %vm2818, %v2852, %v2854
      %v2857 = vsel %vm562, %v2821, 0
      %v2860 = vsel %vm562, %v2823, 0
      %v2863 = vsel %vm562, %v2825, 0
      %v2866 = vsel %vm562, %v2827, 0
      %v2869 = vsel %vm562, %v2829, 0
      %v2872 = vsel %vm562, %v2831, 0
      %v2875 = vsel %vm562, %v2833, 0
      %v2878 = vsel %vm562, %v2835, 0
      %v2881 = vsel %vm562, %v2837, 0
      %v2884 = vsel %vm562, %v2839, 0
      %v2887 = vsel %vm562, %v2841, 0
      %v2890 = vsel %vm562, %v2843, 0
      %v2893 = vsel %vm562, %v2845, 0
      %v2896 = vsel %vm562, %v2847, 0
      %v2899 = vsel %vm562, %v2849, 0
      %v2902 = vsel %vm562, %v2851, 0
      %v2905 = vsel %vm562, %v2853, 0
      %v2908 = vsel %vm562, %v2855, 0
      %v2911 = vsel %vm617, %v315, 0
      %2913 = vmatprep.subr.bf16.mxu0 0
      %2914 = vmatpush1.bf16.msra.mxu0 %v2911
      %2915 = vmatprep.subr.bf16.mxu0 0
      %2916 = vmatpush1.bf16.msra.mxu0 0
      %2917 = vmatprep.subr.bf16.mxu0 0
      %2918 = vmatpush1.bf16.msra.mxu0 0
      %2919 = vmatprep.subr.bf16.mxu0 0
      %2920 = vmatpush1.bf16.msra.mxu0 0
      %2921 = vmatprep.subr.bf16.mxu0 0
      %2922 = vmatpush1.bf16.msra.mxu0 0
      %2923 = vmatprep.subr.bf16.mxu0 0
      %2924 = vmatpush1.bf16.msra.mxu0 0
      %2925 = vmatprep.subr.bf16.mxu0 0
      %2926 = vmatpush1.bf16.msra.mxu0 0
      %2927 = vmatprep.subr.bf16.mxu0 0
      %2928 = vmatpush1.bf16.msra.mxu0 0
      %2929 = vmatprep.subr.bf16.mxu0 0
      %2930 = vmatpush1.bf16.msra.mxu0 0
      %2931 = vmatprep.subr.bf16.mxu0 0
      %2932 = vmatpush1.bf16.msra.mxu0 0
      %2933 = vmatprep.subr.bf16.mxu0 0
      %2934 = vmatpush1.bf16.msra.mxu0 0
      %2935 = vmatprep.subr.bf16.mxu0 0
      %2936 = vmatpush1.bf16.msra.mxu0 0
      %2937 = vmatprep.subr.bf16.mxu0 0
      %2938 = vmatpush1.bf16.msra.mxu0 0
      %2939 = vmatprep.subr.bf16.mxu0 0
      %2940 = vmatpush1.bf16.msra.mxu0 0
      %2941 = vmatprep.subr.bf16.mxu0 0
      %2942 = vmatpush1.bf16.msra.mxu0 0
      %2943 = vmatprep.subr.bf16.mxu0 0
      %2944 = vmatpush1.bf16.msra.mxu0 0
      %2945 = vmatprep.mubr.bf16.mxu0 0
      %2946 = vmatmul.mubr.bf16.gmra.mrb[0].mxu0 %v2857
      %v2947 = vpop.f32.mrb[0].mxu0
      %v2948 = vadd.f32 0.0, %v2947
      %v2949 = vpop.f32.mrb[0].mxu0
      %v2950 = vpop.f32.mrb[0].mxu0
      %v2951 = vadd.f32 0.0, %v2950
      %v2952 = vpop.f32.mrb[0].mxu0
      %2953 = vmatprep.mubr.bf16.mxu0 0
      %2954 = vmatmul.mubr.bf16.gmra.mrb[0].mxu0 %v2860
      %v2955 = vpop.f32.mrb[0].mxu0
      %v2956 = vadd.f32 0.0, %v2955
      %v2957 = vpop.f32.mrb[0].mxu0
      %v2958 = vpop.f32.mrb[0].mxu0
      %v2959 = vadd.f32 0.0, %v2958
      %v2960 = vpop.f32.mrb[0].mxu0
      %2961 = vmatprep.mubr.bf16.mxu0 0
      %2962 = vmatmul.mubr.bf16.gmra.mrb[0].mxu0 %v2863
      %v2963 = vpop.f32.mrb[0].mxu0
      %v2964 = vadd.f32 0.0, %v2963
      %v2965 = vpop.f32.mrb[0].mxu0
      %v2966 = vpop.f32.mrb[0].mxu0
      %v2967 = vadd.f32 0.0, %v2966
      %v2968 = vpop.f32.mrb[0].mxu0
      %2969 = vmatprep.mubr.bf16.mxu0 0
      %2970 = vmatmul.mubr.bf16.gmra.mrb[0].mxu0 %v2866
      %v2971 = vpop.f32.mrb[0].mxu0
      %v2972 = vadd.f32 0.0, %v2971
      %v2973 = vpop.f32.mrb[0].mxu0
      %v2974 = vpop.f32.mrb[0].mxu0
      %v2975 = vadd.f32 0.0, %v2974
      %v2976 = vpop.f32.mrb[0].mxu0
      %2977 = vmatprep.mubr.bf16.mxu0 0
      %2978 = vmatmul.mubr.bf16.gmra.mrb[0].mxu0 %v2869
      %v2979 = vpop.f32.mrb[0].mxu0
      %v2980 = vadd.f32 0.0, %v2979
      %v2981 = vpop.f32.mrb[0].mxu0
      %v2982 = vpop.f32.mrb[0].mxu0
      %v2983 = vadd.f32 0.0, %v2982
      %v2984 = vpop.f32.mrb[0].mxu0
      %2985 = vmatprep.mubr.bf16.mxu0 0
      %2986 = vmatmul.mubr.bf16.gmra.mrb[0].mxu0 %v2872
      %v2987 = vpop.f32.mrb[0].mxu0
      %v2988 = vadd.f32 0.0, %v2987
      %v2989 = vpop.f32.mrb[0].mxu0
      %v2990 = vpop.f32.mrb[0].mxu0
      %v2991 = vadd.f32 0.0, %v2990
      %v2992 = vpop.f32.mrb[0].mxu0
      %2993 = vmatprep.mubr.bf16.mxu0 0
      %2994 = vmatmul.mubr.bf16.gmra.mrb[0].mxu0 %v2875
      %v2995 = vpop.f32.mrb[0].mxu0
      %v2996 = vadd.f32 0.0, %v2995
      %v2997 = vpop.f32.mrb[0].mxu0
      %v2998 = vpop.f32.mrb[0].mxu0
      %v2999 = vadd.f32 0.0, %v2998
      %v3000 = vpop.f32.mrb[0].mxu0
      %3001 = vmatprep.mubr.bf16.mxu0 0
      %3002 = vmatmul.mubr.bf16.gmra.mrb[0].mxu0 %v2878
      %v3003 = vpop.f32.mrb[0].mxu0
      %v3004 = vadd.f32 0.0, %v3003
      %v3005 = vpop.f32.mrb[0].mxu0
      %v3006 = vpop.f32.mrb[0].mxu0
      %v3007 = vadd.f32 0.0, %v3006
      %v3008 = vpop.f32.mrb[0].mxu0
      %3009 = vmatprep.mubr.bf16.mxu0 0
      %3010 = vmatmul.mubr.bf16.gmra.mrb[0].mxu0 %v2881
      %v3011 = vpop.f32.mrb[0].mxu0
      %v3012 = vadd.f32 0.0, %v3011
      %v3013 = vpop.f32.mrb[0].mxu0
      %v3014 = vpop.f32.mrb[0].mxu0
      %v3015 = vadd.f32 0.0, %v3014
      %v3016 = vpop.f32.mrb[0].mxu0
      %3017 = vmatprep.mubr.bf16.mxu0 0
      %3018 = vmatmul.mubr.bf16.gmra.mrb[0].mxu0 %v2884
      %v3019 = vpop.f32.mrb[0].mxu0
      %v3020 = vadd.f32 0.0, %v3019
      %v3021 = vpop.f32.mrb[0].mxu0
      %v3022 = vpop.f32.mrb[0].mxu0
      %v3023 = vadd.f32 0.0, %v3022
      %v3024 = vpop.f32.mrb[0].mxu0
      %3025 = vmatprep.mubr.bf16.mxu0 0
      %3026 = vmatmul.mubr.bf16.gmra.mrb[0].mxu0 %v2887
      %v3027 = vpop.f32.mrb[0].mxu0
      %v3028 = vadd.f32 0.0, %v3027
      %v3029 = vpop.f32.mrb[0].mxu0
      %v3030 = vpop.f32.mrb[0].mxu0
      %v3031 = vadd.f32 0.0, %v3030
      %v3032 = vpop.f32.mrb[0].mxu0
      %3033 = vmatprep.mubr.bf16.mxu0 0
      %3034 = vmatmul.mubr.bf16.gmra.mrb[0].mxu0 %v2890
      %v3035 = vpop.f32.mrb[0].mxu0
      %v3036 = vadd.f32 0.0, %v3035
      %v3037 = vpop.f32.mrb[0].mxu0
      %v3038 = vpop.f32.mrb[0].mxu0
      %v3039 = vadd.f32 0.0, %v3038
      %v3040 = vpop.f32.mrb[0].mxu0
      %3041 = vmatprep.mubr.bf16.mxu0 0
      %3042 = vmatmul.mubr.bf16.gmra.mrb[0].mxu0 %v2893
      %v3043 = vpop.f32.mrb[0].mxu0
      %v3044 = vadd.f32 0.0, %v3043
      %v3045 = vpop.f32.mrb[0].mxu0
      %v3046 = vpop.f32.mrb[0].mxu0
      %v3047 = vadd.f32 0.0, %v3046
      %v3048 = vpop.f32.mrb[0].mxu0
      %3049 = vmatprep.mubr.bf16.mxu0 0
      %3050 = vmatmul.mubr.bf16.gmra.mrb[0].mxu0 %v2896
      %v3051 = vpop.f32.mrb[0].mxu0
      %v3052 = vadd.f32 0.0, %v3051
      %v3053 = vpop.f32.mrb[0].mxu0
      %v3054 = vpop.f32.mrb[0].mxu0
      %v3055 = vadd.f32 0.0, %v3054
      %v3056 = vpop.f32.mrb[0].mxu0
      %3057 = vmatprep.mubr.bf16.mxu0 0
      %3058 = vmatmul.mubr.bf16.gmra.mrb[0].mxu0 %v2899
      %v3059 = vpop.f32.mrb[0].mxu0
      %v3060 = vadd.f32 0.0, %v3059
      %v3061 = vpop.f32.mrb[0].mxu0
      %v3062 = vpop.f32.mrb[0].mxu0
      %v3063 = vadd.f32 0.0, %v3062
      %v3064 = vpop.f32.mrb[0].mxu0
      %3065 = vmatprep.mubr.bf16.mxu0 0
      %3066 = vmatmul.mubr.bf16.gmra.mrb[0].mxu0 %v2902
      %v3067 = vpop.f32.mrb[0].mxu0
      %v3068 = vadd.f32 0.0, %v3067
      %v3069 = vpop.f32.mrb[0].mxu0
      %v3070 = vpop.f32.mrb[0].mxu0
      %v3071 = vadd.f32 0.0, %v3070
      %v3072 = vpop.f32.mrb[0].mxu0
      %3073 = vmatprep.mubr.bf16.mxu0 0
      %3074 = vmatmul.mubr.bf16.gmra.mrb[0].mxu0 %v2905
      %v3075 = vpop.f32.mrb[0].mxu0
      %v3076 = vadd.f32 0.0, %v3075
      %v3077 = vpop.f32.mrb[0].mxu0
      %v3078 = vpop.f32.mrb[0].mxu0
      %v3079 = vadd.f32 0.0, %v3078
      %v3080 = vpop.f32.mrb[0].mxu0
      %3081 = vmatprep.mubr.bf16.mxu0 0
      %3082 = vmatmul.mubr.bf16.gmra.mrb[0].mxu0 %v2908
      %v3083 = vpop.f32.mrb[0].mxu0
      %v3084 = vadd.f32 0.0, %v3083
      %v3085 = vpop.f32.mrb[0].mxu0
      %v3086 = vpop.f32.mrb[0].mxu0
      %v3087 = vadd.f32 0.0, %v3086
      %v3088 = vpop.f32.mrb[0].mxu0
      %3089 = vdwg.mxu0
      %v3090 = vadd.f32 %v2782, %v2948
      %v3091 = vadd.f32 %v2783, %v2951
      %v3092 = vadd.f32 %v2784, %v2956
      %v3093 = vadd.f32 %v2785, %v2959
      %v3094 = vadd.f32 %v2786, %v2964
      %v3095 = vadd.f32 %v2787, %v2967
      %v3096 = vadd.f32 %v2788, %v2972
      %v3097 = vadd.f32 %v2789, %v2975
      %v3098 = vadd.f32 %v2790, %v2980
      %v3099 = vadd.f32 %v2791, %v2983
      %v3100 = vadd.f32 %v2792, %v2988
      %v3101 = vadd.f32 %v2793, %v2991
      %v3102 = vadd.f32 %v2794, %v2996
      %v3103 = vadd.f32 %v2795, %v2999
      %v3104 = vadd.f32 %v2796, %v3004
      %v3105 = vadd.f32 %v2797, %v3007
      %v3106 = vadd.f32 %v2798, %v3012
      %v3107 = vadd.f32 %v2799, %v3015
      %v3108 = vadd.f32 %v2800, %v3020
      %v3109 = vadd.f32 %v2801, %v3023
      %v3110 = vadd.f32 %v2802, %v3028
      %v3111 = vadd.f32 %v2803, %v3031
      %v3112 = vadd.f32 %v2804, %v3036
      %v3113 = vadd.f32 %v2805, %v3039
      %v3114 = vadd.f32 %v2806, %v3044
      %v3115 = vadd.f32 %v2807, %v3047
      %v3116 = vadd.f32 %v2808, %v3052
      %v3117 = vadd.f32 %v2809, %v3055
      %v3118 = vadd.f32 %v2810, %v3060
      %v3119 = vadd.f32 %v2811, %v3063
      %v3120 = vadd.f32 %v2812, %v3068
      %v3121 = vadd.f32 %v2813, %v3071
      %v3122 = vadd.f32 %v2814, %v3076
      %v3123 = vadd.f32 %v2815, %v3079
      %v3124 = vadd.f32 %v2816, %v3084
      %v3125 = vadd.f32 %v2817, %v3087
      %v3126 = vld [vmem:[%s2] sm:$0x1]
      %v3128 = vlaneseq
      %v3129 = vshrl.u32 %v3128, 7
      %v3130 = vsub.s32 0, %v3129
      %v3131 = vrot.slane %v3126, %v3130
      %v3133 = vadd.f32 %v3090, %v3131
      %v3134 = vadd.f32 %v3091, %v3131
      %v3135 = vadd.f32 %v3092, %v3131
      %v3136 = vadd.f32 %v3093, %v3131
      %v3137 = vadd.f32 %v3094, %v3131
      %v3138 = vadd.f32 %v3095, %v3131
      %v3139 = vadd.f32 %v3096, %v3131
      %v3140 = vadd.f32 %v3097, %v3131
      %v3141 = vadd.f32 %v3098, %v3131
      %v3142 = vadd.f32 %v3099, %v3131
      %v3143 = vadd.f32 %v3100, %v3131
      %v3144 = vadd.f32 %v3101, %v3131
      %v3145 = vadd.f32 %v3102, %v3131
      %v3146 = vadd.f32 %v3103, %v3131
      %v3147 = vadd.f32 %v3104, %v3131
      %v3148 = vadd.f32 %v3105, %v3131
      %v3149 = vadd.f32 %v3106, %v3131
      %v3150 = vadd.f32 %v3107, %v3131
      %v3151 = vadd.f32 %v3108, %v3131
      %v3152 = vadd.f32 %v3109, %v3131
      %v3153 = vadd.f32 %v3110, %v3131
      %v3154 = vadd.f32 %v3111, %v3131
      %v3155 = vadd.f32 %v3112, %v3131
      %v3156 = vadd.f32 %v3113, %v3131
      %v3157 = vadd.f32 %v3114, %v3131
      %v3158 = vadd.f32 %v3115, %v3131
      %v3159 = vadd.f32 %v3116, %v3131
      %v3160 = vadd.f32 %v3117, %v3131
      %v3161 = vadd.f32 %v3118, %v3131
      %v3162 = vadd.f32 %v3119, %v3131
      %v3163 = vadd.f32 %v3120, %v3131
      %v3164 = vadd.f32 %v3121, %v3131
      %v3165 = vadd.f32 %v3122, %v3131
      %v3166 = vadd.f32 %v3123, %v3131
      %v3167 = vadd.f32 %v3124, %v3131
      %v3168 = vadd.f32 %v3125, %v3131
      %3169 = vst [vmem:[%s262] sm:$0xff] %v3133
      %3170 = vst [vmem:[%s262 + $0x8] sm:$0xff] %v3134
      %3171 = vst [vmem:[%s262 + $0x10] sm:$0xff] %v3135
      %3172 = vst [vmem:[%s262 + $0x18] sm:$0xff] %v3136
      %3173 = vst [vmem:[%s262 + $0x20] sm:$0xff] %v3137
      %3174 = vst [vmem:[%s262 + $0x28] sm:$0xff] %v3138
      %3175 = vst [vmem:[%s262 + $0x30] sm:$0xff] %v3139
      %3176 = vst [vmem:[%s262 + $0x38] sm:$0xff] %v3140
      %3177 = vst [vmem:[%s262 + $0x40] sm:$0xff] %v3141
      %3178 = vst [vmem:[%s262 + $0x48] sm:$0xff] %v3142
      %3179 = vst [vmem:[%s262 + $0x50] sm:$0xff] %v3143
      %3180 = vst [vmem:[%s262 + $0x58] sm:$0xff] %v3144
      %3181 = vst [vmem:[%s262 + $0x60] sm:$0xff] %v3145
      %3182 = vst [vmem:[%s262 + $0x68] sm:$0xff] %v3146
      %3183 = vst [vmem:[%s262 + $0x70] sm:$0xff] %v3147
      %3184 = vst [vmem:[%s262 + $0x78] sm:$0xff] %v3148
      %3185 = vst [vmem:[%s262 + $0x80] sm:$0xff] %v3149
      %3186 = vst [vmem:[%s262 + $0x88] sm:$0xff] %v3150
      %3187 = vst [vmem:[%s262 + $0x90] sm:$0xff] %v3151
      %3188 = vst [vmem:[%s262 + $0x98] sm:$0xff] %v3152
      %3189 = vst [vmem:[%s262 + $0xa0] sm:$0xff] %v3153
      %3190 = vst [vmem:[%s262 + $0xa8] sm:$0xff] %v3154
      %3191 = vst [vmem:[%s262 + $0xb0] sm:$0xff] %v3155
      %3192 = vst [vmem:[%s262 + $0xb8] sm:$0xff] %v3156
      %3193 = vst [vmem:[%s262 + $0xc0] sm:$0xff] %v3157
      %3194 = vst [vmem:[%s262 + $0xc8] sm:$0xff] %v3158
      %3195 = vst [vmem:[%s262 + $0xd0] sm:$0xff] %v3159
      %3196 = vst [vmem:[%s262 + $0xd8] sm:$0xff] %v3160
      %3197 = vst [vmem:[%s262 + $0xe0] sm:$0xff] %v3161
      %3198 = vst [vmem:[%s262 + $0xe8] sm:$0xff] %v3162
      %3199 = vst [vmem:[%s262 + $0xf0] sm:$0xff] %v3163
      %3200 = vst [vmem:[%s262 + $0xf8] sm:$0xff] %v3164
      %3201 = vst [vmem:[%s262 + $0x100] sm:$0xff] %v3165
      %3202 = vst [vmem:[%s262 + $0x108] sm:$0xff] %v3166
      %3203 = vst [vmem:[%s262 + $0x110] sm:$0xff] %v3167
      %3204 = vst [vmem:[%s262 + $0x118] sm:$0xff] %v3168
      %v3205 = vld [vmem:[%s3] sm:$0xff]
      %v3206 = vld [vmem:[%s3 + $0x8] sm:$0xff]
      %v3207 = vld [vmem:[%s3 + $0x10] sm:$0xff]
      %v3208 = vld [vmem:[%s3 + $0x18] sm:$0xff]
      %v3209 = vld [vmem:[%s3 + $0x20] sm:$0xff]
      %v3210 = vld [vmem:[%s3 + $0x28] sm:$0xff]
      %v3211 = vld [vmem:[%s3 + $0x30] sm:$0xff]
      %v3212 = vld [vmem:[%s3 + $0x38] sm:$0xff]
      %v3213 = vld [vmem:[%s3 + $0x40] sm:$0xff]
      %v3214 = vld [vmem:[%s3 + $0x48] sm:$0xff]
      %v3215 = vld [vmem:[%s3 + $0x50] sm:$0xff]
      %v3216 = vld [vmem:[%s3 + $0x58] sm:$0xff]
      %v3217 = vld [vmem:[%s3 + $0x60] sm:$0xff]
      %v3218 = vld [vmem:[%s3 + $0x68] sm:$0xff]
      %v3219 = vld [vmem:[%s3 + $0x70] sm:$0xff]
      %v3220 = vld [vmem:[%s3 + $0x78] sm:$0xff]
      %v3221 = vld [vmem:[%s3 + $0x80] sm:$0xff]
      %v3222 = vld [vmem:[%s3 + $0x88] sm:$0xff]
      %v3223 = vld [vmem:[%s3 + $0x90] sm:$0xff]
      %v3224 = vld [vmem:[%s3 + $0x98] sm:$0xff]
      %v3225 = vld [vmem:[%s3 + $0xa0] sm:$0xff]
      %v3226 = vld [vmem:[%s3 + $0xa8] sm:$0xff]
      %v3227 = vld [vmem:[%s3 + $0xb0] sm:$0xff]
      %v3228 = vld [vmem:[%s3 + $0xb8] sm:$0xff]
      %v3229 = vld [vmem:[%s3 + $0xc0] sm:$0xff]
      %v3230 = vld [vmem:[%s3 + $0xc8] sm:$0xff]
      %v3231 = vld [vmem:[%s3 + $0xd0] sm:$0xff]
      %v3232 = vld [vmem:[%s3 + $0xd8] sm:$0xff]
      %v3233 = vld [vmem:[%s3 + $0xe0] sm:$0xff]
      %v3234 = vld [vmem:[%s3 + $0xe8] sm:$0xff]
      %v3235 = vld [vmem:[%s3 + $0xf0] sm:$0xff]
      %v3236 = vld [vmem:[%s3 + $0xf8] sm:$0xff]
      %v3237 = vld [vmem:[%s3 + $0x100] sm:$0xff]
      %v3238 = vld [vmem:[%s3 + $0x108] sm:$0xff]
      %v3239 = vld [vmem:[%s3 + $0x110] sm:$0xff]
      %v3240 = vld [vmem:[%s3 + $0x118] sm:$0xff]
      %3242 = vset.pattern.permute.xlu0 0
      %3243 = vperm.xlu0 %3242, %v3205
      %v3244 = vpop.permute.xlu0 %3243
      %3247 = vset.pattern.permute.xlu0 0
      %3248 = vperm.xlu0 %3247, %v3206
      %v3249 = vpop.permute.xlu0 %3248
      %3252 = vset.pattern.permute.xlu0 0
      %3253 = vperm.xlu0 %3252, %v3207
      %v3254 = vpop.permute.xlu0 %3253
      %3257 = vset.pattern.permute.xlu0 0
      %3258 = vperm.xlu0 %3257, %v3208
      %v3259 = vpop.permute.xlu0 %3258
      %3262 = vset.pattern.permute.xlu0 0
      %3263 = vperm.xlu0 %3262, %v3209
      %v3264 = vpop.permute.xlu0 %3263
      %3267 = vset.pattern.permute.xlu0 0
      %3268 = vperm.xlu0 %3267, %v3210
      %v3269 = vpop.permute.xlu0 %3268
      %3272 = vset.pattern.permute.xlu0 0
      %3273 = vperm.xlu0 %3272, %v3211
      %v3274 = vpop.permute.xlu0 %3273
      %3277 = vset.pattern.permute.xlu0 0
      %3278 = vperm.xlu0 %3277, %v3212
      %v3279 = vpop.permute.xlu0 %3278
      %3282 = vset.pattern.permute.xlu0 0
      %3283 = vperm.xlu0 %3282, %v3213
      %v3284 = vpop.permute.xlu0 %3283
      %3287 = vset.pattern.permute.xlu0 0
      %3288 = vperm.xlu0 %3287, %v3214
      %v3289 = vpop.permute.xlu0 %3288
      %3292 = vset.pattern.permute.xlu0 0
      %3293 = vperm.xlu0 %3292, %v3215
      %v3294 = vpop.permute.xlu0 %3293
      %3297 = vset.pattern.permute.xlu0 0
      %3298 = vperm.xlu0 %3297, %v3216
      %v3299 = vpop.permute.xlu0 %3298
      %3302 = vset.pattern.permute.xlu0 0
      %3303 = vperm.xlu0 %3302, %v3217
      %v3304 = vpop.permute.xlu0 %3303
      %3307 = vset.pattern.permute.xlu0 0
      %3308 = vperm.xlu0 %3307, %v3218
      %v3309 = vpop.permute.xlu0 %3308
      %3312 = vset.pattern.permute.xlu0 0
      %3313 = vperm.xlu0 %3312, %v3219
      %v3314 = vpop.permute.xlu0 %3313
      %3317 = vset.pattern.permute.xlu0 0
      %3318 = vperm.xlu0 %3317, %v3220
      %v3319 = vpop.permute.xlu0 %3318
      %3322 = vset.pattern.permute.xlu0 0
      %3323 = vperm.xlu0 %3322, %v3221
      %v3324 = vpop.permute.xlu0 %3323
      %3327 = vset.pattern.permute.xlu0 0
      %3328 = vperm.xlu0 %3327, %v3222
      %v3329 = vpop.permute.xlu0 %3328
      %3332 = vset.pattern.permute.xlu0 0
      %3333 = vperm.xlu0 %3332, %v3223
      %v3334 = vpop.permute.xlu0 %3333
      %3337 = vset.pattern.permute.xlu0 0
      %3338 = vperm.xlu0 %3337, %v3224
      %v3339 = vpop.permute.xlu0 %3338
      %3342 = vset.pattern.permute.xlu0 0
      %3343 = vperm.xlu0 %3342, %v3225
      %v3344 = vpop.permute.xlu0 %3343
      %3347 = vset.pattern.permute.xlu0 0
      %3348 = vperm.xlu0 %3347, %v3226
      %v3349 = vpop.permute.xlu0 %3348
      %3352 = vset.pattern.permute.xlu0 0
      %3353 = vperm.xlu0 %3352, %v3227
      %v3354 = vpop.permute.xlu0 %3353
      %3357 = vset.pattern.permute.xlu0 0
      %3358 = vperm.xlu0 %3357, %v3228
      %v3359 = vpop.permute.xlu0 %3358
      %3362 = vset.pattern.permute.xlu0 0
      %3363 = vperm.xlu0 %3362, %v3229
      %v3364 = vpop.permute.xlu0 %3363
      %3367 = vset.pattern.permute.xlu0 0
      %3368 = vperm.xlu0 %3367, %v3230
      %v3369 = vpop.permute.xlu0 %3368
      %3372 = vset.pattern.permute.xlu0 0
      %3373 = vperm.xlu0 %3372, %v3231
      %v3374 = vpop.permute.xlu0 %3373
      %3377 = vset.pattern.permute.xlu0 0
      %3378 = vperm.xlu0 %3377, %v3232
      %v3379 = vpop.permute.xlu0 %3378
      %3382 = vset.pattern.permute.xlu0 0
      %3383 = vperm.xlu0 %3382, %v3233
      %v3384 = vpop.permute.xlu0 %3383
      %3387 = vset.pattern.permute.xlu0 0
      %3388 = vperm.xlu0 %3387, %v3234
      %v3389 = vpop.permute.xlu0 %3388
      %3392 = vset.pattern.permute.xlu0 0
      %3393 = vperm.xlu0 %3392, %v3235
      %v3394 = vpop.permute.xlu0 %3393
      %3397 = vset.pattern.permute.xlu0 0
      %3398 = vperm.xlu0 %3397, %v3236
      %v3399 = vpop.permute.xlu0 %3398
      %3402 = vset.pattern.permute.xlu0 0
      %3403 = vperm.xlu0 %3402, %v3237
      %v3404 = vpop.permute.xlu0 %3403
      %3407 = vset.pattern.permute.xlu0 0
      %3408 = vperm.xlu0 %3407, %v3238
      %v3409 = vpop.permute.xlu0 %3408
      %3412 = vset.pattern.permute.xlu0 0
      %3413 = vperm.xlu0 %3412, %v3239
      %v3414 = vpop.permute.xlu0 %3413
      %3417 = vset.pattern.permute.xlu0 0
      %3418 = vperm.xlu0 %3417, %v3240
      %v3419 = vpop.permute.xlu0 %3418
      %v3421 = vmul.f32 %v3133, %v3244
      %v3422 = vmul.f32 %v3134, %v3249
      %v3423 = vmul.f32 %v3135, %v3254
      %v3424 = vmul.f32 %v3136, %v3259
      %v3425 = vmul.f32 %v3137, %v3264
      %v3426 = vmul.f32 %v3138, %v3269
      %v3427 = vmul.f32 %v3139, %v3274
      %v3428 = vmul.f32 %v3140, %v3279
      %v3429 = vmul.f32 %v3141, %v3284
      %v3430 = vmul.f32 %v3142, %v3289
      %v3431 = vmul.f32 %v3143, %v3294
      %v3432 = vmul.f32 %v3144, %v3299
      %v3433 = vmul.f32 %v3145, %v3304
      %v3434 = vmul.f32 %v3146, %v3309
      %v3435 = vmul.f32 %v3147, %v3314
      %v3436 = vmul.f32 %v3148, %v3319
      %v3437 = vmul.f32 %v3149, %v3324
      %v3438 = vmul.f32 %v3150, %v3329
      %v3439 = vmul.f32 %v3151, %v3334
      %v3440 = vmul.f32 %v3152, %v3339
      %v3441 = vmul.f32 %v3153, %v3344
      %v3442 = vmul.f32 %v3154, %v3349
      %v3443 = vmul.f32 %v3155, %v3354
      %v3444 = vmul.f32 %v3156, %v3359
      %v3445 = vmul.f32 %v3157, %v3364
      %v3446 = vmul.f32 %v3158, %v3369
      %v3447 = vmul.f32 %v3159, %v3374
      %v3448 = vmul.f32 %v3160, %v3379
      %v3449 = vmul.f32 %v3161, %v3384
      %v3450 = vmul.f32 %v3162, %v3389
      %v3451 = vmul.f32 %v3163, %v3394
      %v3452 = vmul.f32 %v3164, %v3399
      %v3453 = vmul.f32 %v3165, %v3404
      %v3454 = vmul.f32 %v3166, %v3409
      %v3455 = vmul.f32 %v3167, %v3414
      %v3456 = vmul.f32 %v3168, %v3419
      %v3457 = vadd.f32 %v3421, %v3422
      %v3458 = vadd.f32 %v3457, %v3423
      %v3459 = vadd.f32 %v3458, %v3424
      %v3460 = vadd.f32 %v3459, %v3425
      %v3461 = vadd.f32 %v3460, %v3426
      %v3462 = vadd.f32 %v3461, %v3427
      %v3463 = vadd.f32 %v3462, %v3428
      %v3464 = vadd.f32 %v3463, %v3429
      %v3465 = vadd.f32 %v3464, %v3430
      %v3466 = vadd.f32 %v3465, %v3431
      %v3467 = vadd.f32 %v3466, %v3432
      %v3468 = vadd.f32 %v3467, %v3433
      %v3469 = vadd.f32 %v3468, %v3434
      %v3470 = vadd.f32 %v3469, %v3435
      %v3471 = vadd.f32 %v3470, %v3436
      %v3472 = vadd.f32 %v3471, %v3437
      %v3473 = vadd.f32 %v3472, %v3438
      %v3474 = vadd.f32 %v3473, %v3439
      %v3475 = vadd.f32 %v3474, %v3440
      %v3476 = vadd.f32 %v3475, %v3441
      %v3477 = vadd.f32 %v3476, %v3442
      %v3478 = vadd.f32 %v3477, %v3443
      %v3479 = vadd.f32 %v3478, %v3444
      %v3480 = vadd.f32 %v3479, %v3445
      %v3481 = vadd.f32 %v3480, %v3446
      %v3482 = vadd.f32 %v3481, %v3447
      %v3483 = vadd.f32 %v3482, %v3448
      %v3484 = vadd.f32 %v3483, %v3449
      %v3485 = vadd.f32 %v3484, %v3450
      %v3486 = vadd.f32 %v3485, %v3451
      %v3487 = vadd.f32 %v3486, %v3452
      %v3488 = vadd.f32 %v3487, %v3453
      %v3489 = vadd.f32 %v3488, %v3454
      %v3490 = vadd.f32 %v3489, %v3455
      %v3491 = vadd.f32 %v3490, %v3456
      %v3492 = vrot.slane %v3491, 4
      %v3493 = vadd.f32 %v3491, %v3492
      %v3494 = vrot.slane %v3493, 2
      %v3495 = vadd.f32 %v3493, %v3494
      %v3496 = vrot.slane %v3495, 1
      %v3497 = vadd.f32 %v3495, %v3496
      %3498 = vst [vmem:[%s265] sm:$0x1] %v3497
      %v3499 = vmul.f32 %v3421, %v3133
      %v3500 = vmul.f32 %v3422, %v3134
      %v3501 = vmul.f32 %v3423, %v3135
      %v3502 = vmul.f32 %v3424, %v3136
      %v3503 = vmul.f32 %v3425, %v3137
      %v3504 = vmul.f32 %v3426, %v3138
      %v3505 = vmul.f32 %v3427, %v3139
      %v3506 = vmul.f32 %v3428, %v3140
      %v3507 = vmul.f32 %v3429, %v3141
      %v3508 = vmul.f32 %v3430, %v3142
      %v3509 = vmul.f32 %v3431, %v3143
      %v3510 = vmul.f32 %v3432, %v3144
      %v3511 = vmul.f32 %v3433, %v3145
      %v3512 = vmul.f32 %v3434, %v3146
      %v3513 = vmul.f32 %v3435, %v3147
      %v3514 = vmul.f32 %v3436, %v3148
      %v3515 = vmul.f32 %v3437, %v3149
      %v3516 = vmul.f32 %v3438, %v3150
      %v3517 = vmul.f32 %v3439, %v3151
      %v3518 = vmul.f32 %v3440, %v3152
      %v3519 = vmul.f32 %v3441, %v3153
      %v3520 = vmul.f32 %v3442, %v3154
      %v3521 = vmul.f32 %v3443, %v3155
      %v3522 = vmul.f32 %v3444, %v3156
      %v3523 = vmul.f32 %v3445, %v3157
      %v3524 = vmul.f32 %v3446, %v3158
      %v3525 = vmul.f32 %v3447, %v3159
      %v3526 = vmul.f32 %v3448, %v3160
      %v3527 = vmul.f32 %v3449, %v3161
      %v3528 = vmul.f32 %v3450, %v3162
      %v3529 = vmul.f32 %v3451, %v3163
      %v3530 = vmul.f32 %v3452, %v3164
      %v3531 = vmul.f32 %v3453, %v3165
      %v3532 = vmul.f32 %v3454, %v3166
      %v3533 = vmul.f32 %v3455, %v3167
      %v3534 = vmul.f32 %v3456, %v3168
      %v3535 = vadd.f32 %v3499, %v3500
      %v3536 = vadd.f32 %v3535, %v3501
      %v3537 = vadd.f32 %v3536, %v3502
      %v3538 = vadd.f32 %v3537, %v3503
      %v3539 = vadd.f32 %v3538, %v3504
      %v3540 = vadd.f32 %v3539, %v3505
      %v3541 = vadd.f32 %v3540, %v3506
      %v3542 = vadd.f32 %v3541, %v3507
      %v3543 = vadd.f32 %v3542, %v3508
      %v3544 = vadd.f32 %v3543, %v3509
      %v3545 = vadd.f32 %v3544, %v3510
      %v3546 = vadd.f32 %v3545, %v3511
      %v3547 = vadd.f32 %v3546, %v3512
      %v3548 = vadd.f32 %v3547, %v3513
      %v3549 = vadd.f32 %v3548, %v3514
      %v3550 = vadd.f32 %v3549, %v3515
      %v3551 = vadd.f32 %v3550, %v3516
      %v3552 = vadd.f32 %v3551, %v3517
      %v3553 = vadd.f32 %v3552, %v3518
      %v3554 = vadd.f32 %v3553, %v3519
      %v3555 = vadd.f32 %v3554, %v3520
      %v3556 = vadd.f32 %v3555, %v3521
      %v3557 = vadd.f32 %v3556, %v3522
      %v3558 = vadd.f32 %v3557, %v3523
      %v3559 = vadd.f32 %v3558, %v3524
      %v3560 = vadd.f32 %v3559, %v3525
      %v3561 = vadd.f32 %v3560, %v3526
      %v3562 = vadd.f32 %v3561, %v3527
      %v3563 = vadd.f32 %v3562, %v3528
      %v3564 = vadd.f32 %v3563, %v3529
      %v3565 = vadd.f32 %v3564, %v3530
      %v3566 = vadd.f32 %v3565, %v3531
      %v3567 = vadd.f32 %v3566, %v3532
      %v3568 = vadd.f32 %v3567, %v3533
      %v3569 = vadd.f32 %v3568, %v3534
      %v3570 = vrot.slane %v3569, 4
      %v3571 = vadd.f32 %v3569, %v3570
      %v3572 = vrot.slane %v3571, 2
      %v3573 = vadd.f32 %v3571, %v3572
      %v3574 = vrot.slane %v3573, 1
      %v3575 = vadd.f32 %v3573, %v3574
      %3576 = vst [vmem:[%s268] sm:$0x1] %v3575
      %p3577 = scmp.lt.s32.totalorder %s18, 1
      %s3578 = scalar_select %p3577, %s18, 1
      %s3579 = smul.addr %s3578, 36
      %s3580 = smul.addr %s3579, 8
      %s3581 = scalar_lea.vmem %s4, %s3580
      %p3582 = scmp.lt.s32.totalorder %s18, 1
      %s3583 = scalar_select %p3582, %s18, 1
      %s3584 = scalar_lea.vmem %s5, %s3583
      %p3585 = scmp.lt.s32.totalorder %s18, 1
      %s3586 = scalar_select %p3585, %s18, 1
      %s3587 = scalar_lea.vmem %s6, %s3586
      // Predicated region
      $region37: #{concat_block_forward.3} parent=35 // pred_check
        %p3588 = pneg %p125
      $region38: #{concat_block_forward.3} parent=35 // pred_check_branch
        %3590 = sbr.rel (%p3588) target = $region40
      $region39: #{concat_block_forward.3} parent=35 // pred_region
        _
      $region40: #{concat_block_forward.3} parent=35 // pred_fallthru
        _
      // Predicated region
      $region41: #{concat_block_forward.3} parent=35 // pred_check
        %p3591 = pneg %p151
      $region42: #{concat_block_forward.3} parent=35 // pred_check_branch
        %3593 = sbr.rel (%p3591) target = $region44
      $region43: #{concat_block_forward.3} parent=35 // pred_region
        _
      $region44: #{concat_block_forward.3} parent=35 // pred_fallthru
        _
      // Predicated region
      $region45: #{concat_block_forward.3} parent=35 // pred_check
        %p3594 = pneg %p177
      $region46: #{concat_block_forward.3} parent=35 // pred_check_branch
        %3596 = sbr.rel (%p3594) target = $region48
      $region47: #{concat_block_forward.3} parent=35 // pred_region
        _
      $region48: #{concat_block_forward.3} parent=35 // pred_fallthru
        _
    $region36: #{concat_block_forward.3} parent=5 // pred_fallthru
      _
    %p3597 = scmp.le.s32.totalorder 2, %s13
    // Predicated region
    $region49: #{concat_block_forward.3} parent=5 // pred_check
      %p3598 = pneg %p3597
    $region50: #{concat_block_forward.3} parent=5 // pred_check_branch
      %3600 = sbr.rel (%p3598) target = $region52
    $region51: #{concat_block_forward.3} parent=5 // pred_region
      %s3601 = ssub.s32 %s13, 2
      // Predicated region
      $region53: #{concat_block_forward.3} parent=51 // pred_check
        %p3602 = pneg %p131
      $region54: #{concat_block_forward.3} parent=51 // pred_check_branch
        %3604 = sbr.rel (%p3602) target = $region56
      $region55: #{concat_block_forward.3} parent=51 // pred_region
        %p3605 = scmp.lt.s32.totalorder %s19, 1
        %s3606 = scalar_select %p3605, %s19, 1
        %s3607 = smul.addr %s3606, 36
        %s3608 = smul.addr %s3607, 8
        %s3609 = scalar_lea.vmem %s4, %s3608
      $region56: #{concat_block_forward.3} parent=51 // pred_fallthru
        _
      // Predicated region
      $region57: #{concat_block_forward.3} parent=51 // pred_check
        %p3610 = pneg %p157
      $region58: #{concat_block_forward.3} parent=51 // pred_check_branch
        %3612 = sbr.rel (%p3610) target = $region60
      $region59: #{concat_block_forward.3} parent=51 // pred_region
        %p3613 = scmp.lt.s32.totalorder %s19, 1
        %s3614 = scalar_select %p3613, %s19, 1
        %s3615 = scalar_lea.vmem %s5, %s3614
      $region60: #{concat_block_forward.3} parent=51 // pred_fallthru
        _
      // Predicated region
      $region61: #{concat_block_forward.3} parent=51 // pred_check
        %p3616 = pneg %p183
      $region62: #{concat_block_forward.3} parent=51 // pred_check_branch
        %3618 = sbr.rel (%p3616) target = $region64
      $region63: #{concat_block_forward.3} parent=51 // pred_region
        %p3619 = scmp.lt.s32.totalorder %s19, 1
        %s3620 = scalar_select %p3619, %s19, 1
        %s3621 = scalar_lea.vmem %s6, %s3620
      $region64: #{concat_block_forward.3} parent=51 // pred_fallthru
        _
    $region52: #{concat_block_forward.3} parent=5 // pred_fallthru
      _
  $region6: #{concat_block_forward.3} parent=0 // loop_footer
    %s17 = sadd.s32 1, %s13
  $region7: #{concat_block_forward.3} parent=0 // loop_footer_branch
    %12 = sbr.rel target = $region3
  $region8: #{concat_block_forward.3} parent=0 // loop_exit
    _

// kernel: concat_block_forward.5
$region0: #{concat_block_forward.5}
  #allocation0 [shape = 'u32[]', space=smem, size = 0x4, offset = 0x4, fixed_abs, tag = 'smem constant byte address 0x4 - core index']
  #allocation1 [shape = 'u32[144,128]{1,0:T(1,128)}', space=vmem, size = 0x12000, scoped, tag = 'internal scratch']
  %s0 = inlined_call_operand.vmem [shape: bf16[2,342,128], index: 0, kind: input, shape index: {}]
  %s1 = inlined_call_operand.vmem [shape: bf16[1152,128], index: 1, kind: input, shape index: {}]
  %s2 = inlined_call_operand.vmem [shape: f32[1,128], index: 2, kind: input, shape index: {}]
  %s3 = inlined_call_operand.vmem [shape: f32[2,288,128], index: 3, kind: output, shape index: {}]
  %s4 = sld [smem:[#allocation0]]
  $region45: #{concat_block_forward.5} parent=0
    _
  %s6 = ssub.s32 1, %s4
  %s7 = scalar_select 0, %s6, %s4
  loop: start=0, step=1, limit=4
  $region2: #{concat_block_forward.5} parent=0 // loop_pre_header
    _
  $region3: #{concat_block_forward.5} parent=0 // loop_header
    %s9 = sphi 0, %s13
    %p10 = scmp.ge.s32.totalorder %s9, 4
    %s19 = sphi 0, %s21
    %s22 = sphi 0, %s19
    %s23 = sphi 0, %s22
    %s39 = sphi 0, %s23
    %s43 = sphi 0, %s43
    %s45 = sphi 0, %s43
    %s46 = sphi 0, %s45
    %s60 = sphi 0, %s46
    %s64 = sphi 0, %s64
    %s66 = sphi 0, %s64
    %s67 = sphi 0, %s66
    %s81 = sphi 0, %s67
    %s87 = sphi 0, %s89
    %s90 = sphi 0, %s87
    %s91 = sphi 0, %s90
    %s107 = sphi 0, %s91
  $region4: #{concat_block_forward.5} parent=0 // loop_header_branch
    %12 = sbr.rel (%p10) target = $region8
  $region5: #{concat_block_forward.5} parent=0 // loop_body
    %s14 = ssub.s32 %s9, 1
    %s15 = ssub.s32 %s9, 2
    %s16 = sadd.s32 %s9, 1
    %s17 = ssub.s32 %s9, %s16
    %p18 = scmp.eq.s32.totalorder %s17, 0
    %s20 = sadd.s32 %s19, 1
    %s21 = scalar_select %p18, %s19, %s20
    %p24 = pneg %p18
    %p25 = scmp.eq.s32.totalorder %s9, 1
    %p26 = por %p24, %p25
    %p27 = scmp.ne.s32.totalorder %s19, %s22
    %p28 = scmp.eq.s32.totalorder %s9, 0
    %p29 = por %p27, %p28
    %p30 = scmp.ne.s32.totalorder %s19, %s22
    %p31 = scmp.eq.s32.totalorder %s14, 1
    %p32 = por %p30, %p31
    %p33 = scmp.ne.s32.totalorder %s22, %s23
    %p34 = scmp.eq.s32.totalorder %s14, 0
    %p35 = por %p33, %p34
    %p36 = scmp.ne.s32.totalorder %s22, %s23
    %p37 = scmp.eq.s32.totalorder %s15, 1
    %p38 = por %p36, %p37
    %p40 = scmp.ne.s32.totalorder %s23, %s39
    %p41 = scmp.eq.s32.totalorder %s15, 0
    %p42 = por %p40, %p41
    %s44 = sadd.s32 %s43, 1
    %p47 = scmp.eq.s32.totalorder %s9, 1
    %p48 = scmp.ne.s32.totalorder %s43, %s45
    %p49 = scmp.eq.s32.totalorder %s9, 0
    %p50 = por %p48, %p49
    %p51 = scmp.ne.s32.totalorder %s43, %s45
    %p52 = scmp.eq.s32.totalorder %s14, 1
    %p53 = por %p51, %p52
    %p54 = scmp.ne.s32.totalorder %s45, %s46
    %p55 = scmp.eq.s32.totalorder %s14, 0
    %p56 = por %p54, %p55
    %p57 = scmp.ne.s32.totalorder %s45, %s46
    %p58 = scmp.eq.s32.totalorder %s15, 1
    %p59 = por %p57, %p58
    %p61 = scmp.ne.s32.totalorder %s46, %s60
    %p62 = scmp.eq.s32.totalorder %s15, 0
    %p63 = por %p61, %p62
    %s65 = sadd.s32 %s64, 1
    %p68 = scmp.eq.s32.totalorder %s9, 1
    %p69 = scmp.ne.s32.totalorder %s64, %s66
    %p70 = scmp.eq.s32.totalorder %s9, 0
    %p71 = por %p69, %p70
    %p72 = scmp.ne.s32.totalorder %s64, %s66
    %p73 = scmp.eq.s32.totalorder %s14, 1
    %p74 = por %p72, %p73
    %p75 = scmp.ne.s32.totalorder %s66, %s67
    %p76 = scmp.eq.s32.totalorder %s14, 0
    %p77 = por %p75, %p76
    %p78 = scmp.ne.s32.totalorder %s66, %s67
    %p79 = scmp.eq.s32.totalorder %s15, 1
    %p80 = por %p78, %p79
    %p82 = scmp.ne.s32.totalorder %s67, %s81
    %p83 = scmp.eq.s32.totalorder %s15, 0
    %p84 = por %p82, %p83
    %s85 = ssub.s32 %s9, %s16
    %p86 = scmp.eq.s32.totalorder %s85, 0
    %s88 = sadd.s32 %s87, 1
    %s89 = scalar_select %p86, %s87, %s88
    %p92 = pneg %p86
    %p93 = scmp.eq.s32.totalorder %s9, 1
    %p94 = por %p92, %p93
    %p95 = scmp.ne.s32.totalorder %s87, %s90
    %p96 = scmp.eq.s32.totalorder %s9, 0
    %p97 = por %p95, %p96
    %p98 = scmp.ne.s32.totalorder %s87, %s90
    %p99 = scmp.eq.s32.totalorder %s14, 1
    %p100 = por %p98, %p99
    %p101 = scmp.ne.s32.totalorder %s90, %s91
    %p102 = scmp.eq.s32.totalorder %s14, 0
    %p103 = por %p101, %p102
    %p104 = scmp.ne.s32.totalorder %s90, %s91
    %p105 = scmp.eq.s32.totalorder %s15, 1
    %p106 = por %p104, %p105
    %p108 = scmp.ne.s32.totalorder %s91, %s107
    %p109 = scmp.eq.s32.totalorder %s15, 0
    %p110 = por %p108, %p109
    %p111 = scmp.le.s32.totalorder 1, %s9
    %p112 = scmp.lt.s32.totalorder %s9, 3
    %p113 = pnand %p111, %p112
    %p114 = pneg %p113
    // Predicated region
    $region9: #{concat_block_forward.5} parent=5 // pred_check
      _
    $region10: #{concat_block_forward.5} parent=5 // pred_check_branch
      %116 = sbr.rel (%p113) target = $region12
    $region11: #{concat_block_forward.5} parent=5 // pred_region
      %s117 = ssub.s32 %s9, 1
      // Predicated region
      $region13: #{concat_block_forward.5} parent=11 // pred_check
        %p118 = pneg %p56
      $region14: #{concat_block_forward.5} parent=11 // pred_check_branch
        %120 = sbr.rel (%p118) target = $region16
      $region15: #{concat_block_forward.5} parent=11 // pred_region
        _
      $region16: #{concat_block_forward.5} parent=11 // pred_fallthru
        _
      // Predicated region
      $region17: #{concat_block_forward.5} parent=11 // pred_check
        %p121 = pneg %p77
      $region18: #{concat_block_forward.5} parent=11 // pred_check_branch
        %123 = sbr.rel (%p121) target = $region20
      $region19: #{concat_block_forward.5} parent=11 // pred_region
        _
      $region20: #{concat_block_forward.5} parent=11 // pred_fallthru
        _
    $region12: #{concat_block_forward.5} parent=5 // pred_fallthru
      _
    %p124 = scmp.lt.s32.totalorder %s9, 2
    // Predicated region
    $region21: #{concat_block_forward.5} parent=5 // pred_check
      %p125 = pneg %p124
    $region22: #{concat_block_forward.5} parent=5 // pred_check_branch
      %127 = sbr.rel (%p125) target = $region24
    $region23: #{concat_block_forward.5} parent=5 // pred_region
      // Predicated region
      $region25: #{concat_block_forward.5} parent=23 // pred_check
        %p128 = pneg %p29
      $region26: #{concat_block_forward.5} parent=23 // pred_check_branch
        %130 = sbr.rel (%p128) target = $region28
      $region27: #{concat_block_forward.5} parent=23 // pred_region
        %p131 = scmp.lt.s32.totalorder %s9, 1
        %s132 = scalar_select %p131, %s9, 1
        %s133 = smul.addr %s132, 43
        %s134 = smul.addr %s133, 4
        %s135 = scalar_lea.vmem %s0, %s134
      $region28: #{concat_block_forward.5} parent=23 // pred_fallthru
        _
    $region24: #{concat_block_forward.5} parent=5 // pred_fallthru
      _
    %p136 = scmp.le.s32.totalorder 1, %s9
    %p137 = scmp.lt.s32.totalorder %s9, 3
    %p138 = pnand %p136, %p137
    %p139 = pneg %p138
    // Predicated region
    $region29: #{concat_block_forward.5} parent=5 // pred_check
      _
    $region30: #{concat_block_forward.5} parent=5 // pred_check_branch
      %141 = sbr.rel (%p138) target = $region32
    $region31: #{concat_block_forward.5} parent=5 // pred_region
      %s142 = ssub.s32 %s9, 1
      %p143 = scmp.lt.s32.totalorder %s14, 1
      %s144 = scalar_select %p143, %s14, 1
      %s145 = smul.addr %s144, 43
      %s146 = smul.addr %s145, 4
      %s147 = scalar_lea.vmem %s0, %s146
      %p148 = pneg %p35
      %p149 = pneg %p32
      %p150 = pneg %p56
      %p151 = pneg %p53
      %p152 = pneg %p77
      %p153 = pneg %p74
      %p154 = pneg %p103
      %p155 = pneg %p100
      %p156 = scmp.lt.s32.totalorder %s14, 1
      %s157 = scalar_select %p156, %s14, 1
      %s158 = smul.addr %s157, 36
      %s159 = smul.addr %s158, 8
      %s160 = scalar_lea.vmem %s3, %s159
      %p161 = scmp.lt.s32.totalorder %s14, 1
      %s162 = scalar_select %p161, %s14, 1
      %s163 = smul.addr %s162, 43
      %s164 = smul.addr %s163, 4
      %s165 = scalar_lea.vmem %s0, %s164
      %p166 = scmp.lt.s32.totalorder %s14, 1
      %s167 = scalar_select %p166, %s14, 1
      %s168 = smul.addr %s167, 36
      %s169 = smul.addr %s168, 8
      %s170 = scalar_lea.vmem %s3, %s169
      %v172 = vld [vmem:[%s165] sm:$0xf]
      %v173 = vld [vmem:[%s165 + $0x4] sm:$0xf]
      %v174 = vld [vmem:[%s165 + $0x8] sm:$0xf]
      %v175 = vld [vmem:[%s165 + $0xc] sm:$0xf]
      %v176 = vld [vmem:[%s165 + $0x10] sm:$0xf]
      %v177 = vld [vmem:[%s165 + $0x14] sm:$0xf]
      %v178 = vld [vmem:[%s165 + $0x18] sm:$0xf]
      %v179 = vld [vmem:[%s165 + $0x1c] sm:$0xf]
      %v180 = vld [vmem:[%s165 + $0x20] sm:$0xf]
      %v181 = vld [vmem:[%s165 + $0x24] sm:$0xf]
      %v182 = vld [vmem:[%s165 + $0x28] sm:$0xf]
      %v183 = vld [vmem:[%s165 + $0x2c] sm:$0xf]
      %v184 = vld [vmem:[%s165 + $0x30] sm:$0xf]
      %v185 = vld [vmem:[%s165 + $0x34] sm:$0xf]
      %v186 = vld [vmem:[%s165 + $0x38] sm:$0xf]
      %v187 = vld [vmem:[%s165 + $0x3c] sm:$0xf]
      %v188 = vld [vmem:[%s165 + $0x40] sm:$0xf]
      %v189 = vld [vmem:[%s165 + $0x44] sm:$0xf]
      %v190 = vld [vmem:[%s165 + $0x48] sm:$0xf]
      %v191 = vld [vmem:[%s165 + $0x4c] sm:$0xf]
      %v192 = vld [vmem:[%s165 + $0x50] sm:$0xf]
      %v193 = vld [vmem:[%s165 + $0x54] sm:$0xf]
      %v194 = vld [vmem:[%s165 + $0x58] sm:$0xf]
      %v195 = vld [vmem:[%s165 + $0x5c] sm:$0xf]
      %v196 = vld [vmem:[%s165 + $0x60] sm:$0xf]
      %v197 = vld [vmem:[%s165 + $0x64] sm:$0xf]
      %v198 = vld [vmem:[%s165 + $0x68] sm:$0xf]
      %v199 = vld [vmem:[%s165 + $0x6c] sm:$0xf]
      %v200 = vld [vmem:[%s165 + $0x70] sm:$0xf]
      %v201 = vld [vmem:[%s165 + $0x74] sm:$0xf]
      %v202 = vld [vmem:[%s165 + $0x78] sm:$0xf]
      %v203 = vld [vmem:[%s165 + $0x7c] sm:$0xf]
      %v204 = vld [vmem:[%s165 + $0x80] sm:$0xf]
      %v205 = vld [vmem:[%s165 + $0x84] sm:$0xf]
      %v206 = vld [vmem:[%s165 + $0x88] sm:$0xf]
      %v207 = vld [vmem:[%s165 + $0x8c] sm:$0xf]
      %v208 = vld [vmem:[%s165 + $0x90] sm:$0xf]
      %v209 = vld [vmem:[%s165 + $0x94] sm:$0xf]
      %v210 = vld [vmem:[%s165 + $0x98] sm:$0xf]
      %v211 = vld [vmem:[%s165 + $0x9c] sm:$0xf]
      %v212 = vld [vmem:[%s165 + $0xa0] sm:$0xf]
      %v213 = vld [vmem:[%s1] sm:$0xf]
      %v214 = vld [vmem:[%s1 + $0x4] sm:$0xf]
      %v215 = vld [vmem:[%s1 + $0x8] sm:$0xf]
      %v216 = vld [vmem:[%s1 + $0xc] sm:$0xf]
      %v217 = vld [vmem:[%s1 + $0x10] sm:$0xf]
      %v218 = vld [vmem:[%s1 + $0x14] sm:$0xf]
      %v219 = vld [vmem:[%s1 + $0x18] sm:$0xf]
      %v220 = vld [vmem:[%s1 + $0x1c] sm:$0xf]
      %v221 = vld [vmem:[%s1 + $0x20] sm:$0xf]
      %v222 = vld [vmem:[%s1 + $0x24] sm:$0xf]
      %v223 = vld [vmem:[%s1 + $0x28] sm:$0xf]
      %v224 = vld [vmem:[%s1 + $0x2c] sm:$0xf]
      %v225 = vld [vmem:[%s1 + $0x30] sm:$0xf]
      %v226 = vld [vmem:[%s1 + $0x34] sm:$0xf]
      %v227 = vld [vmem:[%s1 + $0x38] sm:$0xf]
      %v228 = vld [vmem:[%s1 + $0x3c] sm:$0xf]
      %v229 = vld [vmem:[%s1 + $0x40] sm:$0xf]
      %v230 = vld [vmem:[%s1 + $0x44] sm:$0xf]
      %v231 = vld [vmem:[%s1 + $0x48] sm:$0xf]
      %v232 = vld [vmem:[%s1 + $0x4c] sm:$0xf]
      %v233 = vld [vmem:[%s1 + $0x50] sm:$0xf]
      %v234 = vld [vmem:[%s1 + $0x54] sm:$0xf]
      %v235 = vld [vmem:[%s1 + $0x58] sm:$0xf]
      %v236 = vld [vmem:[%s1 + $0x5c] sm:$0xf]
      %v237 = vld [vmem:[%s1 + $0x60] sm:$0xf]
      %v238 = vld [vmem:[%s1 + $0x64] sm:$0xf]
      %v239 = vld [vmem:[%s1 + $0x68] sm:$0xf]
      %v240 = vld [vmem:[%s1 + $0x6c] sm:$0xf]
      %v241 = vld [vmem:[%s1 + $0x70] sm:$0xf]
      %v242 = vld [vmem:[%s1 + $0x74] sm:$0xf]
      %v243 = vld [vmem:[%s1 + $0x78] sm:$0xf]
      %v244 = vld [vmem:[%s1 + $0x7c] sm:$0xf]
      %v245 = vld [vmem:[%s1 + $0x80] sm:$0xf]
      %v246 = vld [vmem:[%s1 + $0x84] sm:$0xf]
      %v247 = vld [vmem:[%s1 + $0x88] sm:$0xf]
      %v248 = vld [vmem:[%s1 + $0x8c] sm:$0xf]
      %v249 = vld [vmem:[%s1 + $0x90] sm:$0xf]
      %v250 = vld [vmem:[%s1 + $0x94] sm:$0xf]
      %v251 = vld [vmem:[%s1 + $0x98] sm:$0xf]
      %v252 = vld [vmem:[%s1 + $0x9c] sm:$0xf]
      %v253 = vld [vmem:[%s1 + $0xa0] sm:$0xf]
      %v254 = vld [vmem:[%s1 + $0xa4] sm:$0xf]
      %v255 = vld [vmem:[%s1 + $0xa8] sm:$0xf]
      %v256 = vld [vmem:[%s1 + $0xac] sm:$0xf]
      %v257 = vld [vmem:[%s1 + $0xb0] sm:$0xf]
      %v258 = vld [vmem:[%s1 + $0xb4] sm:$0xf]
      %v259 = vld [vmem:[%s1 + $0xb8] sm:$0xf]
      %v260 = vld [vmem:[%s1 + $0xbc] sm:$0xf]
      %v261 = vld [vmem:[%s1 + $0xc0] sm:$0xf]
      %v262 = vld [vmem:[%s1 + $0xc4] sm:$0xf]
      %v263 = vld [vmem:[%s1 + $0xc8] sm:$0xf]
      %v264 = vld [vmem:[%s1 + $0xcc] sm:$0xf]
      %v265 = vld [vmem:[%s1 + $0xd0] sm:$0xf]
      %v266 = vld [vmem:[%s1 + $0xd4] sm:$0xf]
      %v267 = vld [vmem:[%s1 + $0xd8] sm:$0xf]
      %v268 = vld [vmem:[%s1 + $0xdc] sm:$0xf]
      %v269 = vld [vmem:[%s1 + $0xe0] sm:$0xf]
      %v270 = vld [vmem:[%s1 + $0xe4] sm:$0xf]
      %v271 = vld [vmem:[%s1 + $0xe8] sm:$0xf]
      %v272 = vld [vmem:[%s1 + $0xec] sm:$0xf]
      %v273 = vld [vmem:[%s1 + $0xf0] sm:$0xf]
      %v274 = vld [vmem:[%s1 + $0xf4] sm:$0xf]
      %v275 = vld [vmem:[%s1 + $0xf8] sm:$0xf]
      %v276 = vld [vmem:[%s1 + $0xfc] sm:$0xf]
      %v277 = vld [vmem:[%s1 + $0x100] sm:$0xf]
      %v278 = vld [vmem:[%s1 + $0x104] sm:$0xf]
      %v279 = vld [vmem:[%s1 + $0x108] sm:$0xf]
      %v280 = vld [vmem:[%s1 + $0x10c] sm:$0xf]
      %v281 = vld [vmem:[%s1 + $0x110] sm:$0xf]
      %v282 = vld [vmem:[%s1 + $0x114] sm:$0xf]
      %v283 = vld [vmem:[%s1 + $0x118] sm:$0xf]
      %v284 = vld [vmem:[%s1 + $0x11c] sm:$0xf]
      %v285 = vld [vmem:[%s1 + $0x120] sm:$0xf]
      %v286 = vld [vmem:[%s1 + $0x124] sm:$0xf]
      %v287 = vld [vmem:[%s1 + $0x128] sm:$0xf]
      %v288 = vld [vmem:[%s1 + $0x12c] sm:$0xf]
      %v289 = vld [vmem:[%s1 + $0x130] sm:$0xf]
      %v290 = vld [vmem:[%s1 + $0x134] sm:$0xf]
      %v291 = vld [vmem:[%s1 + $0x138] sm:$0xf]
      %v292 = vld [vmem:[%s1 + $0x13c] sm:$0xf]
      %v293 = vld [vmem:[%s1 + $0x140] sm:$0xf]
      %v294 = vld [vmem:[%s1 + $0x144] sm:$0xf]
      %v295 = vld [vmem:[%s1 + $0x148] sm:$0xf]
      %v296 = vld [vmem:[%s1 + $0x14c] sm:$0xf]
      %v297 = vld [vmem:[%s1 + $0x150] sm:$0xf]
      %v298 = vld [vmem:[%s1 + $0x154] sm:$0xf]
      %v299 = vld [vmem:[%s1 + $0x158] sm:$0xf]
      %v300 = vld [vmem:[%s1 + $0x15c] sm:$0xf]
      %v301 = vld [vmem:[%s1 + $0x160] sm:$0xf]
      %v302 = vld [vmem:[%s1 + $0x164] sm:$0xf]
      %v303 = vld [vmem:[%s1 + $0x168] sm:$0xf]
      %v304 = vld [vmem:[%s1 + $0x16c] sm:$0xf]
      %v305 = vld [vmem:[%s1 + $0x170] sm:$0xf]
      %v306 = vld [vmem:[%s1 + $0x174] sm:$0xf]
      %v307 = vld [vmem:[%s1 + $0x178] sm:$0xf]
      %v308 = vld [vmem:[%s1 + $0x17c] sm:$0xf]
      %v309 = vld [vmem:[%s1 + $0x180] sm:$0xf]
      %v310 = vld [vmem:[%s1 + $0x184] sm:$0xf]
      %v311 = vld [vmem:[%s1 + $0x188] sm:$0xf]
      %v312 = vld [vmem:[%s1 + $0x18c] sm:$0xf]
      %v313 = vld [vmem:[%s1 + $0x190] sm:$0xf]
      %v314 = vld [vmem:[%s1 + $0x194] sm:$0xf]
      %v315 = vld [vmem:[%s1 + $0x198] sm:$0xf]
      %v316 = vld [vmem:[%s1 + $0x19c] sm:$0xf]
      %v317 = vld [vmem:[%s1 + $0x1a0] sm:$0xf]
      %v318 = vld [vmem:[%s1 + $0x1a4] sm:$0xf]
      %v319 = vld [vmem:[%s1 + $0x1a8] sm:$0xf]
      %v320 = vld [vmem:[%s1 + $0x1ac] sm:$0xf]
      %v321 = vld [vmem:[%s1 + $0x1b0] sm:$0xf]
      %v322 = vld [vmem:[%s1 + $0x1b4] sm:$0xf]
      %v323 = vld [vmem:[%s1 + $0x1b8] sm:$0xf]
      %v324 = vld [vmem:[%s1 + $0x1bc] sm:$0xf]
      %v325 = vld [vmem:[%s1 + $0x1c0] sm:$0xf]
      %v326 = vld [vmem:[%s1 + $0x1c4] sm:$0xf]
      %v327 = vld [vmem:[%s1 + $0x1c8] sm:$0xf]
      %v328 = vld [vmem:[%s1 + $0x1cc] sm:$0xf]
      %v329 = vld [vmem:[%s1 + $0x1d0] sm:$0xf]
      %v330 = vld [vmem:[%s1 + $0x1d4] sm:$0xf]
      %v331 = vld [vmem:[%s1 + $0x1d8] sm:$0xf]
      %v332 = vld [vmem:[%s1 + $0x1dc] sm:$0xf]
      %v333 = vld [vmem:[%s1 + $0x1e0] sm:$0xf]
      %v334 = vld [vmem:[%s1 + $0x1e4] sm:$0xf]
      %v335 = vld [vmem:[%s1 + $0x1e8] sm:$0xf]
      %v336 = vld [vmem:[%s1 + $0x1ec] sm:$0xf]
      %v337 = vld [vmem:[%s1 + $0x1f0] sm:$0xf]
      %v338 = vld [vmem:[%s1 + $0x1f4] sm:$0xf]
      %v339 = vld [vmem:[%s1 + $0x1f8] sm:$0xf]
      %v340 = vld [vmem:[%s1 + $0x1fc] sm:$0xf]
      %v341 = vld [vmem:[%s1 + $0x200] sm:$0xf]
      %v342 = vld [vmem:[%s1 + $0x204] sm:$0xf]
      %v343 = vld [vmem:[%s1 + $0x208] sm:$0xf]
      %v344 = vld [vmem:[%s1 + $0x20c] sm:$0xf]
      %v345 = vld [vmem:[%s1 + $0x210] sm:$0xf]
      %v346 = vld [vmem:[%s1 + $0x214] sm:$0xf]
      %v347 = vld [vmem:[%s1 + $0x218] sm:$0xf]
      %v348 = vld [vmem:[%s1 + $0x21c] sm:$0xf]
      %v349 = vld [vmem:[%s1 + $0x220] sm:$0xf]
      %v350 = vld [vmem:[%s1 + $0x224] sm:$0xf]
      %v351 = vld [vmem:[%s1 + $0x228] sm:$0xf]
      %v352 = vld [vmem:[%s1 + $0x22c] sm:$0xf]
      %v353 = vld [vmem:[%s1 + $0x230] sm:$0xf]
      %v354 = vld [vmem:[%s1 + $0x234] sm:$0xf]
      %v355 = vld [vmem:[%s1 + $0x238] sm:$0xf]
      %v356 = vld [vmem:[%s1 + $0x23c] sm:$0xf]
      %v394 = vunpack.c.l.b16 %v172
      %v395 = vunpack.c.l.b16 %v173
      %v396 = vunpack.c.l.b16 %v174
      %v397 = vunpack.c.l.b16 %v175
      %v398 = vunpack.c.l.b16 %v176
      %v399 = vunpack.c.l.b16 %v177
      %v400 = vunpack.c.l.b16 %v178
      %v401 = vunpack.c.l.b16 %v179
      %v402 = vunpack.c.l.b16 %v180
      %v403 = vunpack.c.l.b16 %v181
      %v404 = vunpack.c.l.b16 %v182
      %v405 = vunpack.c.l.b16 %v183
      %v406 = vunpack.c.l.b16 %v184
      %v407 = vunpack.c.l.b16 %v185
      %v408 = vunpack.c.l.b16 %v186
      %v409 = vunpack.c.l.b16 %v187
      %v410 = vunpack.c.l.b16 %v188
      %v411 = vunpack.c.l.b16 %v189
      %v412 = vunpack.c.l.b16 %v190
      %v413 = vunpack.c.l.b16 %v191
      %v414 = vunpack.c.l.b16 %v192
      %v415 = vunpack.c.l.b16 %v193
      %v416 = vunpack.c.l.b16 %v194
      %v417 = vunpack.c.l.b16 %v195
      %v418 = vunpack.c.l.b16 %v196
      %v419 = vunpack.c.l.b16 %v197
      %v420 = vunpack.c.l.b16 %v198
      %v421 = vunpack.c.l.b16 %v199
      %v422 = vunpack.c.l.b16 %v200
      %v423 = vunpack.c.l.b16 %v201
      %v424 = vunpack.c.l.b16 %v202
      %v425 = vunpack.c.l.b16 %v203
      %v426 = vunpack.c.l.b16 %v204
      %v427 = vunpack.c.l.b16 %v205
      %v428 = vunpack.c.l.b16 %v206
      %v429 = vunpack.c.l.b16 %v207
      %v430 = vunpack.c.l.b16 %v208
      %v431 = vpack.c.b16 %v395, %v394
      %v432 = vpack.c.b16 %v397, %v396
      %v433 = vpack.c.b16 %v399, %v398
      %v434 = vpack.c.b16 %v401, %v400
      %v435 = vpack.c.b16 %v403, %v402
      %v436 = vpack.c.b16 %v405, %v404
      %v437 = vpack.c.b16 %v407, %v406
      %v438 = vpack.c.b16 %v409, %v408
      %v439 = vpack.c.b16 %v411, %v410
      %v440 = vpack.c.b16 %v413, %v412
      %v441 = vpack.c.b16 %v415, %v414
      %v442 = vpack.c.b16 %v417, %v416
      %v443 = vpack.c.b16 %v419, %v418
      %v444 = vpack.c.b16 %v421, %v420
      %v445 = vpack.c.b16 %v423, %v422
      %v446 = vpack.c.b16 %v425, %v424
      %v447 = vpack.c.b16 %v427, %v426
      %v448 = vpack.c.b16 %v429, %v428
      %v449 = vpack.c.b16 %v430, %v430
      %vm450 = vsmask.f32 7424
      %v452 = vshrl.u32 %v431, 16
      %v454 = vshll.u32 %v431, 16
      %v456 = vrot.slane %v454, 1
      %v457 = vor.u32 %v452, %v456
      %v459 = vshll.u32 %v432, 16
      %v461 = vrot.slane %v459, 1
      %v462 = vsel %vm450, %v457, %v461
      %v463 = vshrl.u32 %v432, 16
      %v465 = vor.u32 %v463, %v461
      %v467 = vshll.u32 %v433, 16
      %v469 = vrot.slane %v467, 1
      %v470 = vsel %vm450, %v465, %v469
      %v471 = vshrl.u32 %v433, 16
      %v473 = vor.u32 %v471, %v469
      %v475 = vshll.u32 %v434, 16
      %v477 = vrot.slane %v475, 1
      %v478 = vsel %vm450, %v473, %v477
      %v479 = vshrl.u32 %v434, 16
      %v481 = vor.u32 %v479, %v477
      %v483 = vshll.u32 %v435, 16
      %v485 = vrot.slane %v483, 1
      %v486 = vsel %vm450, %v481, %v485
      %v487 = vshrl.u32 %v435, 16
      %v489 = vor.u32 %v487, %v485
      %v491 = vshll.u32 %v436, 16
      %v493 = vrot.slane %v491, 1
      %v494 = vsel %vm450, %v489, %v493
      %v495 = vshrl.u32 %v436, 16
      %v497 = vor.u32 %v495, %v493
      %v499 = vshll.u32 %v437, 16
      %v501 = vrot.slane %v499, 1
      %v502 = vsel %vm450, %v497, %v501
      %v503 = vshrl.u32 %v437, 16
      %v505 = vor.u32 %v503, %v501
      %v507 = vshll.u32 %v438, 16
      %v509 = vrot.slane %v507, 1
      %v510 = vsel %vm450, %v505, %v509
      %v511 = vshrl.u32 %v438, 16
      %v513 = vor.u32 %v511, %v509
      %v515 = vshll.u32 %v439, 16
      %v517 = vrot.slane %v515, 1
      %v518 = vsel %vm450, %v513, %v517
      %v519 = vshrl.u32 %v439, 16
      %v521 = vor.u32 %v519, %v517
      %v523 = vshll.u32 %v440, 16
      %v525 = vrot.slane %v523, 1
      %v526 = vsel %vm450, %v521, %v525
      %v527 = vshrl.u32 %v440, 16
      %v529 = vor.u32 %v527, %v525
      %v531 = vshll.u32 %v441, 16
      %v533 = vrot.slane %v531, 1
      %v534 = vsel %vm450, %v529, %v533
      %v535 = vshrl.u32 %v441, 16
      %v537 = vor.u32 %v535, %v533
      %v539 = vshll.u32 %v442, 16
      %v541 = vrot.slane %v539, 1
      %v542 = vsel %vm450, %v537, %v541
      %v543 = vshrl.u32 %v442, 16
      %v545 = vor.u32 %v543, %v541
      %v547 = vshll.u32 %v443, 16
      %v549 = vrot.slane %v547, 1
      %v550 = vsel %vm450, %v545, %v549
      %v551 = vshrl.u32 %v443, 16
      %v553 = vor.u32 %v551, %v549
      %v555 = vshll.u32 %v444, 16
      %v557 = vrot.slane %v555, 1
      %v558 = vsel %vm450, %v553, %v557
      %v559 = vshrl.u32 %v444, 16
      %v561 = vor.u32 %v559, %v557
      %v563 = vshll.u32 %v445, 16
      %v565 = vrot.slane %v563, 1
      %v566 = vsel %vm450, %v561, %v565
      %v567 = vshrl.u32 %v445, 16
      %v569 = vor.u32 %v567, %v565
      %v571 = vshll.u32 %v446, 16
      %v573 = vrot.slane %v571, 1
      %v574 = vsel %vm450, %v569, %v573
      %v575 = vshrl.u32 %v446, 16
      %v577 = vor.u32 %v575, %v573
      %v579 = vshll.u32 %v447, 16
      %v581 = vrot.slane %v579, 1
      %v582 = vsel %vm450, %v577, %v581
      %v583 = vshrl.u32 %v447, 16
      %v585 = vor.u32 %v583, %v581
      %v587 = vshll.u32 %v448, 16
      %v589 = vrot.slane %v587, 1
      %v590 = vsel %vm450, %v585, %v589
      %v591 = vshrl.u32 %v448, 16
      %v593 = vor.u32 %v591, %v589
      %v595 = vshll.u32 %v449, 16
      %v597 = vrot.slane %v595, 1
      %v598 = vsel %vm450, %v593, %v597
      %v633 = vunpack.c.l.b16 %v229
      %v634 = vunpack.c.l.b16 %v230
      %v635 = vunpack.c.l.b16 %v231
      %v636 = vunpack.c.l.b16 %v232
      %v637 = vunpack.c.l.b16 %v233
      %v638 = vunpack.c.l.b16 %v234
      %v639 = vunpack.c.l.b16 %v235
      %v640 = vunpack.c.l.b16 %v236
      %v641 = vunpack.c.l.b16 %v237
      %v642 = vunpack.c.l.b16 %v238
      %v643 = vunpack.c.l.b16 %v239
      %v644 = vunpack.c.l.b16 %v240
      %v645 = vunpack.c.l.b16 %v241
      %v646 = vunpack.c.l.b16 %v242
      %v647 = vunpack.c.l.b16 %v243
      %v648 = vunpack.c.l.b16 %v244
      %v649 = vpack.c.b16 %v634, %v633
      %v650 = vpack.c.b16 %v636, %v635
      %v651 = vpack.c.b16 %v638, %v637
      %v652 = vpack.c.b16 %v640, %v639
      %v653 = vpack.c.b16 %v642, %v641
      %v654 = vpack.c.b16 %v644, %v643
      %v655 = vpack.c.b16 %v646, %v645
      %v656 = vpack.c.b16 %v648, %v647
      %665 = vmatprep.subr.bf16.mxu0 0
      %666 = vmatpush1.bf16.msra.mxu0 %v649
      %667 = vmatprep.subr.bf16.mxu0 0
      %668 = vmatpush1.bf16.msra.mxu0 %v650
      %669 = vmatprep.subr.bf16.mxu0 0
      %670 = vmatpush1.bf16.msra.mxu0 %v651
      %671 = vmatprep.subr.bf16.mxu0 0
      %672 = vmatpush1.bf16.msra.mxu0 %v652
      %673 = vmatprep.subr.bf16.mxu0 0
      %674 = vmatpush1.bf16.msra.mxu0 %v653
      %675 = vmatprep.subr.bf16.mxu0 0
      %676 = vmatpush1.bf16.msra.mxu0 %v654
      %677 = vmatprep.subr.bf16.mxu0 0
      %678 = vmatpush1.bf16.msra.mxu0 %v655
      %679 = vmatprep.subr.bf16.mxu0 0
      %680 = vmatpush1.bf16.msra.mxu0 %v656
      %681 = vmatprep.subr.bf16.mxu0 0
      %682 = vmatpush1.bf16.msra.mxu0 0
      %683 = vmatprep.subr.bf16.mxu0 0
      %684 = vmatpush1.bf16.msra.mxu0 0
      %685 = vmatprep.subr.bf16.mxu0 0
      %686 = vmatpush1.bf16.msra.mxu0 0
      %687 = vmatprep.subr.bf16.mxu0 0
      %688 = vmatpush1.bf16.msra.mxu0 0
      %689 = vmatprep.subr.bf16.mxu0 0
      %690 = vmatpush1.bf16.msra.mxu0 0
      %691 = vmatprep.subr.bf16.mxu0 0
      %692 = vmatpush1.bf16.msra.mxu0 0
      %693 = vmatprep.subr.bf16.mxu0 0
      %694 = vmatpush1.bf16.msra.mxu0 0
      %695 = vmatprep.subr.bf16.mxu0 0
      %696 = vmatpush1.bf16.msra.mxu0 0
      %697 = vmatprep.mubr.bf16.mxu0 0
      %698 = vmatmul.mubr.bf16.gmra.mrb[0].mxu0 %v462
      %v699 = vpop.f32.mrb[0].mxu0
      %v700 = vadd.f32 0.0, %v699
      %v701 = vpop.f32.mrb[0].mxu0
      %v702 = vpop.f32.mrb[0].mxu0
      %v703 = vadd.f32 0.0, %v702
      %v704 = vpop.f32.mrb[0].mxu0
      %705 = vmatprep.mubr.bf16.mxu0 0
      %706 = vmatmul.mubr.bf16.gmra.mrb[0].mxu0 %v470
      %v707 = vpop.f32.mrb[0].mxu0
      %v708 = vadd.f32 0.0, %v707
      %v709 = vpop.f32.mrb[0].mxu0
      %v710 = vpop.f32.mrb[0].mxu0
      %v711 = vadd.f32 0.0, %v710
      %v712 = vpop.f32.mrb[0].mxu0
      %713 = vmatprep.mubr.bf16.mxu0 0
      %714 = vmatmul.mubr.bf16.gmra.mrb[0].mxu0 %v478
      %v715 = vpop.f32.mrb[0].mxu0
      %v716 = vadd.f32 0.0, %v715
      %v717 = vpop.f32.mrb[0].mxu0
      %v718 = vpop.f32.mrb[0].mxu0
      %v719 = vadd.f32 0.0, %v718
      %v720 = vpop.f32.mrb[0].mxu0
      %721 = vmatprep.mubr.bf16.mxu0 0
      %722 = vmatmul.mubr.bf16.gmra.mrb[0].mxu0 %v486
      %v723 = vpop.f32.mrb[0].mxu0
      %v724 = vadd.f32 0.0, %v723
      %v725 = vpop.f32.mrb[0].mxu0
      %v726 = vpop.f32.mrb[0].mxu0
      %v727 = vadd.f32 0.0, %v726
      %v728 = vpop.f32.mrb[0].mxu0
      %729 = vmatprep.mubr.bf16.mxu0 0
      %730 = vmatmul.mubr.bf16.gmra.mrb[0].mxu0 %v494
      %v731 = vpop.f32.mrb[0].mxu0
      %v732 = vadd.f32 0.0, %v731
      %v733 = vpop.f32.mrb[0].mxu0
      %v734 = vpop.f32.mrb[0].mxu0
      %v735 = vadd.f32 0.0, %v734
      %v736 = vpop.f32.mrb[0].mxu0
      %737 = vmatprep.mubr.bf16.mxu0 0
      %738 = vmatmul.mubr.bf16.gmra.mrb[0].mxu0 %v502
      %v739 = vpop.f32.mrb[0].mxu0
      %v740 = vadd.f32 0.0, %v739
      %v741 = vpop.f32.mrb[0].mxu0
      %v742 = vpop.f32.mrb[0].mxu0
      %v743 = vadd.f32 0.0, %v742
      %v744 = vpop.f32.mrb[0].mxu0
      %745 = vmatprep.mubr.bf16.mxu0 0
      %746 = vmatmul.mubr.bf16.gmra.mrb[0].mxu0 %v510
      %v747 = vpop.f32.mrb[0].mxu0
      %v748 = vadd.f32 0.0, %v747
      %v749 = vpop.f32.mrb[0].mxu0
      %v750 = vpop.f32.mrb[0].mxu0
      %v751 = vadd.f32 0.0, %v750
      %v752 = vpop.f32.mrb[0].mxu0
      %753 = vmatprep.mubr.bf16.mxu0 0
      %754 = vmatmul.mubr.bf16.gmra.mrb[0].mxu0 %v518
      %v755 = vpop.f32.mrb[0].mxu0
      %v756 = vadd.f32 0.0, %v755
      %v757 = vpop.f32.mrb[0].mxu0
      %v758 = vpop.f32.mrb[0].mxu0
      %v759 = vadd.f32 0.0, %v758
      %v760 = vpop.f32.mrb[0].mxu0
      %761 = vmatprep.mubr.bf16.mxu0 0
      %762 = vmatmul.mubr.bf16.gmra.mrb[0].mxu0 %v526
      %v763 = vpop.f32.mrb[0].mxu0
      %v764 = vadd.f32 0.0, %v763
      %v765 = vpop.f32.mrb[0].mxu0
      %v766 = vpop.f32.mrb[0].mxu0
      %v767 = vadd.f32 0.0, %v766
      %v768 = vpop.f32.mrb[0].mxu0
      %769 = vmatprep.mubr.bf16.mxu0 0
      %770 = vmatmul.mubr.bf16.gmra.mrb[0].mxu0 %v534
      %v771 = vpop.f32.mrb[0].mxu0
      %v772 = vadd.f32 0.0, %v771
      %v773 = vpop.f32.mrb[0].mxu0
      %v774 = vpop.f32.mrb[0].mxu0
      %v775 = vadd.f32 0.0, %v774
      %v776 = vpop.f32.mrb[0].mxu0
      %777 = vmatprep.mubr.bf16.mxu0 0
      %778 = vmatmul.mubr.bf16.gmra.mrb[0].mxu0 %v542
      %v779 = vpop.f32.mrb[0].mxu0
      %v780 = vadd.f32 0.0, %v779
      %v781 = vpop.f32.mrb[0].mxu0
      %v782 = vpop.f32.mrb[0].mxu0
      %v783 = vadd.f32 0.0, %v782
      %v784 = vpop.f32.mrb[0].mxu0
      %785 = vmatprep.mubr.bf16.mxu0 0
      %786 = vmatmul.mubr.bf16.gmra.mrb[0].mxu0 %v550
      %v787 = vpop.f32.mrb[0].mxu0
      %v788 = vadd.f32 0.0, %v787
      %v789 = vpop.f32.mrb[0].mxu0
      %v790 = vpop.f32.mrb[0].mxu0
      %v791 = vadd.f32 0.0, %v790
      %v792 = vpop.f32.mrb[0].mxu0
      %793 = vmatprep.mubr.bf16.mxu0 0
      %794 = vmatmul.mubr.bf16.gmra.mrb[0].mxu0 %v558
      %v795 = vpop.f32.mrb[0].mxu0
      %v796 = vadd.f32 0.0, %v795
      %v797 = vpop.f32.mrb[0].mxu0
      %v798 = vpop.f32.mrb[0].mxu0
      %v799 = vadd.f32 0.0, %v798
      %v800 = vpop.f32.mrb[0].mxu0
      %801 = vmatprep.mubr.bf16.mxu0 0
      %802 = vmatmul.mubr.bf16.gmra.mrb[0].mxu0 %v566
      %v803 = vpop.f32.mrb[0].mxu0
      %v804 = vadd.f32 0.0, %v803
      %v805 = vpop.f32.mrb[0].mxu0
      %v806 = vpop.f32.mrb[0].mxu0
      %v807 = vadd.f32 0.0, %v806
      %v808 = vpop.f32.mrb[0].mxu0
      %809 = vmatprep.mubr.bf16.mxu0 0
      %810 = vmatmul.mubr.bf16.gmra.mrb[0].mxu0 %v574
      %v811 = vpop.f32.mrb[0].mxu0
      %v812 = vadd.f32 0.0, %v811
      %v813 = vpop.f32.mrb[0].mxu0
      %v814 = vpop.f32.mrb[0].mxu0
      %v815 = vadd.f32 0.0, %v814
      %v816 = vpop.f32.mrb[0].mxu0
      %817 = vmatprep.mubr.bf16.mxu0 0
      %818 = vmatmul.mubr.bf16.gmra.mrb[0].mxu0 %v582
      %v819 = vpop.f32.mrb[0].mxu0
      %v820 = vadd.f32 0.0, %v819
      %v821 = vpop.f32.mrb[0].mxu0
      %v822 = vpop.f32.mrb[0].mxu0
      %v823 = vadd.f32 0.0, %v822
      %v824 = vpop.f32.mrb[0].mxu0
      %825 = vmatprep.mubr.bf16.mxu0 0
      %826 = vmatmul.mubr.bf16.gmra.mrb[0].mxu0 %v590
      %v827 = vpop.f32.mrb[0].mxu0
      %v828 = vadd.f32 0.0, %v827
      %v829 = vpop.f32.mrb[0].mxu0
      %v830 = vpop.f32.mrb[0].mxu0
      %v831 = vadd.f32 0.0, %v830
      %v832 = vpop.f32.mrb[0].mxu0
      %833 = vmatprep.mubr.bf16.mxu0 0
      %834 = vmatmul.mubr.bf16.gmra.mrb[0].mxu0 %v598
      %v835 = vpop.f32.mrb[0].mxu0
      %v836 = vadd.f32 0.0, %v835
      %v837 = vpop.f32.mrb[0].mxu0
      %v838 = vpop.f32.mrb[0].mxu0
      %v839 = vadd.f32 0.0, %v838
      %v840 = vpop.f32.mrb[0].mxu0
      %841 = vdwg.mxu0
      %v876 = vunpack.c.l.b16 %v213
      %v877 = vunpack.c.l.b16 %v214
      %v878 = vunpack.c.l.b16 %v215
      %v879 = vunpack.c.l.b16 %v216
      %v880 = vunpack.c.l.b16 %v217
      %v881 = vunpack.c.l.b16 %v218
      %v882 = vunpack.c.l.b16 %v219
      %v883 = vunpack.c.l.b16 %v220
      %v884 = vunpack.c.l.b16 %v221
      %v885 = vunpack.c.l.b16 %v222
      %v886 = vunpack.c.l.b16 %v223
      %v887 = vunpack.c.l.b16 %v224
      %v888 = vunpack.c.l.b16 %v225
      %v889 = vunpack.c.l.b16 %v226
      %v890 = vunpack.c.l.b16 %v227
      %v891 = vunpack.c.l.b16 %v228
      %v892 = vpack.c.b16 %v877, %v876
      %v893 = vpack.c.b16 %v879, %v878
      %v894 = vpack.c.b16 %v881, %v880
      %v895 = vpack.c.b16 %v883, %v882
      %v896 = vpack.c.b16 %v885, %v884
      %v897 = vpack.c.b16 %v887, %v886
      %v898 = vpack.c.b16 %v889, %v888
      %v899 = vpack.c.b16 %v891, %v890
      %908 = vmatprep.subr.bf16.mxu0 0
      %909 = vmatpush1.bf16.msra.mxu0 %v892
      %910 = vmatprep.subr.bf16.mxu0 0
      %911 = vmatpush1.bf16.msra.mxu0 %v893
      %912 = vmatprep.subr.bf16.mxu0 0
      %913 = vmatpush1.bf16.msra.mxu0 %v894
      %914 = vmatprep.subr.bf16.mxu0 0
      %915 = vmatpush1.bf16.msra.mxu0 %v895
      %916 = vmatprep.subr.bf16.mxu0 0
      %917 = vmatpush1.bf16.msra.mxu0 %v896
      %918 = vmatprep.subr.bf16.mxu0 0
      %919 = vmatpush1.bf16.msra.mxu0 %v897
      %920 = vmatprep.subr.bf16.mxu0 0
      %921 = vmatpush1.bf16.msra.mxu0 %v898
      %922 = vmatprep.subr.bf16.mxu0 0
      %923 = vmatpush1.bf16.msra.mxu0 %v899
      %924 = vmatprep.subr.bf16.mxu0 0
      %925 = vmatpush1.bf16.msra.mxu0 0
      %926 = vmatprep.subr.bf16.mxu0 0
      %927 = vmatpush1.bf16.msra.mxu0 0
      %928 = vmatprep.subr.bf16.mxu0 0
      %929 = vmatpush1.bf16.msra.mxu0 0
      %930 = vmatprep.subr.bf16.mxu0 0
      %931 = vmatpush1.bf16.msra.mxu0 0
      %932 = vmatprep.subr.bf16.mxu0 0
      %933 = vmatpush1.bf16.msra.mxu0 0
      %934 = vmatprep.subr.bf16.mxu0 0
      %935 = vmatpush1.bf16.msra.mxu0 0
      %936 = vmatprep.subr.bf16.mxu0 0
      %937 = vmatpush1.bf16.msra.mxu0 0
      %938 = vmatprep.subr.bf16.mxu0 0
      %939 = vmatpush1.bf16.msra.mxu0 0
      %940 = vmatprep.mubr.bf16.mxu0 0
      %941 = vmatmul.mubr.bf16.gmra.mrb[0].mxu0 %v431
      %v942 = vpop.f32.mrb[0].mxu0
      %v943 = vadd.f32 %v700, %v942
      %v944 = vpop.f32.mrb[0].mxu0
      %v945 = vpop.f32.mrb[0].mxu0
      %v946 = vadd.f32 %v703, %v945
      %v947 = vpop.f32.mrb[0].mxu0
      %948 = vmatprep.mubr.bf16.mxu0 0
      %949 = vmatmul.mubr.bf16.gmra.mrb[0].mxu0 %v432
      %v950 = vpop.f32.mrb[0].mxu0
      %v951 = vadd.f32 %v708, %v950
      %v952 = vpop.f32.mrb[0].mxu0
      %v953 = vpop.f32.mrb[0].mxu0
      %v954 = vadd.f32 %v711, %v953
      %v955 = vpop.f32.mrb[0].mxu0
      %956 = vmatprep.mubr.bf16.mxu0 0
      %957 = vmatmul.mubr.bf16.gmra.mrb[0].mxu0 %v433
      %v958 = vpop.f32.mrb[0].mxu0
      %v959 = vadd.f32 %v716, %v958
      %v960 = vpop.f32.mrb[0].mxu0
      %v961 = vpop.f32.mrb[0].mxu0
      %v962 = vadd.f32 %v719, %v961
      %v963 = vpop.f32.mrb[0].mxu0
      %964 = vmatprep.mubr.bf16.mxu0 0
      %965 = vmatmul.mubr.bf16.gmra.mrb[0].mxu0 %v434
      %v966 = vpop.f32.mrb[0].mxu0
      %v967 = vadd.f32 %v724, %v966
      %v968 = vpop.f32.mrb[0].mxu0
      %v969 = vpop.f32.mrb[0].mxu0
      %v970 = vadd.f32 %v727, %v969
      %v971 = vpop.f32.mrb[0].mxu0
      %972 = vmatprep.mubr.bf16.mxu0 0
      %973 = vmatmul.mubr.bf16.gmra.mrb[0].mxu0 %v435
      %v974 = vpop.f32.mrb[0].mxu0
      %v975 = vadd.f32 %v732, %v974
      %v976 = vpop.f32.mrb[0].mxu0
      %v977 = vpop.f32.mrb[0].mxu0
      %v978 = vadd.f32 %v735, %v977
      %v979 = vpop.f32.mrb[0].mxu0
      %980 = vmatprep.mubr.bf16.mxu0 0
      %981 = vmatmul.mubr.bf16.gmra.mrb[0].mxu0 %v436
      %v982 = vpop.f32.mrb[0].mxu0
      %v983 = vadd.f32 %v740, %v982
      %v984 = vpop.f32.mrb[0].mxu0
      %v985 = vpop.f32.mrb[0].mxu0
      %v986 = vadd.f32 %v743, %v985
      %v987 = vpop.f32.mrb[0].mxu0
      %988 = vmatprep.mubr.bf16.mxu0 0
      %989 = vmatmul.mubr.bf16.gmra.mrb[0].mxu0 %v437
      %v990 = vpop.f32.mrb[0].mxu0
      %v991 = vadd.f32 %v748, %v990
      %v992 = vpop.f32.mrb[0].mxu0
      %v993 = vpop.f32.mrb[0].mxu0
      %v994 = vadd.f32 %v751, %v993
      %v995 = vpop.f32.mrb[0].mxu0
      %996 = vmatprep.mubr.bf16.mxu0 0
      %997 = vmatmul.mubr.bf16.gmra.mrb[0].mxu0 %v438
      %v998 = vpop.f32.mrb[0].mxu0
      %v999 = vadd.f32 %v756, %v998
      %v1000 = vpop.f32.mrb[0].mxu0
      %v1001 = vpop.f32.mrb[0].mxu0
      %v1002 = vadd.f32 %v759, %v1001
      %v1003 = vpop.f32.mrb[0].mxu0
      %1004 = vmatprep.mubr.bf16.mxu0 0
      %1005 = vmatmul.mubr.bf16.gmra.mrb[0].mxu0 %v439
      %v1006 = vpop.f32.mrb[0].mxu0
      %v1007 = vadd.f32 %v764, %v1006
      %v1008 = vpop.f32.mrb[0].mxu0
      %v1009 = vpop.f32.mrb[0].mxu0
      %v1010 = vadd.f32 %v767, %v1009
      %v1011 = vpop.f32.mrb[0].mxu0
      %1012 = vmatprep.mubr.bf16.mxu0 0
      %1013 = vmatmul.mubr.bf16.gmra.mrb[0].mxu0 %v440
      %v1014 = vpop.f32.mrb[0].mxu0
      %v1015 = vadd.f32 %v772, %v1014
      %v1016 = vpop.f32.mrb[0].mxu0
      %v1017 = vpop.f32.mrb[0].mxu0
      %v1018 = vadd.f32 %v775, %v1017
      %v1019 = vpop.f32.mrb[0].mxu0
      %1020 = vmatprep.mubr.bf16.mxu0 0
      %1021 = vmatmul.mubr.bf16.gmra.mrb[0].mxu0 %v441
      %v1022 = vpop.f32.mrb[0].mxu0
      %v1023 = vadd.f32 %v780, %v1022
      %v1024 = vpop.f32.mrb[0].mxu0
      %v1025 = vpop.f32.mrb[0].mxu0
      %v1026 = vadd.f32 %v783, %v1025
      %v1027 = vpop.f32.mrb[0].mxu0
      %1028 = vmatprep.mubr.bf16.mxu0 0
      %1029 = vmatmul.mubr.bf16.gmra.mrb[0].mxu0 %v442
      %v1030 = vpop.f32.mrb[0].mxu0
      %v1031 = vadd.f32 %v788, %v1030
      %v1032 = vpop.f32.mrb[0].mxu0
      %v1033 = vpop.f32.mrb[0].mxu0
      %v1034 = vadd.f32 %v791, %v1033
      %v1035 = vpop.f32.mrb[0].mxu0
      %1036 = vmatprep.mubr.bf16.mxu0 0
      %1037 = vmatmul.mubr.bf16.gmra.mrb[0].mxu0 %v443
      %v1038 = vpop.f32.mrb[0].mxu0
      %v1039 = vadd.f32 %v796, %v1038
      %v1040 = vpop.f32.mrb[0].mxu0
      %v1041 = vpop.f32.mrb[0].mxu0
      %v1042 = vadd.f32 %v799, %v1041
      %v1043 = vpop.f32.mrb[0].mxu0
      %1044 = vmatprep.mubr.bf16.mxu0 0
      %1045 = vmatmul.mubr.bf16.gmra.mrb[0].mxu0 %v444
      %v1046 = vpop.f32.mrb[0].mxu0
      %v1047 = vadd.f32 %v804, %v1046
      %v1048 = vpop.f32.mrb[0].mxu0
      %v1049 = vpop.f32.mrb[0].mxu0
      %v1050 = vadd.f32 %v807, %v1049
      %v1051 = vpop.f32.mrb[0].mxu0
      %1052 = vmatprep.mubr.bf16.mxu0 0
      %1053 = vmatmul.mubr.bf16.gmra.mrb[0].mxu0 %v445
      %v1054 = vpop.f32.mrb[0].mxu0
      %v1055 = vadd.f32 %v812, %v1054
      %v1056 = vpop.f32.mrb[0].mxu0
      %v1057 = vpop.f32.mrb[0].mxu0
      %v1058 = vadd.f32 %v815, %v1057
      %v1059 = vpop.f32.mrb[0].mxu0
      %1060 = vmatprep.mubr.bf16.mxu0 0
      %1061 = vmatmul.mubr.bf16.gmra.mrb[0].mxu0 %v446
      %v1062 = vpop.f32.mrb[0].mxu0
      %v1063 = vadd.f32 %v820, %v1062
      %v1064 = vpop.f32.mrb[0].mxu0
      %v1065 = vpop.f32.mrb[0].mxu0
      %v1066 = vadd.f32 %v823, %v1065
      %v1067 = vpop.f32.mrb[0].mxu0
      %1068 = vmatprep.mubr.bf16.mxu0 0
      %1069 = vmatmul.mubr.bf16.gmra.mrb[0].mxu0 %v447
      %v1070 = vpop.f32.mrb[0].mxu0
      %v1071 = vadd.f32 %v828, %v1070
      %v1072 = vpop.f32.mrb[0].mxu0
      %v1073 = vpop.f32.mrb[0].mxu0
      %v1074 = vadd.f32 %v831, %v1073
      %v1075 = vpop.f32.mrb[0].mxu0
      %1076 = vmatprep.mubr.bf16.mxu0 0
      %1077 = vmatmul.mubr.bf16.gmra.mrb[0].mxu0 %v448
      %v1078 = vpop.f32.mrb[0].mxu0
      %v1079 = vadd.f32 %v836, %v1078
      %v1080 = vpop.f32.mrb[0].mxu0
      %v1081 = vpop.f32.mrb[0].mxu0
      %v1082 = vadd.f32 %v839, %v1081
      %v1083 = vpop.f32.mrb[0].mxu0
      %1084 = vdwg.mxu0
      %vm1085 = vcmask 1046528
      %v1086 = vrot.slane %v431, 1
      %v1087 = vrot.slane %v432, 1
      %v1088 = vsel %vm1085, %v1086, %v1087
      %v1089 = vrot.slane %v433, 1
      %v1090 = vsel %vm1085, %v1087, %v1089
      %v1091 = vrot.slane %v434, 1
      %v1092 = vsel %vm1085, %v1089, %v1091
      %v1093 = vrot.slane %v435, 1
      %v1094 = vsel %vm1085, %v1091, %v1093
      %v1095 = vrot.slane %v436, 1
      %v1096 = vsel %vm1085, %v1093, %v1095
      %v1097 = vrot.slane %v437, 1
      %v1098 = vsel %vm1085, %v1095, %v1097
      %v1099 = vrot.slane %v438, 1
      %v1100 = vsel %vm1085, %v1097, %v1099
      %v1101 = vrot.slane %v439, 1
      %v1102 = vsel %vm1085, %v1099, %v1101
      %v1103 = vrot.slane %v440, 1
      %v1104 = vsel %vm1085, %v1101, %v1103
      %v1105 = vrot.slane %v441, 1
      %v1106 = vsel %vm1085, %v1103, %v1105
      %v1107 = vrot.slane %v442, 1
      %v1108 = vsel %vm1085, %v1105, %v1107
      %v1109 = vrot.slane %v443, 1
      %v1110 = vsel %vm1085, %v1107, %v1109
      %v1111 = vrot.slane %v444, 1
      %v1112 = vsel %vm1085, %v1109, %v1111
      %v1113 = vrot.slane %v445, 1
      %v1114 = vsel %vm1085, %v1111, %v1113
      %v1115 = vrot.slane %v446, 1
      %v1116 = vsel %vm1085, %v1113, %v1115
      %v1117 = vrot.slane %v447, 1
      %v1118 = vsel %vm1085, %v1115, %v1117
      %v1119 = vrot.slane %v448, 1
      %v1120 = vsel %vm1085, %v1117, %v1119
      %v1121 = vrot.slane %v449, 1
      %v1122 = vsel %vm1085, %v1119, %v1121
      %v1157 = vunpack.c.l.b16 %v245
      %v1158 = vunpack.c.l.b16 %v246
      %v1159 = vunpack.c.l.b16 %v247
      %v1160 = vunpack.c.l.b16 %v248
      %v1161 = vunpack.c.l.b16 %v249
      %v1162 = vunpack.c.l.b16 %v250
      %v1163 = vunpack.c.l.b16 %v251
      %v1164 = vunpack.c.l.b16 %v252
      %v1165 = vunpack.c.l.b16 %v253
      %v1166 = vunpack.c.l.b16 %v254
      %v1167 = vunpack.c.l.b16 %v255
      %v1168 = vunpack.c.l.b16 %v256
      %v1169 = vunpack.c.l.b16 %v257
      %v1170 = vunpack.c.l.b16 %v258
      %v1171 = vunpack.c.l.b16 %v259
      %v1172 = vunpack.c.l.b16 %v260
      %v1173 = vpack.c.b16 %v1158, %v1157
      %v1174 = vpack.c.b16 %v1160, %v1159
      %v1175 = vpack.c.b16 %v1162, %v1161
      %v1176 = vpack.c.b16 %v1164, %v1163
      %v1177 = vpack.c.b16 %v1166, %v1165
      %v1178 = vpack.c.b16 %v1168, %v1167
      %v1179 = vpack.c.b16 %v1170, %v1169
      %v1180 = vpack.c.b16 %v1172, %v1171
      %1189 = vmatprep.subr.bf16.mxu0 0
      %1190 = vmatpush1.bf16.msra.mxu0 %v1173
      %1191 = vmatprep.subr.bf16.mxu0 0
      %1192 = vmatpush1.bf16.msra.mxu0 %v1174
      %1193 = vmatprep.subr.bf16.mxu0 0
      %1194 = vmatpush1.bf16.msra.mxu0 %v1175
      %1195 = vmatprep.subr.bf16.mxu0 0
      %1196 = vmatpush1.bf16.msra.mxu0 %v1176
      %1197 = vmatprep.subr.bf16.mxu0 0
      %1198 = vmatpush1.bf16.msra.mxu0 %v1177
      %1199 = vmatprep.subr.bf16.mxu0 0
      %1200 = vmatpush1.bf16.msra.mxu0 %v1178
      %1201 = vmatprep.subr.bf16.mxu0 0
      %1202 = vmatpush1.bf16.msra.mxu0 %v1179
      %1203 = vmatprep.subr.bf16.mxu0 0
      %1204 = vmatpush1.bf16.msra.mxu0 %v1180
      %1205 = vmatprep.subr.bf16.mxu0 0
      %1206 = vmatpush1.bf16.msra.mxu0 0
      %1207 = vmatprep.subr.bf16.mxu0 0
      %1208 = vmatpush1.bf16.msra.mxu0 0
      %1209 = vmatprep.subr.bf16.mxu0 0
      %1210 = vmatpush1.bf16.msra.mxu0 0
      %1211 = vmatprep.subr.bf16.mxu0 0
      %1212 = vmatpush1.bf16.msra.mxu0 0
      %1213 = vmatprep.subr.bf16.mxu0 0
      %1214 = vmatpush1.bf16.msra.mxu0 0
      %1215 = vmatprep.subr.bf16.mxu0 0
      %1216 = vmatpush1.bf16.msra.mxu0 0
      %1217 = vmatprep.subr.bf16.mxu0 0
      %1218 = vmatpush1.bf16.msra.mxu0 0
      %1219 = vmatprep.subr.bf16.mxu0 0
      %1220 = vmatpush1.bf16.msra.mxu0 0
      %1221 = vmatprep.mubr.bf16.mxu0 0
      %1222 = vmatmul.mubr.bf16.gmra.mrb[0].mxu0 %v1088
      %v1223 = vpop.f32.mrb[0].mxu0
      %v1224 = vadd.f32 0.0, %v1223
      %v1225 = vpop.f32.mrb[0].mxu0
      %v1226 = vpop.f32.mrb[0].mxu0
      %v1227 = vadd.f32 0.0, %v1226
      %v1228 = vpop.f32.mrb[0].mxu0
      %1229 = vmatprep.mubr.bf16.mxu0 0
      %1230 = vmatmul.mubr.bf16.gmra.mrb[0].mxu0 %v1090
      %v1231 = vpop.f32.mrb[0].mxu0
      %v1232 = vadd.f32 0.0, %v1231
      %v1233 = vpop.f32.mrb[0].mxu0
      %v1234 = vpop.f32.mrb[0].mxu0
      %v1235 = vadd.f32 0.0, %v1234
      %v1236 = vpop.f32.mrb[0].mxu0
      %1237 = vmatprep.mubr.bf16.mxu0 0
      %1238 = vmatmul.mubr.bf16.gmra.mrb[0].mxu0 %v1092
      %v1239 = vpop.f32.mrb[0].mxu0
      %v1240 = vadd.f32 0.0, %v1239
      %v1241 = vpop.f32.mrb[0].mxu0
      %v1242 = vpop.f32.mrb[0].mxu0
      %v1243 = vadd.f32 0.0, %v1242
      %v1244 = vpop.f32.mrb[0].mxu0
      %1245 = vmatprep.mubr.bf16.mxu0 0
      %1246 = vmatmul.mubr.bf16.gmra.mrb[0].mxu0 %v1094
      %v1247 = vpop.f32.mrb[0].mxu0
      %v1248 = vadd.f32 0.0, %v1247
      %v1249 = vpop.f32.mrb[0].mxu0
      %v1250 = vpop.f32.mrb[0].mxu0
      %v1251 = vadd.f32 0.0, %v1250
      %v1252 = vpop.f32.mrb[0].mxu0
      %1253 = vmatprep.mubr.bf16.mxu0 0
      %1254 = vmatmul.mubr.bf16.gmra.mrb[0].mxu0 %v1096
      %v1255 = vpop.f32.mrb[0].mxu0
      %v1256 = vadd.f32 0.0, %v1255
      %v1257 = vpop.f32.mrb[0].mxu0
      %v1258 = vpop.f32.mrb[0].mxu0
      %v1259 = vadd.f32 0.0, %v1258
      %v1260 = vpop.f32.mrb[0].mxu0
      %1261 = vmatprep.mubr.bf16.mxu0 0
      %1262 = vmatmul.mubr.bf16.gmra.mrb[0].mxu0 %v1098
      %v1263 = vpop.f32.mrb[0].mxu0
      %v1264 = vadd.f32 0.0, %v1263
      %v1265 = vpop.f32.mrb[0].mxu0
      %v1266 = vpop.f32.mrb[0].mxu0
      %v1267 = vadd.f32 0.0, %v1266
      %v1268 = vpop.f32.mrb[0].mxu0
      %1269 = vmatprep.mubr.bf16.mxu0 0
      %1270 = vmatmul.mubr.bf16.gmra.mrb[0].mxu0 %v1100
      %v1271 = vpop.f32.mrb[0].mxu0
      %v1272 = vadd.f32 0.0, %v1271
      %v1273 = vpop.f32.mrb[0].mxu0
      %v1274 = vpop.f32.mrb[0].mxu0
      %v1275 = vadd.f32 0.0, %v1274
      %v1276 = vpop.f32.mrb[0].mxu0
      %1277 = vmatprep.mubr.bf16.mxu0 0
      %1278 = vmatmul.mubr.bf16.gmra.mrb[0].mxu0 %v1102
      %v1279 = vpop.f32.mrb[0].mxu0
      %v1280 = vadd.f32 0.0, %v1279
      %v1281 = vpop.f32.mrb[0].mxu0
      %v1282 = vpop.f32.mrb[0].mxu0
      %v1283 = vadd.f32 0.0, %v1282
      %v1284 = vpop.f32.mrb[0].mxu0
      %1285 = vmatprep.mubr.bf16.mxu0 0
      %1286 = vmatmul.mubr.bf16.gmra.mrb[0].mxu0 %v1104
      %v1287 = vpop.f32.mrb[0].mxu0
      %v1288 = vadd.f32 0.0, %v1287
      %v1289 = vpop.f32.mrb[0].mxu0
      %v1290 = vpop.f32.mrb[0].mxu0
      %v1291 = vadd.f32 0.0, %v1290
      %v1292 = vpop.f32.mrb[0].mxu0
      %1293 = vmatprep.mubr.bf16.mxu0 0
      %1294 = vmatmul.mubr.bf16.gmra.mrb[0].mxu0 %v1106
      %v1295 = vpop.f32.mrb[0].mxu0
      %v1296 = vadd.f32 0.0, %v1295
      %v1297 = vpop.f32.mrb[0].mxu0
      %v1298 = vpop.f32.mrb[0].mxu0
      %v1299 = vadd.f32 0.0, %v1298
      %v1300 = vpop.f32.mrb[0].mxu0
      %1301 = vmatprep.mubr.bf16.mxu0 0
      %1302 = vmatmul.mubr.bf16.gmra.mrb[0].mxu0 %v1108
      %v1303 = vpop.f32.mrb[0].mxu0
      %v1304 = vadd.f32 0.0, %v1303
      %v1305 = vpop.f32.mrb[0].mxu0
      %v1306 = vpop.f32.mrb[0].mxu0
      %v1307 = vadd.f32 0.0, %v1306
      %v1308 = vpop.f32.mrb[0].mxu0
      %1309 = vmatprep.mubr.bf16.mxu0 0
      %1310 = vmatmul.mubr.bf16.gmra.mrb[0].mxu0 %v1110
      %v1311 = vpop.f32.mrb[0].mxu0
      %v1312 = vadd.f32 0.0, %v1311
      %v1313 = vpop.f32.mrb[0].mxu0
      %v1314 = vpop.f32.mrb[0].mxu0
      %v1315 = vadd.f32 0.0, %v1314
      %v1316 = vpop.f32.mrb[0].mxu0
      %1317 = vmatprep.mubr.bf16.mxu0 0
      %1318 = vmatmul.mubr.bf16.gmra.mrb[0].mxu0 %v1112
      %v1319 = vpop.f32.mrb[0].mxu0
      %v1320 = vadd.f32 0.0, %v1319
      %v1321 = vpop.f32.mrb[0].mxu0
      %v1322 = vpop.f32.mrb[0].mxu0
      %v1323 = vadd.f32 0.0, %v1322
      %v1324 = vpop.f32.mrb[0].mxu0
      %1325 = vmatprep.mubr.bf16.mxu0 0
      %1326 = vmatmul.mubr.bf16.gmra.mrb[0].mxu0 %v1114
      %v1327 = vpop.f32.mrb[0].mxu0
      %v1328 = vadd.f32 0.0, %v1327
      %v1329 = vpop.f32.mrb[0].mxu0
      %v1330 = vpop.f32.mrb[0].mxu0
      %v1331 = vadd.f32 0.0, %v1330
      %v1332 = vpop.f32.mrb[0].mxu0
      %1333 = vmatprep.mubr.bf16.mxu0 0
      %1334 = vmatmul.mubr.bf16.gmra.mrb[0].mxu0 %v1116
      %v1335 = vpop.f32.mrb[0].mxu0
      %v1336 = vadd.f32 0.0, %v1335
      %v1337 = vpop.f32.mrb[0].mxu0
      %v1338 = vpop.f32.mrb[0].mxu0
      %v1339 = vadd.f32 0.0, %v1338
      %v1340 = vpop.f32.mrb[0].mxu0
      %1341 = vmatprep.mubr.bf16.mxu0 0
      %1342 = vmatmul.mubr.bf16.gmra.mrb[0].mxu0 %v1118
      %v1343 = vpop.f32.mrb[0].mxu0
      %v1344 = vadd.f32 0.0, %v1343
      %v1345 = vpop.f32.mrb[0].mxu0
      %v1346 = vpop.f32.mrb[0].mxu0
      %v1347 = vadd.f32 0.0, %v1346
      %v1348 = vpop.f32.mrb[0].mxu0
      %1349 = vmatprep.mubr.bf16.mxu0 0
      %1350 = vmatmul.mubr.bf16.gmra.mrb[0].mxu0 %v1120
      %v1351 = vpop.f32.mrb[0].mxu0
      %v1352 = vadd.f32 0.0, %v1351
      %v1353 = vpop.f32.mrb[0].mxu0
      %v1354 = vpop.f32.mrb[0].mxu0
      %v1355 = vadd.f32 0.0, %v1354
      %v1356 = vpop.f32.mrb[0].mxu0
      %1357 = vmatprep.mubr.bf16.mxu0 0
      %1358 = vmatmul.mubr.bf16.gmra.mrb[0].mxu0 %v1122
      %v1359 = vpop.f32.mrb[0].mxu0
      %v1360 = vadd.f32 0.0, %v1359
      %v1361 = vpop.f32.mrb[0].mxu0
      %v1362 = vpop.f32.mrb[0].mxu0
      %v1363 = vadd.f32 0.0, %v1362
      %v1364 = vpop.f32.mrb[0].mxu0
      %1365 = vdwg.mxu0
      %v1366 = vadd.f32 %v943, %v1224
      %v1367 = vadd.f32 %v946, %v1227
      %v1368 = vadd.f32 %v951, %v1232
      %v1369 = vadd.f32 %v954, %v1235
      %v1370 = vadd.f32 %v959, %v1240
      %v1371 = vadd.f32 %v962, %v1243
      %v1372 = vadd.f32 %v967, %v1248
      %v1373 = vadd.f32 %v970, %v1251
      %v1374 = vadd.f32 %v975, %v1256
      %v1375 = vadd.f32 %v978, %v1259
      %v1376 = vadd.f32 %v983, %v1264
      %v1377 = vadd.f32 %v986, %v1267
      %v1378 = vadd.f32 %v991, %v1272
      %v1379 = vadd.f32 %v994, %v1275
      %v1380 = vadd.f32 %v999, %v1280
      %v1381 = vadd.f32 %v1002, %v1283
      %v1382 = vadd.f32 %v1007, %v1288
      %v1383 = vadd.f32 %v1010, %v1291
      %v1384 = vadd.f32 %v1015, %v1296
      %v1385 = vadd.f32 %v1018, %v1299
      %v1386 = vadd.f32 %v1023, %v1304
      %v1387 = vadd.f32 %v1026, %v1307
      %v1388 = vadd.f32 %v1031, %v1312
      %v1389 = vadd.f32 %v1034, %v1315
      %v1390 = vadd.f32 %v1039, %v1320
      %v1391 = vadd.f32 %v1042, %v1323
      %v1392 = vadd.f32 %v1047, %v1328
      %v1393 = vadd.f32 %v1050, %v1331
      %v1394 = vadd.f32 %v1055, %v1336
      %v1395 = vadd.f32 %v1058, %v1339
      %v1396 = vadd.f32 %v1063, %v1344
      %v1397 = vadd.f32 %v1066, %v1347
      %v1398 = vadd.f32 %v1071, %v1352
      %v1399 = vadd.f32 %v1074, %v1355
      %v1400 = vadd.f32 %v1079, %v1360
      %v1401 = vadd.f32 %v1082, %v1363
      %v1404 = vunpack.c.l.b16 %v209
      %v1405 = vunpack.c.l.b16 %v210
      %v1406 = vpack.c.b16 %v1404, %v430
      %v1407 = vpack.c.b16 %v1405, %v1405
      %v1408 = vrot.slane %v1406, 1
      %v1409 = vsel %vm1085, %v1119, %v1408
      %v1410 = vrot.slane %v1407, 1
      %v1411 = vsel %vm1085, %v1408, %v1410
      %v1430 = vunpack.c.l.b16 %v261
      %v1431 = vunpack.c.l.b16 %v262
      %v1432 = vunpack.c.l.b16 %v263
      %v1433 = vunpack.c.l.b16 %v264
      %v1434 = vunpack.c.l.b16 %v265
      %v1435 = vunpack.c.l.b16 %v266
      %v1436 = vunpack.c.l.b16 %v267
      %v1437 = vunpack.c.l.b16 %v268
      %v1438 = vunpack.c.l.b16 %v269
      %v1439 = vunpack.c.l.b16 %v270
      %v1440 = vunpack.c.l.b16 %v271
      %v1441 = vunpack.c.l.b16 %v272
      %v1442 = vunpack.c.l.b16 %v273
      %v1443 = vunpack.c.l.b16 %v274
      %v1444 = vunpack.c.l.b16 %v275
      %v1445 = vunpack.c.l.b16 %v276
      %v1446 = vpack.c.b16 %v1431, %v1430
      %v1447 = vpack.c.b16 %v1433, %v1432
      %v1448 = vpack.c.b16 %v1435, %v1434
      %v1449 = vpack.c.b16 %v1437, %v1436
      %v1450 = vpack.c.b16 %v1439, %v1438
      %v1451 = vpack.c.b16 %v1441, %v1440
      %v1452 = vpack.c.b16 %v1443, %v1442
      %v1453 = vpack.c.b16 %v1445, %v1444
      %1462 = vmatprep.subr.bf16.mxu0 0
      %1463 = vmatpush1.bf16.msra.mxu0 %v1446
      %1464 = vmatprep.subr.bf16.mxu0 0
      %1465 = vmatpush1.bf16.msra.mxu0 %v1447
      %1466 = vmatprep.subr.bf16.mxu0 0
      %1467 = vmatpush1.bf16.msra.mxu0 %v1448
      %1468 = vmatprep.subr.bf16.mxu0 0
      %1469 = vmatpush1.bf16.msra.mxu0 %v1449
      %1470 = vmatprep.subr.bf16.mxu0 0
      %1471 = vmatpush1.bf16.msra.mxu0 %v1450
      %1472 = vmatprep.subr.bf16.mxu0 0
      %1473 = vmatpush1.bf16.msra.mxu0 %v1451
      %1474 = vmatprep.subr.bf16.mxu0 0
      %1475 = vmatpush1.bf16.msra.mxu0 %v1452
      %1476 = vmatprep.subr.bf16.mxu0 0
      %1477 = vmatpush1.bf16.msra.mxu0 %v1453
      %1478 = vmatprep.subr.bf16.mxu0 0
      %1479 = vmatpush1.bf16.msra.mxu0 0
      %1480 = vmatprep.subr.bf16.mxu0 0
      %1481 = vmatpush1.bf16.msra.mxu0 0
      %1482 = vmatprep.subr.bf16.mxu0 0
      %1483 = vmatpush1.bf16.msra.mxu0 0
      %1484 = vmatprep.subr.bf16.mxu0 0
      %1485 = vmatpush1.bf16.msra.mxu0 0
      %1486 = vmatprep.subr.bf16.mxu0 0
      %1487 = vmatpush1.bf16.msra.mxu0 0
      %1488 = vmatprep.subr.bf16.mxu0 0
      %1489 = vmatpush1.bf16.msra.mxu0 0
      %1490 = vmatprep.subr.bf16.mxu0 0
      %1491 = vmatpush1.bf16.msra.mxu0 0
      %1492 = vmatprep.subr.bf16.mxu0 0
      %1493 = vmatpush1.bf16.msra.mxu0 0
      %1494 = vmatprep.mubr.bf16.mxu0 0
      %1495 = vmatmul.mubr.bf16.gmra.mrb[0].mxu0 %v1090
      %v1496 = vpop.f32.mrb[0].mxu0
      %v1497 = vadd.f32 0.0, %v1496
      %v1498 = vpop.f32.mrb[0].mxu0
      %v1499 = vpop.f32.mrb[0].mxu0
      %v1500 = vadd.f32 0.0, %v1499
      %v1501 = vpop.f32.mrb[0].mxu0
      %1502 = vmatprep.mubr.bf16.mxu0 0
      %1503 = vmatmul.mubr.bf16.gmra.mrb[0].mxu0 %v1092
      %v1504 = vpop.f32.mrb[0].mxu0
      %v1505 = vadd.f32 0.0, %v1504
      %v1506 = vpop.f32.mrb[0].mxu0
      %v1507 = vpop.f32.mrb[0].mxu0
      %v1508 = vadd.f32 0.0, %v1507
      %v1509 = vpop.f32.mrb[0].mxu0
      %1510 = vmatprep.mubr.bf16.mxu0 0
      %1511 = vmatmul.mubr.bf16.gmra.mrb[0].mxu0 %v1094
      %v1512 = vpop.f32.mrb[0].mxu0
      %v1513 = vadd.f32 0.0, %v1512
      %v1514 = vpop.f32.mrb[0].mxu0
      %v1515 = vpop.f32.mrb[0].mxu0
      %v1516 = vadd.f32 0.0, %v1515
      %v1517 = vpop.f32.mrb[0].mxu0
      %1518 = vmatprep.mubr.bf16.mxu0 0
      %1519 = vmatmul.mubr.bf16.gmra.mrb[0].mxu0 %v1096
      %v1520 = vpop.f32.mrb[0].mxu0
      %v1521 = vadd.f32 0.0, %v1520
      %v1522 = vpop.f32.mrb[0].mxu0
      %v1523 = vpop.f32.mrb[0].mxu0
      %v1524 = vadd.f32 0.0, %v1523
      %v1525 = vpop.f32.mrb[0].mxu0
      %1526 = vmatprep.mubr.bf16.mxu0 0
      %1527 = vmatmul.mubr.bf16.gmra.mrb[0].mxu0 %v1098
      %v1528 = vpop.f32.mrb[0].mxu0
      %v1529 = vadd.f32 0.0, %v1528
      %v1530 = vpop.f32.mrb[0].mxu0
      %v1531 = vpop.f32.mrb[0].mxu0
      %v1532 = vadd.f32 0.0, %v1531
      %v1533 = vpop.f32.mrb[0].mxu0
      %1534 = vmatprep.mubr.bf16.mxu0 0
      %1535 = vmatmul.mubr.bf16.gmra.mrb[0].mxu0 %v1100
      %v1536 = vpop.f32.mrb[0].mxu0
      %v1537 = vadd.f32 0.0, %v1536
      %v1538 = vpop.f32.mrb[0].mxu0
      %v1539 = vpop.f32.mrb[0].mxu0
      %v1540 = vadd.f32 0.0, %v1539
      %v1541 = vpop.f32.mrb[0].mxu0
      %1542 = vmatprep.mubr.bf16.mxu0 0
      %1543 = vmatmul.mubr.bf16.gmra.mrb[0].mxu0 %v1102
      %v1544 = vpop.f32.mrb[0].mxu0
      %v1545 = vadd.f32 0.0, %v1544
      %v1546 = vpop.f32.mrb[0].mxu0
      %v1547 = vpop.f32.mrb[0].mxu0
      %v1548 = vadd.f32 0.0, %v1547
      %v1549 = vpop.f32.mrb[0].mxu0
      %1550 = vmatprep.mubr.bf16.mxu0 0
      %1551 = vmatmul.mubr.bf16.gmra.mrb[0].mxu0 %v1104
      %v1552 = vpop.f32.mrb[0].mxu0
      %v1553 = vadd.f32 0.0, %v1552
      %v1554 = vpop.f32.mrb[0].mxu0
      %v1555 = vpop.f32.mrb[0].mxu0
      %v1556 = vadd.f32 0.0, %v1555
      %v1557 = vpop.f32.mrb[0].mxu0
      %1558 = vmatprep.mubr.bf16.mxu0 0
      %1559 = vmatmul.mubr.bf16.gmra.mrb[0].mxu0 %v1106
      %v1560 = vpop.f32.mrb[0].mxu0
      %v1561 = vadd.f32 0.0, %v1560
      %v1562 = vpop.f32.mrb[0].mxu0
      %v1563 = vpop.f32.mrb[0].mxu0
      %v1564 = vadd.f32 0.0, %v1563
      %v1565 = vpop.f32.mrb[0].mxu0
      %1566 = vmatprep.mubr.bf16.mxu0 0
      %1567 = vmatmul.mubr.bf16.gmra.mrb[0].mxu0 %v1108
      %v1568 = vpop.f32.mrb[0].mxu0
      %v1569 = vadd.f32 0.0, %v1568
      %v1570 = vpop.f32.mrb[0].mxu0
      %v1571 = vpop.f32.mrb[0].mxu0
      %v1572 = vadd.f32 0.0, %v1571
      %v1573 = vpop.f32.mrb[0].mxu0
      %1574 = vmatprep.mubr.bf16.mxu0 0
      %1575 = vmatmul.mubr.bf16.gmra.mrb[0].mxu0 %v1110
      %v1576 = vpop.f32.mrb[0].mxu0
      %v1577 = vadd.f32 0.0, %v1576
      %v1578 = vpop.f32.mrb[0].mxu0
      %v1579 = vpop.f32.mrb[0].mxu0
      %v1580 = vadd.f32 0.0, %v1579
      %v1581 = vpop.f32.mrb[0].mxu0
      %1582 = vmatprep.mubr.bf16.mxu0 0
      %1583 = vmatmul.mubr.bf16.gmra.mrb[0].mxu0 %v1112
      %v1584 = vpop.f32.mrb[0].mxu0
      %v1585 = vadd.f32 0.0, %v1584
      %v1586 = vpop.f32.mrb[0].mxu0
      %v1587 = vpop.f32.mrb[0].mxu0
      %v1588 = vadd.f32 0.0, %v1587
      %v1589 = vpop.f32.mrb[0].mxu0
      %1590 = vmatprep.mubr.bf16.mxu0 0
      %1591 = vmatmul.mubr.bf16.gmra.mrb[0].mxu0 %v1114
      %v1592 = vpop.f32.mrb[0].mxu0
      %v1593 = vadd.f32 0.0, %v1592
      %v1594 = vpop.f32.mrb[0].mxu0
      %v1595 = vpop.f32.mrb[0].mxu0
      %v1596 = vadd.f32 0.0, %v1595
      %v1597 = vpop.f32.mrb[0].mxu0
      %1598 = vmatprep.mubr.bf16.mxu0 0
      %1599 = vmatmul.mubr.bf16.gmra.mrb[0].mxu0 %v1116
      %v1600 = vpop.f32.mrb[0].mxu0
      %v1601 = vadd.f32 0.0, %v1600
      %v1602 = vpop.f32.mrb[0].mxu0
      %v1603 = vpop.f32.mrb[0].mxu0
      %v1604 = vadd.f32 0.0, %v1603
      %v1605 = vpop.f32.mrb[0].mxu0
      %1606 = vmatprep.mubr.bf16.mxu0 0
      %1607 = vmatmul.mubr.bf16.gmra.mrb[0].mxu0 %v1118
      %v1608 = vpop.f32.mrb[0].mxu0
      %v1609 = vadd.f32 0.0, %v1608
      %v1610 = vpop.f32.mrb[0].mxu0
      %v1611 = vpop.f32.mrb[0].mxu0
      %v1612 = vadd.f32 0.0, %v1611
      %v1613 = vpop.f32.mrb[0].mxu0
      %1614 = vmatprep.mubr.bf16.mxu0 0
      %1615 = vmatmul.mubr.bf16.gmra.mrb[0].mxu0 %v1120
      %v1616 = vpop.f32.mrb[0].mxu0
      %v1617 = vadd.f32 0.0, %v1616
      %v1618 = vpop.f32.mrb[0].mxu0
      %v1619 = vpop.f32.mrb[0].mxu0
      %v1620 = vadd.f32 0.0, %v1619
      %v1621 = vpop.f32.mrb[0].mxu0
      %1622 = vmatprep.mubr.bf16.mxu0 0
      %1623 = vmatmul.mubr.bf16.gmra.mrb[0].mxu0 %v1409
      %v1624 = vpop.f32.mrb[0].mxu0
      %v1625 = vadd.f32 0.0, %v1624
      %v1626 = vpop.f32.mrb[0].mxu0
      %v1627 = vpop.f32.mrb[0].mxu0
      %v1628 = vadd.f32 0.0, %v1627
      %v1629 = vpop.f32.mrb[0].mxu0
      %1630 = vmatprep.mubr.bf16.mxu0 0
      %1631 = vmatmul.mubr.bf16.gmra.mrb[0].mxu0 %v1411
      %v1632 = vpop.f32.mrb[0].mxu0
      %v1633 = vadd.f32 0.0, %v1632
      %v1634 = vpop.f32.mrb[0].mxu0
      %v1635 = vpop.f32.mrb[0].mxu0
      %v1636 = vadd.f32 0.0, %v1635
      %v1637 = vpop.f32.mrb[0].mxu0
      %1638 = vdwg.mxu0
      %v1639 = vadd.f32 %v1366, %v1497
      %v1640 = vadd.f32 %v1367, %v1500
      %v1641 = vadd.f32 %v1368, %v1505
      %v1642 = vadd.f32 %v1369, %v1508
      %v1643 = vadd.f32 %v1370, %v1513
      %v1644 = vadd.f32 %v1371, %v1516
      %v1645 = vadd.f32 %v1372, %v1521
      %v1646 = vadd.f32 %v1373, %v1524
      %v1647 = vadd.f32 %v1374, %v1529
      %v1648 = vadd.f32 %v1375, %v1532
      %v1649 = vadd.f32 %v1376, %v1537
      %v1650 = vadd.f32 %v1377, %v1540
      %v1651 = vadd.f32 %v1378, %v1545
      %v1652 = vadd.f32 %v1379, %v1548
      %v1653 = vadd.f32 %v1380, %v1553
      %v1654 = vadd.f32 %v1381, %v1556
      %v1655 = vadd.f32 %v1382, %v1561
      %v1656 = vadd.f32 %v1383, %v1564
      %v1657 = vadd.f32 %v1384, %v1569
      %v1658 = vadd.f32 %v1385, %v1572
      %v1659 = vadd.f32 %v1386, %v1577
      %v1660 = vadd.f32 %v1387, %v1580
      %v1661 = vadd.f32 %v1388, %v1585
      %v1662 = vadd.f32 %v1389, %v1588
      %v1663 = vadd.f32 %v1390, %v1593
      %v1664 = vadd.f32 %v1391, %v1596
      %v1665 = vadd.f32 %v1392, %v1601
      %v1666 = vadd.f32 %v1393, %v1604
      %v1667 = vadd.f32 %v1394, %v1609
      %v1668 = vadd.f32 %v1395, %v1612
      %v1669 = vadd.f32 %v1396, %v1617
      %v1670 = vadd.f32 %v1397, %v1620
      %v1671 = vadd.f32 %v1398, %v1625
      %v1672 = vadd.f32 %v1399, %v1628
      %v1673 = vadd.f32 %v1400, %v1633
      %v1674 = vadd.f32 %v1401, %v1636
      %vm1675 = vsmask.f32 6400
      %v1676 = vrot.slane %v463, 1
      %v1677 = vrot.slane %v459, 2
      %v1678 = vor.u32 %v1676, %v1677
      %v1679 = vrot.slane %v471, 1
      %v1680 = vrot.slane %v467, 2
      %v1681 = vor.u32 %v1679, %v1680
      %v1682 = vsel %vm1675, %v1678, %v1681
      %v1683 = vrot.slane %v479, 1
      %v1684 = vrot.slane %v475, 2
      %v1685 = vor.u32 %v1683, %v1684
      %v1686 = vsel %vm1675, %v1681, %v1685
      %v1687 = vrot.slane %v487, 1
      %v1688 = vrot.slane %v483, 2
      %v1689 = vor.u32 %v1687, %v1688
      %v1690 = vsel %vm1675, %v1685, %v1689
      %v1691 = vrot.slane %v495, 1
      %v1692 = vrot.slane %v491, 2
      %v1693 = vor.u32 %v1691, %v1692
      %v1694 = vsel %vm1675, %v1689, %v1693
      %v1695 = vrot.slane %v503, 1
      %v1696 = vrot.slane %v499, 2
      %v1697 = vor.u32 %v1695, %v1696
      %v1698 = vsel %vm1675, %v1693, %v1697
      %v1699 = vrot.slane %v511, 1
      %v1700 = vrot.slane %v507, 2
      %v1701 = vor.u32 %v1699, %v1700
      %v1702 = vsel %vm1675, %v1697, %v1701
      %v1703 = vrot.slane %v519, 1
      %v1704 = vrot.slane %v515, 2
      %v1705 = vor.u32 %v1703, %v1704
      %v1706 = vsel %vm1675, %v1701, %v1705
      %v1707 = vrot.slane %v527, 1
      %v1708 = vrot.slane %v523, 2
      %v1709 = vor.u32 %v1707, %v1708
      %v1710 = vsel %vm1675, %v1705, %v1709
      %v1711 = vrot.slane %v535, 1
      %v1712 = vrot.slane %v531, 2
      %v1713 = vor.u32 %v1711, %v1712
      %v1714 = vsel %vm1675, %v1709, %v1713
      %v1715 = vrot.slane %v543, 1
      %v1716 = vrot.slane %v539, 2
      %v1717 = vor.u32 %v1715, %v1716
      %v1718 = vsel %vm1675, %v1713, %v1717
      %v1719 = vrot.slane %v551, 1
      %v1720 = vrot.slane %v547, 2
      %v1721 = vor.u32 %v1719, %v1720
      %v1722 = vsel %vm1675, %v1717, %v1721
      %v1723 = vrot.slane %v559, 1
      %v1724 = vrot.slane %v555, 2
      %v1725 = vor.u32 %v1723, %v1724
      %v1726 = vsel %vm1675, %v1721, %v1725
      %v1727 = vrot.slane %v567, 1
      %v1728 = vrot.slane %v563, 2
      %v1729 = vor.u32 %v1727, %v1728
      %v1730 = vsel %vm1675, %v1725, %v1729
      %v1731 = vrot.slane %v575, 1
      %v1732 = vrot.slane %v571, 2
      %v1733 = vor.u32 %v1731, %v1732
      %v1734 = vsel %vm1675, %v1729, %v1733
      %v1735 = vrot.slane %v583, 1
      %v1736 = vrot.slane %v579, 2
      %v1737 = vor.u32 %v1735, %v1736
      %v1738 = vsel %vm1675, %v1733, %v1737
      %v1739 = vrot.slane %v591, 1
      %v1740 = vrot.slane %v587, 2
      %v1741 = vor.u32 %v1739, %v1740
      %v1742 = vsel %vm1675, %v1737, %v1741
      %v1744 = vshrl.u32 %v1406, 16
      %v1746 = vrot.slane %v1744, 1
      %v1747 = vshll.u32 %v1406, 16
      %v1749 = vrot.slane %v1747, 2
      %v1750 = vor.u32 %v1746, %v1749
      %v1751 = vsel %vm1675, %v1741, %v1750
      %v1753 = vshrl.u32 %v1407, 16
      %v1755 = vrot.slane %v1753, 1
      %v1756 = vshll.u32 %v1407, 16
      %v1758 = vrot.slane %v1756, 2
      %v1759 = vor.u32 %v1755, %v1758
      %v1760 = vsel %vm1675, %v1750, %v1759
      %v1795 = vunpack.c.l.b16 %v277
      %v1796 = vunpack.c.l.b16 %v278
      %v1797 = vunpack.c.l.b16 %v279
      %v1798 = vunpack.c.l.b16 %v280
      %v1799 = vunpack.c.l.b16 %v281
      %v1800 = vunpack.c.l.b16 %v282
      %v1801 = vunpack.c.l.b16 %v283
      %v1802 = vunpack.c.l.b16 %v284
      %v1803 = vunpack.c.l.b16 %v285
      %v1804 = vunpack.c.l.b16 %v286
      %v1805 = vunpack.c.l.b16 %v287
      %v1806 = vunpack.c.l.b16 %v288
      %v1807 = vunpack.c.l.b16 %v289
      %v1808 = vunpack.c.l.b16 %v290
      %v1809 = vunpack.c.l.b16 %v291
      %v1810 = vunpack.c.l.b16 %v292
      %v1811 = vpack.c.b16 %v1796, %v1795
      %v1812 = vpack.c.b16 %v1798, %v1797
      %v1813 = vpack.c.b16 %v1800, %v1799
      %v1814 = vpack.c.b16 %v1802, %v1801
      %v1815 = vpack.c.b16 %v1804, %v1803
      %v1816 = vpack.c.b16 %v1806, %v1805
      %v1817 = vpack.c.b16 %v1808, %v1807
      %v1818 = vpack.c.b16 %v1810, %v1809
      %1827 = vmatprep.subr.bf16.mxu0 0
      %1828 = vmatpush1.bf16.msra.mxu0 %v1811
      %1829 = vmatprep.subr.bf16.mxu0 0
      %1830 = vmatpush1.bf16.msra.mxu0 %v1812
      %1831 = vmatprep.subr.bf16.mxu0 0
      %1832 = vmatpush1.bf16.msra.mxu0 %v1813
      %1833 = vmatprep.subr.bf16.mxu0 0
      %1834 = vmatpush1.bf16.msra.mxu0 %v1814
      %1835 = vmatprep.subr.bf16.mxu0 0
      %1836 = vmatpush1.bf16.msra.mxu0 %v1815
      %1837 = vmatprep.subr.bf16.mxu0 0
      %1838 = vmatpush1.bf16.msra.mxu0 %v1816
      %1839 = vmatprep.subr.bf16.mxu0 0
      %1840 = vmatpush1.bf16.msra.mxu0 %v1817
      %1841 = vmatprep.subr.bf16.mxu0 0
      %1842 = vmatpush1.bf16.msra.mxu0 %v1818
      %1843 = vmatprep.subr.bf16.mxu0 0
      %1844 = vmatpush1.bf16.msra.mxu0 0
      %1845 = vmatprep.subr.bf16.mxu0 0
      %1846 = vmatpush1.bf16.msra.mxu0 0
      %1847 = vmatprep.subr.bf16.mxu0 0
      %1848 = vmatpush1.bf16.msra.mxu0 0
      %1849 = vmatprep.subr.bf16.mxu0 0
      %1850 = vmatpush1.bf16.msra.mxu0 0
      %1851 = vmatprep.subr.bf16.mxu0 0
      %1852 = vmatpush1.bf16.msra.mxu0 0
      %1853 = vmatprep.subr.bf16.mxu0 0
      %1854 = vmatpush1.bf16.msra.mxu0 0
      %1855 = vmatprep.subr.bf16.mxu0 0
      %1856 = vmatpush1.bf16.msra.mxu0 0
      %1857 = vmatprep.subr.bf16.mxu0 0
      %1858 = vmatpush1.bf16.msra.mxu0 0
      %1859 = vmatprep.mubr.bf16.mxu0 0
      %1860 = vmatmul.mubr.bf16.gmra.mrb[0].mxu0 %v1682
      %v1861 = vpop.f32.mrb[0].mxu0
      %v1862 = vadd.f32 0.0, %v1861
      %v1863 = vpop.f32.mrb[0].mxu0
      %v1864 = vpop.f32.mrb[0].mxu0
      %v1865 = vadd.f32 0.0, %v1864
      %v1866 = vpop.f32.mrb[0].mxu0
      %1867 = vmatprep.mubr.bf16.mxu0 0
      %1868 = vmatmul.mubr.bf16.gmra.mrb[0].mxu0 %v1686
      %v1869 = vpop.f32.mrb[0].mxu0
      %v1870 = vadd.f32 0.0, %v1869
      %v1871 = vpop.f32.mrb[0].mxu0
      %v1872 = vpop.f32.mrb[0].mxu0
      %v1873 = vadd.f32 0.0, %v1872
      %v1874 = vpop.f32.mrb[0].mxu0
      %1875 = vmatprep.mubr.bf16.mxu0 0
      %1876 = vmatmul.mubr.bf16.gmra.mrb[0].mxu0 %v1690
      %v1877 = vpop.f32.mrb[0].mxu0
      %v1878 = vadd.f32 0.0, %v1877
      %v1879 = vpop.f32.mrb[0].mxu0
      %v1880 = vpop.f32.mrb[0].mxu0
      %v1881 = vadd.f32 0.0, %v1880
      %v1882 = vpop.f32.mrb[0].mxu0
      %1883 = vmatprep.mubr.bf16.mxu0 0
      %1884 = vmatmul.mubr.bf16.gmra.mrb[0].mxu0 %v1694
      %v1885 = vpop.f32.mrb[0].mxu0
      %v1886 = vadd.f32 0.0, %v1885
      %v1887 = vpop.f32.mrb[0].mxu0
      %v1888 = vpop.f32.mrb[0].mxu0
      %v1889 = vadd.f32 0.0, %v1888
      %v1890 = vpop.f32.mrb[0].mxu0
      %1891 = vmatprep.mubr.bf16.mxu0 0
      %1892 = vmatmul.mubr.bf16.gmra.mrb[0].mxu0 %v1698
      %v1893 = vpop.f32.mrb[0].mxu0
      %v1894 = vadd.f32 0.0, %v1893
      %v1895 = vpop.f32.mrb[0].mxu0
      %v1896 = vpop.f32.mrb[0].mxu0
      %v1897 = vadd.f32 0.0, %v1896
      %v1898 = vpop.f32.mrb[0].mxu0
      %1899 = vmatprep.mubr.bf16.mxu0 0
      %1900 = vmatmul.mubr.bf16.gmra.mrb[0].mxu0 %v1702
      %v1901 = vpop.f32.mrb[0].mxu0
      %v1902 = vadd.f32 0.0, %v1901
      %v1903 = vpop.f32.mrb[0].mxu0
      %v1904 = vpop.f32.mrb[0].mxu0
      %v1905 = vadd.f32 0.0, %v1904
      %v1906 = vpop.f32.mrb[0].mxu0
      %1907 = vmatprep.mubr.bf16.mxu0 0
      %1908 = vmatmul.mubr.bf16.gmra.mrb[0].mxu0 %v1706
      %v1909 = vpop.f32.mrb[0].mxu0
      %v1910 = vadd.f32 0.0, %v1909
      %v1911 = vpop.f32.mrb[0].mxu0
      %v1912 = vpop.f32.mrb[0].mxu0
      %v1913 = vadd.f32 0.0, %v1912
      %v1914 = vpop.f32.mrb[0].mxu0
      %1915 = vmatprep.mubr.bf16.mxu0 0
      %1916 = vmatmul.mubr.bf16.gmra.mrb[0].mxu0 %v1710
      %v1917 = vpop.f32.mrb[0].mxu0
      %v1918 = vadd.f32 0.0, %v1917
      %v1919 = vpop.f32.mrb[0].mxu0
      %v1920 = vpop.f32.mrb[0].mxu0
      %v1921 = vadd.f32 0.0, %v1920
      %v1922 = vpop.f32.mrb[0].mxu0
      %1923 = vmatprep.mubr.bf16.mxu0 0
      %1924 = vmatmul.mubr.bf16.gmra.mrb[0].mxu0 %v1714
      %v1925 = vpop.f32.mrb[0].mxu0
      %v1926 = vadd.f32 0.0, %v1925
      %v1927 = vpop.f32.mrb[0].mxu0
      %v1928 = vpop.f32.mrb[0].mxu0
      %v1929 = vadd.f32 0.0, %v1928
      %v1930 = vpop.f32.mrb[0].mxu0
      %1931 = vmatprep.mubr.bf16.mxu0 0
      %1932 = vmatmul.mubr.bf16.gmra.mrb[0].mxu0 %v1718
      %v1933 = vpop.f32.mrb[0].mxu0
      %v1934 = vadd.f32 0.0, %v1933
      %v1935 = vpop.f32.mrb[0].mxu0
      %v1936 = vpop.f32.mrb[0].mxu0
      %v1937 = vadd.f32 0.0, %v1936
      %v1938 = vpop.f32.mrb[0].mxu0
      %1939 = vmatprep.mubr.bf16.mxu0 0
      %1940 = vmatmul.mubr.bf16.gmra.mrb[0].mxu0 %v1722
      %v1941 = vpop.f32.mrb[0].mxu0
      %v1942 = vadd.f32 0.0, %v1941
      %v1943 = vpop.f32.mrb[0].mxu0
      %v1944 = vpop.f32.mrb[0].mxu0
      %v1945 = vadd.f32 0.0, %v1944
      %v1946 = vpop.f32.mrb[0].mxu0
      %1947 = vmatprep.mubr.bf16.mxu0 0
      %1948 = vmatmul.mubr.bf16.gmra.mrb[0].mxu0 %v1726
      %v1949 = vpop.f32.mrb[0].mxu0
      %v1950 = vadd.f32 0.0, %v1949
      %v1951 = vpop.f32.mrb[0].mxu0
      %v1952 = vpop.f32.mrb[0].mxu0
      %v1953 = vadd.f32 0.0, %v1952
      %v1954 = vpop.f32.mrb[0].mxu0
      %1955 = vmatprep.mubr.bf16.mxu0 0
      %1956 = vmatmul.mubr.bf16.gmra.mrb[0].mxu0 %v1730
      %v1957 = vpop.f32.mrb[0].mxu0
      %v1958 = vadd.f32 0.0, %v1957
      %v1959 = vpop.f32.mrb[0].mxu0
      %v1960 = vpop.f32.mrb[0].mxu0
      %v1961 = vadd.f32 0.0, %v1960
      %v1962 = vpop.f32.mrb[0].mxu0
      %1963 = vmatprep.mubr.bf16.mxu0 0
      %1964 = vmatmul.mubr.bf16.gmra.mrb[0].mxu0 %v1734
      %v1965 = vpop.f32.mrb[0].mxu0
      %v1966 = vadd.f32 0.0, %v1965
      %v1967 = vpop.f32.mrb[0].mxu0
      %v1968 = vpop.f32.mrb[0].mxu0
      %v1969 = vadd.f32 0.0, %v1968
      %v1970 = vpop.f32.mrb[0].mxu0
      %1971 = vmatprep.mubr.bf16.mxu0 0
      %1972 = vmatmul.mubr.bf16.gmra.mrb[0].mxu0 %v1738
      %v1973 = vpop.f32.mrb[0].mxu0
      %v1974 = vadd.f32 0.0, %v1973
      %v1975 = vpop.f32.mrb[0].mxu0
      %v1976 = vpop.f32.mrb[0].mxu0
      %v1977 = vadd.f32 0.0, %v1976
      %v1978 = vpop.f32.mrb[0].mxu0
      %1979 = vmatprep.mubr.bf16.mxu0 0
      %1980 = vmatmul.mubr.bf16.gmra.mrb[0].mxu0 %v1742
      %v1981 = vpop.f32.mrb[0].mxu0
      %v1982 = vadd.f32 0.0, %v1981
      %v1983 = vpop.f32.mrb[0].mxu0
      %v1984 = vpop.f32.mrb[0].mxu0
      %v1985 = vadd.f32 0.0, %v1984
      %v1986 = vpop.f32.mrb[0].mxu0
      %1987 = vmatprep.mubr.bf16.mxu0 0
      %1988 = vmatmul.mubr.bf16.gmra.mrb[0].mxu0 %v1751
      %v1989 = vpop.f32.mrb[0].mxu0
      %v1990 = vadd.f32 0.0, %v1989
      %v1991 = vpop.f32.mrb[0].mxu0
      %v1992 = vpop.f32.mrb[0].mxu0
      %v1993 = vadd.f32 0.0, %v1992
      %v1994 = vpop.f32.mrb[0].mxu0
      %1995 = vmatprep.mubr.bf16.mxu0 0
      %1996 = vmatmul.mubr.bf16.gmra.mrb[0].mxu0 %v1760
      %v1997 = vpop.f32.mrb[0].mxu0
      %v1998 = vadd.f32 0.0, %v1997
      %v1999 = vpop.f32.mrb[0].mxu0
      %v2000 = vpop.f32.mrb[0].mxu0
      %v2001 = vadd.f32 0.0, %v2000
      %v2002 = vpop.f32.mrb[0].mxu0
      %2003 = vdwg.mxu0
      %v2004 = vadd.f32 %v1639, %v1862
      %v2005 = vadd.f32 %v1640, %v1865
      %v2006 = vadd.f32 %v1641, %v1870
      %v2007 = vadd.f32 %v1642, %v1873
      %v2008 = vadd.f32 %v1643, %v1878
      %v2009 = vadd.f32 %v1644, %v1881
      %v2010 = vadd.f32 %v1645, %v1886
      %v2011 = vadd.f32 %v1646, %v1889
      %v2012 = vadd.f32 %v1647, %v1894
      %v2013 = vadd.f32 %v1648, %v1897
      %v2014 = vadd.f32 %v1649, %v1902
      %v2015 = vadd.f32 %v1650, %v1905
      %v2016 = vadd.f32 %v1651, %v1910
      %v2017 = vadd.f32 %v1652, %v1913
      %v2018 = vadd.f32 %v1653, %v1918
      %v2019 = vadd.f32 %v1654, %v1921
      %v2020 = vadd.f32 %v1655, %v1926
      %v2021 = vadd.f32 %v1656, %v1929
      %v2022 = vadd.f32 %v1657, %v1934
      %v2023 = vadd.f32 %v1658, %v1937
      %v2024 = vadd.f32 %v1659, %v1942
      %v2025 = vadd.f32 %v1660, %v1945
      %v2026 = vadd.f32 %v1661, %v1950
      %v2027 = vadd.f32 %v1662, %v1953
      %v2028 = vadd.f32 %v1663, %v1958
      %v2029 = vadd.f32 %v1664, %v1961
      %v2030 = vadd.f32 %v1665, %v1966
      %v2031 = vadd.f32 %v1666, %v1969
      %v2032 = vadd.f32 %v1667, %v1974
      %v2033 = vadd.f32 %v1668, %v1977
      %v2034 = vadd.f32 %v1669, %v1982
      %v2035 = vadd.f32 %v1670, %v1985
      %v2036 = vadd.f32 %v1671, %v1990
      %v2037 = vadd.f32 %v1672, %v1993
      %v2038 = vadd.f32 %v1673, %v1998
      %v2039 = vadd.f32 %v1674, %v2001
      %vm2040 = vcmask 1045504
      %v2041 = vrot.slane %v432, 2
      %v2042 = vrot.slane %v433, 2
      %v2043 = vsel %vm2040, %v2041, %v2042
      %v2044 = vrot.slane %v434, 2
      %v2045 = vsel %vm2040, %v2042, %v2044
      %v2046 = vrot.slane %v435, 2
      %v2047 = vsel %vm2040, %v2044, %v2046
      %v2048 = vrot.slane %v436, 2
      %v2049 = vsel %vm2040, %v2046, %v2048
      %v2050 = vrot.slane %v437, 2
      %v2051 = vsel %vm2040, %v2048, %v2050
      %v2052 = vrot.slane %v438, 2
      %v2053 = vsel %vm2040, %v2050, %v2052
      %v2054 = vrot.slane %v439, 2
      %v2055 = vsel %vm2040, %v2052, %v2054
      %v2056 = vrot.slane %v440, 2
      %v2057 = vsel %vm2040, %v2054, %v2056
      %v2058 = vrot.slane %v441, 2
      %v2059 = vsel %vm2040, %v2056, %v2058
      %v2060 = vrot.slane %v442, 2
      %v2061 = vsel %vm2040, %v2058, %v2060
      %v2062 = vrot.slane %v443, 2
      %v2063 = vsel %vm2040, %v2060, %v2062
      %v2064 = vrot.slane %v444, 2
      %v2065 = vsel %vm2040, %v2062, %v2064
      %v2066 = vrot.slane %v445, 2
      %v2067 = vsel %vm2040, %v2064, %v2066
      %v2068 = vrot.slane %v446, 2
      %v2069 = vsel %vm2040, %v2066, %v2068
      %v2070 = vrot.slane %v447, 2
      %v2071 = vsel %vm2040, %v2068, %v2070
      %v2072 = vrot.slane %v448, 2
      %v2073 = vsel %vm2040, %v2070, %v2072
      %v2074 = vrot.slane %v1406, 2
      %v2075 = vsel %vm2040, %v2072, %v2074
      %v2076 = vrot.slane %v1407, 2
      %v2077 = vsel %vm2040, %v2074, %v2076
      %v2112 = vunpack.c.l.b16 %v293
      %v2113 = vunpack.c.l.b16 %v294
      %v2114 = vunpack.c.l.b16 %v295
      %v2115 = vunpack.c.l.b16 %v296
      %v2116 = vunpack.c.l.b16 %v297
      %v2117 = vunpack.c.l.b16 %v298
      %v2118 = vunpack.c.l.b16 %v299
      %v2119 = vunpack.c.l.b16 %v300
      %v2120 = vunpack.c.l.b16 %v301
      %v2121 = vunpack.c.l.b16 %v302
      %v2122 = vunpack.c.l.b16 %v303
      %v2123 = vunpack.c.l.b16 %v304
      %v2124 = vunpack.c.l.b16 %v305
      %v2125 = vunpack.c.l.b16 %v306
      %v2126 = vunpack.c.l.b16 %v307
      %v2127 = vunpack.c.l.b16 %v308
      %v2128 = vpack.c.b16 %v2113, %v2112
      %v2129 = vpack.c.b16 %v2115, %v2114
      %v2130 = vpack.c.b16 %v2117, %v2116
      %v2131 = vpack.c.b16 %v2119, %v2118
      %v2132 = vpack.c.b16 %v2121, %v2120
      %v2133 = vpack.c.b16 %v2123, %v2122
      %v2134 = vpack.c.b16 %v2125, %v2124
      %v2135 = vpack.c.b16 %v2127, %v2126
      %2144 = vmatprep.subr.bf16.mxu0 0
      %2145 = vmatpush1.bf16.msra.mxu0 %v2128
      %2146 = vmatprep.subr.bf16.mxu0 0
      %2147 = vmatpush1.bf16.msra.mxu0 %v2129
      %2148 = vmatprep.subr.bf16.mxu0 0
      %2149 = vmatpush1.bf16.msra.mxu0 %v2130
      %2150 = vmatprep.subr.bf16.mxu0 0
      %2151 = vmatpush1.bf16.msra.mxu0 %v2131
      %2152 = vmatprep.subr.bf16.mxu0 0
      %2153 = vmatpush1.bf16.msra.mxu0 %v2132
      %2154 = vmatprep.subr.bf16.mxu0 0
      %2155 = vmatpush1.bf16.msra.mxu0 %v2133
      %2156 = vmatprep.subr.bf16.mxu0 0
      %2157 = vmatpush1.bf16.msra.mxu0 %v2134
      %2158 = vmatprep.subr.bf16.mxu0 0
      %2159 = vmatpush1.bf16.msra.mxu0 %v2135
      %2160 = vmatprep.subr.bf16.mxu0 0
      %2161 = vmatpush1.bf16.msra.mxu0 0
      %2162 = vmatprep.subr.bf16.mxu0 0
      %2163 = vmatpush1.bf16.msra.mxu0 0
      %2164 = vmatprep.subr.bf16.mxu0 0
      %2165 = vmatpush1.bf16.msra.mxu0 0
      %2166 = vmatprep.subr.bf16.mxu0 0
      %2167 = vmatpush1.bf16.msra.mxu0 0
      %2168 = vmatprep.subr.bf16.mxu0 0
      %2169 = vmatpush1.bf16.msra.mxu0 0
      %2170 = vmatprep.subr.bf16.mxu0 0
      %2171 = vmatpush1.bf16.msra.mxu0 0
      %2172 = vmatprep.subr.bf16.mxu0 0
      %2173 = vmatpush1.bf16.msra.mxu0 0
      %2174 = vmatprep.subr.bf16.mxu0 0
      %2175 = vmatpush1.bf16.msra.mxu0 0
      %2176 = vmatprep.mubr.bf16.mxu0 0
      %2177 = vmatmul.mubr.bf16.gmra.mrb[0].mxu0 %v2043
      %v2178 = vpop.f32.mrb[0].mxu0
      %v2179 = vadd.f32 0.0, %v2178
      %v2180 = vpop.f32.mrb[0].mxu0
      %v2181 = vpop.f32.mrb[0].mxu0
      %v2182 = vadd.f32 0.0, %v2181
      %v2183 = vpop.f32.mrb[0].mxu0
      %2184 = vmatprep.mubr.bf16.mxu0 0
      %2185 = vmatmul.mubr.bf16.gmra.mrb[0].mxu0 %v2045
      %v2186 = vpop.f32.mrb[0].mxu0
      %v2187 = vadd.f32 0.0, %v2186
      %v2188 = vpop.f32.mrb[0].mxu0
      %v2189 = vpop.f32.mrb[0].mxu0
      %v2190 = vadd.f32 0.0, %v2189
      %v2191 = vpop.f32.mrb[0].mxu0
      %2192 = vmatprep.mubr.bf16.mxu0 0
      %2193 = vmatmul.mubr.bf16.gmra.mrb[0].mxu0 %v2047
      %v2194 = vpop.f32.mrb[0].mxu0
      %v2195 = vadd.f32 0.0, %v2194
      %v2196 = vpop.f32.mrb[0].mxu0
      %v2197 = vpop.f32.mrb[0].mxu0
      %v2198 = vadd.f32 0.0, %v2197
      %v2199 = vpop.f32.mrb[0].mxu0
      %2200 = vmatprep.mubr.bf16.mxu0 0
      %2201 = vmatmul.mubr.bf16.gmra.mrb[0].mxu0 %v2049
      %v2202 = vpop.f32.mrb[0].mxu0
      %v2203 = vadd.f32 0.0, %v2202
      %v2204 = vpop.f32.mrb[0].mxu0
      %v2205 = vpop.f32.mrb[0].mxu0
      %v2206 = vadd.f32 0.0, %v2205
      %v2207 = vpop.f32.mrb[0].mxu0
      %2208 = vmatprep.mubr.bf16.mxu0 0
      %2209 = vmatmul.mubr.bf16.gmra.mrb[0].mxu0 %v2051
      %v2210 = vpop.f32.mrb[0].mxu0
      %v2211 = vadd.f32 0.0, %v2210
      %v2212 = vpop.f32.mrb[0].mxu0
      %v2213 = vpop.f32.mrb[0].mxu0
      %v2214 = vadd.f32 0.0, %v2213
      %v2215 = vpop.f32.mrb[0].mxu0
      %2216 = vmatprep.mubr.bf16.mxu0 0
      %2217 = vmatmul.mubr.bf16.gmra.mrb[0].mxu0 %v2053
      %v2218 = vpop.f32.mrb[0].mxu0
      %v2219 = vadd.f32 0.0, %v2218
      %v2220 = vpop.f32.mrb[0].mxu0
      %v2221 = vpop.f32.mrb[0].mxu0
      %v2222 = vadd.f32 0.0, %v2221
      %v2223 = vpop.f32.mrb[0].mxu0
      %2224 = vmatprep.mubr.bf16.mxu0 0
      %2225 = vmatmul.mubr.bf16.gmra.mrb[0].mxu0 %v2055
      %v2226 = vpop.f32.mrb[0].mxu0
      %v2227 = vadd.f32 0.0, %v2226
      %v2228 = vpop.f32.mrb[0].mxu0
      %v2229 = vpop.f32.mrb[0].mxu0
      %v2230 = vadd.f32 0.0, %v2229
      %v2231 = vpop.f32.mrb[0].mxu0
      %2232 = vmatprep.mubr.bf16.mxu0 0
      %2233 = vmatmul.mubr.bf16.gmra.mrb[0].mxu0 %v2057
      %v2234 = vpop.f32.mrb[0].mxu0
      %v2235 = vadd.f32 0.0, %v2234
      %v2236 = vpop.f32.mrb[0].mxu0
      %v2237 = vpop.f32.mrb[0].mxu0
      %v2238 = vadd.f32 0.0, %v2237
      %v2239 = vpop.f32.mrb[0].mxu0
      %2240 = vmatprep.mubr.bf16.mxu0 0
      %2241 = vmatmul.mubr.bf16.gmra.mrb[0].mxu0 %v2059
      %v2242 = vpop.f32.mrb[0].mxu0
      %v2243 = vadd.f32 0.0, %v2242
      %v2244 = vpop.f32.mrb[0].mxu0
      %v2245 = vpop.f32.mrb[0].mxu0
      %v2246 = vadd.f32 0.0, %v2245
      %v2247 = vpop.f32.mrb[0].mxu0
      %2248 = vmatprep.mubr.bf16.mxu0 0
      %2249 = vmatmul.mubr.bf16.gmra.mrb[0].mxu0 %v2061
      %v2250 = vpop.f32.mrb[0].mxu0
      %v2251 = vadd.f32 0.0, %v2250
      %v2252 = vpop.f32.mrb[0].mxu0
      %v2253 = vpop.f32.mrb[0].mxu0
      %v2254 = vadd.f32 0.0, %v2253
      %v2255 = vpop.f32.mrb[0].mxu0
      %2256 = vmatprep.mubr.bf16.mxu0 0
      %2257 = vmatmul.mubr.bf16.gmra.mrb[0].mxu0 %v2063
      %v2258 = vpop.f32.mrb[0].mxu0
      %v2259 = vadd.f32 0.0, %v2258
      %v2260 = vpop.f32.mrb[0].mxu0
      %v2261 = vpop.f32.mrb[0].mxu0
      %v2262 = vadd.f32 0.0, %v2261
      %v2263 = vpop.f32.mrb[0].mxu0
      %2264 = vmatprep.mubr.bf16.mxu0 0
      %2265 = vmatmul.mubr.bf16.gmra.mrb[0].mxu0 %v2065
      %v2266 = vpop.f32.mrb[0].mxu0
      %v2267 = vadd.f32 0.0, %v2266
      %v2268 = vpop.f32.mrb[0].mxu0
      %v2269 = vpop.f32.mrb[0].mxu0
      %v2270 = vadd.f32 0.0, %v2269
      %v2271 = vpop.f32.mrb[0].mxu0
      %2272 = vmatprep.mubr.bf16.mxu0 0
      %2273 = vmatmul.mubr.bf16.gmra.mrb[0].mxu0 %v2067
      %v2274 = vpop.f32.mrb[0].mxu0
      %v2275 = vadd.f32 0.0, %v2274
      %v2276 = vpop.f32.mrb[0].mxu0
      %v2277 = vpop.f32.mrb[0].mxu0
      %v2278 = vadd.f32 0.0, %v2277
      %v2279 = vpop.f32.mrb[0].mxu0
      %2280 = vmatprep.mubr.bf16.mxu0 0
      %2281 = vmatmul.mubr.bf16.gmra.mrb[0].mxu0 %v2069
      %v2282 = vpop.f32.mrb[0].mxu0
      %v2283 = vadd.f32 0.0, %v2282
      %v2284 = vpop.f32.mrb[0].mxu0
      %v2285 = vpop.f32.mrb[0].mxu0
      %v2286 = vadd.f32 0.0, %v2285
      %v2287 = vpop.f32.mrb[0].mxu0
      %2288 = vmatprep.mubr.bf16.mxu0 0
      %2289 = vmatmul.mubr.bf16.gmra.mrb[0].mxu0 %v2071
      %v2290 = vpop.f32.mrb[0].mxu0
      %v2291 = vadd.f32 0.0, %v2290
      %v2292 = vpop.f32.mrb[0].mxu0
      %v2293 = vpop.f32.mrb[0].mxu0
      %v2294 = vadd.f32 0.0, %v2293
      %v2295 = vpop.f32.mrb[0].mxu0
      %2296 = vmatprep.mubr.bf16.mxu0 0
      %2297 = vmatmul.mubr.bf16.gmra.mrb[0].mxu0 %v2073
      %v2298 = vpop.f32.mrb[0].mxu0
      %v2299 = vadd.f32 0.0, %v2298
      %v2300 = vpop.f32.mrb[0].mxu0
      %v2301 = vpop.f32.mrb[0].mxu0
      %v2302 = vadd.f32 0.0, %v2301
      %v2303 = vpop.f32.mrb[0].mxu0
      %2304 = vmatprep.mubr.bf16.mxu0 0
      %2305 = vmatmul.mubr.bf16.gmra.mrb[0].mxu0 %v2075
      %v2306 = vpop.f32.mrb[0].mxu0
      %v2307 = vadd.f32 0.0, %v2306
      %v2308 = vpop.f32.mrb[0].mxu0
      %v2309 = vpop.f32.mrb[0].mxu0
      %v2310 = vadd.f32 0.0, %v2309
      %v2311 = vpop.f32.mrb[0].mxu0
      %2312 = vmatprep.mubr.bf16.mxu0 0
      %2313 = vmatmul.mubr.bf16.gmra.mrb[0].mxu0 %v2077
      %v2314 = vpop.f32.mrb[0].mxu0
      %v2315 = vadd.f32 0.0, %v2314
      %v2316 = vpop.f32.mrb[0].mxu0
      %v2317 = vpop.f32.mrb[0].mxu0
      %v2318 = vadd.f32 0.0, %v2317
      %v2319 = vpop.f32.mrb[0].mxu0
      %2320 = vdwg.mxu0
      %v2321 = vadd.f32 %v2004, %v2179
      %v2322 = vadd.f32 %v2005, %v2182
      %v2323 = vadd.f32 %v2006, %v2187
      %v2324 = vadd.f32 %v2007, %v2190
      %v2325 = vadd.f32 %v2008, %v2195
      %v2326 = vadd.f32 %v2009, %v2198
      %v2327 = vadd.f32 %v2010, %v2203
      %v2328 = vadd.f32 %v2011, %v2206
      %v2329 = vadd.f32 %v2012, %v2211
      %v2330 = vadd.f32 %v2013, %v2214
      %v2331 = vadd.f32 %v2014, %v2219
      %v2332 = vadd.f32 %v2015, %v2222
      %v2333 = vadd.f32 %v2016, %v2227
      %v2334 = vadd.f32 %v2017, %v2230
      %v2335 = vadd.f32 %v2018, %v2235
      %v2336 = vadd.f32 %v2019, %v2238
      %v2337 = vadd.f32 %v2020, %v2243
      %v2338 = vadd.f32 %v2021, %v2246
      %v2339 = vadd.f32 %v2022, %v2251
      %v2340 = vadd.f32 %v2023, %v2254
      %v2341 = vadd.f32 %v2024, %v2259
      %v2342 = vadd.f32 %v2025, %v2262
      %v2343 = vadd.f32 %v2026, %v2267
      %v2344 = vadd.f32 %v2027, %v2270
      %v2345 = vadd.f32 %v2028, %v2275
      %v2346 = vadd.f32 %v2029, %v2278
      %v2347 = vadd.f32 %v2030, %v2283
      %v2348 = vadd.f32 %v2031, %v2286
      %v2349 = vadd.f32 %v2032, %v2291
      %v2350 = vadd.f32 %v2033, %v2294
      %v2351 = vadd.f32 %v2034, %v2299
      %v2352 = vadd.f32 %v2035, %v2302
      %v2353 = vadd.f32 %v2036, %v2307
      %v2354 = vadd.f32 %v2037, %v2310
      %v2355 = vadd.f32 %v2038, %v2315
      %v2356 = vadd.f32 %v2039, %v2318
      %v2359 = vunpack.c.l.b16 %v211
      %v2360 = vunpack.c.l.b16 %v212
      %v2361 = vpack.c.b16 %v2359, %v1405
      %v2362 = vpack.c.b16 %v2360, %v2360
      %v2363 = vrot.slane %v2361, 2
      %v2364 = vsel %vm2040, %v2074, %v2363
      %v2365 = vrot.slane %v2362, 2
      %v2366 = vsel %vm2040, %v2363, %v2365
      %v2385 = vunpack.c.l.b16 %v309
      %v2386 = vunpack.c.l.b16 %v310
      %v2387 = vunpack.c.l.b16 %v311
      %v2388 = vunpack.c.l.b16 %v312
      %v2389 = vunpack.c.l.b16 %v313
      %v2390 = vunpack.c.l.b16 %v314
      %v2391 = vunpack.c.l.b16 %v315
      %v2392 = vunpack.c.l.b16 %v316
      %v2393 = vunpack.c.l.b16 %v317
      %v2394 = vunpack.c.l.b16 %v318
      %v2395 = vunpack.c.l.b16 %v319
      %v2396 = vunpack.c.l.b16 %v320
      %v2397 = vunpack.c.l.b16 %v321
      %v2398 = vunpack.c.l.b16 %v322
      %v2399 = vunpack.c.l.b16 %v323
      %v2400 = vunpack.c.l.b16 %v324
      %v2401 = vpack.c.b16 %v2386, %v2385
      %v2402 = vpack.c.b16 %v2388, %v2387
      %v2403 = vpack.c.b16 %v2390, %v2389
      %v2404 = vpack.c.b16 %v2392, %v2391
      %v2405 = vpack.c.b16 %v2394, %v2393
      %v2406 = vpack.c.b16 %v2396, %v2395
      %v2407 = vpack.c.b16 %v2398, %v2397
      %v2408 = vpack.c.b16 %v2400, %v2399
      %2417 = vmatprep.subr.bf16.mxu0 0
      %2418 = vmatpush1.bf16.msra.mxu0 %v2401
      %2419 = vmatprep.subr.bf16.mxu0 0
      %2420 = vmatpush1.bf16.msra.mxu0 %v2402
      %2421 = vmatprep.subr.bf16.mxu0 0
      %2422 = vmatpush1.bf16.msra.mxu0 %v2403
      %2423 = vmatprep.subr.bf16.mxu0 0
      %2424 = vmatpush1.bf16.msra.mxu0 %v2404
      %2425 = vmatprep.subr.bf16.mxu0 0
      %2426 = vmatpush1.bf16.msra.mxu0 %v2405
      %2427 = vmatprep.subr.bf16.mxu0 0
      %2428 = vmatpush1.bf16.msra.mxu0 %v2406
      %2429 = vmatprep.subr.bf16.mxu0 0
      %2430 = vmatpush1.bf16.msra.mxu0 %v2407
      %2431 = vmatprep.subr.bf16.mxu0 0
      %2432 = vmatpush1.bf16.msra.mxu0 %v2408
      %2433 = vmatprep.subr.bf16.mxu0 0
      %2434 = vmatpush1.bf16.msra.mxu0 0
      %2435 = vmatprep.subr.bf16.mxu0 0
      %2436 = vmatpush1.bf16.msra.mxu0 0
      %2437 = vmatprep.subr.bf16.mxu0 0
      %2438 = vmatpush1.bf16.msra.mxu0 0
      %2439 = vmatprep.subr.bf16.mxu0 0
      %2440 = vmatpush1.bf16.msra.mxu0 0
      %2441 = vmatprep.subr.bf16.mxu0 0
      %2442 = vmatpush1.bf16.msra.mxu0 0
      %2443 = vmatprep.subr.bf16.mxu0 0
      %2444 = vmatpush1.bf16.msra.mxu0 0
      %2445 = vmatprep.subr.bf16.mxu0 0
      %2446 = vmatpush1.bf16.msra.mxu0 0
      %2447 = vmatprep.subr.bf16.mxu0 0
      %2448 = vmatpush1.bf16.msra.mxu0 0
      %2449 = vmatprep.mubr.bf16.mxu0 0
      %2450 = vmatmul.mubr.bf16.gmra.mrb[0].mxu0 %v2045
      %v2451 = vpop.f32.mrb[0].mxu0
      %v2452 = vadd.f32 0.0, %v2451
      %v2453 = vpop.f32.mrb[0].mxu0
      %v2454 = vpop.f32.mrb[0].mxu0
      %v2455 = vadd.f32 0.0, %v2454
      %v2456 = vpop.f32.mrb[0].mxu0
      %2457 = vmatprep.mubr.bf16.mxu0 0
      %2458 = vmatmul.mubr.bf16.gmra.mrb[0].mxu0 %v2047
      %v2459 = vpop.f32.mrb[0].mxu0
      %v2460 = vadd.f32 0.0, %v2459
      %v2461 = vpop.f32.mrb[0].mxu0
      %v2462 = vpop.f32.mrb[0].mxu0
      %v2463 = vadd.f32 0.0, %v2462
      %v2464 = vpop.f32.mrb[0].mxu0
      %2465 = vmatprep.mubr.bf16.mxu0 0
      %2466 = vmatmul.mubr.bf16.gmra.mrb[0].mxu0 %v2049
      %v2467 = vpop.f32.mrb[0].mxu0
      %v2468 = vadd.f32 0.0, %v2467
      %v2469 = vpop.f32.mrb[0].mxu0
      %v2470 = vpop.f32.mrb[0].mxu0
      %v2471 = vadd.f32 0.0, %v2470
      %v2472 = vpop.f32.mrb[0].mxu0
      %2473 = vmatprep.mubr.bf16.mxu0 0
      %2474 = vmatmul.mubr.bf16.gmra.mrb[0].mxu0 %v2051
      %v2475 = vpop.f32.mrb[0].mxu0
      %v2476 = vadd.f32 0.0, %v2475
      %v2477 = vpop.f32.mrb[0].mxu0
      %v2478 = vpop.f32.mrb[0].mxu0
      %v2479 = vadd.f32 0.0, %v2478
      %v2480 = vpop.f32.mrb[0].mxu0
      %2481 = vmatprep.mubr.bf16.mxu0 0
      %2482 = vmatmul.mubr.bf16.gmra.mrb[0].mxu0 %v2053
      %v2483 = vpop.f32.mrb[0].mxu0
      %v2484 = vadd.f32 0.0, %v2483
      %v2485 = vpop.f32.mrb[0].mxu0
      %v2486 = vpop.f32.mrb[0].mxu0
      %v2487 = vadd.f32 0.0, %v2486
      %v2488 = vpop.f32.mrb[0].mxu0
      %2489 = vmatprep.mubr.bf16.mxu0 0
      %2490 = vmatmul.mubr.bf16.gmra.mrb[0].mxu0 %v2055
      %v2491 = vpop.f32.mrb[0].mxu0
      %v2492 = vadd.f32 0.0, %v2491
      %v2493 = vpop.f32.mrb[0].mxu0
      %v2494 = vpop.f32.mrb[0].mxu0
      %v2495 = vadd.f32 0.0, %v2494
      %v2496 = vpop.f32.mrb[0].mxu0
      %2497 = vmatprep.mubr.bf16.mxu0 0
      %2498 = vmatmul.mubr.bf16.gmra.mrb[0].mxu0 %v2057
      %v2499 = vpop.f32.mrb[0].mxu0
      %v2500 = vadd.f32 0.0, %v2499
      %v2501 = vpop.f32.mrb[0].mxu0
      %v2502 = vpop.f32.mrb[0].mxu0
      %v2503 = vadd.f32 0.0, %v2502
      %v2504 = vpop.f32.mrb[0].mxu0
      %2505 = vmatprep.mubr.bf16.mxu0 0
      %2506 = vmatmul.mubr.bf16.gmra.mrb[0].mxu0 %v2059
      %v2507 = vpop.f32.mrb[0].mxu0
      %v2508 = vadd.f32 0.0, %v2507
      %v2509 = vpop.f32.mrb[0].mxu0
      %v2510 = vpop.f32.mrb[0].mxu0
      %v2511 = vadd.f32 0.0, %v2510
      %v2512 = vpop.f32.mrb[0].mxu0
      %2513 = vmatprep.mubr.bf16.mxu0 0
      %2514 = vmatmul.mubr.bf16.gmra.mrb[0].mxu0 %v2061
      %v2515 = vpop.f32.mrb[0].mxu0
      %v2516 = vadd.f32 0.0, %v2515
      %v2517 = vpop.f32.mrb[0].mxu0
      %v2518 = vpop.f32.mrb[0].mxu0
      %v2519 = vadd.f32 0.0, %v2518
      %v2520 = vpop.f32.mrb[0].mxu0
      %2521 = vmatprep.mubr.bf16.mxu0 0
      %2522 = vmatmul.mubr.bf16.gmra.mrb[0].mxu0 %v2063
      %v2523 = vpop.f32.mrb[0].mxu0
      %v2524 = vadd.f32 0.0, %v2523
      %v2525 = vpop.f32.mrb[0].mxu0
      %v2526 = vpop.f32.mrb[0].mxu0
      %v2527 = vadd.f32 0.0, %v2526
      %v2528 = vpop.f32.mrb[0].mxu0
      %2529 = vmatprep.mubr.bf16.mxu0 0
      %2530 = vmatmul.mubr.bf16.gmra.mrb[0].mxu0 %v2065
      %v2531 = vpop.f32.mrb[0].mxu0
      %v2532 = vadd.f32 0.0, %v2531
      %v2533 = vpop.f32.mrb[0].mxu0
      %v2534 = vpop.f32.mrb[0].mxu0
      %v2535 = vadd.f32 0.0, %v2534
      %v2536 = vpop.f32.mrb[0].mxu0
      %2537 = vmatprep.mubr.bf16.mxu0 0
      %2538 = vmatmul.mubr.bf16.gmra.mrb[0].mxu0 %v2067
      %v2539 = vpop.f32.mrb[0].mxu0
      %v2540 = vadd.f32 0.0, %v2539
      %v2541 = vpop.f32.mrb[0].mxu0
      %v2542 = vpop.f32.mrb[0].mxu0
      %v2543 = vadd.f32 0.0, %v2542
      %v2544 = vpop.f32.mrb[0].mxu0
      %2545 = vmatprep.mubr.bf16.mxu0 0
      %2546 = vmatmul.mubr.bf16.gmra.mrb[0].mxu0 %v2069
      %v2547 = vpop.f32.mrb[0].mxu0
      %v2548 = vadd.f32 0.0, %v2547
      %v2549 = vpop.f32.mrb[0].mxu0
      %v2550 = vpop.f32.mrb[0].mxu0
      %v2551 = vadd.f32 0.0, %v2550
      %v2552 = vpop.f32.mrb[0].mxu0
      %2553 = vmatprep.mubr.bf16.mxu0 0
      %2554 = vmatmul.mubr.bf16.gmra.mrb[0].mxu0 %v2071
      %v2555 = vpop.f32.mrb[0].mxu0
      %v2556 = vadd.f32 0.0, %v2555
      %v2557 = vpop.f32.mrb[0].mxu0
      %v2558 = vpop.f32.mrb[0].mxu0
      %v2559 = vadd.f32 0.0, %v2558
      %v2560 = vpop.f32.mrb[0].mxu0
      %2561 = vmatprep.mubr.bf16.mxu0 0
      %2562 = vmatmul.mubr.bf16.gmra.mrb[0].mxu0 %v2073
      %v2563 = vpop.f32.mrb[0].mxu0
      %v2564 = vadd.f32 0.0, %v2563
      %v2565 = vpop.f32.mrb[0].mxu0
      %v2566 = vpop.f32.mrb[0].mxu0
      %v2567 = vadd.f32 0.0, %v2566
      %v2568 = vpop.f32.mrb[0].mxu0
      %2569 = vmatprep.mubr.bf16.mxu0 0
      %2570 = vmatmul.mubr.bf16.gmra.mrb[0].mxu0 %v2075
      %v2571 = vpop.f32.mrb[0].mxu0
      %v2572 = vadd.f32 0.0, %v2571
      %v2573 = vpop.f32.mrb[0].mxu0
      %v2574 = vpop.f32.mrb[0].mxu0
      %v2575 = vadd.f32 0.0, %v2574
      %v2576 = vpop.f32.mrb[0].mxu0
      %2577 = vmatprep.mubr.bf16.mxu0 0
      %2578 = vmatmul.mubr.bf16.gmra.mrb[0].mxu0 %v2364
      %v2579 = vpop.f32.mrb[0].mxu0
      %v2580 = vadd.f32 0.0, %v2579
      %v2581 = vpop.f32.mrb[0].mxu0
      %v2582 = vpop.f32.mrb[0].mxu0
      %v2583 = vadd.f32 0.0, %v2582
      %v2584 = vpop.f32.mrb[0].mxu0
      %2585 = vmatprep.mubr.bf16.mxu0 0
      %2586 = vmatmul.mubr.bf16.gmra.mrb[0].mxu0 %v2366
      %v2587 = vpop.f32.mrb[0].mxu0
      %v2588 = vadd.f32 0.0, %v2587
      %v2589 = vpop.f32.mrb[0].mxu0
      %v2590 = vpop.f32.mrb[0].mxu0
      %v2591 = vadd.f32 0.0, %v2590
      %v2592 = vpop.f32.mrb[0].mxu0
      %2593 = vdwg.mxu0
      %v2594 = vadd.f32 %v2321, %v2452
      %v2595 = vadd.f32 %v2322, %v2455
      %v2596 = vadd.f32 %v2323, %v2460
      %v2597 = vadd.f32 %v2324, %v2463
      %v2598 = vadd.f32 %v2325, %v2468
      %v2599 = vadd.f32 %v2326, %v2471
      %v2600 = vadd.f32 %v2327, %v2476
      %v2601 = vadd.f32 %v2328, %v2479
      %v2602 = vadd.f32 %v2329, %v2484
      %v2603 = vadd.f32 %v2330, %v2487
      %v2604 = vadd.f32 %v2331, %v2492
      %v2605 = vadd.f32 %v2332, %v2495
      %v2606 = vadd.f32 %v2333, %v2500
      %v2607 = vadd.f32 %v2334, %v2503
      %v2608 = vadd.f32 %v2335, %v2508
      %v2609 = vadd.f32 %v2336, %v2511
      %v2610 = vadd.f32 %v2337, %v2516
      %v2611 = vadd.f32 %v2338, %v2519
      %v2612 = vadd.f32 %v2339, %v2524
      %v2613 = vadd.f32 %v2340, %v2527
      %v2614 = vadd.f32 %v2341, %v2532
      %v2615 = vadd.f32 %v2342, %v2535
      %v2616 = vadd.f32 %v2343, %v2540
      %v2617 = vadd.f32 %v2344, %v2543
      %v2618 = vadd.f32 %v2345, %v2548
      %v2619 = vadd.f32 %v2346, %v2551
      %v2620 = vadd.f32 %v2347, %v2556
      %v2621 = vadd.f32 %v2348, %v2559
      %v2622 = vadd.f32 %v2349, %v2564
      %v2623 = vadd.f32 %v2350, %v2567
      %v2624 = vadd.f32 %v2351, %v2572
      %v2625 = vadd.f32 %v2352, %v2575
      %v2626 = vadd.f32 %v2353, %v2580
      %v2627 = vadd.f32 %v2354, %v2583
      %v2628 = vadd.f32 %v2355, %v2588
      %v2629 = vadd.f32 %v2356, %v2591
      %vm2630 = vsmask.f32 5376
      %v2631 = vrot.slane %v471, 2
      %v2632 = vrot.slane %v467, 3
      %v2633 = vor.u32 %v2631, %v2632
      %v2634 = vrot.slane %v479, 2
      %v2635 = vrot.slane %v475, 3
      %v2636 = vor.u32 %v2634, %v2635
      %v2637 = vsel %vm2630, %v2633, %v2636
      %v2638 = vrot.slane %v487, 2
      %v2639 = vrot.slane %v483, 3
      %v2640 = vor.u32 %v2638, %v2639
      %v2641 = vsel %vm2630, %v2636, %v2640
      %v2642 = vrot.slane %v495, 2
      %v2643 = vrot.slane %v491, 3
      %v2644 = vor.u32 %v2642, %v2643
      %v2645 = vsel %vm2630, %v2640, %v2644
      %v2646 = vrot.slane %v503, 2
      %v2647 = vrot.slane %v499, 3
      %v2648 = vor.u32 %v2646, %v2647
      %v2649 = vsel %vm2630, %v2644, %v2648
      %v2650 = vrot.slane %v511, 2
      %v2651 = vrot.slane %v507, 3
      %v2652 = vor.u32 %v2650, %v2651
      %v2653 = vsel %vm2630, %v2648, %v2652
      %v2654 = vrot.slane %v519, 2
      %v2655 = vrot.slane %v515, 3
      %v2656 = vor.u32 %v2654, %v2655
      %v2657 = vsel %vm2630, %v2652, %v2656
      %v2658 = vrot.slane %v527, 2
      %v2659 = vrot.slane %v523, 3
      %v2660 = vor.u32 %v2658, %v2659
      %v2661 = vsel %vm2630, %v2656, %v2660
      %v2662 = vrot.slane %v535, 2
      %v2663 = vrot.slane %v531, 3
      %v2664 = vor.u32 %v2662, %v2663
      %v2665 = vsel %vm2630, %v2660, %v2664
      %v2666 = vrot.slane %v543, 2
      %v2667 = vrot.slane %v539, 3
      %v2668 = vor.u32 %v2666, %v2667
      %v2669 = vsel %vm2630, %v2664, %v2668
      %v2670 = vrot.slane %v551, 2
      %v2671 = vrot.slane %v547, 3
      %v2672 = vor.u32 %v2670, %v2671
      %v2673 = vsel %vm2630, %v2668, %v2672
      %v2674 = vrot.slane %v559, 2
      %v2675 = vrot.slane %v555, 3
      %v2676 = vor.u32 %v2674, %v2675
      %v2677 = vsel %vm2630, %v2672, %v2676
      %v2678 = vrot.slane %v567, 2
      %v2679 = vrot.slane %v563, 3
      %v2680 = vor.u32 %v2678, %v2679
      %v2681 = vsel %vm2630, %v2676, %v2680
      %v2682 = vrot.slane %v575, 2
      %v2683 = vrot.slane %v571, 3
      %v2684 = vor.u32 %v2682, %v2683
      %v2685 = vsel %vm2630, %v2680, %v2684
      %v2686 = vrot.slane %v583, 2
      %v2687 = vrot.slane %v579, 3
      %v2688 = vor.u32 %v2686, %v2687
      %v2689 = vsel %vm2630, %v2684, %v2688
      %v2690 = vrot.slane %v591, 2
      %v2691 = vrot.slane %v587, 3
      %v2692 = vor.u32 %v2690, %v2691
      %v2693 = vsel %vm2630, %v2688, %v2692
      %v2694 = vrot.slane %v1744, 2
      %v2695 = vrot.slane %v1747, 3
      %v2696 = vor.u32 %v2694, %v2695
      %v2697 = vsel %vm2630, %v2692, %v2696
      %v2699 = vshrl.u32 %v2361, 16
      %v2701 = vrot.slane %v2699, 2
      %v2702 = vshll.u32 %v2361, 16
      %v2704 = vrot.slane %v2702, 3
      %v2705 = vor.u32 %v2701, %v2704
      %v2706 = vsel %vm2630, %v2696, %v2705
      %v2708 = vshrl.u32 %v2362, 16
      %v2710 = vrot.slane %v2708, 2
      %v2711 = vshll.u32 %v2362, 16
      %v2713 = vrot.slane %v2711, 3
      %v2714 = vor.u32 %v2710, %v2713
      %v2715 = vsel %vm2630, %v2705, %v2714
      %v2750 = vunpack.c.l.b16 %v325
      %v2751 = vunpack.c.l.b16 %v326
      %v2752 = vunpack.c.l.b16 %v327
      %v2753 = vunpack.c.l.b16 %v328
      %v2754 = vunpack.c.l.b16 %v329
      %v2755 = vunpack.c.l.b16 %v330
      %v2756 = vunpack.c.l.b16 %v331
      %v2757 = vunpack.c.l.b16 %v332
      %v2758 = vunpack.c.l.b16 %v333
      %v2759 = vunpack.c.l.b16 %v334
      %v2760 = vunpack.c.l.b16 %v335
      %v2761 = vunpack.c.l.b16 %v336
      %v2762 = vunpack.c.l.b16 %v337
      %v2763 = vunpack.c.l.b16 %v338
      %v2764 = vunpack.c.l.b16 %v339
      %v2765 = vunpack.c.l.b16 %v340
      %v2766 = vpack.c.b16 %v2751, %v2750
      %v2767 = vpack.c.b16 %v2753, %v2752
      %v2768 = vpack.c.b16 %v2755, %v2754
      %v2769 = vpack.c.b16 %v2757, %v2756
      %v2770 = vpack.c.b16 %v2759, %v2758
      %v2771 = vpack.c.b16 %v2761, %v2760
      %v2772 = vpack.c.b16 %v2763, %v2762
      %v2773 = vpack.c.b16 %v2765, %v2764
      %2782 = vmatprep.subr.bf16.mxu0 0
      %2783 = vmatpush1.bf16.msra.mxu0 %v2766
      %2784 = vmatprep.subr.bf16.mxu0 0
      %2785 = vmatpush1.bf16.msra.mxu0 %v2767
      %2786 = vmatprep.subr.bf16.mxu0 0
      %2787 = vmatpush1.bf16.msra.mxu0 %v2768
      %2788 = vmatprep.subr.bf16.mxu0 0
      %2789 = vmatpush1.bf16.msra.mxu0 %v2769
      %2790 = vmatprep.subr.bf16.mxu0 0
      %2791 = vmatpush1.bf16.msra.mxu0 %v2770
      %2792 = vmatprep.subr.bf16.mxu0 0
      %2793 = vmatpush1.bf16.msra.mxu0 %v2771
      %2794 = vmatprep.subr.bf16.mxu0 0
      %2795 = vmatpush1.bf16.msra.mxu0 %v2772
      %2796 = vmatprep.subr.bf16.mxu0 0
      %2797 = vmatpush1.bf16.msra.mxu0 %v2773
      %2798 = vmatprep.subr.bf16.mxu0 0
      %2799 = vmatpush1.bf16.msra.mxu0 0
      %2800 = vmatprep.subr.bf16.mxu0 0
      %2801 = vmatpush1.bf16.msra.mxu0 0
      %2802 = vmatprep.subr.bf16.mxu0 0
      %2803 = vmatpush1.bf16.msra.mxu0 0
      %2804 = vmatprep.subr.bf16.mxu0 0
      %2805 = vmatpush1.bf16.msra.mxu0 0
      %2806 = vmatprep.subr.bf16.mxu0 0
      %2807 = vmatpush1.bf16.msra.mxu0 0
      %2808 = vmatprep.subr.bf16.mxu0 0
      %2809 = vmatpush1.bf16.msra.mxu0 0
      %2810 = vmatprep.subr.bf16.mxu0 0
      %2811 = vmatpush1.bf16.msra.mxu0 0
      %2812 = vmatprep.subr.bf16.mxu0 0
      %2813 = vmatpush1.bf16.msra.mxu0 0
      %2814 = vmatprep.mubr.bf16.mxu0 0
      %2815 = vmatmul.mubr.bf16.gmra.mrb[0].mxu0 %v2637
      %v2816 = vpop.f32.mrb[0].mxu0
      %v2817 = vadd.f32 0.0, %v2816
      %v2818 = vpop.f32.mrb[0].mxu0
      %v2819 = vpop.f32.mrb[0].mxu0
      %v2820 = vadd.f32 0.0, %v2819
      %v2821 = vpop.f32.mrb[0].mxu0
      %2822 = vmatprep.mubr.bf16.mxu0 0
      %2823 = vmatmul.mubr.bf16.gmra.mrb[0].mxu0 %v2641
      %v2824 = vpop.f32.mrb[0].mxu0
      %v2825 = vadd.f32 0.0, %v2824
      %v2826 = vpop.f32.mrb[0].mxu0
      %v2827 = vpop.f32.mrb[0].mxu0
      %v2828 = vadd.f32 0.0, %v2827
      %v2829 = vpop.f32.mrb[0].mxu0
      %2830 = vmatprep.mubr.bf16.mxu0 0
      %2831 = vmatmul.mubr.bf16.gmra.mrb[0].mxu0 %v2645
      %v2832 = vpop.f32.mrb[0].mxu0
      %v2833 = vadd.f32 0.0, %v2832
      %v2834 = vpop.f32.mrb[0].mxu0
      %v2835 = vpop.f32.mrb[0].mxu0
      %v2836 = vadd.f32 0.0, %v2835
      %v2837 = vpop.f32.mrb[0].mxu0
      %2838 = vmatprep.mubr.bf16.mxu0 0
      %2839 = vmatmul.mubr.bf16.gmra.mrb[0].mxu0 %v2649
      %v2840 = vpop.f32.mrb[0].mxu0
      %v2841 = vadd.f32 0.0, %v2840
      %v2842 = vpop.f32.mrb[0].mxu0
      %v2843 = vpop.f32.mrb[0].mxu0
      %v2844 = vadd.f32 0.0, %v2843
      %v2845 = vpop.f32.mrb[0].mxu0
      %2846 = vmatprep.mubr.bf16.mxu0 0
      %2847 = vmatmul.mubr.bf16.gmra.mrb[0].mxu0 %v2653
      %v2848 = vpop.f32.mrb[0].mxu0
      %v2849 = vadd.f32 0.0, %v2848
      %v2850 = vpop.f32.mrb[0].mxu0
      %v2851 = vpop.f32.mrb[0].mxu0
      %v2852 = vadd.f32 0.0, %v2851
      %v2853 = vpop.f32.mrb[0].mxu0
      %2854 = vmatprep.mubr.bf16.mxu0 0
      %2855 = vmatmul.mubr.bf16.gmra.mrb[0].mxu0 %v2657
      %v2856 = vpop.f32.mrb[0].mxu0
      %v2857 = vadd.f32 0.0, %v2856
      %v2858 = vpop.f32.mrb[0].mxu0
      %v2859 = vpop.f32.mrb[0].mxu0
      %v2860 = vadd.f32 0.0, %v2859
      %v2861 = vpop.f32.mrb[0].mxu0
      %2862 = vmatprep.mubr.bf16.mxu0 0
      %2863 = vmatmul.mubr.bf16.gmra.mrb[0].mxu0 %v2661
      %v2864 = vpop.f32.mrb[0].mxu0
      %v2865 = vadd.f32 0.0, %v2864
      %v2866 = vpop.f32.mrb[0].mxu0
      %v2867 = vpop.f32.mrb[0].mxu0
      %v2868 = vadd.f32 0.0, %v2867
      %v2869 = vpop.f32.mrb[0].mxu0
      %2870 = vmatprep.mubr.bf16.mxu0 0
      %2871 = vmatmul.mubr.bf16.gmra.mrb[0].mxu0 %v2665
      %v2872 = vpop.f32.mrb[0].mxu0
      %v2873 = vadd.f32 0.0, %v2872
      %v2874 = vpop.f32.mrb[0].mxu0
      %v2875 = vpop.f32.mrb[0].mxu0
      %v2876 = vadd.f32 0.0, %v2875
      %v2877 = vpop.f32.mrb[0].mxu0
      %2878 = vmatprep.mubr.bf16.mxu0 0
      %2879 = vmatmul.mubr.bf16.gmra.mrb[0].mxu0 %v2669
      %v2880 = vpop.f32.mrb[0].mxu0
      %v2881 = vadd.f32 0.0, %v2880
      %v2882 = vpop.f32.mrb[0].mxu0
      %v2883 = vpop.f32.mrb[0].mxu0
      %v2884 = vadd.f32 0.0, %v2883
      %v2885 = vpop.f32.mrb[0].mxu0
      %2886 = vmatprep.mubr.bf16.mxu0 0
      %2887 = vmatmul.mubr.bf16.gmra.mrb[0].mxu0 %v2673
      %v2888 = vpop.f32.mrb[0].mxu0
      %v2889 = vadd.f32 0.0, %v2888
      %v2890 = vpop.f32.mrb[0].mxu0
      %v2891 = vpop.f32.mrb[0].mxu0
      %v2892 = vadd.f32 0.0, %v2891
      %v2893 = vpop.f32.mrb[0].mxu0
      %2894 = vmatprep.mubr.bf16.mxu0 0
      %2895 = vmatmul.mubr.bf16.gmra.mrb[0].mxu0 %v2677
      %v2896 = vpop.f32.mrb[0].mxu0
      %v2897 = vadd.f32 0.0, %v2896
      %v2898 = vpop.f32.mrb[0].mxu0
      %v2899 = vpop.f32.mrb[0].mxu0
      %v2900 = vadd.f32 0.0, %v2899
      %v2901 = vpop.f32.mrb[0].mxu0
      %2902 = vmatprep.mubr.bf16.mxu0 0
      %2903 = vmatmul.mubr.bf16.gmra.mrb[0].mxu0 %v2681
      %v2904 = vpop.f32.mrb[0].mxu0
      %v2905 = vadd.f32 0.0, %v2904
      %v2906 = vpop.f32.mrb[0].mxu0
      %v2907 = vpop.f32.mrb[0].mxu0
      %v2908 = vadd.f32 0.0, %v2907
      %v2909 = vpop.f32.mrb[0].mxu0
      %2910 = vmatprep.mubr.bf16.mxu0 0
      %2911 = vmatmul.mubr.bf16.gmra.mrb[0].mxu0 %v2685
      %v2912 = vpop.f32.mrb[0].mxu0
      %v2913 = vadd.f32 0.0, %v2912
      %v2914 = vpop.f32.mrb[0].mxu0
      %v2915 = vpop.f32.mrb[0].mxu0
      %v2916 = vadd.f32 0.0, %v2915
      %v2917 = vpop.f32.mrb[0].mxu0
      %2918 = vmatprep.mubr.bf16.mxu0 0
      %2919 = vmatmul.mubr.bf16.gmra.mrb[0].mxu0 %v2689
      %v2920 = vpop.f32.mrb[0].mxu0
      %v2921 = vadd.f32 0.0, %v2920
      %v2922 = vpop.f32.mrb[0].mxu0
      %v2923 = vpop.f32.mrb[0].mxu0
      %v2924 = vadd.f32 0.0, %v2923
      %v2925 = vpop.f32.mrb[0].mxu0
      %2926 = vmatprep.mubr.bf16.mxu0 0
      %2927 = vmatmul.mubr.bf16.gmra.mrb[0].mxu0 %v2693
      %v2928 = vpop.f32.mrb[0].mxu0
      %v2929 = vadd.f32 0.0, %v2928
      %v2930 = vpop.f32.mrb[0].mxu0
      %v2931 = vpop.f32.mrb[0].mxu0
      %v2932 = vadd.f32 0.0, %v2931
      %v2933 = vpop.f32.mrb[0].mxu0
      %2934 = vmatprep.mubr.bf16.mxu0 0
      %2935 = vmatmul.mubr.bf16.gmra.mrb[0].mxu0 %v2697
      %v2936 = vpop.f32.mrb[0].mxu0
      %v2937 = vadd.f32 0.0, %v2936
      %v2938 = vpop.f32.mrb[0].mxu0
      %v2939 = vpop.f32.mrb[0].mxu0
      %v2940 = vadd.f32 0.0, %v2939
      %v2941 = vpop.f32.mrb[0].mxu0
      %2942 = vmatprep.mubr.bf16.mxu0 0
      %2943 = vmatmul.mubr.bf16.gmra.mrb[0].mxu0 %v2706
      %v2944 = vpop.f32.mrb[0].mxu0
      %v2945 = vadd.f32 0.0, %v2944
      %v2946 = vpop.f32.mrb[0].mxu0
      %v2947 = vpop.f32.mrb[0].mxu0
      %v2948 = vadd.f32 0.0, %v2947
      %v2949 = vpop.f32.mrb[0].mxu0
      %2950 = vmatprep.mubr.bf16.mxu0 0
      %2951 = vmatmul.mubr.bf16.gmra.mrb[0].mxu0 %v2715
      %v2952 = vpop.f32.mrb[0].mxu0
      %v2953 = vadd.f32 0.0, %v2952
      %v2954 = vpop.f32.mrb[0].mxu0
      %v2955 = vpop.f32.mrb[0].mxu0
      %v2956 = vadd.f32 0.0, %v2955
      %v2957 = vpop.f32.mrb[0].mxu0
      %2958 = vdwg.mxu0
      %v2959 = vadd.f32 %v2594, %v2817
      %v2960 = vadd.f32 %v2595, %v2820
      %v2961 = vadd.f32 %v2596, %v2825
      %v2962 = vadd.f32 %v2597, %v2828
      %v2963 = vadd.f32 %v2598, %v2833
      %v2964 = vadd.f32 %v2599, %v2836
      %v2965 = vadd.f32 %v2600, %v2841
      %v2966 = vadd.f32 %v2601, %v2844
      %v2967 = vadd.f32 %v2602, %v2849
      %v2968 = vadd.f32 %v2603, %v2852
      %v2969 = vadd.f32 %v2604, %v2857
      %v2970 = vadd.f32 %v2605, %v2860
      %v2971 = vadd.f32 %v2606, %v2865
      %v2972 = vadd.f32 %v2607, %v2868
      %v2973 = vadd.f32 %v2608, %v2873
      %v2974 = vadd.f32 %v2609, %v2876
      %v2975 = vadd.f32 %v2610, %v2881
      %v2976 = vadd.f32 %v2611, %v2884
      %v2977 = vadd.f32 %v2612, %v2889
      %v2978 = vadd.f32 %v2613, %v2892
      %v2979 = vadd.f32 %v2614, %v2897
      %v2980 = vadd.f32 %v2615, %v2900
      %v2981 = vadd.f32 %v2616, %v2905
      %v2982 = vadd.f32 %v2617, %v2908
      %v2983 = vadd.f32 %v2618, %v2913
      %v2984 = vadd.f32 %v2619, %v2916
      %v2985 = vadd.f32 %v2620, %v2921
      %v2986 = vadd.f32 %v2621, %v2924
      %v2987 = vadd.f32 %v2622, %v2929
      %v2988 = vadd.f32 %v2623, %v2932
      %v2989 = vadd.f32 %v2624, %v2937
      %v2990 = vadd.f32 %v2625, %v2940
      %v2991 = vadd.f32 %v2626, %v2945
      %v2992 = vadd.f32 %v2627, %v2948
      %v2993 = vadd.f32 %v2628, %v2953
      %v2994 = vadd.f32 %v2629, %v2956
      %vm2995 = vcmask 1044480
      %v2996 = vrot.slane %v433, 3
      %v2997 = vrot.slane %v434, 3
      %v2998 = vsel %vm2995, %v2996, %v2997
      %v2999 = vrot.slane %v435, 3
      %v3000 = vsel %vm2995, %v2997, %v2999
      %v3001 = vrot.slane %v436, 3
      %v3002 = vsel %vm2995, %v2999, %v3001
      %v3003 = vrot.slane %v437, 3
      %v3004 = vsel %vm2995, %v3001, %v3003
      %v3005 = vrot.slane %v438, 3
      %v3006 = vsel %vm2995, %v3003, %v3005
      %v3007 = vrot.slane %v439, 3
      %v3008 = vsel %vm2995, %v3005, %v3007
      %v3009 = vrot.slane %v440, 3
      %v3010 = vsel %vm2995, %v3007, %v3009
      %v3011 = vrot.slane %v441, 3
      %v3012 = vsel %vm2995, %v3009, %v3011
      %v3013 = vrot.slane %v442, 3
      %v3014 = vsel %vm2995, %v3011, %v3013
      %v3015 = vrot.slane %v443, 3
      %v3016 = vsel %vm2995, %v3013, %v3015
      %v3017 = vrot.slane %v444, 3
      %v3018 = vsel %vm2995, %v3015, %v3017
      %v3019 = vrot.slane %v445, 3
      %v3020 = vsel %vm2995, %v3017, %v3019
      %v3021 = vrot.slane %v446, 3
      %v3022 = vsel %vm2995, %v3019, %v3021
      %v3023 = vrot.slane %v447, 3
      %v3024 = vsel %vm2995, %v3021, %v3023
      %v3025 = vrot.slane %v448, 3
      %v3026 = vsel %vm2995, %v3023, %v3025
      %v3027 = vrot.slane %v1406, 3
      %v3028 = vsel %vm2995, %v3025, %v3027
      %v3029 = vrot.slane %v2361, 3
      %v3030 = vsel %vm2995, %v3027, %v3029
      %v3031 = vrot.slane %v2362, 3
      %v3032 = vsel %vm2995, %v3029, %v3031
      %v3067 = vunpack.c.l.b16 %v341
      %v3068 = vunpack.c.l.b16 %v342
      %v3069 = vunpack.c.l.b16 %v343
      %v3070 = vunpack.c.l.b16 %v344
      %v3071 = vunpack.c.l.b16 %v345
      %v3072 = vunpack.c.l.b16 %v346
      %v3073 = vunpack.c.l.b16 %v347
      %v3074 = vunpack.c.l.b16 %v348
      %v3075 = vunpack.c.l.b16 %v349
      %v3076 = vunpack.c.l.b16 %v350
      %v3077 = vunpack.c.l.b16 %v351
      %v3078 = vunpack.c.l.b16 %v352
      %v3079 = vunpack.c.l.b16 %v353
      %v3080 = vunpack.c.l.b16 %v354
      %v3081 = vunpack.c.l.b16 %v355
      %v3082 = vunpack.c.l.b16 %v356
      %v3083 = vpack.c.b16 %v3068, %v3067
      %v3084 = vpack.c.b16 %v3070, %v3069
      %v3085 = vpack.c.b16 %v3072, %v3071
      %v3086 = vpack.c.b16 %v3074, %v3073
      %v3087 = vpack.c.b16 %v3076, %v3075
      %v3088 = vpack.c.b16 %v3078, %v3077
      %v3089 = vpack.c.b16 %v3080, %v3079
      %v3090 = vpack.c.b16 %v3082, %v3081
      %3099 = vmatprep.subr.bf16.mxu0 0
      %3100 = vmatpush1.bf16.msra.mxu0 %v3083
      %3101 = vmatprep.subr.bf16.mxu0 0
      %3102 = vmatpush1.bf16.msra.mxu0 %v3084
      %3103 = vmatprep.subr.bf16.mxu0 0
      %3104 = vmatpush1.bf16.msra.mxu0 %v3085
      %3105 = vmatprep.subr.bf16.mxu0 0
      %3106 = vmatpush1.bf16.msra.mxu0 %v3086
      %3107 = vmatprep.subr.bf16.mxu0 0
      %3108 = vmatpush1.bf16.msra.mxu0 %v3087
      %3109 = vmatprep.subr.bf16.mxu0 0
      %3110 = vmatpush1.bf16.msra.mxu0 %v3088
      %3111 = vmatprep.subr.bf16.mxu0 0
      %3112 = vmatpush1.bf16.msra.mxu0 %v3089
      %3113 = vmatprep.subr.bf16.mxu0 0
      %3114 = vmatpush1.bf16.msra.mxu0 %v3090
      %3115 = vmatprep.subr.bf16.mxu0 0
      %3116 = vmatpush1.bf16.msra.mxu0 0
      %3117 = vmatprep.subr.bf16.mxu0 0
      %3118 = vmatpush1.bf16.msra.mxu0 0
      %3119 = vmatprep.subr.bf16.mxu0 0
      %3120 = vmatpush1.bf16.msra.mxu0 0
      %3121 = vmatprep.subr.bf16.mxu0 0
      %3122 = vmatpush1.bf16.msra.mxu0 0
      %3123 = vmatprep.subr.bf16.mxu0 0
      %3124 = vmatpush1.bf16.msra.mxu0 0
      %3125 = vmatprep.subr.bf16.mxu0 0
      %3126 = vmatpush1.bf16.msra.mxu0 0
      %3127 = vmatprep.subr.bf16.mxu0 0
      %3128 = vmatpush1.bf16.msra.mxu0 0
      %3129 = vmatprep.subr.bf16.mxu0 0
      %3130 = vmatpush1.bf16.msra.mxu0 0
      %3131 = vmatprep.mubr.bf16.mxu0 0
      %3132 = vmatmul.mubr.bf16.gmra.mrb[0].mxu0 %v2998
      %v3133 = vpop.f32.mrb[0].mxu0
      %v3134 = vadd.f32 0.0, %v3133
      %v3135 = vpop.f32.mrb[0].mxu0
      %v3136 = vpop.f32.mrb[0].mxu0
      %v3137 = vadd.f32 0.0, %v3136
      %v3138 = vpop.f32.mrb[0].mxu0
      %3139 = vmatprep.mubr.bf16.mxu0 0
      %3140 = vmatmul.mubr.bf16.gmra.mrb[0].mxu0 %v3000
      %v3141 = vpop.f32.mrb[0].mxu0
      %v3142 = vadd.f32 0.0, %v3141
      %v3143 = vpop.f32.mrb[0].mxu0
      %v3144 = vpop.f32.mrb[0].mxu0
      %v3145 = vadd.f32 0.0, %v3144
      %v3146 = vpop.f32.mrb[0].mxu0
      %3147 = vmatprep.mubr.bf16.mxu0 0
      %3148 = vmatmul.mubr.bf16.gmra.mrb[0].mxu0 %v3002
      %v3149 = vpop.f32.mrb[0].mxu0
      %v3150 = vadd.f32 0.0, %v3149
      %v3151 = vpop.f32.mrb[0].mxu0
      %v3152 = vpop.f32.mrb[0].mxu0
      %v3153 = vadd.f32 0.0, %v3152
      %v3154 = vpop.f32.mrb[0].mxu0
      %3155 = vmatprep.mubr.bf16.mxu0 0
      %3156 = vmatmul.mubr.bf16.gmra.mrb[0].mxu0 %v3004
      %v3157 = vpop.f32.mrb[0].mxu0
      %v3158 = vadd.f32 0.0, %v3157
      %v3159 = vpop.f32.mrb[0].mxu0
      %v3160 = vpop.f32.mrb[0].mxu0
      %v3161 = vadd.f32 0.0, %v3160
      %v3162 = vpop.f32.mrb[0].mxu0
      %3163 = vmatprep.mubr.bf16.mxu0 0
      %3164 = vmatmul.mubr.bf16.gmra.mrb[0].mxu0 %v3006
      %v3165 = vpop.f32.mrb[0].mxu0
      %v3166 = vadd.f32 0.0, %v3165
      %v3167 = vpop.f32.mrb[0].mxu0
      %v3168 = vpop.f32.mrb[0].mxu0
      %v3169 = vadd.f32 0.0, %v3168
      %v3170 = vpop.f32.mrb[0].mxu0
      %3171 = vmatprep.mubr.bf16.mxu0 0
      %3172 = vmatmul.mubr.bf16.gmra.mrb[0].mxu0 %v3008
      %v3173 = vpop.f32.mrb[0].mxu0
      %v3174 = vadd.f32 0.0, %v3173
      %v3175 = vpop.f32.mrb[0].mxu0
      %v3176 = vpop.f32.mrb[0].mxu0
      %v3177 = vadd.f32 0.0, %v3176
      %v3178 = vpop.f32.mrb[0].mxu0
      %3179 = vmatprep.mubr.bf16.mxu0 0
      %3180 = vmatmul.mubr.bf16.gmra.mrb[0].mxu0 %v3010
      %v3181 = vpop.f32.mrb[0].mxu0
      %v3182 = vadd.f32 0.0, %v3181
      %v3183 = vpop.f32.mrb[0].mxu0
      %v3184 = vpop.f32.mrb[0].mxu0
      %v3185 = vadd.f32 0.0, %v3184
      %v3186 = vpop.f32.mrb[0].mxu0
      %3187 = vmatprep.mubr.bf16.mxu0 0
      %3188 = vmatmul.mubr.bf16.gmra.mrb[0].mxu0 %v3012
      %v3189 = vpop.f32.mrb[0].mxu0
      %v3190 = vadd.f32 0.0, %v3189
      %v3191 = vpop.f32.mrb[0].mxu0
      %v3192 = vpop.f32.mrb[0].mxu0
      %v3193 = vadd.f32 0.0, %v3192
      %v3194 = vpop.f32.mrb[0].mxu0
      %3195 = vmatprep.mubr.bf16.mxu0 0
      %3196 = vmatmul.mubr.bf16.gmra.mrb[0].mxu0 %v3014
      %v3197 = vpop.f32.mrb[0].mxu0
      %v3198 = vadd.f32 0.0, %v3197
      %v3199 = vpop.f32.mrb[0].mxu0
      %v3200 = vpop.f32.mrb[0].mxu0
      %v3201 = vadd.f32 0.0, %v3200
      %v3202 = vpop.f32.mrb[0].mxu0
      %3203 = vmatprep.mubr.bf16.mxu0 0
      %3204 = vmatmul.mubr.bf16.gmra.mrb[0].mxu0 %v3016
      %v3205 = vpop.f32.mrb[0].mxu0
      %v3206 = vadd.f32 0.0, %v3205
      %v3207 = vpop.f32.mrb[0].mxu0
      %v3208 = vpop.f32.mrb[0].mxu0
      %v3209 = vadd.f32 0.0, %v3208
      %v3210 = vpop.f32.mrb[0].mxu0
      %3211 = vmatprep.mubr.bf16.mxu0 0
      %3212 = vmatmul.mubr.bf16.gmra.mrb[0].mxu0 %v3018
      %v3213 = vpop.f32.mrb[0].mxu0
      %v3214 = vadd.f32 0.0, %v3213
      %v3215 = vpop.f32.mrb[0].mxu0
      %v3216 = vpop.f32.mrb[0].mxu0
      %v3217 = vadd.f32 0.0, %v3216
      %v3218 = vpop.f32.mrb[0].mxu0
      %3219 = vmatprep.mubr.bf16.mxu0 0
      %3220 = vmatmul.mubr.bf16.gmra.mrb[0].mxu0 %v3020
      %v3221 = vpop.f32.mrb[0].mxu0
      %v3222 = vadd.f32 0.0, %v3221
      %v3223 = vpop.f32.mrb[0].mxu0
      %v3224 = vpop.f32.mrb[0].mxu0
      %v3225 = vadd.f32 0.0, %v3224
      %v3226 = vpop.f32.mrb[0].mxu0
      %3227 = vmatprep.mubr.bf16.mxu0 0
      %3228 = vmatmul.mubr.bf16.gmra.mrb[0].mxu0 %v3022
      %v3229 = vpop.f32.mrb[0].mxu0
      %v3230 = vadd.f32 0.0, %v3229
      %v3231 = vpop.f32.mrb[0].mxu0
      %v3232 = vpop.f32.mrb[0].mxu0
      %v3233 = vadd.f32 0.0, %v3232
      %v3234 = vpop.f32.mrb[0].mxu0
      %3235 = vmatprep.mubr.bf16.mxu0 0
      %3236 = vmatmul.mubr.bf16.gmra.mrb[0].mxu0 %v3024
      %v3237 = vpop.f32.mrb[0].mxu0
      %v3238 = vadd.f32 0.0, %v3237
      %v3239 = vpop.f32.mrb[0].mxu0
      %v3240 = vpop.f32.mrb[0].mxu0
      %v3241 = vadd.f32 0.0, %v3240
      %v3242 = vpop.f32.mrb[0].mxu0
      %3243 = vmatprep.mubr.bf16.mxu0 0
      %3244 = vmatmul.mubr.bf16.gmra.mrb[0].mxu0 %v3026
      %v3245 = vpop.f32.mrb[0].mxu0
      %v3246 = vadd.f32 0.0, %v3245
      %v3247 = vpop.f32.mrb[0].mxu0
      %v3248 = vpop.f32.mrb[0].mxu0
      %v3249 = vadd.f32 0.0, %v3248
      %v3250 = vpop.f32.mrb[0].mxu0
      %3251 = vmatprep.mubr.bf16.mxu0 0
      %3252 = vmatmul.mubr.bf16.gmra.mrb[0].mxu0 %v3028
      %v3253 = vpop.f32.mrb[0].mxu0
      %v3254 = vadd.f32 0.0, %v3253
      %v3255 = vpop.f32.mrb[0].mxu0
      %v3256 = vpop.f32.mrb[0].mxu0
      %v3257 = vadd.f32 0.0, %v3256
      %v3258 = vpop.f32.mrb[0].mxu0
      %3259 = vmatprep.mubr.bf16.mxu0 0
      %3260 = vmatmul.mubr.bf16.gmra.mrb[0].mxu0 %v3030
      %v3261 = vpop.f32.mrb[0].mxu0
      %v3262 = vadd.f32 0.0, %v3261
      %v3263 = vpop.f32.mrb[0].mxu0
      %v3264 = vpop.f32.mrb[0].mxu0
      %v3265 = vadd.f32 0.0, %v3264
      %v3266 = vpop.f32.mrb[0].mxu0
      %3267 = vmatprep.mubr.bf16.mxu0 0
      %3268 = vmatmul.mubr.bf16.gmra.mrb[0].mxu0 %v3032
      %v3269 = vpop.f32.mrb[0].mxu0
      %v3270 = vadd.f32 0.0, %v3269
      %v3271 = vpop.f32.mrb[0].mxu0
      %v3272 = vpop.f32.mrb[0].mxu0
      %v3273 = vadd.f32 0.0, %v3272
      %v3274 = vpop.f32.mrb[0].mxu0
      %3275 = vdwg.mxu0
      %v3276 = vadd.f32 %v2959, %v3134
      %v3277 = vadd.f32 %v2960, %v3137
      %v3278 = vadd.f32 %v2961, %v3142
      %v3279 = vadd.f32 %v2962, %v3145
      %v3280 = vadd.f32 %v2963, %v3150
      %v3281 = vadd.f32 %v2964, %v3153
      %v3282 = vadd.f32 %v2965, %v3158
      %v3283 = vadd.f32 %v2966, %v3161
      %v3284 = vadd.f32 %v2967, %v3166
      %v3285 = vadd.f32 %v2968, %v3169
      %v3286 = vadd.f32 %v2969, %v3174
      %v3287 = vadd.f32 %v2970, %v3177
      %v3288 = vadd.f32 %v2971, %v3182
      %v3289 = vadd.f32 %v2972, %v3185
      %v3290 = vadd.f32 %v2973, %v3190
      %v3291 = vadd.f32 %v2974, %v3193
      %v3292 = vadd.f32 %v2975, %v3198
      %v3293 = vadd.f32 %v2976, %v3201
      %v3294 = vadd.f32 %v2977, %v3206
      %v3295 = vadd.f32 %v2978, %v3209
      %v3296 = vadd.f32 %v2979, %v3214
      %v3297 = vadd.f32 %v2980, %v3217
      %v3298 = vadd.f32 %v2981, %v3222
      %v3299 = vadd.f32 %v2982, %v3225
      %v3300 = vadd.f32 %v2983, %v3230
      %v3301 = vadd.f32 %v2984, %v3233
      %v3302 = vadd.f32 %v2985, %v3238
      %v3303 = vadd.f32 %v2986, %v3241
      %v3304 = vadd.f32 %v2987, %v3246
      %v3305 = vadd.f32 %v2988, %v3249
      %v3306 = vadd.f32 %v2989, %v3254
      %v3307 = vadd.f32 %v2990, %v3257
      %v3308 = vadd.f32 %v2991, %v3262
      %v3309 = vadd.f32 %v2992, %v3265
      %v3310 = vadd.f32 %v2993, %v3270
      %v3311 = vadd.f32 %v2994, %v3273
      %v3312 = vld [vmem:[%s2] sm:$0x1]
      %v3314 = vlaneseq
      %v3315 = vshrl.u32 %v3314, 7
      %v3316 = vsub.s32 0, %v3315
      %v3317 = vrot.slane %v3312, %v3316
      %v3319 = vadd.f32 %v3276, %v3317
      %v3320 = vadd.f32 %v3277, %v3317
      %v3321 = vadd.f32 %v3278, %v3317
      %v3322 = vadd.f32 %v3279, %v3317
      %v3323 = vadd.f32 %v3280, %v3317
      %v3324 = vadd.f32 %v3281, %v3317
      %v3325 = vadd.f32 %v3282, %v3317
      %v3326 = vadd.f32 %v3283, %v3317
      %v3327 = vadd.f32 %v3284, %v3317
      %v3328 = vadd.f32 %v3285, %v3317
      %v3329 = vadd.f32 %v3286, %v3317
      %v3330 = vadd.f32 %v3287, %v3317
      %v3331 = vadd.f32 %v3288, %v3317
      %v3332 = vadd.f32 %v3289, %v3317
      %v3333 = vadd.f32 %v3290, %v3317
      %v3334 = vadd.f32 %v3291, %v3317
      %v3335 = vadd.f32 %v3292, %v3317
      %v3336 = vadd.f32 %v3293, %v3317
      %v3337 = vadd.f32 %v3294, %v3317
      %v3338 = vadd.f32 %v3295, %v3317
      %v3339 = vadd.f32 %v3296, %v3317
      %v3340 = vadd.f32 %v3297, %v3317
      %v3341 = vadd.f32 %v3298, %v3317
      %v3342 = vadd.f32 %v3299, %v3317
      %v3343 = vadd.f32 %v3300, %v3317
      %v3344 = vadd.f32 %v3301, %v3317
      %v3345 = vadd.f32 %v3302, %v3317
      %v3346 = vadd.f32 %v3303, %v3317
      %v3347 = vadd.f32 %v3304, %v3317
      %v3348 = vadd.f32 %v3305, %v3317
      %v3349 = vadd.f32 %v3306, %v3317
      %v3350 = vadd.f32 %v3307, %v3317
      %v3351 = vadd.f32 %v3308, %v3317
      %v3352 = vadd.f32 %v3309, %v3317
      %v3353 = vadd.f32 %v3310, %v3317
      %v3354 = vadd.f32 %v3311, %v3317
      %vm3355 = vcmp.ge.f32.partialorder %v3319, 0.0
      %vm3356 = vcmp.ge.f32.partialorder %v3320, 0.0
      %vm3357 = vcmp.ge.f32.partialorder %v3321, 0.0
      %vm3358 = vcmp.ge.f32.partialorder %v3322, 0.0
      %vm3359 = vcmp.ge.f32.partialorder %v3323, 0.0
      %vm3360 = vcmp.ge.f32.partialorder %v3324, 0.0
      %vm3361 = vcmp.ge.f32.partialorder %v3325, 0.0
      %vm3362 = vcmp.ge.f32.partialorder %v3326, 0.0
      %vm3363 = vcmp.ge.f32.partialorder %v3327, 0.0
      %vm3364 = vcmp.ge.f32.partialorder %v3328, 0.0
      %vm3365 = vcmp.ge.f32.partialorder %v3329, 0.0
      %vm3366 = vcmp.ge.f32.partialorder %v3330, 0.0
      %vm3367 = vcmp.ge.f32.partialorder %v3331, 0.0
      %vm3368 = vcmp.ge.f32.partialorder %v3332, 0.0
      %vm3369 = vcmp.ge.f32.partialorder %v3333, 0.0
      %vm3370 = vcmp.ge.f32.partialorder %v3334, 0.0
      %vm3371 = vcmp.ge.f32.partialorder %v3335, 0.0
      %vm3372 = vcmp.ge.f32.partialorder %v3336, 0.0
      %vm3373 = vcmp.ge.f32.partialorder %v3337, 0.0
      %vm3374 = vcmp.ge.f32.partialorder %v3338, 0.0
      %vm3375 = vcmp.ge.f32.partialorder %v3339, 0.0
      %vm3376 = vcmp.ge.f32.partialorder %v3340, 0.0
      %vm3377 = vcmp.ge.f32.partialorder %v3341, 0.0
      %vm3378 = vcmp.ge.f32.partialorder %v3342, 0.0
      %vm3379 = vcmp.ge.f32.partialorder %v3343, 0.0
      %vm3380 = vcmp.ge.f32.partialorder %v3344, 0.0
      %vm3381 = vcmp.ge.f32.partialorder %v3345, 0.0
      %vm3382 = vcmp.ge.f32.partialorder %v3346, 0.0
      %vm3383 = vcmp.ge.f32.partialorder %v3347, 0.0
      %vm3384 = vcmp.ge.f32.partialorder %v3348, 0.0
      %vm3385 = vcmp.ge.f32.partialorder %v3349, 0.0
      %vm3386 = vcmp.ge.f32.partialorder %v3350, 0.0
      %vm3387 = vcmp.ge.f32.partialorder %v3351, 0.0
      %vm3388 = vcmp.ge.f32.partialorder %v3352, 0.0
      %vm3389 = vcmp.ge.f32.partialorder %v3353, 0.0
      %vm3390 = vcmp.ge.f32.partialorder %v3354, 0.0
      %v3391 = vmul.f32 %v3319, 0.2
      %v3392 = vmul.f32 %v3320, 0.2
      %v3393 = vmul.f32 %v3321, 0.2
      %v3394 = vmul.f32 %v3322, 0.2
      %v3395 = vmul.f32 %v3323, 0.2
      %v3396 = vmul.f32 %v3324, 0.2
      %v3397 = vmul.f32 %v3325, 0.2
      %v3398 = vmul.f32 %v3326, 0.2
      %v3399 = vmul.f32 %v3327, 0.2
      %v3400 = vmul.f32 %v3328, 0.2
      %v3401 = vmul.f32 %v3329, 0.2
      %v3402 = vmul.f32 %v3330, 0.2
      %v3403 = vmul.f32 %v3331, 0.2
      %v3404 = vmul.f32 %v3332, 0.2
      %v3405 = vmul.f32 %v3333, 0.2
      %v3406 = vmul.f32 %v3334, 0.2
      %v3407 = vmul.f32 %v3335, 0.2
      %v3408 = vmul.f32 %v3336, 0.2
      %v3409 = vmul.f32 %v3337, 0.2
      %v3410 = vmul.f32 %v3338, 0.2
      %v3411 = vmul.f32 %v3339, 0.2
      %v3412 = vmul.f32 %v3340, 0.2
      %v3413 = vmul.f32 %v3341, 0.2
      %v3414 = vmul.f32 %v3342, 0.2
      %v3415 = vmul.f32 %v3343, 0.2
      %v3416 = vmul.f32 %v3344, 0.2
      %v3417 = vmul.f32 %v3345, 0.2
      %v3418 = vmul.f32 %v3346, 0.2
      %v3419 = vmul.f32 %v3347, 0.2
      %v3420 = vmul.f32 %v3348, 0.2
      %v3421 = vmul.f32 %v3349, 0.2
      %v3422 = vmul.f32 %v3350, 0.2
      %v3423 = vmul.f32 %v3351, 0.2
      %v3424 = vmul.f32 %v3352, 0.2
      %v3425 = vmul.f32 %v3353, 0.2
      %v3426 = vmul.f32 %v3354, 0.2
      %v3427 = vsel %vm3355, %v3319, %v3391
      %v3428 = vsel %vm3356, %v3320, %v3392
      %v3429 = vsel %vm3357, %v3321, %v3393
      %v3430 = vsel %vm3358, %v3322, %v3394
      %v3431 = vsel %vm3359, %v3323, %v3395
      %v3432 = vsel %vm3360, %v3324, %v3396
      %v3433 = vsel %vm3361, %v3325, %v3397
      %v3434 = vsel %vm3362, %v3326, %v3398
      %v3435 = vsel %vm3363, %v3327, %v3399
      %v3436 = vsel %vm3364, %v3328, %v3400
      %v3437 = vsel %vm3365, %v3329, %v3401
      %v3438 = vsel %vm3366, %v3330, %v3402
      %v3439 = vsel %vm3367, %v3331, %v3403
      %v3440 = vsel %vm3368, %v3332, %v3404
      %v3441 = vsel %vm3369, %v3333, %v3405
      %v3442 = vsel %vm3370, %v3334, %v3406
      %v3443 = vsel %vm3371, %v3335, %v3407
      %v3444 = vsel %vm3372, %v3336, %v3408
      %v3445 = vsel %vm3373, %v3337, %v3409
      %v3446 = vsel %vm3374, %v3338, %v3410
      %v3447 = vsel %vm3375, %v3339, %v3411
      %v3448 = vsel %vm3376, %v3340, %v3412
      %v3449 = vsel %vm3377, %v3341, %v3413
      %v3450 = vsel %vm3378, %v3342, %v3414
      %v3451 = vsel %vm3379, %v3343, %v3415
      %v3452 = vsel %vm3380, %v3344, %v3416
      %v3453 = vsel %vm3381, %v3345, %v3417
      %v3454 = vsel %vm3382, %v3346, %v3418
      %v3455 = vsel %vm3383, %v3347, %v3419
      %v3456 = vsel %vm3384, %v3348, %v3420
      %v3457 = vsel %vm3385, %v3349, %v3421
      %v3458 = vsel %vm3386, %v3350, %v3422
      %v3459 = vsel %vm3387, %v3351, %v3423
      %v3460 = vsel %vm3388, %v3352, %v3424
      %v3461 = vsel %vm3389, %v3353, %v3425
      %v3462 = vsel %vm3390, %v3354, %v3426
      %3463 = vst [vmem:[%s170] sm:$0xff] %v3427
      %3464 = vst [vmem:[%s170 + $0x8] sm:$0xff] %v3428
      %3465 = vst [vmem:[%s170 + $0x10] sm:$0xff] %v3429
      %3466 = vst [vmem:[%s170 + $0x18] sm:$0xff] %v3430
      %3467 = vst [vmem:[%s170 + $0x20] sm:$0xff] %v3431
      %3468 = vst [vmem:[%s170 + $0x28] sm:$0xff] %v3432
      %3469 = vst [vmem:[%s170 + $0x30] sm:$0xff] %v3433
      %3470 = vst [vmem:[%s170 + $0x38] sm:$0xff] %v3434
      %3471 = vst [vmem:[%s170 + $0x40] sm:$0xff] %v3435
      %3472 = vst [vmem:[%s170 + $0x48] sm:$0xff] %v3436
      %3473 = vst [vmem:[%s170 + $0x50] sm:$0xff] %v3437
      %3474 = vst [vmem:[%s170 + $0x58] sm:$0xff] %v3438
      %3475 = vst [vmem:[%s170 + $0x60] sm:$0xff] %v3439
      %3476 = vst [vmem:[%s170 + $0x68] sm:$0xff] %v3440
      %3477 = vst [vmem:[%s170 + $0x70] sm:$0xff] %v3441
      %3478 = vst [vmem:[%s170 + $0x78] sm:$0xff] %v3442
      %3479 = vst [vmem:[%s170 + $0x80] sm:$0xff] %v3443
      %3480 = vst [vmem:[%s170 + $0x88] sm:$0xff] %v3444
      %3481 = vst [vmem:[%s170 + $0x90] sm:$0xff] %v3445
      %3482 = vst [vmem:[%s170 + $0x98] sm:$0xff] %v3446
      %3483 = vst [vmem:[%s170 + $0xa0] sm:$0xff] %v3447
      %3484 = vst [vmem:[%s170 + $0xa8] sm:$0xff] %v3448
      %3485 = vst [vmem:[%s170 + $0xb0] sm:$0xff] %v3449
      %3486 = vst [vmem:[%s170 + $0xb8] sm:$0xff] %v3450
      %3487 = vst [vmem:[%s170 + $0xc0] sm:$0xff] %v3451
      %3488 = vst [vmem:[%s170 + $0xc8] sm:$0xff] %v3452
      %3489 = vst [vmem:[%s170 + $0xd0] sm:$0xff] %v3453
      %3490 = vst [vmem:[%s170 + $0xd8] sm:$0xff] %v3454
      %3491 = vst [vmem:[%s170 + $0xe0] sm:$0xff] %v3455
      %3492 = vst [vmem:[%s170 + $0xe8] sm:$0xff] %v3456
      %3493 = vst [vmem:[%s170 + $0xf0] sm:$0xff] %v3457
      %3494 = vst [vmem:[%s170 + $0xf8] sm:$0xff] %v3458
      %3495 = vst [vmem:[%s170 + $0x100] sm:$0xff] %v3459
      %3496 = vst [vmem:[%s170 + $0x108] sm:$0xff] %v3460
      %3497 = vst [vmem:[%s170 + $0x110] sm:$0xff] %v3461
      %3498 = vst [vmem:[%s170 + $0x118] sm:$0xff] %v3462
      %p3499 = scmp.lt.s32.totalorder %s14, 1
      %s3500 = scalar_select %p3499, %s14, 1
      %s3501 = smul.addr %s3500, 36
      %s3502 = smul.addr %s3501, 8
      %s3503 = scalar_lea.vmem %s3, %s3502
      // Predicated region
      $region33: #{concat_block_forward.5} parent=31 // pred_check
        %p3504 = pneg %p100
      $region34: #{concat_block_forward.5} parent=31 // pred_check_branch
        %3506 = sbr.rel (%p3504) target = $region36
      $region35: #{concat_block_forward.5} parent=31 // pred_region
        _
      $region36: #{concat_block_forward.5} parent=31 // pred_fallthru
        _
    $region32: #{concat_block_forward.5} parent=5 // pred_fallthru
      _
    %p3507 = scmp.le.s32.totalorder 2, %s9
    // Predicated region
    $region37: #{concat_block_forward.5} parent=5 // pred_check
      %p3508 = pneg %p3507
    $region38: #{concat_block_forward.5} parent=5 // pred_check_branch
      %3510 = sbr.rel (%p3508) target = $region40
    $region39: #{concat_block_forward.5} parent=5 // pred_region
      %s3511 = ssub.s32 %s9, 2
      // Predicated region
      $region41: #{concat_block_forward.5} parent=39 // pred_check
        %p3512 = pneg %p106
      $region42: #{concat_block_forward.5} parent=39 // pred_check_branch
        %3514 = sbr.rel (%p3512) target = $region44
      $region43: #{concat_block_forward.5} parent=39 // pred_region
        %p3515 = scmp.lt.s32.totalorder %s15, 1
        %s3516 = scalar_select %p3515, %s15, 1
        %s3517 = smul.addr %s3516, 36
        %s3518 = smul.addr %s3517, 8
        %s3519 = scalar_lea.vmem %s3, %s3518
      $region44: #{concat_block_forward.5} parent=39 // pred_fallthru
        _
    $region40: #{concat_block_forward.5} parent=5 // pred_fallthru
      _
  $region6: #{concat_block_forward.5} parent=0 // loop_footer
    %s13 = sadd.s32 1, %s9
  $region7: #{concat_block_forward.5} parent=0 // loop_footer_branch
    %8 = sbr.rel target = $region3
  $region8: #{concat_block_forward.5} parent=0 // loop_exit
    _

</llo_original>
